<compile_context>
chip_gen: v7x
topology: tpu7x:2x2x1
jax: 0.10.0
libtpu: 0.0.40
codegen_flags: <defaults>
</compile_context>

<pallas_src>
import functools

import jax
import jax.numpy as jnp
from jax.experimental import pallas as pl
from jax.experimental.pallas import tpu as pltpu

ENCODER_HEADS = 8
ENCODER_LAYERS = 8
ENCODER_VECTOR_SIZE = 4 ** 2  # 16
SEQ_LENGTH = 48


def _vmem_limit_bytes():
    # Generation-aware VMEM budget: <= half of physical VMEM, capped at 64 MiB.
    try:
        phys = int(pltpu.get_tpu_info().vmem_capacity_bytes)
    except Exception:
        phys = 128 * 1024 * 1024
    return int(min(64 * 1024 * 1024, max(16 * 1024 * 1024, phys // 2)))


_VMEM_LIMIT = _vmem_limit_bytes()


def _rup(x, m):
    return ((x + m - 1) // m) * m


def _pick_tile(xp, cands=(512, 256, 128)):
    for t in cands:
        if xp % t == 0:
            return t
    return xp


def _pick_row_tile(mp, cap=512):
    for t in (512, 256, 128, 64, 32, 16, 8):
        if t <= cap and mp % t == 0:
            return t
    return mp


def _m_tiling(M):
    if M <= 256:
        Mp = _rup(M, 8)
        return Mp, Mp
    Mp = _rup(M, 256)
    return 256, Mp


def _k_tiling(K):
    # No HBM-side K padding when K already fits a full-extent block.
    if K % 128 == 0:
        return _pick_tile(K), K
    if K <= 2048:
        Kp = _rup(K, 8)
        return Kp, Kp
    Kp = _rup(K, 128)
    return 128, Kp


# ----------------------------------------------------------------------------
# General tiled GEMM kernel (bf16 operands, f32 acc, fused bias + activation)
# ----------------------------------------------------------------------------
def _matmul_kernel(a_ref, b_ref, bias_ref, o_ref, acc_ref, *, activation):
    @pl.when(pl.program_id(2) == 0)
    def _():
        acc_ref[...] = jnp.zeros_like(acc_ref)

    acc_ref[...] += jnp.dot(a_ref[...], b_ref[...],
                            preferred_element_type=jnp.float32)

    @pl.when(pl.program_id(2) == pl.num_programs(2) - 1)
    def _():
        acc = acc_ref[...] + bias_ref[...]
        if activation == "relu":
            acc = jnp.maximum(acc, 0.0)
        elif activation == "leaky":
            acc = jnp.where(acc >= 0, acc, 0.3 * acc)
        elif activation == "sigmoid":
            acc = jax.nn.sigmoid(acc)
        o_ref[...] = acc


def pallas_matmul(a, b, bias=None, activation="none"):
    """out = act(a @ b + bias), tiled / pipelined on the MXU."""
    M, K = a.shape
    K2, N = b.shape
    assert K == K2
    TM, Mp = _m_tiling(M)
    TK, Kp = _k_tiling(K)
    Np = _rup(N, 128)           # lane-dense stores
    TN = _pick_tile(Np)

    a_p = a.astype(jnp.bfloat16)
    if (Mp, Kp) != (M, K):
        a_p = jnp.pad(a_p, ((0, Mp - M), (0, Kp - K)))
    b_p = b.astype(jnp.bfloat16)
    if (Kp, Np) != (K, N):
        b_p = jnp.pad(b_p, ((0, Kp - K), (0, Np - N)))
    if bias is None:
        bias_p = jnp.zeros((1, Np), jnp.float32)
    else:
        bias_p = jnp.pad(bias.reshape(1, N).astype(jnp.float32),
                         ((0, 0), (0, Np - N)))

    grid = (Mp // TM, Np // TN, Kp // TK)
    trans = Mp * Np if activation == "sigmoid" else 0
    out = pl.pallas_call(
        functools.partial(_matmul_kernel, activation=activation),
        out_shape=jax.ShapeDtypeStruct((Mp, Np), jnp.float32),
        grid=grid,
        in_specs=[
            pl.BlockSpec((TM, TK), lambda i, j, k: (i, k)),
            pl.BlockSpec((TK, TN), lambda i, j, k: (k, j)),
            pl.BlockSpec((1, TN), lambda i, j, k: (0, j)),
        ],
        out_specs=pl.BlockSpec((TM, TN), lambda i, j, k: (i, j)),
        scratch_shapes=[pltpu.VMEM((TM, TN), jnp.float32)],
        compiler_params=pltpu.CompilerParams(
            dimension_semantics=("parallel", "parallel", "arbitrary"),
            vmem_limit_bytes=_VMEM_LIMIT),
        cost_estimate=pl.CostEstimate(
            flops=2 * Mp * Np * Kp,
            transcendentals=trans,
            bytes_accessed=Mp * Kp * 2 + Kp * Np * 2 + Mp * Np * 4 + Np * 4),
    )(a_p, b_p, bias_p)
    return out[:M, :N]


# ----------------------------------------------------------------------------
# Conv GEMM with BatchNorm statistics fused into the finalize epilogue
# ----------------------------------------------------------------------------
def _conv_gemm_stats_kernel(a_ref, b_ref, o_ref, sum_ref, sq_ref, acc_ref):
    i = pl.program_id(1)        # M axis (grid is N-outer, M-middle, K-inner)
    k = pl.program_id(2)

    @pl.when(k == 0)
    def _():
        acc_ref[...] = jnp.zeros_like(acc_ref)

    @pl.when(jnp.logical_and(i == 0, k == 0))
    def _():
        sum_ref[...] = jnp.zeros_like(sum_ref)
        sq_ref[...] = jnp.zeros_like(sq_ref)

    acc_ref[...] += jnp.dot(a_ref[...], b_ref[...],
                            preferred_element_type=jnp.float32)

    @pl.when(k == pl.num_programs(2) - 1)
    def _():
        acc = acc_ref[...]
        o_ref[...] = acc
        sum_ref[...] += jnp.sum(acc, axis=0, keepdims=True)
        sq_ref[...] += jnp.sum(acc * acc, axis=0, keepdims=True)


def _bn_apply_kernel(x_ref, sum_ref, sq_ref, g_ref, b_ref, o_ref,
                     *, count, eps, slope):
    x = x_ref[...]
    inv_n = 1.0 / count
    mean = sum_ref[...] * inv_n
    # E[x^2]-mean^2 in f32 (clamped at 0); fine for BN-scaled conv activations.
    var = jnp.maximum(sq_ref[...] * inv_n - mean * mean, 0.0)
    y = (x - mean) * jax.lax.rsqrt(var + eps) * g_ref[...] + b_ref[...]
    o_ref[...] = jnp.where(y >= 0, y, slope * y)


def conv_bn_lrelu_nhwc(x, w, gamma, beta, eps=1e-5, slope=0.3):
    """Conv2d(k=4, s=2, p=1, bias=False) + BatchNorm(batch stats) + LeakyReLU(0.3).
    The conv is a tiled MXU GEMM whose finalize epilogue also accumulates the
    per-channel sum / sum-of-squares needed by BatchNorm."""
    N = x.shape[0]
    C_out = w.shape[0]
    a, Ho, Wo = im2col_nhwc(x, w.shape[2], stride=2, pad=1)
    M, K = a.shape
    bmat = weight_nhwc(w)

    TM, Mp = _m_tiling(M)
    TK, Kp = _k_tiling(K)
    Np = _rup(C_out, 128)
    TN = _pick_tile(Np)

    a_p = a.astype(jnp.bfloat16)
    if (Mp, Kp) != (M, K):
        a_p = jnp.pad(a_p, ((0, Mp - M), (0, Kp - K)))
    b_p = jnp.pad(bmat.astype(jnp.bfloat16), ((0, Kp - K), (0, Np - C_out)))

    grid = (Np // TN, Mp // TM, Kp // TK)   # N outer so the stats block stays resident
    rows_p, sum_, sq_ = pl.pallas_call(
        _conv_gemm_stats_kernel,
        out_shape=(jax.ShapeDtypeStruct((Mp, Np), jnp.float32),
                   jax.ShapeDtypeStruct((1, Np), jnp.float32),
                   jax.ShapeDtypeStruct((1, Np), jnp.float32)),
        grid=grid,
        in_specs=[
            pl.BlockSpec((TM, TK), lambda j, i, k: (i, k)),
            pl.BlockSpec((TK, TN), lambda j, i, k: (k, j)),
        ],
        out_specs=(pl.BlockSpec((TM, TN), lambda j, i, k: (i, j)),
                   pl.BlockSpec((1, TN), lambda j, i, k: (0, j)),
                   pl.BlockSpec((1, TN), lambda j, i, k: (0, j))),
        scratch_shapes=[pltpu.VMEM((TM, TN), jnp.float32)],
        compiler_params=pltpu.CompilerParams(
            dimension_semantics=("parallel", "arbitrary", "arbitrary"),
            vmem_limit_bytes=_VMEM_LIMIT),
        cost_estimate=pl.CostEstimate(
            flops=2 * Mp * Np * Kp, transcendentals=0,
            bytes_accessed=Mp * Kp * 2 + Kp * Np * 2 + Mp * Np * 4 + 2 * Np * 4),
    )(a_p, b_p)

    g_p = jnp.pad(gamma.reshape(1, C_out).astype(jnp.float32),
                  ((0, 0), (0, Np - C_out)))
    bb_p = jnp.pad(beta.reshape(1, C_out).astype(jnp.float32),
                   ((0, 0), (0, Np - C_out)))
    TB = _pick_row_tile(Mp)
    rows_p = pl.pallas_call(
        functools.partial(_bn_apply_kernel, count=float(M), eps=eps, slope=slope),
        out_shape=jax.ShapeDtypeStruct((Mp, Np), jnp.float32),
        grid=(Mp // TB,),
        in_specs=[
            pl.BlockSpec((TB, Np), lambda i: (i, 0)),
            pl.BlockSpec((1, Np), lambda i: (0, 0)),
            pl.BlockSpec((1, Np), lambda i: (0, 0)),
            pl.BlockSpec((1, Np), lambda i: (0, 0)),
            pl.BlockSpec((1, Np), lambda i: (0, 0)),
        ],
        out_specs=pl.BlockSpec((TB, Np), lambda i: (i, 0)),
        compiler_params=pltpu.CompilerParams(
            dimension_semantics=("parallel",),
            vmem_limit_bytes=_VMEM_LIMIT),
    )(rows_p, sum_, sq_, g_p, bb_p)

    rows = rows_p[:M, :C_out]
    return rows.reshape(N, Ho, Wo, C_out)


# ----------------------------------------------------------------------------
# Whole transformer encoder (all 8 layers) as ONE pallas_call
# ----------------------------------------------------------------------------
def _text_encoder_kernel(x0_ref, hr_ref, hx_ref,
                         qw_ref, kw_ref, vw_ref, qb_ref, kb_ref, vb_ref,
                         ow_ref, ob_ref, g1_ref, b1_ref,
                         f1w_ref, f1b_ref, f2w_ref, f2b_ref,
                         g2_ref, b2_ref,
                         o_ref, xs_ref, *, nb, scale, eps):
    layer = pl.program_id(0)

    @pl.when(layer == 0)
    def _():
        xs_ref[...] = x0_ref[...]

    x = xs_ref[...]                       # (L*nb, E) f32, carried across layers
    xb = x.astype(jnp.bfloat16)

    # --- self-attention (seq axis = dim 0 of the (B, S, E) input: seq-first
    #     "as written" semantics of the reference module) --------------------
    q = jnp.dot(xb, qw_ref[...], preferred_element_type=jnp.float32) + qb_ref[...]
    k = jnp.dot(xb, kw_ref[...], preferred_element_type=jnp.float32) + kb_ref[...]
    v = jnp.dot(xb, vw_ref[...], preferred_element_type=jnp.float32) + vb_ref[...]
    q = q * scale

    rows = x.shape[0]
    L = rows // nb                        # static (== batch); attention unrolled O(L^2)
    hr = hr_ref[...]                      # (E, H): sums each head's hd lanes
    hx = hx_ref[...]                      # (H, E): expands per-head weights back to hd lanes
    qs = [q[l * nb:(l + 1) * nb, :] for l in range(L)]
    ks = [k[l * nb:(l + 1) * nb, :] for l in range(L)]
    vs = [v[l * nb:(l + 1) * nb, :] for l in range(L)]

    o_parts = []
    for l in range(L):
        scores = [jnp.dot(qs[l] * ks[lp], hr, preferred_element_type=jnp.float32)
                  for lp in range(L)]     # each (nb, H)
        m = scores[0]
        for s in scores[1:]:
            m = jnp.maximum(m, s)
        exps = [jnp.exp(s - m) for s in scores]
        den = exps[0]
        for e in exps[1:]:
            den = den + e
        inv = 1.0 / den
        o_l = None
        for lp in range(L):
            wgt = jnp.dot(exps[lp] * inv, hx, preferred_element_type=jnp.float32)
            term = wgt * vs[lp]
            o_l = term if o_l is None else o_l + term
        o_parts.append(o_l)
    attn_o = jnp.concatenate(o_parts, axis=0) if L > 1 else o_parts[0]

    # --- out-proj + residual + LN1 ------------------------------------------
    proj = jnp.dot(attn_o.astype(jnp.bfloat16), ow_ref[...],
                   preferred_element_type=jnp.float32) + ob_ref[...]
    x1 = x + proj
    mu = jnp.mean(x1, axis=-1, keepdims=True)
    var = jnp.mean(jnp.square(x1 - mu), axis=-1, keepdims=True)
    x1 = (x1 - mu) * jax.lax.rsqrt(var + eps) * g1_ref[...] + b1_ref[...]

    # --- FFN (bf16 MXU operands, f32 accumulation) + residual + LN2 ---------
    h = jnp.dot(x1.astype(jnp.bfloat16), f1w_ref[...],
                preferred_element_type=jnp.float32) + f1b_ref[...]
    h = jnp.maximum(h, 0.0)
    y = jnp.dot(h.astype(jnp.bfloat16), f2w_ref[...],
                preferred_element_type=jnp.float32) + f2b_ref[...]
    x2 = x1 + y
    mu = jnp.mean(x2, axis=-1, keepdims=True)
    var = jnp.mean(jnp.square(x2 - mu), axis=-1, keepdims=True)
    x2 = (x2 - mu) * jax.lax.rsqrt(var + eps) * g2_ref[...] + b2_ref[...]

    xs_ref[...] = x2

    @pl.when(layer == pl.num_programs(0) - 1)
    def _():
        o_ref[...] = x2


def pallas_text_encoder(x0, layers, eps=1e-5):
    """All ENCODER_LAYERS TransformerEncoderLayers in one pallas_call: grid
    axis = layer, per-layer weights streamed via BlockSpecs (double-buffered),
    activations carried in a VMEM scratch."""
    rows, E = x0.shape
    H = ENCODER_HEADS
    hd = E // H
    nb = SEQ_LENGTH
    nl = len(layers)
    bf, f32 = jnp.bfloat16, jnp.float32

    def stk(fn, dtype):
        return jnp.stack([fn(p) for p in layers]).astype(dtype)

    qw = stk(lambda p: p['in_w'][:E].T, bf)
    kw = stk(lambda p: p['in_w'][E:2 * E].T, bf)
    vw = stk(lambda p: p['in_w'][2 * E:].T, bf)
    qb = stk(lambda p: p['in_b'][:E].reshape(1, E), f32)
    kb = stk(lambda p: p['in_b'][E:2 * E].reshape(1, E), f32)
    vb = stk(lambda p: p['in_b'][2 * E:].reshape(1, E), f32)
    ow = stk(lambda p: p['out_w'].T, bf)
    ob = stk(lambda p: p['out_b'].reshape(1, E), f32)
    g1 = stk(lambda p: p['ln1_g'].reshape(1, E), f32)
    b1 = stk(lambda p: p['ln1_b'].reshape(1, E), f32)
    f1w = stk(lambda p: p['ff1_w'].T, bf)
    f1b = stk(lambda p: p['ff1_b'].reshape(1, -1), f32)
    f2w = stk(lambda p: p['ff2_w'].T, bf)
    f2b = stk(lambda p: p['ff2_b'].reshape(1, E), f32)
    g2 = stk(lambda p: p['ln2_g'].reshape(1, E), f32)
    b2 = stk(lambda p: p['ln2_b'].reshape(1, E), f32)

    # head-reduce / head-expand matrices (hd lanes <-> per-head scalar)
    hr = (jnp.arange(E)[:, None] // hd == jnp.arange(H)[None, :]).astype(f32)
    hx = hr.T

    stacked = [qw, kw, vw, qb, kb, vb, ow, ob, g1, b1, f1w, f1b, f2w, f2b, g2, b2]
    F = f1w.shape[-1]

    def full2d(arr):
        return pl.BlockSpec(arr.shape, lambda i: (0, 0))

    def perlayer(arr):
        d1, d2 = arr.shape[1], arr.shape[2]
        return pl.BlockSpec((None, d1, d2), lambda i: (i, 0, 0))

    flops = nl * (2 * rows * E * 4 * E + 4 * rows * E * F)
    out = pl.pallas_call(
        functools.partial(_text_encoder_kernel, nb=nb,
                          scale=float(hd) ** -0.5, eps=eps),
        out_shape=jax.ShapeDtypeStruct((rows, E), jnp.float32),
        grid=(nl,),
        in_specs=[full2d(x0), full2d(hr), full2d(hx)] + [perlayer(a) for a in stacked],
        out_specs=pl.BlockSpec((rows, E), lambda i: (0, 0)),
        scratch_shapes=[pltpu.VMEM((rows, E), jnp.float32)],
        compiler_params=pltpu.CompilerParams(
            dimension_semantics=("arbitrary",),
            vmem_limit_bytes=_VMEM_LIMIT),
        cost_estimate=pl.CostEstimate(
            flops=flops,
            transcendentals=nl * rows * H * 2,
            bytes_accessed=nl * (4 * E * F + 8 * E * E) + 2 * rows * E * 4),
    )(x0.astype(jnp.float32), hr, hx, *stacked)
    return out


# ----------------------------------------------------------------------------
# Plain-JAX glue (NHWC im2col, positional encoding)
# ----------------------------------------------------------------------------
def im2col_nhwc(x, k, stride, pad):
    """x: (N, H, W, C) -> (N*Ho*Wo, k*k*C), patch ordering (kh, kw, C)."""
    # TODO(synk): implicit-GEMM (in-kernel strided patch gather via manual DMA)
    # would avoid materializing this k^2-expanded patch matrix in HBM.
    N, H, W, C = x.shape
    xp = jnp.pad(x, ((0, 0), (pad, pad), (pad, pad), (0, 0)))
    Ho = (H + 2 * pad - k) // stride + 1
    Wo = (W + 2 * pad - k) // stride + 1
    patches = []
    for kh in range(k):
        for kw in range(k):
            patches.append(
                xp[:, kh:kh + stride * Ho:stride, kw:kw + stride * Wo:stride, :])
    patches = jnp.stack(patches, axis=3)              # (N, Ho, Wo, k*k, C)
    return patches.reshape(N * Ho * Wo, k * k * C), Ho, Wo


def weight_nhwc(w):
    """torch (C_out, C_in, kh, kw) -> (kh*kw*C_in, C_out) matching im2col_nhwc."""
    C_out, C_in, kh, kw = w.shape
    return w.transpose(0, 2, 3, 1).reshape(C_out, kh * kw * C_in).T


def make_pos_encoding(max_len, d):
    pos = jnp.arange(max_len, dtype=jnp.float32)[:, None]
    div = jnp.exp(jnp.arange(0, d, 2, dtype=jnp.float32) * (-jnp.log(10000.0) / d))
    pe = jnp.zeros((max_len, d), jnp.float32)
    pe = pe.at[:, 0::2].set(jnp.sin(pos * div))
    pe = pe.at[:, 1::2].set(jnp.cos(pos * div))
    return pe


# ----------------------------------------------------------------------------
# Discriminator forward
# ----------------------------------------------------------------------------
def discriminator_forward(params, x, tokens):
    # TODO(synk): texts_to_tensor (host-side string tokenization) has no kernel
    # equivalent; the wrapper takes pre-tokenized int32 ids of shape (B, SEQ_LENGTH).
    B, _, image_size, _ = x.shape
    encode_mult = image_size // 4

    # ---- text branch: embedding + PE (plain JAX gather), then ONE fused
    #      Pallas kernel for the full 8-layer encoder --------------------------
    caps = params['embed'][tokens]                             # (B, S, E)
    pe = params['pos_enc']
    caps = caps + pe[:caps.shape[0]][:, None, :]               # PE over dim 0 (seq-first, "as written")
    x2 = caps.reshape(B * SEQ_LENGTH, ENCODER_VECTOR_SIZE)
    x2 = pallas_text_encoder(x2, params['layers'])
    caps = x2.reshape(B, SEQ_LENGTH, ENCODER_VECTOR_SIZE)

    # spatial-tile captions and concat in NHWC (no per-layer NCHW transposes)
    caps_sp = caps.reshape(B, SEQ_LENGTH, 4, 4).transpose(0, 2, 3, 1)   # (B,4,4,S)
    caps_nhwc = jnp.tile(caps_sp, (1, encode_mult, encode_mult, 1))     # (B,H,W,S)
    h = jnp.concatenate([x.transpose(0, 2, 3, 1), caps_nhwc], axis=-1)  # (B,H,W,3+S)

    # ---- conv stack (rows / NHWC layout end-to-end; BN stats fused in GEMM) -
    h = conv_bn_lrelu_nhwc(h, params['conv1_w'], params['bn1_g'], params['bn1_b'])
    for blk in params['blocks']:
        h = conv_bn_lrelu_nhwc(h, blk['w'], blk['g'], blk['b'])

    # conv128 (k=4, s=1, p=0) + LeakyReLU(0.3) fused into the GEMM epilogue
    a, ho, wo = im2col_nhwc(h, 4, 1, 0)
    feat = pallas_matmul(a, weight_nhwc(params['conv128_w']), activation="leaky")
    feat = feat.reshape(B * ho * wo, 128)                      # Flatten -> (B, 128)

    # ---- MinibatchDiscriminator(128, 64, 3) --------------------------------
    # TODO(synk): MinibatchDiscriminator is not defined in the source file; this is
    # the standard Salimans et al. formulation (self term included); the B^2 abs-diff
    # stays plain JAX (negligible at small batch).
    M = pallas_matmul(feat, params['mbd_T']).reshape(B, 64, 3)
    diff = jnp.sum(jnp.abs(M[:, None, :, :] - M[None, :, :, :]), axis=-1)   # (B, B, 64)
    o_b = jnp.sum(jnp.exp(-diff), axis=1)                                   # (B, 64)
    feat = jnp.concatenate([feat, o_b], axis=1)                             # (B, 192)

    # ---- Linear(192, 1) + Sigmoid (fused in GEMM epilogue) -----------------
    out = pallas_matmul(feat, params['fc_w'].T, params['fc_b'], activation="sigmoid")
    return out                                                              # (B, 1)


# ----------------------------------------------------------------------------
# Deterministic parameter construction
# ----------------------------------------------------------------------------
def build_params(key, vocab_size, pad_idx, ndf, image_size):
    keys = iter(jax.random.split(key, 256))

    def nrm(shape, scale=0.02):
        return scale * jax.random.normal(next(keys), shape, jnp.float32)

    E = ENCODER_VECTOR_SIZE
    params = {}
    emb = nrm((vocab_size, E), 0.5)
    params['embed'] = emb.at[pad_idx].set(0.0)                 # padding_idx row = 0
    params['pos_enc'] = make_pos_encoding(max(64, SEQ_LENGTH), E)

    layers = []
    for _ in range(ENCODER_LAYERS):
        layers.append(dict(
            in_w=nrm((3 * E, E)), in_b=nrm((3 * E,)),
            out_w=nrm((E, E)), out_b=nrm((E,)),
            ff1_w=nrm((2048, E)), ff1_b=nrm((2048,)),
            ff2_w=nrm((E, 2048)), ff2_b=nrm((E,)),
            ln1_g=jnp.ones((E,), jnp.float32), ln1_b=jnp.zeros((E,), jnp.float32),
            ln2_g=jnp.ones((E,), jnp.float32), ln2_b=jnp.zeros((E,), jnp.float32),
        ))
    params['layers'] = layers

    in_ch = 3 + SEQ_LENGTH
    params['conv1_w'] = nrm((ndf, in_ch, 4, 4))
    params['bn1_g'] = jnp.ones((ndf,), jnp.float32)
    params['bn1_b'] = jnp.zeros((ndf,), jnp.float32)

    blocks = []
    mult = 1
    s = image_size
    while s > 4 * 2:
        cin, cout = ndf * mult, ndf * mult * 2
        blocks.append(dict(w=nrm((cout, cin, 4, 4)),
                           g=jnp.ones((cout,), jnp.float32),
                           b=jnp.zeros((cout,), jnp.float32)))
        s //= 2
        mult *= 2
    params['blocks'] = blocks

    params['conv128_w'] = nrm((128, ndf * mult, 4, 4))
    params['mbd_T'] = nrm((128, 64 * 3))
    params['fc_w'] = nrm((1, 128 + 64))
    params['fc_b'] = nrm((1,))
    return params


# ----------------------------------------------------------------------------
if __name__ == "__main__":
    dictionary = {'<PAD>': 0, '<UNK>': 1, 'a': 2, 'cat': 3, 'dog': 4, 'red': 5,
                  'blue': 6, 'sits': 7, 'on': 8, 'the': 9, 'mat': 10, 'runs': 11}
    ndf = 8
    image_size = 16      # small, consistent with the module (must be divisible by 4)
    batch = 2

    key = jax.random.PRNGKey(0)
    k_img, k_tok, k_par = jax.random.split(key, 3)

    x = jax.random.normal(k_img, (batch, 3, image_size, image_size), jnp.float32)
    tokens = jax.random.randint(k_tok, (batch, SEQ_LENGTH), 0, len(dictionary))

    params = build_params(k_par, len(dictionary), dictionary['<PAD>'], ndf, image_size)

    fwd = jax.jit(discriminator_forward)
    out = fwd(params, x, tokens)
    out = jax.block_until_ready(out)

    assert out.shape == (batch, 1)
    assert bool(jnp.all(jnp.isfinite(out)))
    assert bool(jnp.all((out >= 0.0) & (out <= 1.0)))   # sigmoid output
    print("KERNEL_OK")
</pallas_src>

<mosaic_0001>
module attributes {stable_mosaic.version = 11 : i64} {
  func.func @_text_encoder_kernel(%arg0: i32, %arg1: memref<96x16xf32, #tpu.memory_space<vmem>>, %arg2: memref<16x8xf32, #tpu.memory_space<vmem>>, %arg3: memref<8x16xf32, #tpu.memory_space<vmem>>, %arg4: memref<1x16x16xbf16, #tpu.memory_space<vmem>>, %arg5: memref<1x16x16xbf16, #tpu.memory_space<vmem>>, %arg6: memref<1x16x16xbf16, #tpu.memory_space<vmem>>, %arg7: memref<1x1x16xf32, #tpu.memory_space<vmem>>, %arg8: memref<1x1x16xf32, #tpu.memory_space<vmem>>, %arg9: memref<1x1x16xf32, #tpu.memory_space<vmem>>, %arg10: memref<1x16x16xbf16, #tpu.memory_space<vmem>>, %arg11: memref<1x1x16xf32, #tpu.memory_space<vmem>>, %arg12: memref<1x1x16xf32, #tpu.memory_space<vmem>>, %arg13: memref<1x1x16xf32, #tpu.memory_space<vmem>>, %arg14: memref<1x16x2048xbf16, #tpu.memory_space<vmem>>, %arg15: memref<1x1x2048xf32, #tpu.memory_space<vmem>>, %arg16: memref<1x2048x16xbf16, #tpu.memory_space<vmem>>, %arg17: memref<1x1x16xf32, #tpu.memory_space<vmem>>, %arg18: memref<1x1x16xf32, #tpu.memory_space<vmem>>, %arg19: memref<1x1x16xf32, #tpu.memory_space<vmem>>, %arg20: memref<96x16xf32, #tpu.memory_space<vmem>>, %arg21: memref<96x16xf32, #tpu.memory_space<vmem>>) attributes {dimension_semantics = [#tpu.dimension_semantics<arbitrary>], iteration_bounds = array<i64: 8>, scalar_prefetch = 0 : i64, scratch_operands = 1 : i64, tpu.core_type = #tpu.core_type<tc>, window_params = [{pipeline_mode = #tpu.pipeline_mode<synchronous>, transform_indices = @transform_0, window_bounds = array<i64: 96, 16>}, {pipeline_mode = #tpu.pipeline_mode<synchronous>, transform_indices = @transform_1, window_bounds = array<i64: 16, 8>}, {pipeline_mode = #tpu.pipeline_mode<synchronous>, transform_indices = @transform_2, window_bounds = array<i64: 8, 16>}, {transform_indices = @transform_3, window_bounds = array<i64: 1, 16, 16>}, {transform_indices = @transform_4, window_bounds = array<i64: 1, 16, 16>}, {transform_indices = @transform_5, window_bounds = array<i64: 1, 16, 16>}, {transform_indices = @transform_6, window_bounds = array<i64: 1, 1, 16>}, {transform_indices = @transform_7, window_bounds = array<i64: 1, 1, 16>}, {transform_indices = @transform_8, window_bounds = array<i64: 1, 1, 16>}, {transform_indices = @transform_9, window_bounds = array<i64: 1, 16, 16>}, {transform_indices = @transform_10, window_bounds = array<i64: 1, 1, 16>}, {transform_indices = @transform_11, window_bounds = array<i64: 1, 1, 16>}, {transform_indices = @transform_12, window_bounds = array<i64: 1, 1, 16>}, {transform_indices = @transform_13, window_bounds = array<i64: 1, 16, 2048>}, {transform_indices = @transform_14, window_bounds = array<i64: 1, 1, 2048>}, {transform_indices = @transform_15, window_bounds = array<i64: 1, 2048, 16>}, {transform_indices = @transform_16, window_bounds = array<i64: 1, 1, 16>}, {transform_indices = @transform_17, window_bounds = array<i64: 1, 1, 16>}, {transform_indices = @transform_18, window_bounds = array<i64: 1, 1, 16>}, {pipeline_mode = #tpu.pipeline_mode<synchronous>, transform_indices = @transform_19, window_bounds = array<i64: 96, 16>}]} {
    %c0_i32 = arith.constant 0 : i32
    %0 = arith.cmpi eq, %arg0, %c0_i32 : i32
    %1 = arith.extui %0 : i1 to i32
    %c0_i32_0 = arith.constant 0 : i32
    %2 = arith.cmpi ne, %1, %c0_i32_0 : i32
    scf.if %2 {
      %c0_84 = arith.constant 0 : index
      %c0_85 = arith.constant 0 : index
      %159 = vector.load %arg1[%c0_84, %c0_85] : memref<96x16xf32, #tpu.memory_space<vmem>>, vector<96x16xf32>
      %c0_86 = arith.constant 0 : index
      %c0_87 = arith.constant 0 : index
      %160 = vector.load %arg21[%c0_86, %c0_87] : memref<96x16xf32, #tpu.memory_space<vmem>>, vector<96x16xf32>
      tpu.vector_store %arg21[%c0_86, %c0_87], %159 {strides = array<i32>} : memref<96x16xf32, #tpu.memory_space<vmem>>, vector<96x16xf32>,
    } else {
    }
    %c0 = arith.constant 0 : index
    %c0_1 = arith.constant 0 : index
    %3 = vector.load %arg21[%c0, %c0_1] : memref<96x16xf32, #tpu.memory_space<vmem>>, vector<96x16xf32>
    %4 = arith.truncf %3 : vector<96x16xf32> to vector<96x16xbf16>
    %c0_2 = arith.constant 0 : index
    %c0_3 = arith.constant 0 : index
    %c0_4 = arith.constant 0 : index
    %5 = vector.load %arg4[%c0_2, %c0_3, %c0_4] : memref<1x16x16xbf16, #tpu.memory_space<vmem>>, vector<1x16x16xbf16>
    %6 = vector.shape_cast %5 : vector<1x16x16xbf16> to vector<16x16xbf16>
    %cst = arith.constant dense<0.000000e+00> : vector<96x16xf32>
    %7 = tpu.matmul %4, %6, %cst {dimension_numbers = #tpu.dot_dimension_numbers<[1], [0], [0], [1], [0, 0, 1, 1], [], []>} : vector<96x16xbf16>, vector<16x16xbf16>, vector<96x16xf32> -> vector<96x16xf32>
    %c0_5 = arith.constant 0 : index
    %c0_6 = arith.constant 0 : index
    %c0_7 = arith.constant 0 : index
    %8 = vector.load %arg7[%c0_5, %c0_6, %c0_7] : memref<1x1x16xf32, #tpu.memory_space<vmem>>, vector<1x1x16xf32>
    %9 = vector.shape_cast %8 : vector<1x1x16xf32> to vector<1x16xf32>
    %10 = vector.broadcast %9 : vector<1x16xf32> to vector<96x16xf32>
    %11 = arith.addf %7, %10 : vector<96x16xf32>
    %c0_8 = arith.constant 0 : index
    %c0_9 = arith.constant 0 : index
    %c0_10 = arith.constant 0 : index
    %12 = vector.load %arg5[%c0_8, %c0_9, %c0_10] : memref<1x16x16xbf16, #tpu.memory_space<vmem>>, vector<1x16x16xbf16>
    %13 = vector.shape_cast %12 : vector<1x16x16xbf16> to vector<16x16xbf16>
    %cst_11 = arith.constant dense<0.000000e+00> : vector<96x16xf32>
    %14 = tpu.matmul %4, %13, %cst_11 {dimension_numbers = #tpu.dot_dimension_numbers<[1], [0], [0], [1], [0, 0, 1, 1], [], []>} : vector<96x16xbf16>, vector<16x16xbf16>, vector<96x16xf32> -> vector<96x16xf32>
    %c0_12 = arith.constant 0 : index
    %c0_13 = arith.constant 0 : index
    %c0_14 = arith.constant 0 : index
    %15 = vector.load %arg8[%c0_12, %c0_13, %c0_14] : memref<1x1x16xf32, #tpu.memory_space<vmem>>, vector<1x1x16xf32>
    %16 = vector.shape_cast %15 : vector<1x1x16xf32> to vector<1x16xf32>
    %17 = vector.broadcast %16 : vector<1x16xf32> to vector<96x16xf32>
    %18 = arith.addf %14, %17 : vector<96x16xf32>
    %c0_15 = arith.constant 0 : index
    %c0_16 = arith.constant 0 : index
    %c0_17 = arith.constant 0 : index
    %19 = vector.load %arg6[%c0_15, %c0_16, %c0_17] : memref<1x16x16xbf16, #tpu.memory_space<vmem>>, vector<1x16x16xbf16>
    %20 = vector.shape_cast %19 : vector<1x16x16xbf16> to vector<16x16xbf16>
    %cst_18 = arith.constant dense<0.000000e+00> : vector<96x16xf32>
    %21 = tpu.matmul %4, %20, %cst_18 {dimension_numbers = #tpu.dot_dimension_numbers<[1], [0], [0], [1], [0, 0, 1, 1], [], []>} : vector<96x16xbf16>, vector<16x16xbf16>, vector<96x16xf32> -> vector<96x16xf32>
    %c0_19 = arith.constant 0 : index
    %c0_20 = arith.constant 0 : index
    %c0_21 = arith.constant 0 : index
    %22 = vector.load %arg9[%c0_19, %c0_20, %c0_21] : memref<1x1x16xf32, #tpu.memory_space<vmem>>, vector<1x1x16xf32>
    %23 = vector.shape_cast %22 : vector<1x1x16xf32> to vector<1x16xf32>
    %24 = vector.broadcast %23 : vector<1x16xf32> to vector<96x16xf32>
    %25 = arith.addf %21, %24 : vector<96x16xf32>
    %cst_22 = arith.constant 0.707106769 : f32
    %26 = vector.broadcast %cst_22 : f32 to vector<96x16xf32>
    %27 = arith.mulf %11, %26 : vector<96x16xf32>
    %c0_23 = arith.constant 0 : index
    %c0_24 = arith.constant 0 : index
    %28 = vector.load %arg2[%c0_23, %c0_24] : memref<16x8xf32, #tpu.memory_space<vmem>>, vector<16x8xf32>
    %c0_25 = arith.constant 0 : index
    %c0_26 = arith.constant 0 : index
    %29 = vector.load %arg3[%c0_25, %c0_26] : memref<8x16xf32, #tpu.memory_space<vmem>>, vector<8x16xf32>
    %30 = vector.extract_strided_slice %27 {offsets = [0, 0], sizes = [48, 16], strides = [1, 1]} : vector<96x16xf32> to vector<48x16xf32>
    %31 = vector.extract_strided_slice %27 {offsets = [48, 0], sizes = [48, 16], strides = [1, 1]} : vector<96x16xf32> to vector<48x16xf32>
    %32 = vector.extract_strided_slice %18 {offsets = [0, 0], sizes = [48, 16], strides = [1, 1]} : vector<96x16xf32> to vector<48x16xf32>
    %33 = vector.extract_strided_slice %18 {offsets = [48, 0], sizes = [48, 16], strides = [1, 1]} : vector<96x16xf32> to vector<48x16xf32>
    %34 = vector.extract_strided_slice %25 {offsets = [0, 0], sizes = [48, 16], strides = [1, 1]} : vector<96x16xf32> to vector<48x16xf32>
    %35 = vector.extract_strided_slice %25 {offsets = [48, 0], sizes = [48, 16], strides = [1, 1]} : vector<96x16xf32> to vector<48x16xf32>
    %36 = arith.mulf %30, %32 : vector<48x16xf32>
    %cst_27 = arith.constant dense<0.000000e+00> : vector<48x8xf32>
    %37 = tpu.matmul %36, %28, %cst_27 {dimension_numbers = #tpu.dot_dimension_numbers<[1], [0], [0], [1], [0, 0, 1, 1], [], []>} : vector<48x16xf32>, vector<16x8xf32>, vector<48x8xf32> -> vector<48x8xf32>
    %38 = arith.mulf %30, %33 : vector<48x16xf32>
    %cst_28 = arith.constant dense<0.000000e+00> : vector<48x8xf32>
    %39 = tpu.matmul %38, %28, %cst_28 {dimension_numbers = #tpu.dot_dimension_numbers<[1], [0], [0], [1], [0, 0, 1, 1], [], []>} : vector<48x16xf32>, vector<16x8xf32>, vector<48x8xf32> -> vector<48x8xf32>
    %40 = arith.maximumf %37, %39 : vector<48x8xf32>
    %41 = arith.subf %37, %40 : vector<48x8xf32>
    %42 = math.exp %41 : vector<48x8xf32>
    %43 = arith.subf %39, %40 : vector<48x8xf32>
    %44 = math.exp %43 : vector<48x8xf32>
    %45 = arith.addf %42, %44 : vector<48x8xf32>
    %cst_29 = arith.constant 1.000000e+00 : f32
    %46 = vector.broadcast %cst_29 : f32 to vector<48x8xf32>
    %47 = arith.divf %46, %45 : vector<48x8xf32>
    %48 = arith.mulf %42, %47 : vector<48x8xf32>
    %cst_30 = arith.constant dense<0.000000e+00> : vector<48x16xf32>
    %49 = tpu.matmul %48, %29, %cst_30 {dimension_numbers = #tpu.dot_dimension_numbers<[1], [0], [0], [1], [0, 0, 1, 1], [], []>} : vector<48x8xf32>, vector<8x16xf32>, vector<48x16xf32> -> vector<48x16xf32>
    %50 = arith.mulf %49, %34 : vector<48x16xf32>
    %51 = arith.mulf %44, %47 : vector<48x8xf32>
    %cst_31 = arith.constant dense<0.000000e+00> : vector<48x16xf32>
    %52 = tpu.matmul %51, %29, %cst_31 {dimension_numbers = #tpu.dot_dimension_numbers<[1], [0], [0], [1], [0, 0, 1, 1], [], []>} : vector<48x8xf32>, vector<8x16xf32>, vector<48x16xf32> -> vector<48x16xf32>
    %53 = arith.mulf %52, %35 : vector<48x16xf32>
    %54 = arith.addf %50, %53 : vector<48x16xf32>
    %55 = arith.mulf %31, %32 : vector<48x16xf32>
    %cst_32 = arith.constant dense<0.000000e+00> : vector<48x8xf32>
    %56 = tpu.matmul %55, %28, %cst_32 {dimension_numbers = #tpu.dot_dimension_numbers<[1], [0], [0], [1], [0, 0, 1, 1], [], []>} : vector<48x16xf32>, vector<16x8xf32>, vector<48x8xf32> -> vector<48x8xf32>
    %57 = arith.mulf %31, %33 : vector<48x16xf32>
    %cst_33 = arith.constant dense<0.000000e+00> : vector<48x8xf32>
    %58 = tpu.matmul %57, %28, %cst_33 {dimension_numbers = #tpu.dot_dimension_numbers<[1], [0], [0], [1], [0, 0, 1, 1], [], []>} : vector<48x16xf32>, vector<16x8xf32>, vector<48x8xf32> -> vector<48x8xf32>
    %59 = arith.maximumf %56, %58 : vector<48x8xf32>
    %60 = arith.subf %56, %59 : vector<48x8xf32>
    %61 = math.exp %60 : vector<48x8xf32>
    %62 = arith.subf %58, %59 : vector<48x8xf32>
    %63 = math.exp %62 : vector<48x8xf32>
    %64 = arith.addf %61, %63 : vector<48x8xf32>
    %cst_34 = arith.constant 1.000000e+00 : f32
    %65 = vector.broadcast %cst_34 : f32 to vector<48x8xf32>
    %66 = arith.divf %65, %64 : vector<48x8xf32>
    %67 = arith.mulf %61, %66 : vector<48x8xf32>
    %cst_35 = arith.constant dense<0.000000e+00> : vector<48x16xf32>
    %68 = tpu.matmul %67, %29, %cst_35 {dimension_numbers = #tpu.dot_dimension_numbers<[1], [0], [0], [1], [0, 0, 1, 1], [], []>} : vector<48x8xf32>, vector<8x16xf32>, vector<48x16xf32> -> vector<48x16xf32>
    %69 = arith.mulf %68, %34 : vector<48x16xf32>
    %70 = arith.mulf %63, %66 : vector<48x8xf32>
    %cst_36 = arith.constant dense<0.000000e+00> : vector<48x16xf32>
    %71 = tpu.matmul %70, %29, %cst_36 {dimension_numbers = #tpu.dot_dimension_numbers<[1], [0], [0], [1], [0, 0, 1, 1], [], []>} : vector<48x8xf32>, vector<8x16xf32>, vector<48x16xf32> -> vector<48x16xf32>
    %72 = arith.mulf %71, %35 : vector<48x16xf32>
    %73 = arith.addf %69, %72 : vector<48x16xf32>
    %74 = tpu.concatenate %54, %73 in 0 : vector<48x16xf32>, vector<48x16xf32> -> vector<96x16xf32>
    %75 = arith.truncf %74 : vector<96x16xf32> to vector<96x16xbf16>
    %c0_37 = arith.constant 0 : index
    %c0_38 = arith.constant 0 : index
    %c0_39 = arith.constant 0 : index
    %76 = vector.load %arg10[%c0_37, %c0_38, %c0_39] : memref<1x16x16xbf16, #tpu.memory_space<vmem>>, vector<1x16x16xbf16>
    %77 = vector.shape_cast %76 : vector<1x16x16xbf16> to vector<16x16xbf16>
    %cst_40 = arith.constant dense<0.000000e+00> : vector<96x16xf32>
    %78 = tpu.matmul %75, %77, %cst_40 {dimension_numbers = #tpu.dot_dimension_numbers<[1], [0], [0], [1], [0, 0, 1, 1], [], []>} : vector<96x16xbf16>, vector<16x16xbf16>, vector<96x16xf32> -> vector<96x16xf32>
    %c0_41 = arith.constant 0 : index
    %c0_42 = arith.constant 0 : index
    %c0_43 = arith.constant 0 : index
    %79 = vector.load %arg11[%c0_41, %c0_42, %c0_43] : memref<1x1x16xf32, #tpu.memory_space<vmem>>, vector<1x1x16xf32>
    %80 = vector.shape_cast %79 : vector<1x1x16xf32> to vector<1x16xf32>
    %81 = vector.broadcast %80 : vector<1x16xf32> to vector<96x16xf32>
    %82 = arith.addf %78, %81 : vector<96x16xf32>
    %83 = arith.addf %3, %82 : vector<96x16xf32>
    %cst_44 = arith.constant dense<0.000000e+00> : vector<96xf32>
    %84 = vector.multi_reduction <add>, %83, %cst_44 [1] : vector<96x16xf32> to vector<96xf32>
    %85 = vector.shape_cast %84 : vector<96xf32> to vector<96x1xf32>
    %cst_45 = arith.constant 1.600000e+01 : f32
    %86 = vector.broadcast %cst_45 : f32 to vector<96x1xf32>
    %87 = arith.divf %85, %86 : vector<96x1xf32>
    %88 = vector.broadcast %87 : vector<96x1xf32> to vector<96x16xf32>
    %89 = arith.subf %83, %88 : vector<96x16xf32>
    %90 = arith.mulf %89, %89 : vector<96x16xf32>
    %cst_46 = arith.constant dense<0.000000e+00> : vector<96xf32>
    %91 = vector.multi_reduction <add>, %90, %cst_46 [1] : vector<96x16xf32> to vector<96xf32>
    %92 = vector.shape_cast %91 : vector<96xf32> to vector<96x1xf32>
    %cst_47 = arith.constant 1.600000e+01 : f32
    %93 = vector.broadcast %cst_47 : f32 to vector<96x1xf32>
    %94 = arith.divf %92, %93 : vector<96x1xf32>
    %95 = vector.broadcast %87 : vector<96x1xf32> to vector<96x16xf32>
    %96 = arith.subf %83, %95 : vector<96x16xf32>
    %cst_48 = arith.constant 9.99999974E-6 : f32
    %97 = vector.broadcast %cst_48 : f32 to vector<96x1xf32>
    %98 = arith.addf %94, %97 : vector<96x1xf32>
    %99 = math.rsqrt %98 : vector<96x1xf32>
    %100 = vector.broadcast %99 : vector<96x1xf32> to vector<96x16xf32>
    %101 = arith.mulf %96, %100 : vector<96x16xf32>
    %c0_49 = arith.constant 0 : index
    %c0_50 = arith.constant 0 : index
    %c0_51 = arith.constant 0 : index
    %102 = vector.load %arg12[%c0_49, %c0_50, %c0_51] : memref<1x1x16xf32, #tpu.memory_space<vmem>>, vector<1x1x16xf32>
    %103 = vector.shape_cast %102 : vector<1x1x16xf32> to vector<1x16xf32>
    %104 = vector.broadcast %103 : vector<1x16xf32> to vector<96x16xf32>
    %105 = arith.mulf %101, %104 : vector<96x16xf32>
    %c0_52 = arith.constant 0 : index
    %c0_53 = arith.constant 0 : index
    %c0_54 = arith.constant 0 : index
    %106 = vector.load %arg13[%c0_52, %c0_53, %c0_54] : memref<1x1x16xf32, #tpu.memory_space<vmem>>, vector<1x1x16xf32>
    %107 = vector.shape_cast %106 : vector<1x1x16xf32> to vector<1x16xf32>
    %108 = vector.broadcast %107 : vector<1x16xf32> to vector<96x16xf32>
    %109 = arith.addf %105, %108 : vector<96x16xf32>
    %110 = arith.truncf %109 : vector<96x16xf32> to vector<96x16xbf16>
    %c0_55 = arith.constant 0 : index
    %c0_56 = arith.constant 0 : index
    %c0_57 = arith.constant 0 : index
    %111 = vector.load %arg14[%c0_55, %c0_56, %c0_57] : memref<1x16x2048xbf16, #tpu.memory_space<vmem>>, vector<1x16x2048xbf16>
    %112 = vector.shape_cast %111 : vector<1x16x2048xbf16> to vector<16x2048xbf16>
    %cst_58 = arith.constant dense<0.000000e+00> : vector<96x2048xf32>
    %113 = tpu.matmul %110, %112, %cst_58 {dimension_numbers = #tpu.dot_dimension_numbers<[1], [0], [0], [1], [0, 0, 1, 1], [], []>} : vector<96x16xbf16>, vector<16x2048xbf16>, vector<96x2048xf32> -> vector<96x2048xf32>
    %c0_59 = arith.constant 0 : index
    %c0_60 = arith.constant 0 : index
    %c0_61 = arith.constant 0 : index
    %114 = vector.load %arg15[%c0_59, %c0_60, %c0_61] : memref<1x1x2048xf32, #tpu.memory_space<vmem>>, vector<1x1x2048xf32>
    %115 = vector.shape_cast %114 : vector<1x1x2048xf32> to vector<1x2048xf32>
    %116 = vector.broadcast %115 : vector<1x2048xf32> to vector<96x2048xf32>
    %117 = arith.addf %113, %116 : vector<96x2048xf32>
    %cst_62 = arith.constant 0.000000e+00 : f32
    %118 = vector.broadcast %cst_62 : f32 to vector<96x2048xf32>
    %119 = arith.maximumf %117, %118 : vector<96x2048xf32>
    %120 = arith.truncf %119 : vector<96x2048xf32> to vector<96x2048xbf16>
    %c0_63 = arith.constant 0 : index
    %c0_64 = arith.constant 0 : index
    %c0_65 = arith.constant 0 : index
    %121 = vector.load %arg16[%c0_63, %c0_64, %c0_65] : memref<1x2048x16xbf16, #tpu.memory_space<vmem>>, vector<1x2048x16xbf16>
    %122 = vector.shape_cast %121 : vector<1x2048x16xbf16> to vector<2048x16xbf16>
    %cst_66 = arith.constant dense<0.000000e+00> : vector<96x16xf32>
    %123 = tpu.matmul %120, %122, %cst_66 {dimension_numbers = #tpu.dot_dimension_numbers<[1], [0], [0], [1], [0, 0, 1, 1], [], []>} : vector<96x2048xbf16>, vector<2048x16xbf16>, vector<96x16xf32> -> vector<96x16xf32>
    %c0_67 = arith.constant 0 : index
    %c0_68 = arith.constant 0 : index
    %c0_69 = arith.constant 0 : index
    %124 = vector.load %arg17[%c0_67, %c0_68, %c0_69] : memref<1x1x16xf32, #tpu.memory_space<vmem>>, vector<1x1x16xf32>
    %125 = vector.shape_cast %124 : vector<1x1x16xf32> to vector<1x16xf32>
    %126 = vector.broadcast %125 : vector<1x16xf32> to vector<96x16xf32>
    %127 = arith.addf %123, %126 : vector<96x16xf32>
    %128 = arith.addf %109, %127 : vector<96x16xf32>
    %cst_70 = arith.constant dense<0.000000e+00> : vector<96xf32>
    %129 = vector.multi_reduction <add>, %128, %cst_70 [1] : vector<96x16xf32> to vector<96xf32>
    %130 = vector.shape_cast %129 : vector<96xf32> to vector<96x1xf32>
    %cst_71 = arith.constant 1.600000e+01 : f32
    %131 = vector.broadcast %cst_71 : f32 to vector<96x1xf32>
    %132 = arith.divf %130, %131 : vector<96x1xf32>
    %133 = vector.broadcast %132 : vector<96x1xf32> to vector<96x16xf32>
    %134 = arith.subf %128, %133 : vector<96x16xf32>
    %135 = arith.mulf %134, %134 : vector<96x16xf32>
    %cst_72 = arith.constant dense<0.000000e+00> : vector<96xf32>
    %136 = vector.multi_reduction <add>, %135, %cst_72 [1] : vector<96x16xf32> to vector<96xf32>
    %137 = vector.shape_cast %136 : vector<96xf32> to vector<96x1xf32>
    %cst_73 = arith.constant 1.600000e+01 : f32
    %138 = vector.broadcast %cst_73 : f32 to vector<96x1xf32>
    %139 = arith.divf %137, %138 : vector<96x1xf32>
    %140 = vector.broadcast %132 : vector<96x1xf32> to vector<96x16xf32>
    %141 = arith.subf %128, %140 : vector<96x16xf32>
    %cst_74 = arith.constant 9.99999974E-6 : f32
    %142 = vector.broadcast %cst_74 : f32 to vector<96x1xf32>
    %143 = arith.addf %139, %142 : vector<96x1xf32>
    %144 = math.rsqrt %143 : vector<96x1xf32>
    %145 = vector.broadcast %144 : vector<96x1xf32> to vector<96x16xf32>
    %146 = arith.mulf %141, %145 : vector<96x16xf32>
    %c0_75 = arith.constant 0 : index
    %c0_76 = arith.constant 0 : index
    %c0_77 = arith.constant 0 : index
    %147 = vector.load %arg18[%c0_75, %c0_76, %c0_77] : memref<1x1x16xf32, #tpu.memory_space<vmem>>, vector<1x1x16xf32>
    %148 = vector.shape_cast %147 : vector<1x1x16xf32> to vector<1x16xf32>
    %149 = vector.broadcast %148 : vector<1x16xf32> to vector<96x16xf32>
    %150 = arith.mulf %146, %149 : vector<96x16xf32>
    %c0_78 = arith.constant 0 : index
    %c0_79 = arith.constant 0 : index
    %c0_80 = arith.constant 0 : index
    %151 = vector.load %arg19[%c0_78, %c0_79, %c0_80] : memref<1x1x16xf32, #tpu.memory_space<vmem>>, vector<1x1x16xf32>
    %152 = vector.shape_cast %151 : vector<1x1x16xf32> to vector<1x16xf32>
    %153 = vector.broadcast %152 : vector<1x16xf32> to vector<96x16xf32>
    %154 = arith.addf %150, %153 : vector<96x16xf32>
    %c0_81 = arith.constant 0 : index
    %c0_82 = arith.constant 0 : index
    %155 = vector.load %arg21[%c0_81, %c0_82] : memref<96x16xf32, #tpu.memory_space<vmem>>, vector<96x16xf32>
    tpu.vector_store %arg21[%c0_81, %c0_82], %154 {strides = array<i32>} : memref<96x16xf32, #tpu.memory_space<vmem>>, vector<96x16xf32>,
    %c7_i32 = arith.constant 7 : i32
    %156 = arith.cmpi eq, %arg0, %c7_i32 : i32
    %157 = arith.extui %156 : i1 to i32
    %c0_i32_83 = arith.constant 0 : i32
    %158 = arith.cmpi ne, %157, %c0_i32_83 : i32
    scf.if %158 {
      %c0_84 = arith.constant 0 : index
      %c0_85 = arith.constant 0 : index
      %159 = vector.load %arg20[%c0_84, %c0_85] : memref<96x16xf32, #tpu.memory_space<vmem>>, vector<96x16xf32>
      tpu.vector_store %arg20[%c0_84, %c0_85], %154 {strides = array<i32>} : memref<96x16xf32, #tpu.memory_space<vmem>>, vector<96x16xf32>,
    } else {
    }
    return
  }
  func.func @transform_0(%arg0: i32) -> (i32, i32) {
    %c0_i32 = arith.constant 0 : i32
    %c0_i32_0 = arith.constant 0 : i32
    %c0_i32_1 = arith.constant 0 : i32
    return %c0_i32, %c0_i32_0 : i32, i32
  }
  func.func @transform_1(%arg0: i32) -> (i32, i32) {
    %c0_i32 = arith.constant 0 : i32
    %c0_i32_0 = arith.constant 0 : i32
    %c0_i32_1 = arith.constant 0 : i32
    return %c0_i32, %c0_i32_0 : i32, i32
  }
  func.func @transform_2(%arg0: i32) -> (i32, i32) {
    %c0_i32 = arith.constant 0 : i32
    %c0_i32_0 = arith.constant 0 : i32
    %c0_i32_1 = arith.constant 0 : i32
    return %c0_i32, %c0_i32_0 : i32, i32
  }
  func.func @transform_3(%arg0: i32) -> (i32, i32, i32) {
    %c0_i32 = arith.constant 0 : i32
    %c0_i32_0 = arith.constant 0 : i32
    %c0_i32_1 = arith.constant 0 : i32
    return %arg0, %c0_i32, %c0_i32_0 : i32, i32, i32
  }
  func.func @transform_4(%arg0: i32) -> (i32, i32, i32) {
    %c0_i32 = arith.constant 0 : i32
    %c0_i32_0 = arith.constant 0 : i32
    %c0_i32_1 = arith.constant 0 : i32
    return %arg0, %c0_i32, %c0_i32_0 : i32, i32, i32
  }
  func.func @transform_5(%arg0: i32) -> (i32, i32, i32) {
    %c0_i32 = arith.constant 0 : i32
    %c0_i32_0 = arith.constant 0 : i32
    %c0_i32_1 = arith.constant 0 : i32
    return %arg0, %c0_i32, %c0_i32_0 : i32, i32, i32
  }
  func.func @transform_6(%arg0: i32) -> (i32, i32, i32) {
    %c0_i32 = arith.constant 0 : i32
    %c0_i32_0 = arith.constant 0 : i32
    %c0_i32_1 = arith.constant 0 : i32
    return %arg0, %c0_i32, %c0_i32_0 : i32, i32, i32
  }
  func.func @transform_7(%arg0: i32) -> (i32, i32, i32) {
    %c0_i32 = arith.constant 0 : i32
    %c0_i32_0 = arith.constant 0 : i32
    %c0_i32_1 = arith.constant 0 : i32
    return %arg0, %c0_i32, %c0_i32_0 : i32, i32, i32
  }
  func.func @transform_8(%arg0: i32) -> (i32, i32, i32) {
    %c0_i32 = arith.constant 0 : i32
    %c0_i32_0 = arith.constant 0 : i32
    %c0_i32_1 = arith.constant 0 : i32
    return %arg0, %c0_i32, %c0_i32_0 : i32, i32, i32
  }
  func.func @transform_9(%arg0: i32) -> (i32, i32, i32) {
    %c0_i32 = arith.constant 0 : i32
    %c0_i32_0 = arith.constant 0 : i32
    %c0_i32_1 = arith.constant 0 : i32
    return %arg0, %c0_i32, %c0_i32_0 : i32, i32, i32
  }
  func.func @transform_10(%arg0: i32) -> (i32, i32, i32) {
    %c0_i32 = arith.constant 0 : i32
    %c0_i32_0 = arith.constant 0 : i32
    %c0_i32_1 = arith.constant 0 : i32
    return %arg0, %c0_i32, %c0_i32_0 : i32, i32, i32
  }
  func.func @transform_11(%arg0: i32) -> (i32, i32, i32) {
    %c0_i32 = arith.constant 0 : i32
    %c0_i32_0 = arith.constant 0 : i32
    %c0_i32_1 = arith.constant 0 : i32
    return %arg0, %c0_i32, %c0_i32_0 : i32, i32, i32
  }
  func.func @transform_12(%arg0: i32) -> (i32, i32, i32) {
    %c0_i32 = arith.constant 0 : i32
    %c0_i32_0 = arith.constant 0 : i32
    %c0_i32_1 = arith.constant 0 : i32
    return %arg0, %c0_i32, %c0_i32_0 : i32, i32, i32
  }
  func.func @transform_13(%arg0: i32) -> (i32, i32, i32) {
    %c0_i32 = arith.constant 0 : i32
    %c0_i32_0 = arith.constant 0 : i32
    %c0_i32_1 = arith.constant 0 : i32
    return %arg0, %c0_i32, %c0_i32_0 : i32, i32, i32
  }
  func.func @transform_14(%arg0: i32) -> (i32, i32, i32) {
    %c0_i32 = arith.constant 0 : i32
    %c0_i32_0 = arith.constant 0 : i32
    %c0_i32_1 = arith.constant 0 : i32
    return %arg0, %c0_i32, %c0_i32_0 : i32, i32, i32
  }
  func.func @transform_15(%arg0: i32) -> (i32, i32, i32) {
    %c0_i32 = arith.constant 0 : i32
    %c0_i32_0 = arith.constant 0 : i32
    %c0_i32_1 = arith.constant 0 : i32
    return %arg0, %c0_i32, %c0_i32_0 : i32, i32, i32
  }
  func.func @transform_16(%arg0: i32) -> (i32, i32, i32) {
    %c0_i32 = arith.constant 0 : i32
    %c0_i32_0 = arith.constant 0 : i32
    %c0_i32_1 = arith.constant 0 : i32
    return %arg0, %c0_i32, %c0_i32_0 : i32, i32, i32
  }
  func.func @transform_17(%arg0: i32) -> (i32, i32, i32) {
    %c0_i32 = arith.constant 0 : i32
    %c0_i32_0 = arith.constant 0 : i32
    %c0_i32_1 = arith.constant 0 : i32
    return %arg0, %c0_i32, %c0_i32_0 : i32, i32, i32
  }
  func.func @transform_18(%arg0: i32) -> (i32, i32, i32) {
    %c0_i32 = arith.constant 0 : i32
    %c0_i32_0 = arith.constant 0 : i32
    %c0_i32_1 = arith.constant 0 : i32
    return %arg0, %c0_i32, %c0_i32_0 : i32, i32, i32
  }
  func.func @transform_19(%arg0: i32) -> (i32, i32) {
    %c0_i32 = arith.constant 0 : i32
    %c0_i32_0 = arith.constant 0 : i32
    %c0_i32_1 = arith.constant 0 : i32
    return %c0_i32, %c0_i32_0 : i32, i32
  }
}

module attributes {stable_mosaic.version = 11 : i64} {
  func.func @_conv_gemm_stats_kernel(%arg0: i32, %arg1: i32, %arg2: i32, %arg3: memref<128x816xbf16, #tpu.memory_space<vmem>>, %arg4: memref<816x128xbf16, #tpu.memory_space<vmem>>, %arg5: memref<128x128xf32, #tpu.memory_space<vmem>>, %arg6: memref<1x128xf32, #tpu.memory_space<vmem>>, %arg7: memref<1x128xf32, #tpu.memory_space<vmem>>, %arg8: memref<128x128xf32, #tpu.memory_space<vmem>>) attributes {dimension_semantics = [#tpu.dimension_semantics<parallel>, #tpu.dimension_semantics<arbitrary>, #tpu.dimension_semantics<arbitrary>], iteration_bounds = array<i64: 1, 1, 1>, scalar_prefetch = 0 : i64, scratch_operands = 1 : i64, tpu.core_type = #tpu.core_type<tc>, window_params = [{transform_indices = @transform_0, window_bounds = array<i64: 128, 816>}, {transform_indices = @transform_1, window_bounds = array<i64: 816, 128>}, {transform_indices = @transform_2, window_bounds = array<i64: 128, 128>}, {transform_indices = @transform_3, window_bounds = array<i64: 1, 128>}, {transform_indices = @transform_4, window_bounds = array<i64: 1, 128>}]} {
    %c0_i32 = arith.constant 0 : i32
    %0 = arith.cmpi eq, %arg2, %c0_i32 : i32
    %1 = arith.extui %0 : i1 to i32
    %c0_i32_0 = arith.constant 0 : i32
    %2 = arith.cmpi ne, %1, %c0_i32_0 : i32
    scf.if %2 {
      %cst_13 = arith.constant 0.000000e+00 : f32
      %17 = vector.broadcast %cst_13 : f32 to vector<128x128xf32>
      %c0_14 = arith.constant 0 : index
      %c0_15 = arith.constant 0 : index
      %18 = vector.load %arg8[%c0_14, %c0_15] : memref<128x128xf32, #tpu.memory_space<vmem>>, vector<128x128xf32>
      tpu.vector_store %arg8[%c0_14, %c0_15], %17 {strides = array<i32>} : memref<128x128xf32, #tpu.memory_space<vmem>>, vector<128x128xf32>,
    } else {
    }
    %c0_i32_1 = arith.constant 0 : i32
    %3 = arith.cmpi eq, %arg1, %c0_i32_1 : i32
    %c0_i32_2 = arith.constant 0 : i32
    %4 = arith.cmpi eq, %arg2, %c0_i32_2 : i32
    %5 = arith.andi %3, %4 : i1
    %6 = arith.extui %5 : i1 to i32
    %c0_i32_3 = arith.constant 0 : i32
    %7 = arith.cmpi ne, %6, %c0_i32_3 : i32
    scf.if %7 {
      %cst_13 = arith.constant 0.000000e+00 : f32
      %17 = vector.broadcast %cst_13 : f32 to vector<1x128xf32>
      %c0_14 = arith.constant 0 : index
      %c0_15 = arith.constant 0 : index
      %18 = vector.load %arg6[%c0_14, %c0_15] : memref<1x128xf32, #tpu.memory_space<vmem>>, vector<1x128xf32>
      tpu.vector_store %arg6[%c0_14, %c0_15], %17 {strides = array<i32>} : memref<1x128xf32, #tpu.memory_space<vmem>>, vector<1x128xf32>,
      %cst_16 = arith.constant 0.000000e+00 : f32
      %19 = vector.broadcast %cst_16 : f32 to vector<1x128xf32>
      %c0_17 = arith.constant 0 : index
      %c0_18 = arith.constant 0 : index
      %20 = vector.load %arg7[%c0_17, %c0_18] : memref<1x128xf32, #tpu.memory_space<vmem>>, vector<1x128xf32>
      tpu.vector_store %arg7[%c0_17, %c0_18], %19 {strides = array<i32>} : memref<1x128xf32, #tpu.memory_space<vmem>>, vector<1x128xf32>,
    } else {
    }
    %c0 = arith.constant 0 : index
    %c0_4 = arith.constant 0 : index
    %8 = vector.load %arg8[%c0, %c0_4] : memref<128x128xf32, #tpu.memory_space<vmem>>, vector<128x128xf32>
    %c0_5 = arith.constant 0 : index
    %c0_6 = arith.constant 0 : index
    %9 = vector.load %arg3[%c0_5, %c0_6] : memref<128x816xbf16, #tpu.memory_space<vmem>>, vector<128x816xbf16>
    %c0_7 = arith.constant 0 : index
    %c0_8 = arith.constant 0 : index
    %10 = vector.load %arg4[%c0_7, %c0_8] : memref<816x128xbf16, #tpu.memory_space<vmem>>, vector<816x128xbf16>
    %cst = arith.constant dense<0.000000e+00> : vector<128x128xf32>
    %11 = tpu.matmul %9, %10, %cst {dimension_numbers = #tpu.dot_dimension_numbers<[1], [0], [0], [1], [0, 0, 1, 1], [], []>} : vector<128x816xbf16>, vector<816x128xbf16>, vector<128x128xf32> -> vector<128x128xf32>
    %12 = arith.addf %8, %11 : vector<128x128xf32>
    %c0_9 = arith.constant 0 : index
    %c0_10 = arith.constant 0 : index
    %13 = vector.load %arg8[%c0_9, %c0_10] : memref<128x128xf32, #tpu.memory_space<vmem>>, vector<128x128xf32>
    tpu.vector_store %arg8[%c0_9, %c0_10], %12 {strides = array<i32>} : memref<128x128xf32, #tpu.memory_space<vmem>>, vector<128x128xf32>,
    %c0_i32_11 = arith.constant 0 : i32
    %14 = arith.cmpi eq, %arg2, %c0_i32_11 : i32
    %15 = arith.extui %14 : i1 to i32
    %c0_i32_12 = arith.constant 0 : i32
    %16 = arith.cmpi ne, %15, %c0_i32_12 : i32
    scf.if %16 {
      %c0_13 = arith.constant 0 : index
      %c0_14 = arith.constant 0 : index
      %17 = vector.load %arg8[%c0_13, %c0_14] : memref<128x128xf32, #tpu.memory_space<vmem>>, vector<128x128xf32>
      %c0_15 = arith.constant 0 : index
      %c0_16 = arith.constant 0 : index
      %18 = vector.load %arg5[%c0_15, %c0_16] : memref<128x128xf32, #tpu.memory_space<vmem>>, vector<128x128xf32>
      tpu.vector_store %arg5[%c0_15, %c0_16], %17 {strides = array<i32>} : memref<128x128xf32, #tpu.memory_space<vmem>>, vector<128x128xf32>,
      %c0_17 = arith.constant 0 : index
      %c0_18 = arith.constant 0 : index
      %19 = vector.load %arg6[%c0_17, %c0_18] : memref<1x128xf32, #tpu.memory_space<vmem>>, vector<1x128xf32>
      %cst_19 = arith.constant dense<0.000000e+00> : vector<128xf32>
      %20 = vector.multi_reduction <add>, %17, %cst_19 [0] : vector<128x128xf32> to vector<128xf32>
      %21 = vector.shape_cast %20 : vector<128xf32> to vector<1x128xf32>
      %22 = arith.addf %19, %21 : vector<1x128xf32>
      %c0_20 = arith.constant 0 : index
      %c0_21 = arith.constant 0 : index
      %23 = vector.load %arg6[%c0_20, %c0_21] : memref<1x128xf32, #tpu.memory_space<vmem>>, vector<1x128xf32>
      tpu.vector_store %arg6[%c0_20, %c0_21], %22 {strides = array<i32>} : memref<1x128xf32, #tpu.memory_space<vmem>>, vector<1x128xf32>,
      %c0_22 = arith.constant 0 : index
      %c0_23 = arith.constant 0 : index
      %24 = vector.load %arg7[%c0_22, %c0_23] : memref<1x128xf32, #tpu.memory_space<vmem>>, vector<1x128xf32>
      %25 = arith.mulf %17, %17 : vector<128x128xf32>
      %cst_24 = arith.constant dense<0.000000e+00> : vector<128xf32>
      %26 = vector.multi_reduction <add>, %25, %cst_24 [0] : vector<128x128xf32> to vector<128xf32>
      %27 = vector.shape_cast %26 : vector<128xf32> to vector<1x128xf32>
      %28 = arith.addf %24, %27 : vector<1x128xf32>
      %c0_25 = arith.constant 0 : index
      %c0_26 = arith.constant 0 : index
      %29 = vector.load %arg7[%c0_25, %c0_26] : memref<1x128xf32, #tpu.memory_space<vmem>>, vector<1x128xf32>
      tpu.vector_store %arg7[%c0_25, %c0_26], %28 {strides = array<i32>} : memref<1x128xf32, #tpu.memory_space<vmem>>, vector<1x128xf32>,
    } else {
    }
    return
  }
  func.func @transform_0(%arg0: i32, %arg1: i32, %arg2: i32) -> (i32, i32) {
    %c0_i32 = arith.constant 0 : i32
    return %arg1, %arg2 : i32, i32
  }
  func.func @transform_1(%arg0: i32, %arg1: i32, %arg2: i32) -> (i32, i32) {
    %c0_i32 = arith.constant 0 : i32
    return %arg2, %arg0 : i32, i32
  }
  func.func @transform_2(%arg0: i32, %arg1: i32, %arg2: i32) -> (i32, i32) {
    %c0_i32 = arith.constant 0 : i32
    return %arg1, %arg0 : i32, i32
  }
  func.func @transform_3(%arg0: i32, %arg1: i32, %arg2: i32) -> (i32, i32) {
    %c0_i32 = arith.constant 0 : i32
    %c0_i32_0 = arith.constant 0 : i32
    return %c0_i32, %arg0 : i32, i32
  }
  func.func @transform_4(%arg0: i32, %arg1: i32, %arg2: i32) -> (i32, i32) {
    %c0_i32 = arith.constant 0 : i32
    %c0_i32_0 = arith.constant 0 : i32
    return %c0_i32, %arg0 : i32, i32
  }
}

module attributes {stable_mosaic.version = 11 : i64} {
  func.func @_bn_apply_kernel(%arg0: i32, %arg1: memref<128x128xf32, #tpu.memory_space<vmem>>, %arg2: memref<1x128xf32, #tpu.memory_space<vmem>>, %arg3: memref<1x128xf32, #tpu.memory_space<vmem>>, %arg4: memref<1x128xf32, #tpu.memory_space<vmem>>, %arg5: memref<1x128xf32, #tpu.memory_space<vmem>>, %arg6: memref<128x128xf32, #tpu.memory_space<vmem>>) attributes {dimension_semantics = [#tpu.dimension_semantics<parallel>], iteration_bounds = array<i64: 1>, scalar_prefetch = 0 : i64, scratch_operands = 0 : i64, tpu.core_type = #tpu.core_type<tc>, window_params = [{transform_indices = @transform_0, window_bounds = array<i64: 128, 128>}, {pipeline_mode = #tpu.pipeline_mode<synchronous>, transform_indices = @transform_1, window_bounds = array<i64: 1, 128>}, {pipeline_mode = #tpu.pipeline_mode<synchronous>, transform_indices = @transform_2, window_bounds = array<i64: 1, 128>}, {pipeline_mode = #tpu.pipeline_mode<synchronous>, transform_indices = @transform_3, window_bounds = array<i64: 1, 128>}, {pipeline_mode = #tpu.pipeline_mode<synchronous>, transform_indices = @transform_4, window_bounds = array<i64: 1, 128>}, {transform_indices = @transform_5, window_bounds = array<i64: 128, 128>}]} {
    %c0 = arith.constant 0 : index
    %c0_0 = arith.constant 0 : index
    %0 = vector.load %arg1[%c0, %c0_0] : memref<128x128xf32, #tpu.memory_space<vmem>>, vector<128x128xf32>
    %c0_1 = arith.constant 0 : index
    %c0_2 = arith.constant 0 : index
    %1 = vector.load %arg2[%c0_1, %c0_2] : memref<1x128xf32, #tpu.memory_space<vmem>>, vector<1x128xf32>
    %cst = arith.constant 7.812500e-03 : f32
    %2 = vector.broadcast %cst : f32 to vector<1x128xf32>
    %3 = arith.mulf %1, %2 : vector<1x128xf32>
    %c0_3 = arith.constant 0 : index
    %c0_4 = arith.constant 0 : index
    %4 = vector.load %arg3[%c0_3, %c0_4] : memref<1x128xf32, #tpu.memory_space<vmem>>, vector<1x128xf32>
    %cst_5 = arith.constant 7.812500e-03 : f32
    %5 = vector.broadcast %cst_5 : f32 to vector<1x128xf32>
    %6 = arith.mulf %4, %5 : vector<1x128xf32>
    %7 = arith.mulf %3, %3 : vector<1x128xf32>
    %8 = arith.subf %6, %7 : vector<1x128xf32>
    %cst_6 = arith.constant 0.000000e+00 : f32
    %9 = vector.broadcast %cst_6 : f32 to vector<1x128xf32>
    %10 = arith.maximumf %8, %9 : vector<1x128xf32>
    %11 = vector.broadcast %3 : vector<1x128xf32> to vector<128x128xf32>
    %12 = arith.subf %0, %11 : vector<128x128xf32>
    %cst_7 = arith.constant 9.99999974E-6 : f32
    %13 = vector.broadcast %cst_7 : f32 to vector<1x128xf32>
    %14 = arith.addf %10, %13 : vector<1x128xf32>
    %15 = math.rsqrt %14 : vector<1x128xf32>
    %16 = vector.broadcast %15 : vector<1x128xf32> to vector<128x128xf32>
    %17 = arith.mulf %12, %16 : vector<128x128xf32>
    %c0_8 = arith.constant 0 : index
    %c0_9 = arith.constant 0 : index
    %18 = vector.load %arg4[%c0_8, %c0_9] : memref<1x128xf32, #tpu.memory_space<vmem>>, vector<1x128xf32>
    %19 = vector.broadcast %18 : vector<1x128xf32> to vector<128x128xf32>
    %20 = arith.mulf %17, %19 : vector<128x128xf32>
    %c0_10 = arith.constant 0 : index
    %c0_11 = arith.constant 0 : index
    %21 = vector.load %arg5[%c0_10, %c0_11] : memref<1x128xf32, #tpu.memory_space<vmem>>, vector<1x128xf32>
    %22 = vector.broadcast %21 : vector<1x128xf32> to vector<128x128xf32>
    %23 = arith.addf %20, %22 : vector<128x128xf32>
    %cst_12 = arith.constant 0.000000e+00 : f32
    %24 = vector.broadcast %cst_12 : f32 to vector<128x128xf32>
    %25 = arith.cmpf oge, %23, %24 : vector<128x128xf32>
    %cst_13 = arith.constant 3.000000e-01 : f32
    %26 = vector.broadcast %cst_13 : f32 to vector<128x128xf32>
    %27 = arith.mulf %26, %23 : vector<128x128xf32>
    %28 = arith.select %25, %23, %27 : vector<128x128xi1>, vector<128x128xf32>
    %c0_14 = arith.constant 0 : index
    %c0_15 = arith.constant 0 : index
    %29 = vector.load %arg6[%c0_14, %c0_15] : memref<128x128xf32, #tpu.memory_space<vmem>>, vector<128x128xf32>
    tpu.vector_store %arg6[%c0_14, %c0_15], %28 {strides = array<i32>} : memref<128x128xf32, #tpu.memory_space<vmem>>, vector<128x128xf32>,
    return
  }
  func.func @transform_0(%arg0: i32) -> (i32, i32) {
    %c0_i32 = arith.constant 0 : i32
    %c0_i32_0 = arith.constant 0 : i32
    return %arg0, %c0_i32 : i32, i32
  }
  func.func @transform_1(%arg0: i32) -> (i32, i32) {
    %c0_i32 = arith.constant 0 : i32
    %c0_i32_0 = arith.constant 0 : i32
    %c0_i32_1 = arith.constant 0 : i32
    return %c0_i32, %c0_i32_0 : i32, i32
  }
  func.func @transform_2(%arg0: i32) -> (i32, i32) {
    %c0_i32 = arith.constant 0 : i32
    %c0_i32_0 = arith.constant 0 : i32
    %c0_i32_1 = arith.constant 0 : i32
    return %c0_i32, %c0_i32_0 : i32, i32
  }
  func.func @transform_3(%arg0: i32) -> (i32, i32) {
    %c0_i32 = arith.constant 0 : i32
    %c0_i32_0 = arith.constant 0 : i32
    %c0_i32_1 = arith.constant 0 : i32
    return %c0_i32, %c0_i32_0 : i32, i32
  }
  func.func @transform_4(%arg0: i32) -> (i32, i32) {
    %c0_i32 = arith.constant 0 : i32
    %c0_i32_0 = arith.constant 0 : i32
    %c0_i32_1 = arith.constant 0 : i32
    return %c0_i32, %c0_i32_0 : i32, i32
  }
  func.func @transform_5(%arg0: i32) -> (i32, i32) {
    %c0_i32 = arith.constant 0 : i32
    %c0_i32_0 = arith.constant 0 : i32
    return %arg0, %c0_i32 : i32, i32
  }
}

module attributes {stable_mosaic.version = 11 : i64} {
  func.func @_conv_gemm_stats_kernel(%arg0: i32, %arg1: i32, %arg2: i32, %arg3: memref<32x128xbf16, #tpu.memory_space<vmem>>, %arg4: memref<128x128xbf16, #tpu.memory_space<vmem>>, %arg5: memref<32x128xf32, #tpu.memory_space<vmem>>, %arg6: memref<1x128xf32, #tpu.memory_space<vmem>>, %arg7: memref<1x128xf32, #tpu.memory_space<vmem>>, %arg8: memref<32x128xf32, #tpu.memory_space<vmem>>) attributes {dimension_semantics = [#tpu.dimension_semantics<parallel>, #tpu.dimension_semantics<arbitrary>, #tpu.dimension_semantics<arbitrary>], iteration_bounds = array<i64: 1, 1, 1>, scalar_prefetch = 0 : i64, scratch_operands = 1 : i64, tpu.core_type = #tpu.core_type<tc>, window_params = [{transform_indices = @transform_0, window_bounds = array<i64: 32, 128>}, {transform_indices = @transform_1, window_bounds = array<i64: 128, 128>}, {transform_indices = @transform_2, window_bounds = array<i64: 32, 128>}, {transform_indices = @transform_3, window_bounds = array<i64: 1, 128>}, {transform_indices = @transform_4, window_bounds = array<i64: 1, 128>}]} {
    %c0_i32 = arith.constant 0 : i32
    %0 = arith.cmpi eq, %arg2, %c0_i32 : i32
    %1 = arith.extui %0 : i1 to i32
    %c0_i32_0 = arith.constant 0 : i32
    %2 = arith.cmpi ne, %1, %c0_i32_0 : i32
    scf.if %2 {
      %cst_13 = arith.constant 0.000000e+00 : f32
      %17 = vector.broadcast %cst_13 : f32 to vector<32x128xf32>
      %c0_14 = arith.constant 0 : index
      %c0_15 = arith.constant 0 : index
      %18 = vector.load %arg8[%c0_14, %c0_15] : memref<32x128xf32, #tpu.memory_space<vmem>>, vector<32x128xf32>
      tpu.vector_store %arg8[%c0_14, %c0_15], %17 {strides = array<i32>} : memref<32x128xf32, #tpu.memory_space<vmem>>, vector<32x128xf32>,
    } else {
    }
    %c0_i32_1 = arith.constant 0 : i32
    %3 = arith.cmpi eq, %arg1, %c0_i32_1 : i32
    %c0_i32_2 = arith.constant 0 : i32
    %4 = arith.cmpi eq, %arg2, %c0_i32_2 : i32
    %5 = arith.andi %3, %4 : i1
    %6 = arith.extui %5 : i1 to i32
    %c0_i32_3 = arith.constant 0 : i32
    %7 = arith.cmpi ne, %6, %c0_i32_3 : i32
    scf.if %7 {
      %cst_13 = arith.constant 0.000000e+00 : f32
      %17 = vector.broadcast %cst_13 : f32 to vector<1x128xf32>
      %c0_14 = arith.constant 0 : index
      %c0_15 = arith.constant 0 : index
      %18 = vector.load %arg6[%c0_14, %c0_15] : memref<1x128xf32, #tpu.memory_space<vmem>>, vector<1x128xf32>
      tpu.vector_store %arg6[%c0_14, %c0_15], %17 {strides = array<i32>} : memref<1x128xf32, #tpu.memory_space<vmem>>, vector<1x128xf32>,
      %cst_16 = arith.constant 0.000000e+00 : f32
      %19 = vector.broadcast %cst_16 : f32 to vector<1x128xf32>
      %c0_17 = arith.constant 0 : index
      %c0_18 = arith.constant 0 : index
      %20 = vector.load %arg7[%c0_17, %c0_18] : memref<1x128xf32, #tpu.memory_space<vmem>>, vector<1x128xf32>
      tpu.vector_store %arg7[%c0_17, %c0_18], %19 {strides = array<i32>} : memref<1x128xf32, #tpu.memory_space<vmem>>, vector<1x128xf32>,
    } else {
    }
    %c0 = arith.constant 0 : index
    %c0_4 = arith.constant 0 : index
    %8 = vector.load %arg8[%c0, %c0_4] : memref<32x128xf32, #tpu.memory_space<vmem>>, vector<32x128xf32>
    %c0_5 = arith.constant 0 : index
    %c0_6 = arith.constant 0 : index
    %9 = vector.load %arg3[%c0_5, %c0_6] : memref<32x128xbf16, #tpu.memory_space<vmem>>, vector<32x128xbf16>
    %c0_7 = arith.constant 0 : index
    %c0_8 = arith.constant 0 : index
    %10 = vector.load %arg4[%c0_7, %c0_8] : memref<128x128xbf16, #tpu.memory_space<vmem>>, vector<128x128xbf16>
    %cst = arith.constant dense<0.000000e+00> : vector<32x128xf32>
    %11 = tpu.matmul %9, %10, %cst {dimension_numbers = #tpu.dot_dimension_numbers<[1], [0], [0], [1], [0, 0, 1, 1], [], []>} : vector<32x128xbf16>, vector<128x128xbf16>, vector<32x128xf32> -> vector<32x128xf32>
    %12 = arith.addf %8, %11 : vector<32x128xf32>
    %c0_9 = arith.constant 0 : index
    %c0_10 = arith.constant 0 : index
    %13 = vector.load %arg8[%c0_9, %c0_10] : memref<32x128xf32, #tpu.memory_space<vmem>>, vector<32x128xf32>
    tpu.vector_store %arg8[%c0_9, %c0_10], %12 {strides = array<i32>} : memref<32x128xf32, #tpu.memory_space<vmem>>, vector<32x128xf32>,
    %c0_i32_11 = arith.constant 0 : i32
    %14 = arith.cmpi eq, %arg2, %c0_i32_11 : i32
    %15 = arith.extui %14 : i1 to i32
    %c0_i32_12 = arith.constant 0 : i32
    %16 = arith.cmpi ne, %15, %c0_i32_12 : i32
    scf.if %16 {
      %c0_13 = arith.constant 0 : index
      %c0_14 = arith.constant 0 : index
      %17 = vector.load %arg8[%c0_13, %c0_14] : memref<32x128xf32, #tpu.memory_space<vmem>>, vector<32x128xf32>
      %c0_15 = arith.constant 0 : index
      %c0_16 = arith.constant 0 : index
      %18 = vector.load %arg5[%c0_15, %c0_16] : memref<32x128xf32, #tpu.memory_space<vmem>>, vector<32x128xf32>
      tpu.vector_store %arg5[%c0_15, %c0_16], %17 {strides = array<i32>} : memref<32x128xf32, #tpu.memory_space<vmem>>, vector<32x128xf32>,
      %c0_17 = arith.constant 0 : index
      %c0_18 = arith.constant 0 : index
      %19 = vector.load %arg6[%c0_17, %c0_18] : memref<1x128xf32, #tpu.memory_space<vmem>>, vector<1x128xf32>
      %cst_19 = arith.constant dense<0.000000e+00> : vector<128xf32>
      %20 = vector.multi_reduction <add>, %17, %cst_19 [0] : vector<32x128xf32> to vector<128xf32>
      %21 = vector.shape_cast %20 : vector<128xf32> to vector<1x128xf32>
      %22 = arith.addf %19, %21 : vector<1x128xf32>
      %c0_20 = arith.constant 0 : index
      %c0_21 = arith.constant 0 : index
      %23 = vector.load %arg6[%c0_20, %c0_21] : memref<1x128xf32, #tpu.memory_space<vmem>>, vector<1x128xf32>
      tpu.vector_store %arg6[%c0_20, %c0_21], %22 {strides = array<i32>} : memref<1x128xf32, #tpu.memory_space<vmem>>, vector<1x128xf32>,
      %c0_22 = arith.constant 0 : index
      %c0_23 = arith.constant 0 : index
      %24 = vector.load %arg7[%c0_22, %c0_23] : memref<1x128xf32, #tpu.memory_space<vmem>>, vector<1x128xf32>
      %25 = arith.mulf %17, %17 : vector<32x128xf32>
      %cst_24 = arith.constant dense<0.000000e+00> : vector<128xf32>
      %26 = vector.multi_reduction <add>, %25, %cst_24 [0] : vector<32x128xf32> to vector<128xf32>
      %27 = vector.shape_cast %26 : vector<128xf32> to vector<1x128xf32>
      %28 = arith.addf %24, %27 : vector<1x128xf32>
      %c0_25 = arith.constant 0 : index
      %c0_26 = arith.constant 0 : index
      %29 = vector.load %arg7[%c0_25, %c0_26] : memref<1x128xf32, #tpu.memory_space<vmem>>, vector<1x128xf32>
      tpu.vector_store %arg7[%c0_25, %c0_26], %28 {strides = array<i32>} : memref<1x128xf32, #tpu.memory_space<vmem>>, vector<1x128xf32>,
    } else {
    }
    return
  }
  func.func @transform_0(%arg0: i32, %arg1: i32, %arg2: i32) -> (i32, i32) {
    %c0_i32 = arith.constant 0 : i32
    return %arg1, %arg2 : i32, i32
  }
  func.func @transform_1(%arg0: i32, %arg1: i32, %arg2: i32) -> (i32, i32) {
    %c0_i32 = arith.constant 0 : i32
    return %arg2, %arg0 : i32, i32
  }
  func.func @transform_2(%arg0: i32, %arg1: i32, %arg2: i32) -> (i32, i32) {
    %c0_i32 = arith.constant 0 : i32
    return %arg1, %arg0 : i32, i32
  }
  func.func @transform_3(%arg0: i32, %arg1: i32, %arg2: i32) -> (i32, i32) {
    %c0_i32 = arith.constant 0 : i32
    %c0_i32_0 = arith.constant 0 : i32
    return %c0_i32, %arg0 : i32, i32
  }
  func.func @transform_4(%arg0: i32, %arg1: i32, %arg2: i32) -> (i32, i32) {
    %c0_i32 = arith.constant 0 : i32
    %c0_i32_0 = arith.constant 0 : i32
    return %c0_i32, %arg0 : i32, i32
  }
}

module attributes {stable_mosaic.version = 11 : i64} {
  func.func @_bn_apply_kernel(%arg0: i32, %arg1: memref<32x128xf32, #tpu.memory_space<vmem>>, %arg2: memref<1x128xf32, #tpu.memory_space<vmem>>, %arg3: memref<1x128xf32, #tpu.memory_space<vmem>>, %arg4: memref<1x128xf32, #tpu.memory_space<vmem>>, %arg5: memref<1x128xf32, #tpu.memory_space<vmem>>, %arg6: memref<32x128xf32, #tpu.memory_space<vmem>>) attributes {dimension_semantics = [#tpu.dimension_semantics<parallel>], iteration_bounds = array<i64: 1>, scalar_prefetch = 0 : i64, scratch_operands = 0 : i64, tpu.core_type = #tpu.core_type<tc>, window_params = [{transform_indices = @transform_0, window_bounds = array<i64: 32, 128>}, {pipeline_mode = #tpu.pipeline_mode<synchronous>, transform_indices = @transform_1, window_bounds = array<i64: 1, 128>}, {pipeline_mode = #tpu.pipeline_mode<synchronous>, transform_indices = @transform_2, window_bounds = array<i64: 1, 128>}, {pipeline_mode = #tpu.pipeline_mode<synchronous>, transform_indices = @transform_3, window_bounds = array<i64: 1, 128>}, {pipeline_mode = #tpu.pipeline_mode<synchronous>, transform_indices = @transform_4, window_bounds = array<i64: 1, 128>}, {transform_indices = @transform_5, window_bounds = array<i64: 32, 128>}]} {
    %c0 = arith.constant 0 : index
    %c0_0 = arith.constant 0 : index
    %0 = vector.load %arg1[%c0, %c0_0] : memref<32x128xf32, #tpu.memory_space<vmem>>, vector<32x128xf32>
    %c0_1 = arith.constant 0 : index
    %c0_2 = arith.constant 0 : index
    %1 = vector.load %arg2[%c0_1, %c0_2] : memref<1x128xf32, #tpu.memory_space<vmem>>, vector<1x128xf32>
    %cst = arith.constant 3.125000e-02 : f32
    %2 = vector.broadcast %cst : f32 to vector<1x128xf32>
    %3 = arith.mulf %1, %2 : vector<1x128xf32>
    %c0_3 = arith.constant 0 : index
    %c0_4 = arith.constant 0 : index
    %4 = vector.load %arg3[%c0_3, %c0_4] : memref<1x128xf32, #tpu.memory_space<vmem>>, vector<1x128xf32>
    %cst_5 = arith.constant 3.125000e-02 : f32
    %5 = vector.broadcast %cst_5 : f32 to vector<1x128xf32>
    %6 = arith.mulf %4, %5 : vector<1x128xf32>
    %7 = arith.mulf %3, %3 : vector<1x128xf32>
    %8 = arith.subf %6, %7 : vector<1x128xf32>
    %cst_6 = arith.constant 0.000000e+00 : f32
    %9 = vector.broadcast %cst_6 : f32 to vector<1x128xf32>
    %10 = arith.maximumf %8, %9 : vector<1x128xf32>
    %11 = vector.broadcast %3 : vector<1x128xf32> to vector<32x128xf32>
    %12 = arith.subf %0, %11 : vector<32x128xf32>
    %cst_7 = arith.constant 9.99999974E-6 : f32
    %13 = vector.broadcast %cst_7 : f32 to vector<1x128xf32>
    %14 = arith.addf %10, %13 : vector<1x128xf32>
    %15 = math.rsqrt %14 : vector<1x128xf32>
    %16 = vector.broadcast %15 : vector<1x128xf32> to vector<32x128xf32>
    %17 = arith.mulf %12, %16 : vector<32x128xf32>
    %c0_8 = arith.constant 0 : index
    %c0_9 = arith.constant 0 : index
    %18 = vector.load %arg4[%c0_8, %c0_9] : memref<1x128xf32, #tpu.memory_space<vmem>>, vector<1x128xf32>
    %19 = vector.broadcast %18 : vector<1x128xf32> to vector<32x128xf32>
    %20 = arith.mulf %17, %19 : vector<32x128xf32>
    %c0_10 = arith.constant 0 : index
    %c0_11 = arith.constant 0 : index
    %21 = vector.load %arg5[%c0_10, %c0_11] : memref<1x128xf32, #tpu.memory_space<vmem>>, vector<1x128xf32>
    %22 = vector.broadcast %21 : vector<1x128xf32> to vector<32x128xf32>
    %23 = arith.addf %20, %22 : vector<32x128xf32>
    %cst_12 = arith.constant 0.000000e+00 : f32
    %24 = vector.broadcast %cst_12 : f32 to vector<32x128xf32>
    %25 = arith.cmpf oge, %23, %24 : vector<32x128xf32>
    %cst_13 = arith.constant 3.000000e-01 : f32
    %26 = vector.broadcast %cst_13 : f32 to vector<32x128xf32>
    %27 = arith.mulf %26, %23 : vector<32x128xf32>
    %28 = arith.select %25, %23, %27 : vector<32x128xi1>, vector<32x128xf32>
    %c0_14 = arith.constant 0 : index
    %c0_15 = arith.constant 0 : index
    %29 = vector.load %arg6[%c0_14, %c0_15] : memref<32x128xf32, #tpu.memory_space<vmem>>, vector<32x128xf32>
    tpu.vector_store %arg6[%c0_14, %c0_15], %28 {strides = array<i32>} : memref<32x128xf32, #tpu.memory_space<vmem>>, vector<32x128xf32>,
    return
  }
  func.func @transform_0(%arg0: i32) -> (i32, i32) {
    %c0_i32 = arith.constant 0 : i32
    %c0_i32_0 = arith.constant 0 : i32
    return %arg0, %c0_i32 : i32, i32
  }
  func.func @transform_1(%arg0: i32) -> (i32, i32) {
    %c0_i32 = arith.constant 0 : i32
    %c0_i32_0 = arith.constant 0 : i32
    %c0_i32_1 = arith.constant 0 : i32
    return %c0_i32, %c0_i32_0 : i32, i32
  }
  func.func @transform_2(%arg0: i32) -> (i32, i32) {
    %c0_i32 = arith.constant 0 : i32
    %c0_i32_0 = arith.constant 0 : i32
    %c0_i32_1 = arith.constant 0 : i32
    return %c0_i32, %c0_i32_0 : i32, i32
  }
  func.func @transform_3(%arg0: i32) -> (i32, i32) {
    %c0_i32 = arith.constant 0 : i32
    %c0_i32_0 = arith.constant 0 : i32
    %c0_i32_1 = arith.constant 0 : i32
    return %c0_i32, %c0_i32_0 : i32, i32
  }
  func.func @transform_4(%arg0: i32) -> (i32, i32) {
    %c0_i32 = arith.constant 0 : i32
    %c0_i32_0 = arith.constant 0 : i32
    %c0_i32_1 = arith.constant 0 : i32
    return %c0_i32, %c0_i32_0 : i32, i32
  }
  func.func @transform_5(%arg0: i32) -> (i32, i32) {
    %c0_i32 = arith.constant 0 : i32
    %c0_i32_0 = arith.constant 0 : i32
    return %arg0, %c0_i32 : i32, i32
  }
}

module attributes {stable_mosaic.version = 11 : i64} {
  func.func @_matmul_kernel(%arg0: i32, %arg1: i32, %arg2: i32, %arg3: memref<8x256xbf16, #tpu.memory_space<vmem>>, %arg4: memref<256x128xbf16, #tpu.memory_space<vmem>>, %arg5: memref<1x128xf32, #tpu.memory_space<vmem>>, %arg6: memref<8x128xf32, #tpu.memory_space<vmem>>, %arg7: memref<8x128xf32, #tpu.memory_space<vmem>>) attributes {dimension_semantics = [#tpu.dimension_semantics<parallel>, #tpu.dimension_semantics<parallel>, #tpu.dimension_semantics<arbitrary>], iteration_bounds = array<i64: 1, 1, 1>, scalar_prefetch = 0 : i64, scratch_operands = 1 : i64, tpu.core_type = #tpu.core_type<tc>, window_params = [{transform_indices = @transform_0, window_bounds = array<i64: 8, 256>}, {transform_indices = @transform_1, window_bounds = array<i64: 256, 128>}, {transform_indices = @transform_2, window_bounds = array<i64: 1, 128>}, {transform_indices = @transform_3, window_bounds = array<i64: 8, 128>}]} {
    %c0_i32 = arith.constant 0 : i32
    %0 = arith.cmpi eq, %arg2, %c0_i32 : i32
    %1 = arith.extui %0 : i1 to i32
    %c0_i32_0 = arith.constant 0 : i32
    %2 = arith.cmpi ne, %1, %c0_i32_0 : i32
    scf.if %2 {
      %cst_10 = arith.constant 0.000000e+00 : f32
      %12 = vector.broadcast %cst_10 : f32 to vector<8x128xf32>
      %c0_11 = arith.constant 0 : index
      %c0_12 = arith.constant 0 : index
      %13 = vector.load %arg7[%c0_11, %c0_12] : memref<8x128xf32, #tpu.memory_space<vmem>>, vector<8x128xf32>
      tpu.vector_store %arg7[%c0_11, %c0_12], %12 {strides = array<i32>} : memref<8x128xf32, #tpu.memory_space<vmem>>, vector<8x128xf32>,
    } else {
    }
    %c0 = arith.constant 0 : index
    %c0_1 = arith.constant 0 : index
    %3 = vector.load %arg7[%c0, %c0_1] : memref<8x128xf32, #tpu.memory_space<vmem>>, vector<8x128xf32>
    %c0_2 = arith.constant 0 : index
    %c0_3 = arith.constant 0 : index
    %4 = vector.load %arg3[%c0_2, %c0_3] : memref<8x256xbf16, #tpu.memory_space<vmem>>, vector<8x256xbf16>
    %c0_4 = arith.constant 0 : index
    %c0_5 = arith.constant 0 : index
    %5 = vector.load %arg4[%c0_4, %c0_5] : memref<256x128xbf16, #tpu.memory_space<vmem>>, vector<256x128xbf16>
    %cst = arith.constant dense<0.000000e+00> : vector<8x128xf32>
    %6 = tpu.matmul %4, %5, %cst {dimension_numbers = #tpu.dot_dimension_numbers<[1], [0], [0], [1], [0, 0, 1, 1], [], []>} : vector<8x256xbf16>, vector<256x128xbf16>, vector<8x128xf32> -> vector<8x128xf32>
    %7 = arith.addf %3, %6 : vector<8x128xf32>
    %c0_6 = arith.constant 0 : index
    %c0_7 = arith.constant 0 : index
    %8 = vector.load %arg7[%c0_6, %c0_7] : memref<8x128xf32, #tpu.memory_space<vmem>>, vector<8x128xf32>
    tpu.vector_store %arg7[%c0_6, %c0_7], %7 {strides = array<i32>} : memref<8x128xf32, #tpu.memory_space<vmem>>, vector<8x128xf32>,
    %c0_i32_8 = arith.constant 0 : i32
    %9 = arith.cmpi eq, %arg2, %c0_i32_8 : i32
    %10 = arith.extui %9 : i1 to i32
    %c0_i32_9 = arith.constant 0 : i32
    %11 = arith.cmpi ne, %10, %c0_i32_9 : i32
    scf.if %11 {
      %c0_10 = arith.constant 0 : index
      %c0_11 = arith.constant 0 : index
      %12 = vector.load %arg7[%c0_10, %c0_11] : memref<8x128xf32, #tpu.memory_space<vmem>>, vector<8x128xf32>
      %c0_12 = arith.constant 0 : index
      %c0_13 = arith.constant 0 : index
      %13 = vector.load %arg5[%c0_12, %c0_13] : memref<1x128xf32, #tpu.memory_space<vmem>>, vector<1x128xf32>
      %14 = vector.broadcast %13 : vector<1x128xf32> to vector<8x128xf32>
      %15 = arith.addf %12, %14 : vector<8x128xf32>
      %cst_14 = arith.constant 0.000000e+00 : f32
      %16 = vector.broadcast %cst_14 : f32 to vector<8x128xf32>
      %17 = arith.cmpf oge, %15, %16 : vector<8x128xf32>
      %cst_15 = arith.constant 3.000000e-01 : f32
      %18 = vector.broadcast %cst_15 : f32 to vector<8x128xf32>
      %19 = arith.mulf %18, %15 : vector<8x128xf32>
      %20 = arith.select %17, %15, %19 : vector<8x128xi1>, vector<8x128xf32>
      %c0_16 = arith.constant 0 : index
      %c0_17 = arith.constant 0 : index
      %21 = vector.load %arg6[%c0_16, %c0_17] : memref<8x128xf32, #tpu.memory_space<vmem>>, vector<8x128xf32>
      tpu.vector_store %arg6[%c0_16, %c0_17], %20 {strides = array<i32>} : memref<8x128xf32, #tpu.memory_space<vmem>>, vector<8x128xf32>,
    } else {
    }
    return
  }
  func.func @transform_0(%arg0: i32, %arg1: i32, %arg2: i32) -> (i32, i32) {
    %c0_i32 = arith.constant 0 : i32
    return %arg0, %arg2 : i32, i32
  }
  func.func @transform_1(%arg0: i32, %arg1: i32, %arg2: i32) -> (i32, i32) {
    %c0_i32 = arith.constant 0 : i32
    return %arg2, %arg1 : i32, i32
  }
  func.func @transform_2(%arg0: i32, %arg1: i32, %arg2: i32) -> (i32, i32) {
    %c0_i32 = arith.constant 0 : i32
    %c0_i32_0 = arith.constant 0 : i32
    return %c0_i32, %arg1 : i32, i32
  }
  func.func @transform_3(%arg0: i32, %arg1: i32, %arg2: i32) -> (i32, i32) {
    %c0_i32 = arith.constant 0 : i32
    return %arg0, %arg1 : i32, i32
  }
}

module attributes {stable_mosaic.version = 11 : i64} {
  func.func @_matmul_kernel(%arg0: i32, %arg1: i32, %arg2: i32, %arg3: memref<8x128xbf16, #tpu.memory_space<vmem>>, %arg4: memref<128x256xbf16, #tpu.memory_space<vmem>>, %arg5: memref<1x256xf32, #tpu.memory_space<vmem>>, %arg6: memref<8x256xf32, #tpu.memory_space<vmem>>, %arg7: memref<8x256xf32, #tpu.memory_space<vmem>>) attributes {dimension_semantics = [#tpu.dimension_semantics<parallel>, #tpu.dimension_semantics<parallel>, #tpu.dimension_semantics<arbitrary>], iteration_bounds = array<i64: 1, 1, 1>, scalar_prefetch = 0 : i64, scratch_operands = 1 : i64, tpu.core_type = #tpu.core_type<tc>, window_params = [{transform_indices = @transform_0, window_bounds = array<i64: 8, 128>}, {transform_indices = @transform_1, window_bounds = array<i64: 128, 256>}, {transform_indices = @transform_2, window_bounds = array<i64: 1, 256>}, {transform_indices = @transform_3, window_bounds = array<i64: 8, 256>}]} {
    %c0_i32 = arith.constant 0 : i32
    %0 = arith.cmpi eq, %arg2, %c0_i32 : i32
    %1 = arith.extui %0 : i1 to i32
    %c0_i32_0 = arith.constant 0 : i32
    %2 = arith.cmpi ne, %1, %c0_i32_0 : i32
    scf.if %2 {
      %cst_10 = arith.constant 0.000000e+00 : f32
      %12 = vector.broadcast %cst_10 : f32 to vector<8x256xf32>
      %c0_11 = arith.constant 0 : index
      %c0_12 = arith.constant 0 : index
      %13 = vector.load %arg7[%c0_11, %c0_12] : memref<8x256xf32, #tpu.memory_space<vmem>>, vector<8x256xf32>
      tpu.vector_store %arg7[%c0_11, %c0_12], %12 {strides = array<i32>} : memref<8x256xf32, #tpu.memory_space<vmem>>, vector<8x256xf32>,
    } else {
    }
    %c0 = arith.constant 0 : index
    %c0_1 = arith.constant 0 : index
    %3 = vector.load %arg7[%c0, %c0_1] : memref<8x256xf32, #tpu.memory_space<vmem>>, vector<8x256xf32>
    %c0_2 = arith.constant 0 : index
    %c0_3 = arith.constant 0 : index
    %4 = vector.load %arg3[%c0_2, %c0_3] : memref<8x128xbf16, #tpu.memory_space<vmem>>, vector<8x128xbf16>
    %c0_4 = arith.constant 0 : index
    %c0_5 = arith.constant 0 : index
    %5 = vector.load %arg4[%c0_4, %c0_5] : memref<128x256xbf16, #tpu.memory_space<vmem>>, vector<128x256xbf16>
    %cst = arith.constant dense<0.000000e+00> : vector<8x256xf32>
    %6 = tpu.matmul %4, %5, %cst {dimension_numbers = #tpu.dot_dimension_numbers<[1], [0], [0], [1], [0, 0, 1, 1], [], []>} : vector<8x128xbf16>, vector<128x256xbf16>, vector<8x256xf32> -> vector<8x256xf32>
    %7 = arith.addf %3, %6 : vector<8x256xf32>
    %c0_6 = arith.constant 0 : index
    %c0_7 = arith.constant 0 : index
    %8 = vector.load %arg7[%c0_6, %c0_7] : memref<8x256xf32, #tpu.memory_space<vmem>>, vector<8x256xf32>
    tpu.vector_store %arg7[%c0_6, %c0_7], %7 {strides = array<i32>} : memref<8x256xf32, #tpu.memory_space<vmem>>, vector<8x256xf32>,
    %c0_i32_8 = arith.constant 0 : i32
    %9 = arith.cmpi eq, %arg2, %c0_i32_8 : i32
    %10 = arith.extui %9 : i1 to i32
    %c0_i32_9 = arith.constant 0 : i32
    %11 = arith.cmpi ne, %10, %c0_i32_9 : i32
    scf.if %11 {
      %c0_10 = arith.constant 0 : index
      %c0_11 = arith.constant 0 : index
      %12 = vector.load %arg7[%c0_10, %c0_11] : memref<8x256xf32, #tpu.memory_space<vmem>>, vector<8x256xf32>
      %c0_12 = arith.constant 0 : index
      %c0_13 = arith.constant 0 : index
      %13 = vector.load %arg5[%c0_12, %c0_13] : memref<1x256xf32, #tpu.memory_space<vmem>>, vector<1x256xf32>
      %14 = vector.broadcast %13 : vector<1x256xf32> to vector<8x256xf32>
      %15 = arith.addf %12, %14 : vector<8x256xf32>
      %c0_14 = arith.constant 0 : index
      %c0_15 = arith.constant 0 : index
      %16 = vector.load %arg6[%c0_14, %c0_15] : memref<8x256xf32, #tpu.memory_space<vmem>>, vector<8x256xf32>
      tpu.vector_store %arg6[%c0_14, %c0_15], %15 {strides = array<i32>} : memref<8x256xf32, #tpu.memory_space<vmem>>, vector<8x256xf32>,
    } else {
    }
    return
  }
  func.func @transform_0(%arg0: i32, %arg1: i32, %arg2: i32) -> (i32, i32) {
    %c0_i32 = arith.constant 0 : i32
    return %arg0, %arg2 : i32, i32
  }
  func.func @transform_1(%arg0: i32, %arg1: i32, %arg2: i32) -> (i32, i32) {
    %c0_i32 = arith.constant 0 : i32
    return %arg2, %arg1 : i32, i32
  }
  func.func @transform_2(%arg0: i32, %arg1: i32, %arg2: i32) -> (i32, i32) {
    %c0_i32 = arith.constant 0 : i32
    %c0_i32_0 = arith.constant 0 : i32
    return %c0_i32, %arg1 : i32, i32
  }
  func.func @transform_3(%arg0: i32, %arg1: i32, %arg2: i32) -> (i32, i32) {
    %c0_i32 = arith.constant 0 : i32
    return %arg0, %arg1 : i32, i32
  }
}

module attributes {stable_mosaic.version = 11 : i64} {
  func.func @_matmul_kernel(%arg0: i32, %arg1: i32, %arg2: i32, %arg3: memref<8x192xbf16, #tpu.memory_space<vmem>>, %arg4: memref<192x128xbf16, #tpu.memory_space<vmem>>, %arg5: memref<1x128xf32, #tpu.memory_space<vmem>>, %arg6: memref<8x128xf32, #tpu.memory_space<vmem>>, %arg7: memref<8x128xf32, #tpu.memory_space<vmem>>) attributes {dimension_semantics = [#tpu.dimension_semantics<parallel>, #tpu.dimension_semantics<parallel>, #tpu.dimension_semantics<arbitrary>], iteration_bounds = array<i64: 1, 1, 1>, scalar_prefetch = 0 : i64, scratch_operands = 1 : i64, tpu.core_type = #tpu.core_type<tc>, window_params = [{transform_indices = @transform_0, window_bounds = array<i64: 8, 192>}, {transform_indices = @transform_1, window_bounds = array<i64: 192, 128>}, {transform_indices = @transform_2, window_bounds = array<i64: 1, 128>}, {transform_indices = @transform_3, window_bounds = array<i64: 8, 128>}]} {
    %c0_i32 = arith.constant 0 : i32
    %0 = arith.cmpi eq, %arg2, %c0_i32 : i32
    %1 = arith.extui %0 : i1 to i32
    %c0_i32_0 = arith.constant 0 : i32
    %2 = arith.cmpi ne, %1, %c0_i32_0 : i32
    scf.if %2 {
      %cst_10 = arith.constant 0.000000e+00 : f32
      %12 = vector.broadcast %cst_10 : f32 to vector<8x128xf32>
      %c0_11 = arith.constant 0 : index
      %c0_12 = arith.constant 0 : index
      %13 = vector.load %arg7[%c0_11, %c0_12] : memref<8x128xf32, #tpu.memory_space<vmem>>, vector<8x128xf32>
      tpu.vector_store %arg7[%c0_11, %c0_12], %12 {strides = array<i32>} : memref<8x128xf32, #tpu.memory_space<vmem>>, vector<8x128xf32>,
    } else {
    }
    %c0 = arith.constant 0 : index
    %c0_1 = arith.constant 0 : index
    %3 = vector.load %arg7[%c0, %c0_1] : memref<8x128xf32, #tpu.memory_space<vmem>>, vector<8x128xf32>
    %c0_2 = arith.constant 0 : index
    %c0_3 = arith.constant 0 : index
    %4 = vector.load %arg3[%c0_2, %c0_3] : memref<8x192xbf16, #tpu.memory_space<vmem>>, vector<8x192xbf16>
    %c0_4 = arith.constant 0 : index
    %c0_5 = arith.constant 0 : index
    %5 = vector.load %arg4[%c0_4, %c0_5] : memref<192x128xbf16, #tpu.memory_space<vmem>>, vector<192x128xbf16>
    %cst = arith.constant dense<0.000000e+00> : vector<8x128xf32>
    %6 = tpu.matmul %4, %5, %cst {dimension_numbers = #tpu.dot_dimension_numbers<[1], [0], [0], [1], [0, 0, 1, 1], [], []>} : vector<8x192xbf16>, vector<192x128xbf16>, vector<8x128xf32> -> vector<8x128xf32>
    %7 = arith.addf %3, %6 : vector<8x128xf32>
    %c0_6 = arith.constant 0 : index
    %c0_7 = arith.constant 0 : index
    %8 = vector.load %arg7[%c0_6, %c0_7] : memref<8x128xf32, #tpu.memory_space<vmem>>, vector<8x128xf32>
    tpu.vector_store %arg7[%c0_6, %c0_7], %7 {strides = array<i32>} : memref<8x128xf32, #tpu.memory_space<vmem>>, vector<8x128xf32>,
    %c0_i32_8 = arith.constant 0 : i32
    %9 = arith.cmpi eq, %arg2, %c0_i32_8 : i32
    %10 = arith.extui %9 : i1 to i32
    %c0_i32_9 = arith.constant 0 : i32
    %11 = arith.cmpi ne, %10, %c0_i32_9 : i32
    scf.if %11 {
      %c0_10 = arith.constant 0 : index
      %c0_11 = arith.constant 0 : index
      %12 = vector.load %arg7[%c0_10, %c0_11] : memref<8x128xf32, #tpu.memory_space<vmem>>, vector<8x128xf32>
      %c0_12 = arith.constant 0 : index
      %c0_13 = arith.constant 0 : index
      %13 = vector.load %arg5[%c0_12, %c0_13] : memref<1x128xf32, #tpu.memory_space<vmem>>, vector<1x128xf32>
      %14 = vector.broadcast %13 : vector<1x128xf32> to vector<8x128xf32>
      %15 = arith.addf %12, %14 : vector<8x128xf32>
      %16 = arith.negf %15 : vector<8x128xf32>
      %17 = math.exp %16 : vector<8x128xf32>
      %cst_14 = arith.constant 1.000000e+00 : f32
      %18 = vector.broadcast %cst_14 : f32 to vector<8x128xf32>
      %19 = arith.addf %18, %17 : vector<8x128xf32>
      %20 = arith.divf %18, %19 : vector<8x128xf32>
      %c0_15 = arith.constant 0 : index
      %c0_16 = arith.constant 0 : index
      %21 = vector.load %arg6[%c0_15, %c0_16] : memref<8x128xf32, #tpu.memory_space<vmem>>, vector<8x128xf32>
      tpu.vector_store %arg6[%c0_15, %c0_16], %20 {strides = array<i32>} : memref<8x128xf32, #tpu.memory_space<vmem>>, vector<8x128xf32>,
    } else {
    }
    return
  }
  func.func @transform_0(%arg0: i32, %arg1: i32, %arg2: i32) -> (i32, i32) {
    %c0_i32 = arith.constant 0 : i32
    return %arg0, %arg2 : i32, i32
  }
  func.func @transform_1(%arg0: i32, %arg1: i32, %arg2: i32) -> (i32, i32) {
    %c0_i32 = arith.constant 0 : i32
    return %arg2, %arg1 : i32, i32
  }
  func.func @transform_2(%arg0: i32, %arg1: i32, %arg2: i32) -> (i32, i32) {
    %c0_i32 = arith.constant 0 : i32
    %c0_i32_0 = arith.constant 0 : i32
    return %c0_i32, %arg1 : i32, i32
  }
  func.func @transform_3(%arg0: i32, %arg1: i32, %arg2: i32) -> (i32, i32) {
    %c0_i32 = arith.constant 0 : i32
    return %arg0, %arg1 : i32, i32
  }
}

</mosaic_0001>

<llo_original>
// kernel: discriminator_forward.8
$region0: #{discriminator_forward.8}
  #allocation0 [shape = 'u32[]', space=smem, size = 0x4, offset = 0x4, fixed_abs, tag = 'smem constant byte address 0x4 - core index']
  #allocation1 [shape = 'u32[144,128]{1,0:T(1,128)}', space=vmem, size = 0x12000, scoped, tag = 'internal scratch']
  #allocation2 [shape = 'f32[96,16]{1,0:T(8,128)}', space=vmem, size = 0xc000, scoped, tag = 'scratch operand']
  %s0 = inlined_call_operand.hbm [shape: f32[96,16], index: 0, kind: input, shape index: {}]
  %s1 = inlined_call_operand.hbm [shape: f32[16,8], index: 1, kind: input, shape index: {}]
  %s2 = inlined_call_operand.hbm [shape: f32[8,16], index: 2, kind: input, shape index: {}]
  %s3 = inlined_call_operand.hbm [shape: bf16[8,16,16], index: 3, kind: input, shape index: {}]
  %s4 = inlined_call_operand.hbm [shape: bf16[8,16,16], index: 4, kind: input, shape index: {}]
  %s5 = inlined_call_operand.hbm [shape: bf16[8,16,16], index: 5, kind: input, shape index: {}]
  %s6 = inlined_call_operand.hbm [shape: f32[8,1,16], index: 6, kind: input, shape index: {}]
  %s7 = inlined_call_operand.hbm [shape: f32[8,1,16], index: 7, kind: input, shape index: {}]
  %s8 = inlined_call_operand.hbm [shape: f32[8,1,16], index: 8, kind: input, shape index: {}]
  %s9 = inlined_call_operand.hbm [shape: bf16[8,16,16], index: 9, kind: input, shape index: {}]
  %s10 = inlined_call_operand.hbm [shape: f32[8,1,16], index: 10, kind: input, shape index: {}]
  %s11 = inlined_call_operand.hbm [shape: f32[8,1,16], index: 11, kind: input, shape index: {}]
  %s12 = inlined_call_operand.hbm [shape: f32[8,1,16], index: 12, kind: input, shape index: {}]
  %s13 = inlined_call_operand.hbm [shape: bf16[8,16,2048], index: 13, kind: input, shape index: {}]
  %s14 = inlined_call_operand.hbm [shape: f32[8,1,2048], index: 14, kind: input, shape index: {}]
  %s15 = inlined_call_operand.hbm [shape: bf16[8,2048,16], index: 15, kind: input, shape index: {}]
  %s16 = inlined_call_operand.hbm [shape: f32[8,1,16], index: 16, kind: input, shape index: {}]
  %s17 = inlined_call_operand.hbm [shape: f32[8,1,16], index: 17, kind: input, shape index: {}]
  %s18 = inlined_call_operand.hbm [shape: f32[8,1,16], index: 18, kind: input, shape index: {}]
  %s19 = inlined_call_operand.hbm [shape: f32[96,16], index: 19, kind: output, shape index: {}]
  %s20 = sld [smem:[#allocation0]]
  $region193: #{discriminator_forward.8} parent=0
    _
  %s22 = ssub.s32 1, %s20
  %s23 = scalar_select 0, %s22, %s20
  $region1: #{discriminator_forward.8} parent=0
    #allocation3 [shape = 'u8[49152]{0}', space=vmem, size = 0xc000, scoped, tag = 'input window, operand 0, single buffered']
    #allocation4 [shape = 's32[2]{0}', space=sflag, size = 0x8, scoped, tag = 'scoped memory for discriminator_forward.8']
    #allocation5 [shape = 's32[2]{0}', space=sflag, size = 0x8, scoped, tag = 'scoped memory for discriminator_forward.8']
    #allocation6 [shape = 'u8[8192]{0}', space=vmem, size = 0x2000, scoped, tag = 'input window, operand 1, single buffered']
    #allocation7 [shape = 's32[1]{0}', space=sflag, size = 0x4, scoped, tag = 'scoped memory for discriminator_forward.8']
    #allocation8 [shape = 'u8[4096]{0}', space=vmem, size = 0x1000, scoped, tag = 'input window, operand 2, single buffered']
    #allocation9 [shape = 'u8[8192]{0}', space=vmem, size = 0x2000, scoped, tag = 'input window, operand 3']
    #allocation10 [shape = 's32[2]{0}', space=sflag, size = 0x8, scoped, tag = 'scoped memory for discriminator_forward.8']
    #allocation11 [shape = 'u8[8192]{0}', space=vmem, size = 0x2000, scoped, tag = 'input window, operand 4']
    #allocation12 [shape = 'u8[8192]{0}', space=vmem, size = 0x2000, scoped, tag = 'input window, operand 5']
    #allocation13 [shape = 's32[2]{0}', space=sflag, size = 0x8, scoped, tag = 'scoped memory for discriminator_forward.8']
    #allocation14 [shape = 'u8[1024]{0}', space=vmem, size = 0x400, scoped, tag = 'input window, operand 6']
    #allocation15 [shape = 'u8[1024]{0}', space=vmem, size = 0x400, scoped, tag = 'input window, operand 7']
    #allocation16 [shape = 's32[2]{0}', space=sflag, size = 0x8, scoped, tag = 'scoped memory for discriminator_forward.8']
    #allocation17 [shape = 'u8[1024]{0}', space=vmem, size = 0x400, scoped, tag = 'input window, operand 8']
    #allocation18 [shape = 'u8[8192]{0}', space=vmem, size = 0x2000, scoped, tag = 'input window, operand 9']
    #allocation19 [shape = 's32[2]{0}', space=sflag, size = 0x8, scoped, tag = 'scoped memory for discriminator_forward.8']
    #allocation20 [shape = 'u8[1024]{0}', space=vmem, size = 0x400, scoped, tag = 'input window, operand 10']
    #allocation21 [shape = 'u8[1024]{0}', space=vmem, size = 0x400, scoped, tag = 'input window, operand 11']
    #allocation22 [shape = 's32[2]{0}', space=sflag, size = 0x8, scoped, tag = 'scoped memory for discriminator_forward.8']
    #allocation23 [shape = 'u8[1024]{0}', space=vmem, size = 0x400, scoped, tag = 'input window, operand 12']
    #allocation24 [shape = 'u8[131072]{0}', space=vmem, size = 0x20000, scoped, tag = 'input window, operand 13']
    #allocation25 [shape = 's32[2]{0}', space=sflag, size = 0x8, scoped, tag = 'scoped memory for discriminator_forward.8']
    #allocation26 [shape = 'u8[16384]{0}', space=vmem, size = 0x4000, scoped, tag = 'input window, operand 14']
    #allocation27 [shape = 'u8[1048576]{0}', space=vmem, size = 0x100000, scoped, tag = 'input window, operand 15']
    #allocation28 [shape = 's32[2]{0}', space=sflag, size = 0x8, scoped, tag = 'scoped memory for discriminator_forward.8']
    #allocation29 [shape = 'u8[1024]{0}', space=vmem, size = 0x400, scoped, tag = 'input window, operand 16']
    #allocation30 [shape = 'u8[1024]{0}', space=vmem, size = 0x400, scoped, tag = 'input window, operand 17']
    #allocation31 [shape = 's32[2]{0}', space=sflag, size = 0x8, scoped, tag = 'scoped memory for discriminator_forward.8']
    #allocation32 [shape = 'u8[1024]{0}', space=vmem, size = 0x400, scoped, tag = 'input window, operand 18']
    #allocation33 [shape = 'u8[49152]{0}', space=vmem, size = 0xc000, scoped, tag = 'output window, operand 0, single buffered']
    %24 = vsyncpa [#allocation4], 0
    %25 = vsyncpa [#allocation7], 0
    %26 = vsyncpa [#allocation10], 0
    %s27 = scalar_lea.sflag [#allocation10], 1
    %28 = vsyncpa %s27, 0
    %29 = vsyncpa [#allocation13], 0
    %s30 = scalar_lea.sflag [#allocation13], 1
    %31 = vsyncpa %s30, 0
    %32 = vsyncpa [#allocation16], 0
    %s33 = scalar_lea.sflag [#allocation16], 1
    %34 = vsyncpa %s33, 0
    %35 = vsyncpa [#allocation19], 0
    %s36 = scalar_lea.sflag [#allocation19], 1
    %37 = vsyncpa %s36, 0
    %38 = vsyncpa [#allocation22], 0
    %s39 = scalar_lea.sflag [#allocation22], 1
    %40 = vsyncpa %s39, 0
    %41 = vsyncpa [#allocation25], 0
    %s42 = scalar_lea.sflag [#allocation25], 1
    %43 = vsyncpa %s42, 0
    %44 = vsyncpa [#allocation28], 0
    %s45 = scalar_lea.sflag [#allocation28], 1
    %46 = vsyncpa %s45, 0
    %47 = vsyncpa [#allocation31], 0
    %s48 = scalar_lea.sflag [#allocation31], 1
    %49 = vsyncpa %s48, 0
    %50 = vsyncpa [#allocation5], 0
    loop: start=0, step=1, limit=10
    $region2: #{discriminator_forward.8} parent=1 // loop_pre_header
      _
    $region3: #{discriminator_forward.8} parent=1 // loop_header
      %s52 = sphi 0, %s56
      %p53 = scmp.ge.s32.totalorder %s52, 10
      %s60 = sphi 0, %s60
      %s62 = sphi 0, %s60
      %s63 = sphi 0, %s62
      %s77 = sphi 0, %s63
      %s81 = sphi 0, %s81
      %s83 = sphi 0, %s81
      %s84 = sphi 0, %s83
      %s98 = sphi 0, %s84
      %s102 = sphi 0, %s102
      %s104 = sphi 0, %s102
      %s105 = sphi 0, %s104
      %s119 = sphi 0, %s105
      %s125 = sphi 0, %s127
      %s128 = sphi 0, %s125
      %s129 = sphi 0, %s128
      %s145 = sphi 0, %s129
      %s151 = sphi 0, %s153
      %s154 = sphi 0, %s151
      %s155 = sphi 0, %s154
      %s171 = sphi 0, %s155
      %s177 = sphi 0, %s179
      %s180 = sphi 0, %s177
      %s181 = sphi 0, %s180
      %s197 = sphi 0, %s181
      %s203 = sphi 0, %s205
      %s206 = sphi 0, %s203
      %s207 = sphi 0, %s206
      %s223 = sphi 0, %s207
      %s229 = sphi 0, %s231
      %s232 = sphi 0, %s229
      %s233 = sphi 0, %s232
      %s249 = sphi 0, %s233
      %s255 = sphi 0, %s257
      %s258 = sphi 0, %s255
      %s259 = sphi 0, %s258
      %s275 = sphi 0, %s259
      %s281 = sphi 0, %s283
      %s284 = sphi 0, %s281
      %s285 = sphi 0, %s284
      %s301 = sphi 0, %s285
      %s307 = sphi 0, %s309
      %s310 = sphi 0, %s307
      %s311 = sphi 0, %s310
      %s327 = sphi 0, %s311
      %s333 = sphi 0, %s335
      %s336 = sphi 0, %s333
      %s337 = sphi 0, %s336
      %s353 = sphi 0, %s337
      %s359 = sphi 0, %s361
      %s362 = sphi 0, %s359
      %s363 = sphi 0, %s362
      %s379 = sphi 0, %s363
      %s385 = sphi 0, %s387
      %s388 = sphi 0, %s385
      %s389 = sphi 0, %s388
      %s405 = sphi 0, %s389
      %s411 = sphi 0, %s413
      %s414 = sphi 0, %s411
      %s415 = sphi 0, %s414
      %s431 = sphi 0, %s415
      %s437 = sphi 0, %s439
      %s440 = sphi 0, %s437
      %s441 = sphi 0, %s440
      %s457 = sphi 0, %s441
      %s463 = sphi 0, %s465
      %s466 = sphi 0, %s463
      %s467 = sphi 0, %s466
      %s483 = sphi 0, %s467
      %s489 = sphi 0, %s491
      %s492 = sphi 0, %s489
      %s493 = sphi 0, %s492
      %s509 = sphi 0, %s493
      %s515 = sphi 0, %s517
      %s518 = sphi 0, %s515
      %s519 = sphi 0, %s518
      %s535 = sphi 0, %s519
      %s539 = sphi 0, %s539
      %s541 = sphi 0, %s539
      %s542 = sphi 0, %s541
      %s556 = sphi 0, %s542
    $region4: #{discriminator_forward.8} parent=1 // loop_header_branch
      %55 = sbr.rel (%p53) target = $region8
    $region5: #{discriminator_forward.8} parent=1 // loop_body
      %s57 = ssub.s32 %s52, 1
      %s58 = ssub.s32 %s52, 2
      %s59 = sadd.s32 %s52, 1
      %s61 = sadd.s32 %s60, 1
      %p64 = scmp.eq.s32.totalorder %s52, 7
      %p65 = scmp.ne.s32.totalorder %s60, %s62
      %p66 = scmp.eq.s32.totalorder %s52, 0
      %p67 = por %p65, %p66
      %p68 = scmp.ne.s32.totalorder %s60, %s62
      %p69 = scmp.eq.s32.totalorder %s57, 7
      %p70 = por %p68, %p69
      %p71 = scmp.ne.s32.totalorder %s62, %s63
      %p72 = scmp.eq.s32.totalorder %s57, 0
      %p73 = por %p71, %p72
      %p74 = scmp.ne.s32.totalorder %s62, %s63
      %p75 = scmp.eq.s32.totalorder %s58, 7
      %p76 = por %p74, %p75
      %p78 = scmp.ne.s32.totalorder %s63, %s77
      %p79 = scmp.eq.s32.totalorder %s58, 0
      %p80 = por %p78, %p79
      %s82 = sadd.s32 %s81, 1
      %p85 = scmp.eq.s32.totalorder %s52, 7
      %p86 = scmp.ne.s32.totalorder %s81, %s83
      %p87 = scmp.eq.s32.totalorder %s52, 0
      %p88 = por %p86, %p87
      %p89 = scmp.ne.s32.totalorder %s81, %s83
      %p90 = scmp.eq.s32.totalorder %s57, 7
      %p91 = por %p89, %p90
      %p92 = scmp.ne.s32.totalorder %s83, %s84
      %p93 = scmp.eq.s32.totalorder %s57, 0
      %p94 = por %p92, %p93
      %p95 = scmp.ne.s32.totalorder %s83, %s84
      %p96 = scmp.eq.s32.totalorder %s58, 7
      %p97 = por %p95, %p96
      %p99 = scmp.ne.s32.totalorder %s84, %s98
      %p100 = scmp.eq.s32.totalorder %s58, 0
      %p101 = por %p99, %p100
      %s103 = sadd.s32 %s102, 1
      %p106 = scmp.eq.s32.totalorder %s52, 7
      %p107 = scmp.ne.s32.totalorder %s102, %s104
      %p108 = scmp.eq.s32.totalorder %s52, 0
      %p109 = por %p107, %p108
      %p110 = scmp.ne.s32.totalorder %s102, %s104
      %p111 = scmp.eq.s32.totalorder %s57, 7
      %p112 = por %p110, %p111
      %p113 = scmp.ne.s32.totalorder %s104, %s105
      %p114 = scmp.eq.s32.totalorder %s57, 0
      %p115 = por %p113, %p114
      %p116 = scmp.ne.s32.totalorder %s104, %s105
      %p117 = scmp.eq.s32.totalorder %s58, 7
      %p118 = por %p116, %p117
      %p120 = scmp.ne.s32.totalorder %s105, %s119
      %p121 = scmp.eq.s32.totalorder %s58, 0
      %p122 = por %p120, %p121
      %s123 = ssub.s32 %s52, %s59
      %p124 = scmp.eq.s32.totalorder %s123, 0
      %s126 = sadd.s32 %s125, 1
      %s127 = scalar_select %p124, %s125, %s126
      %p130 = pneg %p124
      %p131 = scmp.eq.s32.totalorder %s52, 7
      %p132 = por %p130, %p131
      %p133 = scmp.ne.s32.totalorder %s125, %s128
      %p134 = scmp.eq.s32.totalorder %s52, 0
      %p135 = por %p133, %p134
      %p136 = scmp.ne.s32.totalorder %s125, %s128
      %p137 = scmp.eq.s32.totalorder %s57, 7
      %p138 = por %p136, %p137
      %p139 = scmp.ne.s32.totalorder %s128, %s129
      %p140 = scmp.eq.s32.totalorder %s57, 0
      %p141 = por %p139, %p140
      %p142 = scmp.ne.s32.totalorder %s128, %s129
      %p143 = scmp.eq.s32.totalorder %s58, 7
      %p144 = por %p142, %p143
      %p146 = scmp.ne.s32.totalorder %s129, %s145
      %p147 = scmp.eq.s32.totalorder %s58, 0
      %p148 = por %p146, %p147
      %s149 = ssub.s32 %s52, %s59
      %p150 = scmp.eq.s32.totalorder %s149, 0
      %s152 = sadd.s32 %s151, 1
      %s153 = scalar_select %p150, %s151, %s152
      %p156 = pneg %p150
      %p157 = scmp.eq.s32.totalorder %s52, 7
      %p158 = por %p156, %p157
      %p159 = scmp.ne.s32.totalorder %s151, %s154
      %p160 = scmp.eq.s32.totalorder %s52, 0
      %p161 = por %p159, %p160
      %p162 = scmp.ne.s32.totalorder %s151, %s154
      %p163 = scmp.eq.s32.totalorder %s57, 7
      %p164 = por %p162, %p163
      %p165 = scmp.ne.s32.totalorder %s154, %s155
      %p166 = scmp.eq.s32.totalorder %s57, 0
      %p167 = por %p165, %p166
      %p168 = scmp.ne.s32.totalorder %s154, %s155
      %p169 = scmp.eq.s32.totalorder %s58, 7
      %p170 = por %p168, %p169
      %p172 = scmp.ne.s32.totalorder %s155, %s171
      %p173 = scmp.eq.s32.totalorder %s58, 0
      %p174 = por %p172, %p173
      %s175 = ssub.s32 %s52, %s59
      %p176 = scmp.eq.s32.totalorder %s175, 0
      %s178 = sadd.s32 %s177, 1
      %s179 = scalar_select %p176, %s177, %s178
      %p182 = pneg %p176
      %p183 = scmp.eq.s32.totalorder %s52, 7
      %p184 = por %p182, %p183
      %p185 = scmp.ne.s32.totalorder %s177, %s180
      %p186 = scmp.eq.s32.totalorder %s52, 0
      %p187 = por %p185, %p186
      %p188 = scmp.ne.s32.totalorder %s177, %s180
      %p189 = scmp.eq.s32.totalorder %s57, 7
      %p190 = por %p188, %p189
      %p191 = scmp.ne.s32.totalorder %s180, %s181
      %p192 = scmp.eq.s32.totalorder %s57, 0
      %p193 = por %p191, %p192
      %p194 = scmp.ne.s32.totalorder %s180, %s181
      %p195 = scmp.eq.s32.totalorder %s58, 7
      %p196 = por %p194, %p195
      %p198 = scmp.ne.s32.totalorder %s181, %s197
      %p199 = scmp.eq.s32.totalorder %s58, 0
      %p200 = por %p198, %p199
      %s201 = ssub.s32 %s52, %s59
      %p202 = scmp.eq.s32.totalorder %s201, 0
      %s204 = sadd.s32 %s203, 1
      %s205 = scalar_select %p202, %s203, %s204
      %p208 = pneg %p202
      %p209 = scmp.eq.s32.totalorder %s52, 7
      %p210 = por %p208, %p209
      %p211 = scmp.ne.s32.totalorder %s203, %s206
      %p212 = scmp.eq.s32.totalorder %s52, 0
      %p213 = por %p211, %p212
      %p214 = scmp.ne.s32.totalorder %s203, %s206
      %p215 = scmp.eq.s32.totalorder %s57, 7
      %p216 = por %p214, %p215
      %p217 = scmp.ne.s32.totalorder %s206, %s207
      %p218 = scmp.eq.s32.totalorder %s57, 0
      %p219 = por %p217, %p218
      %p220 = scmp.ne.s32.totalorder %s206, %s207
      %p221 = scmp.eq.s32.totalorder %s58, 7
      %p222 = por %p220, %p221
      %p224 = scmp.ne.s32.totalorder %s207, %s223
      %p225 = scmp.eq.s32.totalorder %s58, 0
      %p226 = por %p224, %p225
      %s227 = ssub.s32 %s52, %s59
      %p228 = scmp.eq.s32.totalorder %s227, 0
      %s230 = sadd.s32 %s229, 1
      %s231 = scalar_select %p228, %s229, %s230
      %p234 = pneg %p228
      %p235 = scmp.eq.s32.totalorder %s52, 7
      %p236 = por %p234, %p235
      %p237 = scmp.ne.s32.totalorder %s229, %s232
      %p238 = scmp.eq.s32.totalorder %s52, 0
      %p239 = por %p237, %p238
      %p240 = scmp.ne.s32.totalorder %s229, %s232
      %p241 = scmp.eq.s32.totalorder %s57, 7
      %p242 = por %p240, %p241
      %p243 = scmp.ne.s32.totalorder %s232, %s233
      %p244 = scmp.eq.s32.totalorder %s57, 0
      %p245 = por %p243, %p244
      %p246 = scmp.ne.s32.totalorder %s232, %s233
      %p247 = scmp.eq.s32.totalorder %s58, 7
      %p248 = por %p246, %p247
      %p250 = scmp.ne.s32.totalorder %s233, %s249
      %p251 = scmp.eq.s32.totalorder %s58, 0
      %p252 = por %p250, %p251
      %s253 = ssub.s32 %s52, %s59
      %p254 = scmp.eq.s32.totalorder %s253, 0
      %s256 = sadd.s32 %s255, 1
      %s257 = scalar_select %p254, %s255, %s256
      %p260 = pneg %p254
      %p261 = scmp.eq.s32.totalorder %s52, 7
      %p262 = por %p260, %p261
      %p263 = scmp.ne.s32.totalorder %s255, %s258
      %p264 = scmp.eq.s32.totalorder %s52, 0
      %p265 = por %p263, %p264
      %p266 = scmp.ne.s32.totalorder %s255, %s258
      %p267 = scmp.eq.s32.totalorder %s57, 7
      %p268 = por %p266, %p267
      %p269 = scmp.ne.s32.totalorder %s258, %s259
      %p270 = scmp.eq.s32.totalorder %s57, 0
      %p271 = por %p269, %p270
      %p272 = scmp.ne.s32.totalorder %s258, %s259
      %p273 = scmp.eq.s32.totalorder %s58, 7
      %p274 = por %p272, %p273
      %p276 = scmp.ne.s32.totalorder %s259, %s275
      %p277 = scmp.eq.s32.totalorder %s58, 0
      %p278 = por %p276, %p277
      %s279 = ssub.s32 %s52, %s59
      %p280 = scmp.eq.s32.totalorder %s279, 0
      %s282 = sadd.s32 %s281, 1
      %s283 = scalar_select %p280, %s281, %s282
      %p286 = pneg %p280
      %p287 = scmp.eq.s32.totalorder %s52, 7
      %p288 = por %p286, %p287
      %p289 = scmp.ne.s32.totalorder %s281, %s284
      %p290 = scmp.eq.s32.totalorder %s52, 0
      %p291 = por %p289, %p290
      %p292 = scmp.ne.s32.totalorder %s281, %s284
      %p293 = scmp.eq.s32.totalorder %s57, 7
      %p294 = por %p292, %p293
      %p295 = scmp.ne.s32.totalorder %s284, %s285
      %p296 = scmp.eq.s32.totalorder %s57, 0
      %p297 = por %p295, %p296
      %p298 = scmp.ne.s32.totalorder %s284, %s285
      %p299 = scmp.eq.s32.totalorder %s58, 7
      %p300 = por %p298, %p299
      %p302 = scmp.ne.s32.totalorder %s285, %s301
      %p303 = scmp.eq.s32.totalorder %s58, 0
      %p304 = por %p302, %p303
      %s305 = ssub.s32 %s52, %s59
      %p306 = scmp.eq.s32.totalorder %s305, 0
      %s308 = sadd.s32 %s307, 1
      %s309 = scalar_select %p306, %s307, %s308
      %p312 = pneg %p306
      %p313 = scmp.eq.s32.totalorder %s52, 7
      %p314 = por %p312, %p313
      %p315 = scmp.ne.s32.totalorder %s307, %s310
      %p316 = scmp.eq.s32.totalorder %s52, 0
      %p317 = por %p315, %p316
      %p318 = scmp.ne.s32.totalorder %s307, %s310
      %p319 = scmp.eq.s32.totalorder %s57, 7
      %p320 = por %p318, %p319
      %p321 = scmp.ne.s32.totalorder %s310, %s311
      %p322 = scmp.eq.s32.totalorder %s57, 0
      %p323 = por %p321, %p322
      %p324 = scmp.ne.s32.totalorder %s310, %s311
      %p325 = scmp.eq.s32.totalorder %s58, 7
      %p326 = por %p324, %p325
      %p328 = scmp.ne.s32.totalorder %s311, %s327
      %p329 = scmp.eq.s32.totalorder %s58, 0
      %p330 = por %p328, %p329
      %s331 = ssub.s32 %s52, %s59
      %p332 = scmp.eq.s32.totalorder %s331, 0
      %s334 = sadd.s32 %s333, 1
      %s335 = scalar_select %p332, %s333, %s334
      %p338 = pneg %p332
      %p339 = scmp.eq.s32.totalorder %s52, 7
      %p340 = por %p338, %p339
      %p341 = scmp.ne.s32.totalorder %s333, %s336
      %p342 = scmp.eq.s32.totalorder %s52, 0
      %p343 = por %p341, %p342
      %p344 = scmp.ne.s32.totalorder %s333, %s336
      %p345 = scmp.eq.s32.totalorder %s57, 7
      %p346 = por %p344, %p345
      %p347 = scmp.ne.s32.totalorder %s336, %s337
      %p348 = scmp.eq.s32.totalorder %s57, 0
      %p349 = por %p347, %p348
      %p350 = scmp.ne.s32.totalorder %s336, %s337
      %p351 = scmp.eq.s32.totalorder %s58, 7
      %p352 = por %p350, %p351
      %p354 = scmp.ne.s32.totalorder %s337, %s353
      %p355 = scmp.eq.s32.totalorder %s58, 0
      %p356 = por %p354, %p355
      %s357 = ssub.s32 %s52, %s59
      %p358 = scmp.eq.s32.totalorder %s357, 0
      %s360 = sadd.s32 %s359, 1
      %s361 = scalar_select %p358, %s359, %s360
      %p364 = pneg %p358
      %p365 = scmp.eq.s32.totalorder %s52, 7
      %p366 = por %p364, %p365
      %p367 = scmp.ne.s32.totalorder %s359, %s362
      %p368 = scmp.eq.s32.totalorder %s52, 0
      %p369 = por %p367, %p368
      %p370 = scmp.ne.s32.totalorder %s359, %s362
      %p371 = scmp.eq.s32.totalorder %s57, 7
      %p372 = por %p370, %p371
      %p373 = scmp.ne.s32.totalorder %s362, %s363
      %p374 = scmp.eq.s32.totalorder %s57, 0
      %p375 = por %p373, %p374
      %p376 = scmp.ne.s32.totalorder %s362, %s363
      %p377 = scmp.eq.s32.totalorder %s58, 7
      %p378 = por %p376, %p377
      %p380 = scmp.ne.s32.totalorder %s363, %s379
      %p381 = scmp.eq.s32.totalorder %s58, 0
      %p382 = por %p380, %p381
      %s383 = ssub.s32 %s52, %s59
      %p384 = scmp.eq.s32.totalorder %s383, 0
      %s386 = sadd.s32 %s385, 1
      %s387 = scalar_select %p384, %s385, %s386
      %p390 = pneg %p384
      %p391 = scmp.eq.s32.totalorder %s52, 7
      %p392 = por %p390, %p391
      %p393 = scmp.ne.s32.totalorder %s385, %s388
      %p394 = scmp.eq.s32.totalorder %s52, 0
      %p395 = por %p393, %p394
      %p396 = scmp.ne.s32.totalorder %s385, %s388
      %p397 = scmp.eq.s32.totalorder %s57, 7
      %p398 = por %p396, %p397
      %p399 = scmp.ne.s32.totalorder %s388, %s389
      %p400 = scmp.eq.s32.totalorder %s57, 0
      %p401 = por %p399, %p400
      %p402 = scmp.ne.s32.totalorder %s388, %s389
      %p403 = scmp.eq.s32.totalorder %s58, 7
      %p404 = por %p402, %p403
      %p406 = scmp.ne.s32.totalorder %s389, %s405
      %p407 = scmp.eq.s32.totalorder %s58, 0
      %p408 = por %p406, %p407
      %s409 = ssub.s32 %s52, %s59
      %p410 = scmp.eq.s32.totalorder %s409, 0
      %s412 = sadd.s32 %s411, 1
      %s413 = scalar_select %p410, %s411, %s412
      %p416 = pneg %p410
      %p417 = scmp.eq.s32.totalorder %s52, 7
      %p418 = por %p416, %p417
      %p419 = scmp.ne.s32.totalorder %s411, %s414
      %p420 = scmp.eq.s32.totalorder %s52, 0
      %p421 = por %p419, %p420
      %p422 = scmp.ne.s32.totalorder %s411, %s414
      %p423 = scmp.eq.s32.totalorder %s57, 7
      %p424 = por %p422, %p423
      %p425 = scmp.ne.s32.totalorder %s414, %s415
      %p426 = scmp.eq.s32.totalorder %s57, 0
      %p427 = por %p425, %p426
      %p428 = scmp.ne.s32.totalorder %s414, %s415
      %p429 = scmp.eq.s32.totalorder %s58, 7
      %p430 = por %p428, %p429
      %p432 = scmp.ne.s32.totalorder %s415, %s431
      %p433 = scmp.eq.s32.totalorder %s58, 0
      %p434 = por %p432, %p433
      %s435 = ssub.s32 %s52, %s59
      %p436 = scmp.eq.s32.totalorder %s435, 0
      %s438 = sadd.s32 %s437, 1
      %s439 = scalar_select %p436, %s437, %s438
      %p442 = pneg %p436
      %p443 = scmp.eq.s32.totalorder %s52, 7
      %p444 = por %p442, %p443
      %p445 = scmp.ne.s32.totalorder %s437, %s440
      %p446 = scmp.eq.s32.totalorder %s52, 0
      %p447 = por %p445, %p446
      %p448 = scmp.ne.s32.totalorder %s437, %s440
      %p449 = scmp.eq.s32.totalorder %s57, 7
      %p450 = por %p448, %p449
      %p451 = scmp.ne.s32.totalorder %s440, %s441
      %p452 = scmp.eq.s32.totalorder %s57, 0
      %p453 = por %p451, %p452
      %p454 = scmp.ne.s32.totalorder %s440, %s441
      %p455 = scmp.eq.s32.totalorder %s58, 7
      %p456 = por %p454, %p455
      %p458 = scmp.ne.s32.totalorder %s441, %s457
      %p459 = scmp.eq.s32.totalorder %s58, 0
      %p460 = por %p458, %p459
      %s461 = ssub.s32 %s52, %s59
      %p462 = scmp.eq.s32.totalorder %s461, 0
      %s464 = sadd.s32 %s463, 1
      %s465 = scalar_select %p462, %s463, %s464
      %p468 = pneg %p462
      %p469 = scmp.eq.s32.totalorder %s52, 7
      %p470 = por %p468, %p469
      %p471 = scmp.ne.s32.totalorder %s463, %s466
      %p472 = scmp.eq.s32.totalorder %s52, 0
      %p473 = por %p471, %p472
      %p474 = scmp.ne.s32.totalorder %s463, %s466
      %p475 = scmp.eq.s32.totalorder %s57, 7
      %p476 = por %p474, %p475
      %p477 = scmp.ne.s32.totalorder %s466, %s467
      %p478 = scmp.eq.s32.totalorder %s57, 0
      %p479 = por %p477, %p478
      %p480 = scmp.ne.s32.totalorder %s466, %s467
      %p481 = scmp.eq.s32.totalorder %s58, 7
      %p482 = por %p480, %p481
      %p484 = scmp.ne.s32.totalorder %s467, %s483
      %p485 = scmp.eq.s32.totalorder %s58, 0
      %p486 = por %p484, %p485
      %s487 = ssub.s32 %s52, %s59
      %p488 = scmp.eq.s32.totalorder %s487, 0
      %s490 = sadd.s32 %s489, 1
      %s491 = scalar_select %p488, %s489, %s490
      %p494 = pneg %p488
      %p495 = scmp.eq.s32.totalorder %s52, 7
      %p496 = por %p494, %p495
      %p497 = scmp.ne.s32.totalorder %s489, %s492
      %p498 = scmp.eq.s32.totalorder %s52, 0
      %p499 = por %p497, %p498
      %p500 = scmp.ne.s32.totalorder %s489, %s492
      %p501 = scmp.eq.s32.totalorder %s57, 7
      %p502 = por %p500, %p501
      %p503 = scmp.ne.s32.totalorder %s492, %s493
      %p504 = scmp.eq.s32.totalorder %s57, 0
      %p505 = por %p503, %p504
      %p506 = scmp.ne.s32.totalorder %s492, %s493
      %p507 = scmp.eq.s32.totalorder %s58, 7
      %p508 = por %p506, %p507
      %p510 = scmp.ne.s32.totalorder %s493, %s509
      %p511 = scmp.eq.s32.totalorder %s58, 0
      %p512 = por %p510, %p511
      %s513 = ssub.s32 %s52, %s59
      %p514 = scmp.eq.s32.totalorder %s513, 0
      %s516 = sadd.s32 %s515, 1
      %s517 = scalar_select %p514, %s515, %s516
      %p520 = pneg %p514
      %p521 = scmp.eq.s32.totalorder %s52, 7
      %p522 = por %p520, %p521
      %p523 = scmp.ne.s32.totalorder %s515, %s518
      %p524 = scmp.eq.s32.totalorder %s52, 0
      %p525 = por %p523, %p524
      %p526 = scmp.ne.s32.totalorder %s515, %s518
      %p527 = scmp.eq.s32.totalorder %s57, 7
      %p528 = por %p526, %p527
      %p529 = scmp.ne.s32.totalorder %s518, %s519
      %p530 = scmp.eq.s32.totalorder %s57, 0
      %p531 = por %p529, %p530
      %p532 = scmp.ne.s32.totalorder %s518, %s519
      %p533 = scmp.eq.s32.totalorder %s58, 7
      %p534 = por %p532, %p533
      %p536 = scmp.ne.s32.totalorder %s519, %s535
      %p537 = scmp.eq.s32.totalorder %s58, 0
      %p538 = por %p536, %p537
      %s540 = sadd.s32 %s539, 1
      %p543 = scmp.eq.s32.totalorder %s52, 7
      %p544 = scmp.ne.s32.totalorder %s539, %s541
      %p545 = scmp.eq.s32.totalorder %s52, 0
      %p546 = por %p544, %p545
      %p547 = scmp.ne.s32.totalorder %s539, %s541
      %p548 = scmp.eq.s32.totalorder %s57, 7
      %p549 = por %p547, %p548
      %p550 = scmp.ne.s32.totalorder %s541, %s542
      %p551 = scmp.eq.s32.totalorder %s57, 0
      %p552 = por %p550, %p551
      %p553 = scmp.ne.s32.totalorder %s541, %s542
      %p554 = scmp.eq.s32.totalorder %s58, 7
      %p555 = por %p553, %p554
      %p557 = scmp.ne.s32.totalorder %s542, %s556
      %p558 = scmp.eq.s32.totalorder %s58, 0
      %p559 = por %p557, %p558
      %p560 = scmp.le.s32.totalorder 1, %s52
      %p561 = scmp.lt.s32.totalorder %s52, 9
      %p562 = pnand %p560, %p561
      %p563 = pneg %p562
      // Predicated region
      $region9: #{discriminator_forward.8} parent=5 // pred_check
        _
      $region10: #{discriminator_forward.8} parent=5 // pred_check_branch
        %565 = sbr.rel (%p562) target = $region12
      $region11: #{discriminator_forward.8} parent=5 // pred_region
        %s566 = ssub.s32 %s52, 1
        // Predicated region
        $region13: #{discriminator_forward.8} parent=11 // pred_check
          %p567 = pneg %p73
        $region14: #{discriminator_forward.8} parent=11 // pred_check_branch
          %569 = sbr.rel (%p567) target = $region16
        $region15: #{discriminator_forward.8} parent=11 // pred_region
          %s571 = ssub.s32 1536, 1536
          %572 = vsyncadd [#allocation4], %s571
          %s573 = sshll.u32 [#allocation3], 4
          %s574 = int_to_ptr.vmem [resolvable:$true] %s573
          %579 = dma.hbm_to_vmem [thread:$0]  %s0, 1536, %s574, [#allocation4], 128, 128, 8
        $region16: #{discriminator_forward.8} parent=11 // pred_fallthru
          _
        // Predicated region
        $region17: #{discriminator_forward.8} parent=11 // pred_check
          %p580 = pneg %p94
        $region18: #{discriminator_forward.8} parent=11 // pred_check_branch
          %582 = sbr.rel (%p580) target = $region20
        $region19: #{discriminator_forward.8} parent=11 // pred_region
          %s584 = ssub.s32 256, 256
          %585 = vsyncadd [#allocation7], %s584
          %s586 = sshll.u32 [#allocation6], 4
          %s587 = int_to_ptr.vmem [resolvable:$true] %s586
          %592 = dma.hbm_to_vmem [thread:$0]  %s1, 256, %s587, [#allocation7], 128, 128, 8
        $region20: #{discriminator_forward.8} parent=11 // pred_fallthru
          _
        // Predicated region
        $region21: #{discriminator_forward.8} parent=11 // pred_check
          %p593 = pneg %p115
        $region22: #{discriminator_forward.8} parent=11 // pred_check_branch
          %595 = sbr.rel (%p593) target = $region24
        $region23: #{discriminator_forward.8} parent=11 // pred_region
          %s597 = ssub.s32 128, 128
          %598 = vsyncadd [#allocation7], %s597
          %s600 = sshll.u32 [#allocation8], 4
          %s601 = int_to_ptr.vmem [resolvable:$true] %s600
          %603 = dma.hbm_to_vmem [thread:$0]  %s2, 128, %s601, [#allocation7]
        $region24: #{discriminator_forward.8} parent=11 // pred_fallthru
          _
      $region12: #{discriminator_forward.8} parent=5 // pred_fallthru
        _
      %p604 = scmp.lt.s32.totalorder %s52, 8
      // Predicated region
      $region25: #{discriminator_forward.8} parent=5 // pred_check
        %p605 = pneg %p604
      $region26: #{discriminator_forward.8} parent=5 // pred_check_branch
        %607 = sbr.rel (%p605) target = $region28
      $region27: #{discriminator_forward.8} parent=5 // pred_region
        // Predicated region
        $region29: #{discriminator_forward.8} parent=27 // pred_check
          %p608 = pneg %p135
        $region30: #{discriminator_forward.8} parent=27 // pred_check_branch
          %610 = sbr.rel (%p608) target = $region32
        $region31: #{discriminator_forward.8} parent=27 // pred_region
          %s611 = sand.u32 %s52, 1
          %s612 = scalar_lea.sflag [#allocation10], %s611
          %s613 = sand.u32 %s125, 1
          %s614 = smul.addr %s613, 8
          %s615 = scalar_lea.vmem [#allocation9], %s614
          %s617 = ssub.s32 128, 128
          %618 = vsyncadd %s612, %s617
          %s619 = smul.addr %s52, 2
          %s620 = smul.addr %s619, 64
          %s621 = scalar_lea.hbm %s3, %s620
          %s622 = sshll.u32 %s615, 4
          %s623 = int_to_ptr.vmem [resolvable:$true] %s622
          %628 = dma.hbm_to_vmem [thread:$0]  %s621, 128, %s623, %s612, 64, 64, 4
        $region32: #{discriminator_forward.8} parent=27 // pred_fallthru
          _
        // Predicated region
        $region33: #{discriminator_forward.8} parent=27 // pred_check
          %p629 = pneg %p161
        $region34: #{discriminator_forward.8} parent=27 // pred_check_branch
          %631 = sbr.rel (%p629) target = $region36
        $region35: #{discriminator_forward.8} parent=27 // pred_region
          %s632 = sand.u32 %s52, 1
          %s633 = scalar_lea.sflag [#allocation10], %s632
          %s634 = sand.u32 %s151, 1
          %s635 = smul.addr %s634, 8
          %s636 = scalar_lea.vmem [#allocation11], %s635
          %s638 = ssub.s32 128, 128
          %639 = vsyncadd %s633, %s638
          %s640 = smul.addr %s52, 2
          %s641 = smul.addr %s640, 64
          %s642 = scalar_lea.hbm %s4, %s641
          %s643 = sshll.u32 %s636, 4
          %s644 = int_to_ptr.vmem [resolvable:$true] %s643
          %649 = dma.hbm_to_vmem [thread:$0]  %s642, 128, %s644, %s633, 64, 64, 4
        $region36: #{discriminator_forward.8} parent=27 // pred_fallthru
          _
        // Predicated region
        $region37: #{discriminator_forward.8} parent=27 // pred_check
          %p650 = pneg %p187
        $region38: #{discriminator_forward.8} parent=27 // pred_check_branch
          %652 = sbr.rel (%p650) target = $region40
        $region39: #{discriminator_forward.8} parent=27 // pred_region
          %s653 = sand.u32 %s52, 1
          %s654 = scalar_lea.sflag [#allocation13], %s653
          %s655 = sand.u32 %s177, 1
          %s656 = smul.addr %s655, 8
          %s657 = scalar_lea.vmem [#allocation12], %s656
          %s659 = ssub.s32 128, 128
          %660 = vsyncadd %s654, %s659
          %s661 = smul.addr %s52, 2
          %s662 = smul.addr %s661, 64
          %s663 = scalar_lea.hbm %s5, %s662
          %s664 = sshll.u32 %s657, 4
          %s665 = int_to_ptr.vmem [resolvable:$true] %s664
          %670 = dma.hbm_to_vmem [thread:$0]  %s663, 128, %s665, %s654, 64, 64, 4
        $region40: #{discriminator_forward.8} parent=27 // pred_fallthru
          _
        // Predicated region
        $region41: #{discriminator_forward.8} parent=27 // pred_check
          %p671 = pneg %p213
        $region42: #{discriminator_forward.8} parent=27 // pred_check_branch
          %673 = sbr.rel (%p671) target = $region44
        $region43: #{discriminator_forward.8} parent=27 // pred_region
          %s674 = sand.u32 %s52, 1
          %s675 = scalar_lea.sflag [#allocation13], %s674
          %s676 = sand.u32 %s203, 1
          %s677 = scalar_lea.vmem [#allocation14], %s676
          %s679 = ssub.s32 16, 16
          %680 = vsyncadd %s675, %s679
          %s681 = smul.addr %s52, 16
          %s682 = scalar_lea.hbm %s6, %s681
          %s684 = sshll.u32 %s677, 4
          %s685 = int_to_ptr.vmem [resolvable:$true] %s684
          %687 = dma.hbm_to_vmem [thread:$0]  %s682, 16, %s685, %s675
        $region44: #{discriminator_forward.8} parent=27 // pred_fallthru
          _
        // Predicated region
        $region45: #{discriminator_forward.8} parent=27 // pred_check
          %p688 = pneg %p239
        $region46: #{discriminator_forward.8} parent=27 // pred_check_branch
          %690 = sbr.rel (%p688) target = $region48
        $region47: #{discriminator_forward.8} parent=27 // pred_region
          %s691 = sand.u32 %s52, 1
          %s692 = scalar_lea.sflag [#allocation16], %s691
          %s693 = sand.u32 %s229, 1
          %s694 = scalar_lea.vmem [#allocation15], %s693
          %s696 = ssub.s32 16, 16
          %697 = vsyncadd %s692, %s696
          %s698 = smul.addr %s52, 16
          %s699 = scalar_lea.hbm %s7, %s698
          %s701 = sshll.u32 %s694, 4
          %s702 = int_to_ptr.vmem [resolvable:$true] %s701
          %704 = dma.hbm_to_vmem [thread:$0]  %s699, 16, %s702, %s692
        $region48: #{discriminator_forward.8} parent=27 // pred_fallthru
          _
        // Predicated region
        $region49: #{discriminator_forward.8} parent=27 // pred_check
          %p705 = pneg %p265
        $region50: #{discriminator_forward.8} parent=27 // pred_check_branch
          %707 = sbr.rel (%p705) target = $region52
        $region51: #{discriminator_forward.8} parent=27 // pred_region
          %s708 = sand.u32 %s52, 1
          %s709 = scalar_lea.sflag [#allocation16], %s708
          %s710 = sand.u32 %s255, 1
          %s711 = scalar_lea.vmem [#allocation17], %s710
          %s713 = ssub.s32 16, 16
          %714 = vsyncadd %s709, %s713
          %s715 = smul.addr %s52, 16
          %s716 = scalar_lea.hbm %s8, %s715
          %s718 = sshll.u32 %s711, 4
          %s719 = int_to_ptr.vmem [resolvable:$true] %s718
          %721 = dma.hbm_to_vmem [thread:$0]  %s716, 16, %s719, %s709
        $region52: #{discriminator_forward.8} parent=27 // pred_fallthru
          _
        // Predicated region
        $region53: #{discriminator_forward.8} parent=27 // pred_check
          %p722 = pneg %p291
        $region54: #{discriminator_forward.8} parent=27 // pred_check_branch
          %724 = sbr.rel (%p722) target = $region56
        $region55: #{discriminator_forward.8} parent=27 // pred_region
          %s725 = sand.u32 %s52, 1
          %s726 = scalar_lea.sflag [#allocation19], %s725
          %s727 = sand.u32 %s281, 1
          %s728 = smul.addr %s727, 8
          %s729 = scalar_lea.vmem [#allocation18], %s728
          %s731 = ssub.s32 128, 128
          %732 = vsyncadd %s726, %s731
          %s733 = smul.addr %s52, 2
          %s734 = smul.addr %s733, 64
          %s735 = scalar_lea.hbm %s9, %s734
          %s736 = sshll.u32 %s729, 4
          %s737 = int_to_ptr.vmem [resolvable:$true] %s736
          %742 = dma.hbm_to_vmem [thread:$0]  %s735, 128, %s737, %s726, 64, 64, 4
        $region56: #{discriminator_forward.8} parent=27 // pred_fallthru
          _
        // Predicated region
        $region57: #{discriminator_forward.8} parent=27 // pred_check
          %p743 = pneg %p317
        $region58: #{discriminator_forward.8} parent=27 // pred_check_branch
          %745 = sbr.rel (%p743) target = $region60
        $region59: #{discriminator_forward.8} parent=27 // pred_region
          %s746 = sand.u32 %s52, 1
          %s747 = scalar_lea.sflag [#allocation19], %s746
          %s748 = sand.u32 %s307, 1
          %s749 = scalar_lea.vmem [#allocation20], %s748
          %s751 = ssub.s32 16, 16
          %752 = vsyncadd %s747, %s751
          %s753 = smul.addr %s52, 16
          %s754 = scalar_lea.hbm %s10, %s753
          %s756 = sshll.u32 %s749, 4
          %s757 = int_to_ptr.vmem [resolvable:$true] %s756
          %759 = dma.hbm_to_vmem [thread:$0]  %s754, 16, %s757, %s747
        $region60: #{discriminator_forward.8} parent=27 // pred_fallthru
          _
        // Predicated region
        $region61: #{discriminator_forward.8} parent=27 // pred_check
          %p760 = pneg %p343
        $region62: #{discriminator_forward.8} parent=27 // pred_check_branch
          %762 = sbr.rel (%p760) target = $region64
        $region63: #{discriminator_forward.8} parent=27 // pred_region
          %s763 = sand.u32 %s52, 1
          %s764 = scalar_lea.sflag [#allocation22], %s763
          %s765 = sand.u32 %s333, 1
          %s766 = scalar_lea.vmem [#allocation21], %s765
          %s768 = ssub.s32 16, 16
          %769 = vsyncadd %s764, %s768
          %s770 = smul.addr %s52, 16
          %s771 = scalar_lea.hbm %s11, %s770
          %s773 = sshll.u32 %s766, 4
          %s774 = int_to_ptr.vmem [resolvable:$true] %s773
          %776 = dma.hbm_to_vmem [thread:$0]  %s771, 16, %s774, %s764
        $region64: #{discriminator_forward.8} parent=27 // pred_fallthru
          _
        // Predicated region
        $region65: #{discriminator_forward.8} parent=27 // pred_check
          %p777 = pneg %p369
        $region66: #{discriminator_forward.8} parent=27 // pred_check_branch
          %779 = sbr.rel (%p777) target = $region68
        $region67: #{discriminator_forward.8} parent=27 // pred_region
          %s780 = sand.u32 %s52, 1
          %s781 = scalar_lea.sflag [#allocation22], %s780
          %s782 = sand.u32 %s359, 1
          %s783 = scalar_lea.vmem [#allocation23], %s782
          %s785 = ssub.s32 16, 16
          %786 = vsyncadd %s781, %s785
          %s787 = smul.addr %s52, 16
          %s788 = scalar_lea.hbm %s12, %s787
          %s790 = sshll.u32 %s783, 4
          %s791 = int_to_ptr.vmem [resolvable:$true] %s790
          %793 = dma.hbm_to_vmem [thread:$0]  %s788, 16, %s791, %s781
        $region68: #{discriminator_forward.8} parent=27 // pred_fallthru
          _
        // Predicated region
        $region69: #{discriminator_forward.8} parent=27 // pred_check
          %p794 = pneg %p395
        $region70: #{discriminator_forward.8} parent=27 // pred_check_branch
          %796 = sbr.rel (%p794) target = $region72
        $region71: #{discriminator_forward.8} parent=27 // pred_region
          %s797 = sand.u32 %s52, 1
          %s798 = scalar_lea.sflag [#allocation25], %s797
          %s799 = sand.u32 %s385, 1
          %s800 = smul.addr %s799, 128
          %s801 = scalar_lea.vmem [#allocation24], %s800
          %s803 = ssub.s32 2048, 2048
          %804 = vsyncadd %s798, %s803
          %s805 = smul.addr %s52, 32
          %s806 = smul.addr %s805, 64
          %s807 = scalar_lea.hbm %s13, %s806
          %s808 = sshll.u32 %s801, 4
          %s809 = int_to_ptr.vmem [resolvable:$true] %s808
          %814 = dma.hbm_to_vmem [thread:$0]  %s807, 2048, %s809, %s798, 1024, 1024, 64
        $region72: #{discriminator_forward.8} parent=27 // pred_fallthru
          _
        // Predicated region
        $region73: #{discriminator_forward.8} parent=27 // pred_check
          %p815 = pneg %p421
        $region74: #{discriminator_forward.8} parent=27 // pred_check_branch
          %817 = sbr.rel (%p815) target = $region76
        $region75: #{discriminator_forward.8} parent=27 // pred_region
          %s818 = sand.u32 %s52, 1
          %s819 = scalar_lea.sflag [#allocation25], %s818
          %s820 = sand.u32 %s411, 1
          %s821 = smul.addr %s820, 16
          %s822 = scalar_lea.vmem [#allocation26], %s821
          %s824 = ssub.s32 256, 256
          %825 = vsyncadd %s819, %s824
          %s826 = smul.addr %s52, 16
          %s827 = smul.addr %s826, 16
          %s828 = scalar_lea.hbm %s14, %s827
          %s830 = sshll.u32 %s822, 4
          %s831 = int_to_ptr.vmem [resolvable:$true] %s830
          %833 = dma.hbm_to_vmem [thread:$0]  %s828, 256, %s831, %s819
        $region76: #{discriminator_forward.8} parent=27 // pred_fallthru
          _
        // Predicated region
        $region77: #{discriminator_forward.8} parent=27 // pred_check
          %p834 = pneg %p447
        $region78: #{discriminator_forward.8} parent=27 // pred_check_branch
          %836 = sbr.rel (%p834) target = $region80
        $region79: #{discriminator_forward.8} parent=27 // pred_region
          %s837 = sand.u32 %s52, 1
          %s838 = scalar_lea.sflag [#allocation28], %s837
          %s839 = sand.u32 %s437, 1
          %s840 = smul.addr %s839, 1024
          %s841 = scalar_lea.vmem [#allocation27], %s840
          %s843 = ssub.s32 16384, 16384
          %844 = vsyncadd %s838, %s843
          %s845 = smul.addr %s52, 256
          %s846 = smul.addr %s845, 64
          %s847 = scalar_lea.hbm %s15, %s846
          %s848 = sshll.u32 %s841, 4
          %s849 = int_to_ptr.vmem [resolvable:$true] %s848
          %854 = dma.hbm_to_vmem [thread:$0]  %s847, 16384, %s849, %s838, 64, 64, 4
        $region80: #{discriminator_forward.8} parent=27 // pred_fallthru
          _
        // Predicated region
        $region81: #{discriminator_forward.8} parent=27 // pred_check
          %p855 = pneg %p473
        $region82: #{discriminator_forward.8} parent=27 // pred_check_branch
          %857 = sbr.rel (%p855) target = $region84
        $region83: #{discriminator_forward.8} parent=27 // pred_region
          %s858 = sand.u32 %s52, 1
          %s859 = scalar_lea.sflag [#allocation28], %s858
          %s860 = sand.u32 %s463, 1
          %s861 = scalar_lea.vmem [#allocation29], %s860
          %s863 = ssub.s32 16, 16
          %864 = vsyncadd %s859, %s863
          %s865 = smul.addr %s52, 16
          %s866 = scalar_lea.hbm %s16, %s865
          %s868 = sshll.u32 %s861, 4
          %s869 = int_to_ptr.vmem [resolvable:$true] %s868
          %871 = dma.hbm_to_vmem [thread:$0]  %s866, 16, %s869, %s859
        $region84: #{discriminator_forward.8} parent=27 // pred_fallthru
          _
        // Predicated region
        $region85: #{discriminator_forward.8} parent=27 // pred_check
          %p872 = pneg %p499
        $region86: #{discriminator_forward.8} parent=27 // pred_check_branch
          %874 = sbr.rel (%p872) target = $region88
        $region87: #{discriminator_forward.8} parent=27 // pred_region
          %s875 = sand.u32 %s52, 1
          %s876 = scalar_lea.sflag [#allocation31], %s875
          %s877 = sand.u32 %s489, 1
          %s878 = scalar_lea.vmem [#allocation30], %s877
          %s880 = ssub.s32 16, 16
          %881 = vsyncadd %s876, %s880
          %s882 = smul.addr %s52, 16
          %s883 = scalar_lea.hbm %s17, %s882
          %s885 = sshll.u32 %s878, 4
          %s886 = int_to_ptr.vmem [resolvable:$true] %s885
          %888 = dma.hbm_to_vmem [thread:$0]  %s883, 16, %s886, %s876
        $region88: #{discriminator_forward.8} parent=27 // pred_fallthru
          _
        // Predicated region
        $region89: #{discriminator_forward.8} parent=27 // pred_check
          %p889 = pneg %p525
        $region90: #{discriminator_forward.8} parent=27 // pred_check_branch
          %891 = sbr.rel (%p889) target = $region92
        $region91: #{discriminator_forward.8} parent=27 // pred_region
          %s892 = sand.u32 %s52, 1
          %s893 = scalar_lea.sflag [#allocation31], %s892
          %s894 = sand.u32 %s515, 1
          %s895 = scalar_lea.vmem [#allocation32], %s894
          %s897 = ssub.s32 16, 16
          %898 = vsyncadd %s893, %s897
          %s899 = smul.addr %s52, 16
          %s900 = scalar_lea.hbm %s18, %s899
          %s902 = sshll.u32 %s895, 4
          %s903 = int_to_ptr.vmem [resolvable:$true] %s902
          %905 = dma.hbm_to_vmem [thread:$0]  %s900, 16, %s903, %s893
        $region92: #{discriminator_forward.8} parent=27 // pred_fallthru
          _
      $region28: #{discriminator_forward.8} parent=5 // pred_fallthru
        _
      %p906 = scmp.le.s32.totalorder 1, %s52
      %p907 = scmp.lt.s32.totalorder %s52, 9
      %p908 = pnand %p906, %p907
      %p909 = pneg %p908
      // Predicated region
      $region93: #{discriminator_forward.8} parent=5 // pred_check
        _
      $region94: #{discriminator_forward.8} parent=5 // pred_check_branch
        %911 = sbr.rel (%p908) target = $region96
      $region95: #{discriminator_forward.8} parent=5 // pred_region
        %s912 = ssub.s32 %s52, 1
        // Predicated region
        $region97: #{discriminator_forward.8} parent=95 // pred_check
          %p913 = pneg %p73
        $region98: #{discriminator_forward.8} parent=95 // pred_check_branch
          %915 = sbr.rel (%p913) target = $region100
        $region99: #{discriminator_forward.8} parent=95 // pred_region
          %916 = dma.done [#allocation4], 1536
        $region100: #{discriminator_forward.8} parent=95 // pred_fallthru
          _
        // Predicated region
        $region101: #{discriminator_forward.8} parent=95 // pred_check
          %p917 = pneg %p94
        $region102: #{discriminator_forward.8} parent=95 // pred_check_branch
          %919 = sbr.rel (%p917) target = $region104
        $region103: #{discriminator_forward.8} parent=95 // pred_region
          %920 = dma.done [#allocation7], 256
        $region104: #{discriminator_forward.8} parent=95 // pred_fallthru
          _
        // Predicated region
        $region105: #{discriminator_forward.8} parent=95 // pred_check
          %p921 = pneg %p115
        $region106: #{discriminator_forward.8} parent=95 // pred_check_branch
          %923 = sbr.rel (%p921) target = $region108
        $region107: #{discriminator_forward.8} parent=95 // pred_region
          %924 = dma.done [#allocation7], 128
        $region108: #{discriminator_forward.8} parent=95 // pred_fallthru
          _
        %s925 = sand.u32 %s57, 1
        %s926 = scalar_lea.sflag [#allocation10], %s925
        %s927 = sand.u32 %s128, 1
        %s928 = smul.addr %s927, 8
        %s929 = scalar_lea.vmem [#allocation9], %s928
        // Predicated region
        $region109: #{discriminator_forward.8} parent=95 // pred_check
          %p930 = pneg %p141
        $region110: #{discriminator_forward.8} parent=95 // pred_check_branch
          %932 = sbr.rel (%p930) target = $region112
        $region111: #{discriminator_forward.8} parent=95 // pred_region
          %933 = dma.done %s926, 128
        $region112: #{discriminator_forward.8} parent=95 // pred_fallthru
          _
        %s934 = sand.u32 %s57, 1
        %s935 = scalar_lea.sflag [#allocation10], %s934
        %s936 = sand.u32 %s154, 1
        %s937 = smul.addr %s936, 8
        %s938 = scalar_lea.vmem [#allocation11], %s937
        // Predicated region
        $region113: #{discriminator_forward.8} parent=95 // pred_check
          %p939 = pneg %p167
        $region114: #{discriminator_forward.8} parent=95 // pred_check_branch
          %941 = sbr.rel (%p939) target = $region116
        $region115: #{discriminator_forward.8} parent=95 // pred_region
          %942 = dma.done %s935, 128
        $region116: #{discriminator_forward.8} parent=95 // pred_fallthru
          _
        %s943 = sand.u32 %s57, 1
        %s944 = scalar_lea.sflag [#allocation13], %s943
        %s945 = sand.u32 %s180, 1
        %s946 = smul.addr %s945, 8
        %s947 = scalar_lea.vmem [#allocation12], %s946
        // Predicated region
        $region117: #{discriminator_forward.8} parent=95 // pred_check
          %p948 = pneg %p193
        $region118: #{discriminator_forward.8} parent=95 // pred_check_branch
          %950 = sbr.rel (%p948) target = $region120
        $region119: #{discriminator_forward.8} parent=95 // pred_region
          %951 = dma.done %s944, 128
        $region120: #{discriminator_forward.8} parent=95 // pred_fallthru
          _
        %s952 = sand.u32 %s57, 1
        %s953 = scalar_lea.sflag [#allocation13], %s952
        %s954 = sand.u32 %s206, 1
        %s955 = scalar_lea.vmem [#allocation14], %s954
        // Predicated region
        $region121: #{discriminator_forward.8} parent=95 // pred_check
          %p956 = pneg %p219
        $region122: #{discriminator_forward.8} parent=95 // pred_check_branch
          %958 = sbr.rel (%p956) target = $region124
        $region123: #{discriminator_forward.8} parent=95 // pred_region
          %959 = dma.done %s953, 16
        $region124: #{discriminator_forward.8} parent=95 // pred_fallthru
          _
        %s960 = sand.u32 %s57, 1
        %s961 = scalar_lea.sflag [#allocation16], %s960
        %s962 = sand.u32 %s232, 1
        %s963 = scalar_lea.vmem [#allocation15], %s962
        // Predicated region
        $region125: #{discriminator_forward.8} parent=95 // pred_check
          %p964 = pneg %p245
        $region126: #{discriminator_forward.8} parent=95 // pred_check_branch
          %966 = sbr.rel (%p964) target = $region128
        $region127: #{discriminator_forward.8} parent=95 // pred_region
          %967 = dma.done %s961, 16
        $region128: #{discriminator_forward.8} parent=95 // pred_fallthru
          _
        %s968 = sand.u32 %s57, 1
        %s969 = scalar_lea.sflag [#allocation16], %s968
        %s970 = sand.u32 %s258, 1
        %s971 = scalar_lea.vmem [#allocation17], %s970
        // Predicated region
        $region129: #{discriminator_forward.8} parent=95 // pred_check
          %p972 = pneg %p271
        $region130: #{discriminator_forward.8} parent=95 // pred_check_branch
          %974 = sbr.rel (%p972) target = $region132
        $region131: #{discriminator_forward.8} parent=95 // pred_region
          %975 = dma.done %s969, 16
        $region132: #{discriminator_forward.8} parent=95 // pred_fallthru
          _
        %s976 = sand.u32 %s57, 1
        %s977 = scalar_lea.sflag [#allocation19], %s976
        %s978 = sand.u32 %s284, 1
        %s979 = smul.addr %s978, 8
        %s980 = scalar_lea.vmem [#allocation18], %s979
        // Predicated region
        $region133: #{discriminator_forward.8} parent=95 // pred_check
          %p981 = pneg %p297
        $region134: #{discriminator_forward.8} parent=95 // pred_check_branch
          %983 = sbr.rel (%p981) target = $region136
        $region135: #{discriminator_forward.8} parent=95 // pred_region
          %984 = dma.done %s977, 128
        $region136: #{discriminator_forward.8} parent=95 // pred_fallthru
          _
        %s985 = sand.u32 %s57, 1
        %s986 = scalar_lea.sflag [#allocation19], %s985
        %s987 = sand.u32 %s310, 1
        %s988 = scalar_lea.vmem [#allocation20], %s987
        // Predicated region
        $region137: #{discriminator_forward.8} parent=95 // pred_check
          %p989 = pneg %p323
        $region138: #{discriminator_forward.8} parent=95 // pred_check_branch
          %991 = sbr.rel (%p989) target = $region140
        $region139: #{discriminator_forward.8} parent=95 // pred_region
          %992 = dma.done %s986, 16
        $region140: #{discriminator_forward.8} parent=95 // pred_fallthru
          _
        %s993 = sand.u32 %s57, 1
        %s994 = scalar_lea.sflag [#allocation22], %s993
        %s995 = sand.u32 %s336, 1
        %s996 = scalar_lea.vmem [#allocation21], %s995
        // Predicated region
        $region141: #{discriminator_forward.8} parent=95 // pred_check
          %p997 = pneg %p349
        $region142: #{discriminator_forward.8} parent=95 // pred_check_branch
          %999 = sbr.rel (%p997) target = $region144
        $region143: #{discriminator_forward.8} parent=95 // pred_region
          %1000 = dma.done %s994, 16
        $region144: #{discriminator_forward.8} parent=95 // pred_fallthru
          _
        %s1001 = sand.u32 %s57, 1
        %s1002 = scalar_lea.sflag [#allocation22], %s1001
        %s1003 = sand.u32 %s362, 1
        %s1004 = scalar_lea.vmem [#allocation23], %s1003
        // Predicated region
        $region145: #{discriminator_forward.8} parent=95 // pred_check
          %p1005 = pneg %p375
        $region146: #{discriminator_forward.8} parent=95 // pred_check_branch
          %1007 = sbr.rel (%p1005) target = $region148
        $region147: #{discriminator_forward.8} parent=95 // pred_region
          %1008 = dma.done %s1002, 16
        $region148: #{discriminator_forward.8} parent=95 // pred_fallthru
          _
        %s1009 = sand.u32 %s57, 1
        %s1010 = scalar_lea.sflag [#allocation25], %s1009
        %s1011 = sand.u32 %s388, 1
        %s1012 = smul.addr %s1011, 128
        %s1013 = scalar_lea.vmem [#allocation24], %s1012
        // Predicated region
        $region149: #{discriminator_forward.8} parent=95 // pred_check
          %p1014 = pneg %p401
        $region150: #{discriminator_forward.8} parent=95 // pred_check_branch
          %1016 = sbr.rel (%p1014) target = $region152
        $region151: #{discriminator_forward.8} parent=95 // pred_region
          %1017 = dma.done %s1010, 2048
        $region152: #{discriminator_forward.8} parent=95 // pred_fallthru
          _
        %s1018 = sand.u32 %s57, 1
        %s1019 = scalar_lea.sflag [#allocation25], %s1018
        %s1020 = sand.u32 %s414, 1
        %s1021 = smul.addr %s1020, 16
        %s1022 = scalar_lea.vmem [#allocation26], %s1021
        // Predicated region
        $region153: #{discriminator_forward.8} parent=95 // pred_check
          %p1023 = pneg %p427
        $region154: #{discriminator_forward.8} parent=95 // pred_check_branch
          %1025 = sbr.rel (%p1023) target = $region156
        $region155: #{discriminator_forward.8} parent=95 // pred_region
          %1026 = dma.done %s1019, 256
        $region156: #{discriminator_forward.8} parent=95 // pred_fallthru
          _
        %s1027 = sand.u32 %s57, 1
        %s1028 = scalar_lea.sflag [#allocation28], %s1027
        %s1029 = sand.u32 %s440, 1
        %s1030 = smul.addr %s1029, 1024
        %s1031 = scalar_lea.vmem [#allocation27], %s1030
        // Predicated region
        $region157: #{discriminator_forward.8} parent=95 // pred_check
          %p1032 = pneg %p453
        $region158: #{discriminator_forward.8} parent=95 // pred_check_branch
          %1034 = sbr.rel (%p1032) target = $region160
        $region159: #{discriminator_forward.8} parent=95 // pred_region
          %1035 = dma.done %s1028, 16384
        $region160: #{discriminator_forward.8} parent=95 // pred_fallthru
          _
        %s1036 = sand.u32 %s57, 1
        %s1037 = scalar_lea.sflag [#allocation28], %s1036
        %s1038 = sand.u32 %s466, 1
        %s1039 = scalar_lea.vmem [#allocation29], %s1038
        // Predicated region
        $region161: #{discriminator_forward.8} parent=95 // pred_check
          %p1040 = pneg %p479
        $region162: #{discriminator_forward.8} parent=95 // pred_check_branch
          %1042 = sbr.rel (%p1040) target = $region164
        $region163: #{discriminator_forward.8} parent=95 // pred_region
          %1043 = dma.done %s1037, 16
        $region164: #{discriminator_forward.8} parent=95 // pred_fallthru
          _
        %s1044 = sand.u32 %s57, 1
        %s1045 = scalar_lea.sflag [#allocation31], %s1044
        %s1046 = sand.u32 %s492, 1
        %s1047 = scalar_lea.vmem [#allocation30], %s1046
        // Predicated region
        $region165: #{discriminator_forward.8} parent=95 // pred_check
          %p1048 = pneg %p505
        $region166: #{discriminator_forward.8} parent=95 // pred_check_branch
          %1050 = sbr.rel (%p1048) target = $region168
        $region167: #{discriminator_forward.8} parent=95 // pred_region
          %1051 = dma.done %s1045, 16
        $region168: #{discriminator_forward.8} parent=95 // pred_fallthru
          _
        %s1052 = sand.u32 %s57, 1
        %s1053 = scalar_lea.sflag [#allocation31], %s1052
        %s1054 = sand.u32 %s518, 1
        %s1055 = scalar_lea.vmem [#allocation32], %s1054
        // Predicated region
        $region169: #{discriminator_forward.8} parent=95 // pred_check
          %p1056 = pneg %p531
        $region170: #{discriminator_forward.8} parent=95 // pred_check_branch
          %1058 = sbr.rel (%p1056) target = $region172
        $region171: #{discriminator_forward.8} parent=95 // pred_region
          %1059 = dma.done %s1053, 16
        $region172: #{discriminator_forward.8} parent=95 // pred_fallthru
          _
        %p1060 = pneg %p73
        %p1061 = pneg %p70
        %p1062 = pneg %p94
        %p1063 = pneg %p91
        %p1064 = pneg %p115
        %p1065 = pneg %p112
        %s1066 = sand.u32 %s57, 1
        %s1067 = scalar_lea.sflag [#allocation10], %s1066
        %s1068 = sand.u32 %s128, 1
        %s1069 = smul.addr %s1068, 8
        %s1070 = scalar_lea.vmem [#allocation9], %s1069
        %p1071 = pneg %p141
        %p1072 = pneg %p138
        %s1073 = sand.u32 %s57, 1
        %s1074 = scalar_lea.sflag [#allocation10], %s1073
        %s1075 = sand.u32 %s154, 1
        %s1076 = smul.addr %s1075, 8
        %s1077 = scalar_lea.vmem [#allocation11], %s1076
        %p1078 = pneg %p167
        %p1079 = pneg %p164
        %s1080 = sand.u32 %s57, 1
        %s1081 = scalar_lea.sflag [#allocation13], %s1080
        %s1082 = sand.u32 %s180, 1
        %s1083 = smul.addr %s1082, 8
        %s1084 = scalar_lea.vmem [#allocation12], %s1083
        %p1085 = pneg %p193
        %p1086 = pneg %p190
        %s1087 = sand.u32 %s57, 1
        %s1088 = scalar_lea.sflag [#allocation13], %s1087
        %s1089 = sand.u32 %s206, 1
        %s1090 = scalar_lea.vmem [#allocation14], %s1089
        %p1091 = pneg %p219
        %p1092 = pneg %p216
        %s1093 = sand.u32 %s57, 1
        %s1094 = scalar_lea.sflag [#allocation16], %s1093
        %s1095 = sand.u32 %s232, 1
        %s1096 = scalar_lea.vmem [#allocation15], %s1095
        %p1097 = pneg %p245
        %p1098 = pneg %p242
        %s1099 = sand.u32 %s57, 1
        %s1100 = scalar_lea.sflag [#allocation16], %s1099
        %s1101 = sand.u32 %s258, 1
        %s1102 = scalar_lea.vmem [#allocation17], %s1101
        %p1103 = pneg %p271
        %p1104 = pneg %p268
        %s1105 = sand.u32 %s57, 1
        %s1106 = scalar_lea.sflag [#allocation19], %s1105
        %s1107 = sand.u32 %s284, 1
        %s1108 = smul.addr %s1107, 8
        %s1109 = scalar_lea.vmem [#allocation18], %s1108
        %p1110 = pneg %p297
        %p1111 = pneg %p294
        %s1112 = sand.u32 %s57, 1
        %s1113 = scalar_lea.sflag [#allocation19], %s1112
        %s1114 = sand.u32 %s310, 1
        %s1115 = scalar_lea.vmem [#allocation20], %s1114
        %p1116 = pneg %p323
        %p1117 = pneg %p320
        %s1118 = sand.u32 %s57, 1
        %s1119 = scalar_lea.sflag [#allocation22], %s1118
        %s1120 = sand.u32 %s336, 1
        %s1121 = scalar_lea.vmem [#allocation21], %s1120
        %p1122 = pneg %p349
        %p1123 = pneg %p346
        %s1124 = sand.u32 %s57, 1
        %s1125 = scalar_lea.sflag [#allocation22], %s1124
        %s1126 = sand.u32 %s362, 1
        %s1127 = scalar_lea.vmem [#allocation23], %s1126
        %p1128 = pneg %p375
        %p1129 = pneg %p372
        %s1130 = sand.u32 %s57, 1
        %s1131 = scalar_lea.sflag [#allocation25], %s1130
        %s1132 = sand.u32 %s388, 1
        %s1133 = smul.addr %s1132, 128
        %s1134 = scalar_lea.vmem [#allocation24], %s1133
        %p1135 = pneg %p401
        %p1136 = pneg %p398
        %s1137 = sand.u32 %s57, 1
        %s1138 = scalar_lea.sflag [#allocation25], %s1137
        %s1139 = sand.u32 %s414, 1
        %s1140 = smul.addr %s1139, 16
        %s1141 = scalar_lea.vmem [#allocation26], %s1140
        %p1142 = pneg %p427
        %p1143 = pneg %p424
        %s1144 = sand.u32 %s57, 1
        %s1145 = scalar_lea.sflag [#allocation28], %s1144
        %s1146 = sand.u32 %s440, 1
        %s1147 = smul.addr %s1146, 1024
        %s1148 = scalar_lea.vmem [#allocation27], %s1147
        %p1149 = pneg %p453
        %p1150 = pneg %p450
        %s1151 = sand.u32 %s57, 1
        %s1152 = scalar_lea.sflag [#allocation28], %s1151
        %s1153 = sand.u32 %s466, 1
        %s1154 = scalar_lea.vmem [#allocation29], %s1153
        %p1155 = pneg %p479
        %p1156 = pneg %p476
        %s1157 = sand.u32 %s57, 1
        %s1158 = scalar_lea.sflag [#allocation31], %s1157
        %s1159 = sand.u32 %s492, 1
        %s1160 = scalar_lea.vmem [#allocation30], %s1159
        %p1161 = pneg %p505
        %p1162 = pneg %p502
        %s1163 = sand.u32 %s57, 1
        %s1164 = scalar_lea.sflag [#allocation31], %s1163
        %s1165 = sand.u32 %s518, 1
        %s1166 = scalar_lea.vmem [#allocation32], %s1165
        %p1167 = pneg %p531
        %p1168 = pneg %p528
        %p1169 = pneg %p552
        %p1170 = pneg %p549
        %p1172 = scmp.eq.s32.totalorder %s57, 0
        // Predicated region
        $region173: #{discriminator_forward.8} parent=95 // pred_check
          %p1173 = pneg %p1172
        $region174: #{discriminator_forward.8} parent=95 // pred_check_branch
          %1175 = sbr.rel (%p1173) target = $region176
        $region175: #{discriminator_forward.8} parent=95 // pred_region
          %v1176 = vld [vmem:[#allocation3] sm:$0xff]
          %v1177 = vld [vmem:[#allocation3 + $0x8] sm:$0xff]
          %v1178 = vld [vmem:[#allocation3 + $0x10] sm:$0xff]
          %v1179 = vld [vmem:[#allocation3 + $0x18] sm:$0xff]
          %v1180 = vld [vmem:[#allocation3 + $0x20] sm:$0xff]
          %v1181 = vld [vmem:[#allocation3 + $0x28] sm:$0xff]
          %v1182 = vld [vmem:[#allocation3 + $0x30] sm:$0xff]
          %v1183 = vld [vmem:[#allocation3 + $0x38] sm:$0xff]
          %v1184 = vld [vmem:[#allocation3 + $0x40] sm:$0xff]
          %v1185 = vld [vmem:[#allocation3 + $0x48] sm:$0xff]
          %v1186 = vld [vmem:[#allocation3 + $0x50] sm:$0xff]
          %v1187 = vld [vmem:[#allocation3 + $0x58] sm:$0xff]
          %vm1188 = vcmask 130048
          %1189 = vst.msk [vmem:[#allocation2] sm:$0xff] %vm1188, %v1176
          %1190 = vst.msk [vmem:[#allocation2 + $0x8] sm:$0xff] %vm1188, %v1177
          %1191 = vst.msk [vmem:[#allocation2 + $0x10] sm:$0xff] %vm1188, %v1178
          %1192 = vst.msk [vmem:[#allocation2 + $0x18] sm:$0xff] %vm1188, %v1179
          %1193 = vst.msk [vmem:[#allocation2 + $0x20] sm:$0xff] %vm1188, %v1180
          %1194 = vst.msk [vmem:[#allocation2 + $0x28] sm:$0xff] %vm1188, %v1181
          %1195 = vst.msk [vmem:[#allocation2 + $0x30] sm:$0xff] %vm1188, %v1182
          %1196 = vst.msk [vmem:[#allocation2 + $0x38] sm:$0xff] %vm1188, %v1183
          %1197 = vst.msk [vmem:[#allocation2 + $0x40] sm:$0xff] %vm1188, %v1184
          %1198 = vst.msk [vmem:[#allocation2 + $0x48] sm:$0xff] %vm1188, %v1185
          %1199 = vst.msk [vmem:[#allocation2 + $0x50] sm:$0xff] %vm1188, %v1186
          %1200 = vst.msk [vmem:[#allocation2 + $0x58] sm:$0xff] %vm1188, %v1187
        $region176: #{discriminator_forward.8} parent=95 // pred_fallthru
          _
        %v1201 = vld [vmem:[#allocation2] sm:$0xff]
        %v1202 = vld [vmem:[#allocation2 + $0x8] sm:$0xff]
        %v1203 = vld [vmem:[#allocation2 + $0x10] sm:$0xff]
        %v1204 = vld [vmem:[#allocation2 + $0x18] sm:$0xff]
        %v1205 = vld [vmem:[#allocation2 + $0x20] sm:$0xff]
        %v1206 = vld [vmem:[#allocation2 + $0x28] sm:$0xff]
        %v1207 = vld [vmem:[#allocation2 + $0x30] sm:$0xff]
        %v1208 = vld [vmem:[#allocation2 + $0x38] sm:$0xff]
        %v1209 = vld [vmem:[#allocation2 + $0x40] sm:$0xff]
        %v1210 = vld [vmem:[#allocation2 + $0x48] sm:$0xff]
        %v1211 = vld [vmem:[#allocation2 + $0x50] sm:$0xff]
        %v1212 = vld [vmem:[#allocation2 + $0x58] sm:$0xff]
        %v1213 = vpack.c.bf16 %v1202, %v1201
        %v1214 = vpack.c.bf16 %v1204, %v1203
        %v1215 = vpack.c.bf16 %v1206, %v1205
        %v1216 = vpack.c.bf16 %v1208, %v1207
        %v1217 = vpack.c.bf16 %v1210, %v1209
        %v1218 = vpack.c.bf16 %v1212, %v1211
        %v1219 = vld [vmem:[%s929] sm:$0xf]
        %v1220 = vld [vmem:[%s929 + $0x4] sm:$0xf]
        %v1221 = vld [vmem:[%s955] sm:$0x1]
        %v1223 = vlaneseq
        %v1224 = vshrl.u32 %v1223, 7
        %v1225 = vsub.s32 0, %v1224
        %v1226 = vrot.slane %v1221, %v1225
        %v1230 = vunpack.c.l.b16 %v1219
        %v1231 = vunpack.c.l.b16 %v1220
        %v1232 = vpack.c.b16 %v1231, %v1230
        %vm1234 = vcmask 130048
        %v1236 = vsel %vm1234, %v1213, 0
        %v1239 = vsel %vm1234, %v1214, 0
        %v1242 = vsel %vm1234, %v1215, 0
        %v1245 = vsel %vm1234, %v1216, 0
        %v1248 = vsel %vm1234, %v1217, 0
        %v1251 = vsel %vm1234, %v1218, 0
        %1253 = vmatprep.subr.bf16.mxu0 0
        %1254 = vmatpush1.bf16.msra.mxu0 %v1232
        %1255 = vmatprep.subr.bf16.mxu0 0
        %1256 = vmatpush1.bf16.msra.mxu0 0
        %1257 = vmatprep.subr.bf16.mxu0 0
        %1258 = vmatpush1.bf16.msra.mxu0 0
        %1259 = vmatprep.subr.bf16.mxu0 0
        %1260 = vmatpush1.bf16.msra.mxu0 0
        %1261 = vmatprep.subr.bf16.mxu0 0
        %1262 = vmatpush1.bf16.msra.mxu0 0
        %1263 = vmatprep.subr.bf16.mxu0 0
        %1264 = vmatpush1.bf16.msra.mxu0 0
        %1265 = vmatprep.subr.bf16.mxu0 0
        %1266 = vmatpush1.bf16.msra.mxu0 0
        %1267 = vmatprep.subr.bf16.mxu0 0
        %1268 = vmatpush1.bf16.msra.mxu0 0
        %1269 = vmatprep.subr.bf16.mxu0 0
        %1270 = vmatpush1.bf16.msra.mxu0 0
        %1271 = vmatprep.subr.bf16.mxu0 0
        %1272 = vmatpush1.bf16.msra.mxu0 0
        %1273 = vmatprep.subr.bf16.mxu0 0
        %1274 = vmatpush1.bf16.msra.mxu0 0
        %1275 = vmatprep.subr.bf16.mxu0 0
        %1276 = vmatpush1.bf16.msra.mxu0 0
        %1277 = vmatprep.subr.bf16.mxu0 0
        %1278 = vmatpush1.bf16.msra.mxu0 0
        %1279 = vmatprep.subr.bf16.mxu0 0
        %1280 = vmatpush1.bf16.msra.mxu0 0
        %1281 = vmatprep.subr.bf16.mxu0 0
        %1282 = vmatpush1.bf16.msra.mxu0 0
        %1283 = vmatprep.subr.bf16.mxu0 0
        %1284 = vmatpush1.bf16.msra.mxu0 0
        %1285 = vmatprep.mubr.bf16.mxu0 0
        %1286 = vmatmul.mubr.bf16.gmra.mrb[0].mxu0 %v1236
        %v1287 = vpop.f32.mrb[0].mxu0
        %v1288 = vadd.f32 %v1226, %v1287
        %v1289 = vpop.f32.mrb[0].mxu0
        %v1290 = vpop.f32.mrb[0].mxu0
        %v1291 = vadd.f32 %v1226, %v1290
        %v1292 = vpop.f32.mrb[0].mxu0
        %1293 = vmatprep.mubr.bf16.mxu0 0
        %1294 = vmatmul.mubr.bf16.gmra.mrb[0].mxu0 %v1239
        %v1295 = vpop.f32.mrb[0].mxu0
        %v1296 = vadd.f32 %v1226, %v1295
        %v1297 = vpop.f32.mrb[0].mxu0
        %v1298 = vpop.f32.mrb[0].mxu0
        %v1299 = vadd.f32 %v1226, %v1298
        %v1300 = vpop.f32.mrb[0].mxu0
        %1301 = vmatprep.mubr.bf16.mxu0 0
        %1302 = vmatmul.mubr.bf16.gmra.mrb[0].mxu0 %v1242
        %v1303 = vpop.f32.mrb[0].mxu0
        %v1304 = vadd.f32 %v1226, %v1303
        %v1305 = vpop.f32.mrb[0].mxu0
        %v1306 = vpop.f32.mrb[0].mxu0
        %v1307 = vadd.f32 %v1226, %v1306
        %v1308 = vpop.f32.mrb[0].mxu0
        %1309 = vmatprep.mubr.bf16.mxu0 0
        %1310 = vmatmul.mubr.bf16.gmra.mrb[0].mxu0 %v1245
        %v1311 = vpop.f32.mrb[0].mxu0
        %v1312 = vadd.f32 %v1226, %v1311
        %v1313 = vpop.f32.mrb[0].mxu0
        %v1314 = vpop.f32.mrb[0].mxu0
        %v1315 = vadd.f32 %v1226, %v1314
        %v1316 = vpop.f32.mrb[0].mxu0
        %1317 = vmatprep.mubr.bf16.mxu0 0
        %1318 = vmatmul.mubr.bf16.gmra.mrb[0].mxu0 %v1248
        %v1319 = vpop.f32.mrb[0].mxu0
        %v1320 = vadd.f32 %v1226, %v1319
        %v1321 = vpop.f32.mrb[0].mxu0
        %v1322 = vpop.f32.mrb[0].mxu0
        %v1323 = vadd.f32 %v1226, %v1322
        %v1324 = vpop.f32.mrb[0].mxu0
        %1325 = vmatprep.mubr.bf16.mxu0 0
        %1326 = vmatmul.mubr.bf16.gmra.mrb[0].mxu0 %v1251
        %v1327 = vpop.f32.mrb[0].mxu0
        %v1328 = vadd.f32 %v1226, %v1327
        %v1329 = vpop.f32.mrb[0].mxu0
        %v1330 = vpop.f32.mrb[0].mxu0
        %v1331 = vadd.f32 %v1226, %v1330
        %v1332 = vpop.f32.mrb[0].mxu0
        %1333 = vdwg.mxu0
        %v1334 = vld [vmem:[%s938] sm:$0xf]
        %v1335 = vld [vmem:[%s938 + $0x4] sm:$0xf]
        %v1336 = vld [vmem:[%s963] sm:$0x1]
        %v1338 = vlaneseq
        %v1339 = vshrl.u32 %v1338, 7
        %v1340 = vsub.s32 0, %v1339
        %v1341 = vrot.slane %v1336, %v1340
        %v1345 = vunpack.c.l.b16 %v1334
        %v1346 = vunpack.c.l.b16 %v1335
        %v1347 = vpack.c.b16 %v1346, %v1345
        %1349 = vmatprep.subr.bf16.mxu0 0
        %1350 = vmatpush1.bf16.msra.mxu0 %v1347
        %1351 = vmatprep.subr.bf16.mxu0 0
        %1352 = vmatpush1.bf16.msra.mxu0 0
        %1353 = vmatprep.subr.bf16.mxu0 0
        %1354 = vmatpush1.bf16.msra.mxu0 0
        %1355 = vmatprep.subr.bf16.mxu0 0
        %1356 = vmatpush1.bf16.msra.mxu0 0
        %1357 = vmatprep.subr.bf16.mxu0 0
        %1358 = vmatpush1.bf16.msra.mxu0 0
        %1359 = vmatprep.subr.bf16.mxu0 0
        %1360 = vmatpush1.bf16.msra.mxu0 0
        %1361 = vmatprep.subr.bf16.mxu0 0
        %1362 = vmatpush1.bf16.msra.mxu0 0
        %1363 = vmatprep.subr.bf16.mxu0 0
        %1364 = vmatpush1.bf16.msra.mxu0 0
        %1365 = vmatprep.subr.bf16.mxu0 0
        %1366 = vmatpush1.bf16.msra.mxu0 0
        %1367 = vmatprep.subr.bf16.mxu0 0
        %1368 = vmatpush1.bf16.msra.mxu0 0
        %1369 = vmatprep.subr.bf16.mxu0 0
        %1370 = vmatpush1.bf16.msra.mxu0 0
        %1371 = vmatprep.subr.bf16.mxu0 0
        %1372 = vmatpush1.bf16.msra.mxu0 0
        %1373 = vmatprep.subr.bf16.mxu0 0
        %1374 = vmatpush1.bf16.msra.mxu0 0
        %1375 = vmatprep.subr.bf16.mxu0 0
        %1376 = vmatpush1.bf16.msra.mxu0 0
        %1377 = vmatprep.subr.bf16.mxu0 0
        %1378 = vmatpush1.bf16.msra.mxu0 0
        %1379 = vmatprep.subr.bf16.mxu0 0
        %1380 = vmatpush1.bf16.msra.mxu0 0
        %1381 = vmatprep.mubr.bf16.mxu0 0
        %1382 = vmatmul.mubr.bf16.gmra.mrb[0].mxu0 %v1236
        %v1383 = vpop.f32.mrb[0].mxu0
        %v1384 = vadd.f32 %v1341, %v1383
        %v1385 = vpop.f32.mrb[0].mxu0
        %v1386 = vpop.f32.mrb[0].mxu0
        %v1387 = vadd.f32 %v1341, %v1386
        %v1388 = vpop.f32.mrb[0].mxu0
        %1389 = vmatprep.mubr.bf16.mxu0 0
        %1390 = vmatmul.mubr.bf16.gmra.mrb[0].mxu0 %v1239
        %v1391 = vpop.f32.mrb[0].mxu0
        %v1392 = vadd.f32 %v1341, %v1391
        %v1393 = vpop.f32.mrb[0].mxu0
        %v1394 = vpop.f32.mrb[0].mxu0
        %v1395 = vadd.f32 %v1341, %v1394
        %v1396 = vpop.f32.mrb[0].mxu0
        %1397 = vmatprep.mubr.bf16.mxu0 0
        %1398 = vmatmul.mubr.bf16.gmra.mrb[0].mxu0 %v1242
        %v1399 = vpop.f32.mrb[0].mxu0
        %v1400 = vadd.f32 %v1341, %v1399
        %v1401 = vpop.f32.mrb[0].mxu0
        %v1402 = vpop.f32.mrb[0].mxu0
        %v1403 = vadd.f32 %v1341, %v1402
        %v1404 = vpop.f32.mrb[0].mxu0
        %1405 = vmatprep.mubr.bf16.mxu0 0
        %1406 = vmatmul.mubr.bf16.gmra.mrb[0].mxu0 %v1245
        %v1407 = vpop.f32.mrb[0].mxu0
        %v1408 = vadd.f32 %v1341, %v1407
        %v1409 = vpop.f32.mrb[0].mxu0
        %v1410 = vpop.f32.mrb[0].mxu0
        %v1411 = vadd.f32 %v1341, %v1410
        %v1412 = vpop.f32.mrb[0].mxu0
        %1413 = vmatprep.mubr.bf16.mxu0 0
        %1414 = vmatmul.mubr.bf16.gmra.mrb[0].mxu0 %v1248
        %v1415 = vpop.f32.mrb[0].mxu0
        %v1416 = vadd.f32 %v1341, %v1415
        %v1417 = vpop.f32.mrb[0].mxu0
        %v1418 = vpop.f32.mrb[0].mxu0
        %v1419 = vadd.f32 %v1341, %v1418
        %v1420 = vpop.f32.mrb[0].mxu0
        %1421 = vmatprep.mubr.bf16.mxu0 0
        %1422 = vmatmul.mubr.bf16.gmra.mrb[0].mxu0 %v1251
        %v1423 = vpop.f32.mrb[0].mxu0
        %v1424 = vadd.f32 %v1341, %v1423
        %v1425 = vpop.f32.mrb[0].mxu0
        %v1426 = vpop.f32.mrb[0].mxu0
        %v1427 = vadd.f32 %v1341, %v1426
        %v1428 = vpop.f32.mrb[0].mxu0
        %1429 = vdwg.mxu0
        %v1430 = vld [vmem:[%s947] sm:$0xf]
        %v1431 = vld [vmem:[%s947 + $0x4] sm:$0xf]
        %v1432 = vld [vmem:[%s971] sm:$0x1]
        %v1434 = vlaneseq
        %v1435 = vshrl.u32 %v1434, 7
        %v1436 = vsub.s32 0, %v1435
        %v1437 = vrot.slane %v1432, %v1436
        %v1441 = vunpack.c.l.b16 %v1430
        %v1442 = vunpack.c.l.b16 %v1431
        %v1443 = vpack.c.b16 %v1442, %v1441
        %1445 = vmatprep.subr.bf16.mxu0 0
        %1446 = vmatpush1.bf16.msra.mxu0 %v1443
        %1447 = vmatprep.subr.bf16.mxu0 0
        %1448 = vmatpush1.bf16.msra.mxu0 0
        %1449 = vmatprep.subr.bf16.mxu0 0
        %1450 = vmatpush1.bf16.msra.mxu0 0
        %1451 = vmatprep.subr.bf16.mxu0 0
        %1452 = vmatpush1.bf16.msra.mxu0 0
        %1453 = vmatprep.subr.bf16.mxu0 0
        %1454 = vmatpush1.bf16.msra.mxu0 0
        %1455 = vmatprep.subr.bf16.mxu0 0
        %1456 = vmatpush1.bf16.msra.mxu0 0
        %1457 = vmatprep.subr.bf16.mxu0 0
        %1458 = vmatpush1.bf16.msra.mxu0 0
        %1459 = vmatprep.subr.bf16.mxu0 0
        %1460 = vmatpush1.bf16.msra.mxu0 0
        %1461 = vmatprep.subr.bf16.mxu0 0
        %1462 = vmatpush1.bf16.msra.mxu0 0
        %1463 = vmatprep.subr.bf16.mxu0 0
        %1464 = vmatpush1.bf16.msra.mxu0 0
        %1465 = vmatprep.subr.bf16.mxu0 0
        %1466 = vmatpush1.bf16.msra.mxu0 0
        %1467 = vmatprep.subr.bf16.mxu0 0
        %1468 = vmatpush1.bf16.msra.mxu0 0
        %1469 = vmatprep.subr.bf16.mxu0 0
        %1470 = vmatpush1.bf16.msra.mxu0 0
        %1471 = vmatprep.subr.bf16.mxu0 0
        %1472 = vmatpush1.bf16.msra.mxu0 0
        %1473 = vmatprep.subr.bf16.mxu0 0
        %1474 = vmatpush1.bf16.msra.mxu0 0
        %1475 = vmatprep.subr.bf16.mxu0 0
        %1476 = vmatpush1.bf16.msra.mxu0 0
        %1477 = vmatprep.mubr.bf16.mxu0 0
        %1478 = vmatmul.mubr.bf16.gmra.mrb[0].mxu0 %v1236
        %v1479 = vpop.f32.mrb[0].mxu0
        %v1480 = vadd.f32 %v1437, %v1479
        %v1481 = vpop.f32.mrb[0].mxu0
        %v1482 = vpop.f32.mrb[0].mxu0
        %v1483 = vadd.f32 %v1437, %v1482
        %v1484 = vpop.f32.mrb[0].mxu0
        %1485 = vmatprep.mubr.bf16.mxu0 0
        %1486 = vmatmul.mubr.bf16.gmra.mrb[0].mxu0 %v1239
        %v1487 = vpop.f32.mrb[0].mxu0
        %v1488 = vadd.f32 %v1437, %v1487
        %v1489 = vpop.f32.mrb[0].mxu0
        %v1490 = vpop.f32.mrb[0].mxu0
        %v1491 = vadd.f32 %v1437, %v1490
        %v1492 = vpop.f32.mrb[0].mxu0
        %1493 = vmatprep.mubr.bf16.mxu0 0
        %1494 = vmatmul.mubr.bf16.gmra.mrb[0].mxu0 %v1242
        %v1495 = vpop.f32.mrb[0].mxu0
        %v1496 = vadd.f32 %v1437, %v1495
        %v1497 = vpop.f32.mrb[0].mxu0
        %v1498 = vpop.f32.mrb[0].mxu0
        %v1499 = vadd.f32 %v1437, %v1498
        %v1500 = vpop.f32.mrb[0].mxu0
        %1501 = vmatprep.mubr.bf16.mxu0 0
        %1502 = vmatmul.mubr.bf16.gmra.mrb[0].mxu0 %v1245
        %v1503 = vpop.f32.mrb[0].mxu0
        %v1504 = vadd.f32 %v1437, %v1503
        %v1505 = vpop.f32.mrb[0].mxu0
        %v1506 = vpop.f32.mrb[0].mxu0
        %v1507 = vadd.f32 %v1437, %v1506
        %v1508 = vpop.f32.mrb[0].mxu0
        %1509 = vmatprep.mubr.bf16.mxu0 0
        %1510 = vmatmul.mubr.bf16.gmra.mrb[0].mxu0 %v1248
        %v1511 = vpop.f32.mrb[0].mxu0
        %v1512 = vadd.f32 %v1437, %v1511
        %v1513 = vpop.f32.mrb[0].mxu0
        %v1514 = vpop.f32.mrb[0].mxu0
        %v1515 = vadd.f32 %v1437, %v1514
        %v1516 = vpop.f32.mrb[0].mxu0
        %1517 = vmatprep.mubr.bf16.mxu0 0
        %1518 = vmatmul.mubr.bf16.gmra.mrb[0].mxu0 %v1251
        %v1519 = vpop.f32.mrb[0].mxu0
        %v1520 = vadd.f32 %v1437, %v1519
        %v1521 = vpop.f32.mrb[0].mxu0
        %v1522 = vpop.f32.mrb[0].mxu0
        %v1523 = vadd.f32 %v1437, %v1522
        %v1524 = vpop.f32.mrb[0].mxu0
        %1525 = vdwg.mxu0
        %v1526 = vmul.f32 %v1288, 0.70710677
        %v1527 = vmul.f32 %v1291, 0.70710677
        %v1528 = vmul.f32 %v1296, 0.70710677
        %v1529 = vmul.f32 %v1299, 0.70710677
        %v1530 = vmul.f32 %v1304, 0.70710677
        %v1531 = vmul.f32 %v1307, 0.70710677
        %v1532 = vmul.f32 %v1312, 0.70710677
        %v1533 = vmul.f32 %v1315, 0.70710677
        %v1534 = vmul.f32 %v1320, 0.70710677
        %v1535 = vmul.f32 %v1323, 0.70710677
        %v1536 = vmul.f32 %v1328, 0.70710677
        %v1537 = vmul.f32 %v1331, 0.70710677
        %v1538 = vld [vmem:[#allocation6] sm:$0xff]
        %v1539 = vld [vmem:[#allocation6 + $0x8] sm:$0xff]
        %v1540 = vld [vmem:[#allocation8] sm:$0xff]
        %v1541 = vmul.f32 %v1526, %v1384
        %v1542 = vmul.f32 %v1527, %v1387
        %v1543 = vmul.f32 %v1528, %v1392
        %v1544 = vmul.f32 %v1529, %v1395
        %v1545 = vmul.f32 %v1530, %v1400
        %v1546 = vmul.f32 %v1531, %v1403
        %v1548 = vsel %vm1234, %v1541, 0
        %v1551 = vsel %vm1234, %v1542, 0
        %v1554 = vsel %vm1234, %v1543, 0
        %v1557 = vsel %vm1234, %v1544, 0
        %v1560 = vsel %vm1234, %v1545, 0
        %v1563 = vsel %vm1234, %v1546, 0
        %1565 = vmatprep.subr.mxu0 0.0
        %1566 = vmatpush1.msra.mxu0 %v1538
        %1567 = vmatprep.subr.mxu0 0.0
        %1568 = vmatpush1.msra.mxu0 %v1539
        %1569 = vmatprep.subr.mxu0 0.0
        %1570 = vmatpush1.msra.mxu0 0.0
        %1571 = vmatprep.subr.mxu0 0.0
        %1572 = vmatpush1.msra.mxu0 0.0
        %1573 = vmatprep.subr.mxu0 0.0
        %1574 = vmatpush1.msra.mxu0 0.0
        %1575 = vmatprep.subr.mxu0 0.0
        %1576 = vmatpush1.msra.mxu0 0.0
        %1577 = vmatprep.subr.mxu0 0.0
        %1578 = vmatpush1.msra.mxu0 0.0
        %1579 = vmatprep.subr.mxu0 0.0
        %1580 = vmatpush1.msra.mxu0 0.0
        %1581 = vmatprep.subr.mxu0 0.0
        %1582 = vmatpush1.msra.mxu0 0.0
        %1583 = vmatprep.subr.mxu0 0.0
        %1584 = vmatpush1.msra.mxu0 0.0
        %1585 = vmatprep.subr.mxu0 0.0
        %1586 = vmatpush1.msra.mxu0 0.0
        %1587 = vmatprep.subr.mxu0 0.0
        %1588 = vmatpush1.msra.mxu0 0.0
        %1589 = vmatprep.subr.mxu0 0.0
        %1590 = vmatpush1.msra.mxu0 0.0
        %1591 = vmatprep.subr.mxu0 0.0
        %1592 = vmatpush1.msra.mxu0 0.0
        %1593 = vmatprep.subr.mxu0 0.0
        %1594 = vmatpush1.msra.mxu0 0.0
        %1595 = vmatprep.subr.mxu0 0.0
        %1596 = vmatpush1.msra.mxu0 0.0
        %1597 = vmatprep.subr.mxu0 0.0
        %1598 = vmatpush1.msra.mxu0 0.0
        %1599 = vmatprep.subr.mxu0 0.0
        %1600 = vmatpush1.msra.mxu0 0.0
        %1601 = vmatprep.subr.mxu0 0.0
        %1602 = vmatpush1.msra.mxu0 0.0
        %1603 = vmatprep.subr.mxu0 0.0
        %1604 = vmatpush1.msra.mxu0 0.0
        %1605 = vmatprep.subr.mxu0 0.0
        %1606 = vmatpush1.msra.mxu0 0.0
        %1607 = vmatprep.subr.mxu0 0.0
        %1608 = vmatpush1.msra.mxu0 0.0
        %1609 = vmatprep.subr.mxu0 0.0
        %1610 = vmatpush1.msra.mxu0 0.0
        %1611 = vmatprep.subr.mxu0 0.0
        %1612 = vmatpush1.msra.mxu0 0.0
        %1613 = vmatprep.subr.mxu0 0.0
        %1614 = vmatpush1.msra.mxu0 0.0
        %1615 = vmatprep.subr.mxu0 0.0
        %1616 = vmatpush1.msra.mxu0 0.0
        %1617 = vmatprep.subr.mxu0 0.0
        %1618 = vmatpush1.msra.mxu0 0.0
        %1619 = vmatprep.subr.mxu0 0.0
        %1620 = vmatpush1.msra.mxu0 0.0
        %1621 = vmatprep.subr.mxu0 0.0
        %1622 = vmatpush1.msra.mxu0 0.0
        %1623 = vmatprep.subr.mxu0 0.0
        %1624 = vmatpush1.msra.mxu0 0.0
        %1625 = vmatprep.subr.mxu0 0.0
        %1626 = vmatpush1.msra.mxu0 0.0
        %1627 = vmatprep.subr.mxu0 0.0
        %1628 = vmatpush1.msra.mxu0 0.0
        %1629 = vmatprep.mubr.f32.mxu0 0.0
        %1630 = vmatmul.mubr.f32.gmra.mrb[0].mxu0 %v1548
        %v1631 = vpop.f32.mrb[0].mxu0
        %v1632 = vadd.f32 0.0, %v1631
        %v1633 = vpop.f32.mrb[0].mxu0
        %1634 = vmatprep.mubr.f32.mxu0 0.0
        %1635 = vmatmul.mubr.f32.gmra.mrb[0].mxu0 %v1551
        %v1636 = vpop.f32.mrb[0].mxu0
        %v1637 = vadd.f32 0.0, %v1636
        %v1638 = vpop.f32.mrb[0].mxu0
        %1639 = vmatprep.mubr.f32.mxu0 0.0
        %1640 = vmatmul.mubr.f32.gmra.mrb[0].mxu0 %v1554
        %v1641 = vpop.f32.mrb[0].mxu0
        %v1642 = vadd.f32 0.0, %v1641
        %v1643 = vpop.f32.mrb[0].mxu0
        %1644 = vmatprep.mubr.f32.mxu0 0.0
        %1645 = vmatmul.mubr.f32.gmra.mrb[0].mxu0 %v1557
        %v1646 = vpop.f32.mrb[0].mxu0
        %v1647 = vadd.f32 0.0, %v1646
        %v1648 = vpop.f32.mrb[0].mxu0
        %1649 = vmatprep.mubr.f32.mxu0 0.0
        %1650 = vmatmul.mubr.f32.gmra.mrb[0].mxu0 %v1560
        %v1651 = vpop.f32.mrb[0].mxu0
        %v1652 = vadd.f32 0.0, %v1651
        %v1653 = vpop.f32.mrb[0].mxu0
        %1654 = vmatprep.mubr.f32.mxu0 0.0
        %1655 = vmatmul.mubr.f32.gmra.mrb[0].mxu0 %v1563
        %v1656 = vpop.f32.mrb[0].mxu0
        %v1657 = vadd.f32 0.0, %v1656
        %v1658 = vpop.f32.mrb[0].mxu0
        %1659 = vdwg.mxu0
        %v1660 = vmul.f32 %v1526, %v1408
        %v1661 = vmul.f32 %v1527, %v1411
        %v1662 = vmul.f32 %v1528, %v1416
        %v1663 = vmul.f32 %v1529, %v1419
        %v1664 = vmul.f32 %v1530, %v1424
        %v1665 = vmul.f32 %v1531, %v1427
        %v1667 = vsel %vm1234, %v1660, 0
        %v1670 = vsel %vm1234, %v1661, 0
        %v1673 = vsel %vm1234, %v1662, 0
        %v1676 = vsel %vm1234, %v1663, 0
        %v1679 = vsel %vm1234, %v1664, 0
        %v1682 = vsel %vm1234, %v1665, 0
        %1684 = vmatprep.subr.mxu0 0.0
        %1685 = vmatpush1.msra.mxu0 %v1538
        %1686 = vmatprep.subr.mxu0 0.0
        %1687 = vmatpush1.msra.mxu0 %v1539
        %1688 = vmatprep.subr.mxu0 0.0
        %1689 = vmatpush1.msra.mxu0 0.0
        %1690 = vmatprep.subr.mxu0 0.0
        %1691 = vmatpush1.msra.mxu0 0.0
        %1692 = vmatprep.subr.mxu0 0.0
        %1693 = vmatpush1.msra.mxu0 0.0
        %1694 = vmatprep.subr.mxu0 0.0
        %1695 = vmatpush1.msra.mxu0 0.0
        %1696 = vmatprep.subr.mxu0 0.0
        %1697 = vmatpush1.msra.mxu0 0.0
        %1698 = vmatprep.subr.mxu0 0.0
        %1699 = vmatpush1.msra.mxu0 0.0
        %1700 = vmatprep.subr.mxu0 0.0
        %1701 = vmatpush1.msra.mxu0 0.0
        %1702 = vmatprep.subr.mxu0 0.0
        %1703 = vmatpush1.msra.mxu0 0.0
        %1704 = vmatprep.subr.mxu0 0.0
        %1705 = vmatpush1.msra.mxu0 0.0
        %1706 = vmatprep.subr.mxu0 0.0
        %1707 = vmatpush1.msra.mxu0 0.0
        %1708 = vmatprep.subr.mxu0 0.0
        %1709 = vmatpush1.msra.mxu0 0.0
        %1710 = vmatprep.subr.mxu0 0.0
        %1711 = vmatpush1.msra.mxu0 0.0
        %1712 = vmatprep.subr.mxu0 0.0
        %1713 = vmatpush1.msra.mxu0 0.0
        %1714 = vmatprep.subr.mxu0 0.0
        %1715 = vmatpush1.msra.mxu0 0.0
        %1716 = vmatprep.subr.mxu0 0.0
        %1717 = vmatpush1.msra.mxu0 0.0
        %1718 = vmatprep.subr.mxu0 0.0
        %1719 = vmatpush1.msra.mxu0 0.0
        %1720 = vmatprep.subr.mxu0 0.0
        %1721 = vmatpush1.msra.mxu0 0.0
        %1722 = vmatprep.subr.mxu0 0.0
        %1723 = vmatpush1.msra.mxu0 0.0
        %1724 = vmatprep.subr.mxu0 0.0
        %1725 = vmatpush1.msra.mxu0 0.0
        %1726 = vmatprep.subr.mxu0 0.0
        %1727 = vmatpush1.msra.mxu0 0.0
        %1728 = vmatprep.subr.mxu0 0.0
        %1729 = vmatpush1.msra.mxu0 0.0
        %1730 = vmatprep.subr.mxu0 0.0
        %1731 = vmatpush1.msra.mxu0 0.0
        %1732 = vmatprep.subr.mxu0 0.0
        %1733 = vmatpush1.msra.mxu0 0.0
        %1734 = vmatprep.subr.mxu0 0.0
        %1735 = vmatpush1.msra.mxu0 0.0
        %1736 = vmatprep.subr.mxu0 0.0
        %1737 = vmatpush1.msra.mxu0 0.0
        %1738 = vmatprep.subr.mxu0 0.0
        %1739 = vmatpush1.msra.mxu0 0.0
        %1740 = vmatprep.subr.mxu0 0.0
        %1741 = vmatpush1.msra.mxu0 0.0
        %1742 = vmatprep.subr.mxu0 0.0
        %1743 = vmatpush1.msra.mxu0 0.0
        %1744 = vmatprep.subr.mxu0 0.0
        %1745 = vmatpush1.msra.mxu0 0.0
        %1746 = vmatprep.subr.mxu0 0.0
        %1747 = vmatpush1.msra.mxu0 0.0
        %1748 = vmatprep.mubr.f32.mxu0 0.0
        %1749 = vmatmul.mubr.f32.gmra.mrb[0].mxu0 %v1667
        %v1750 = vpop.f32.mrb[0].mxu0
        %v1751 = vadd.f32 0.0, %v1750
        %v1752 = vpop.f32.mrb[0].mxu0
        %1753 = vmatprep.mubr.f32.mxu0 0.0
        %1754 = vmatmul.mubr.f32.gmra.mrb[0].mxu0 %v1670
        %v1755 = vpop.f32.mrb[0].mxu0
        %v1756 = vadd.f32 0.0, %v1755
        %v1757 = vpop.f32.mrb[0].mxu0
        %1758 = vmatprep.mubr.f32.mxu0 0.0
        %1759 = vmatmul.mubr.f32.gmra.mrb[0].mxu0 %v1673
        %v1760 = vpop.f32.mrb[0].mxu0
        %v1761 = vadd.f32 0.0, %v1760
        %v1762 = vpop.f32.mrb[0].mxu0
        %1763 = vmatprep.mubr.f32.mxu0 0.0
        %1764 = vmatmul.mubr.f32.gmra.mrb[0].mxu0 %v1676
        %v1765 = vpop.f32.mrb[0].mxu0
        %v1766 = vadd.f32 0.0, %v1765
        %v1767 = vpop.f32.mrb[0].mxu0
        %1768 = vmatprep.mubr.f32.mxu0 0.0
        %1769 = vmatmul.mubr.f32.gmra.mrb[0].mxu0 %v1679
        %v1770 = vpop.f32.mrb[0].mxu0
        %v1771 = vadd.f32 0.0, %v1770
        %v1772 = vpop.f32.mrb[0].mxu0
        %1773 = vmatprep.mubr.f32.mxu0 0.0
        %1774 = vmatmul.mubr.f32.gmra.mrb[0].mxu0 %v1682
        %v1775 = vpop.f32.mrb[0].mxu0
        %v1776 = vadd.f32 0.0, %v1775
        %v1777 = vpop.f32.mrb[0].mxu0
        %1778 = vdwg.mxu0
        %v1779 = vmax.f32 %v1632, %v1751
        %v1780 = vmax.f32 %v1637, %v1756
        %v1781 = vmax.f32 %v1642, %v1761
        %v1782 = vmax.f32 %v1647, %v1766
        %v1783 = vmax.f32 %v1652, %v1771
        %v1784 = vmax.f32 %v1657, %v1776
        %v1785 = vsub.f32 %v1632, %v1779
        %v1786 = vsub.f32 %v1637, %v1780
        %v1787 = vsub.f32 %v1642, %v1781
        %v1788 = vsub.f32 %v1647, %v1782
        %v1789 = vsub.f32 %v1652, %v1783
        %v1790 = vsub.f32 %v1657, %v1784
        %v1791 = vmul.f32 %v1785, 1.442695
        %v1792 = vpow.pop %v1791
        %v1793 = vmul.f32 %v1786, 1.442695
        %v1794 = vpow.pop %v1793
        %v1795 = vmul.f32 %v1787, 1.442695
        %v1796 = vpow.pop %v1795
        %v1797 = vmul.f32 %v1788, 1.442695
        %v1798 = vpow.pop %v1797
        %v1799 = vmul.f32 %v1789, 1.442695
        %v1800 = vpow.pop %v1799
        %v1801 = vmul.f32 %v1790, 1.442695
        %v1802 = vpow.pop %v1801
        %v1803 = vsub.f32 %v1751, %v1779
        %v1804 = vsub.f32 %v1756, %v1780
        %v1805 = vsub.f32 %v1761, %v1781
        %v1806 = vsub.f32 %v1766, %v1782
        %v1807 = vsub.f32 %v1771, %v1783
        %v1808 = vsub.f32 %v1776, %v1784
        %v1809 = vmul.f32 %v1803, 1.442695
        %v1810 = vpow.pop %v1809
        %v1811 = vmul.f32 %v1804, 1.442695
        %v1812 = vpow.pop %v1811
        %v1813 = vmul.f32 %v1805, 1.442695
        %v1814 = vpow.pop %v1813
        %v1815 = vmul.f32 %v1806, 1.442695
        %v1816 = vpow.pop %v1815
        %v1817 = vmul.f32 %v1807, 1.442695
        %v1818 = vpow.pop %v1817
        %v1819 = vmul.f32 %v1808, 1.442695
        %v1820 = vpow.pop %v1819
        %v1821 = vadd.f32 %v1792, %v1810
        %v1822 = vadd.f32 %v1794, %v1812
        %v1823 = vadd.f32 %v1796, %v1814
        %v1824 = vadd.f32 %v1798, %v1816
        %v1825 = vadd.f32 %v1800, %v1818
        %v1826 = vadd.f32 %v1802, %v1820
        %v1827 = vrcp.pop %v1821
        %v1828 = vmul.f32 1.0, %v1827
        %v1829 = vrcp.pop %v1822
        %v1830 = vmul.f32 1.0, %v1829
        %v1831 = vrcp.pop %v1823
        %v1832 = vmul.f32 1.0, %v1831
        %v1833 = vrcp.pop %v1824
        %v1834 = vmul.f32 1.0, %v1833
        %v1835 = vrcp.pop %v1825
        %v1836 = vmul.f32 1.0, %v1835
        %v1837 = vrcp.pop %v1826
        %v1838 = vmul.f32 1.0, %v1837
        %v1839 = vmul.f32 %v1792, %v1828
        %v1840 = vmul.f32 %v1794, %v1830
        %v1841 = vmul.f32 %v1796, %v1832
        %v1842 = vmul.f32 %v1798, %v1834
        %v1843 = vmul.f32 %v1800, %v1836
        %v1844 = vmul.f32 %v1802, %v1838
        %vm1845 = vcmask 64512
        %v1847 = vsel %vm1845, %v1839, 0
        %v1850 = vsel %vm1845, %v1840, 0
        %v1853 = vsel %vm1845, %v1841, 0
        %v1856 = vsel %vm1845, %v1842, 0
        %v1859 = vsel %vm1845, %v1843, 0
        %v1862 = vsel %vm1845, %v1844, 0
        %1864 = vmatprep.subr.mxu0 0.0
        %1865 = vmatpush1.msra.mxu0 %v1540
        %1866 = vmatprep.subr.mxu0 0.0
        %1867 = vmatpush1.msra.mxu0 0.0
        %1868 = vmatprep.subr.mxu0 0.0
        %1869 = vmatpush1.msra.mxu0 0.0
        %1870 = vmatprep.subr.mxu0 0.0
        %1871 = vmatpush1.msra.mxu0 0.0
        %1872 = vmatprep.subr.mxu0 0.0
        %1873 = vmatpush1.msra.mxu0 0.0
        %1874 = vmatprep.subr.mxu0 0.0
        %1875 = vmatpush1.msra.mxu0 0.0
        %1876 = vmatprep.subr.mxu0 0.0
        %1877 = vmatpush1.msra.mxu0 0.0
        %1878 = vmatprep.subr.mxu0 0.0
        %1879 = vmatpush1.msra.mxu0 0.0
        %1880 = vmatprep.subr.mxu0 0.0
        %1881 = vmatpush1.msra.mxu0 0.0
        %1882 = vmatprep.subr.mxu0 0.0
        %1883 = vmatpush1.msra.mxu0 0.0
        %1884 = vmatprep.subr.mxu0 0.0
        %1885 = vmatpush1.msra.mxu0 0.0
        %1886 = vmatprep.subr.mxu0 0.0
        %1887 = vmatpush1.msra.mxu0 0.0
        %1888 = vmatprep.subr.mxu0 0.0
        %1889 = vmatpush1.msra.mxu0 0.0
        %1890 = vmatprep.subr.mxu0 0.0
        %1891 = vmatpush1.msra.mxu0 0.0
        %1892 = vmatprep.subr.mxu0 0.0
        %1893 = vmatpush1.msra.mxu0 0.0
        %1894 = vmatprep.subr.mxu0 0.0
        %1895 = vmatpush1.msra.mxu0 0.0
        %1896 = vmatprep.subr.mxu0 0.0
        %1897 = vmatpush1.msra.mxu0 0.0
        %1898 = vmatprep.subr.mxu0 0.0
        %1899 = vmatpush1.msra.mxu0 0.0
        %1900 = vmatprep.subr.mxu0 0.0
        %1901 = vmatpush1.msra.mxu0 0.0
        %1902 = vmatprep.subr.mxu0 0.0
        %1903 = vmatpush1.msra.mxu0 0.0
        %1904 = vmatprep.subr.mxu0 0.0
        %1905 = vmatpush1.msra.mxu0 0.0
        %1906 = vmatprep.subr.mxu0 0.0
        %1907 = vmatpush1.msra.mxu0 0.0
        %1908 = vmatprep.subr.mxu0 0.0
        %1909 = vmatpush1.msra.mxu0 0.0
        %1910 = vmatprep.subr.mxu0 0.0
        %1911 = vmatpush1.msra.mxu0 0.0
        %1912 = vmatprep.subr.mxu0 0.0
        %1913 = vmatpush1.msra.mxu0 0.0
        %1914 = vmatprep.subr.mxu0 0.0
        %1915 = vmatpush1.msra.mxu0 0.0
        %1916 = vmatprep.subr.mxu0 0.0
        %1917 = vmatpush1.msra.mxu0 0.0
        %1918 = vmatprep.subr.mxu0 0.0
        %1919 = vmatpush1.msra.mxu0 0.0
        %1920 = vmatprep.subr.mxu0 0.0
        %1921 = vmatpush1.msra.mxu0 0.0
        %1922 = vmatprep.subr.mxu0 0.0
        %1923 = vmatpush1.msra.mxu0 0.0
        %1924 = vmatprep.subr.mxu0 0.0
        %1925 = vmatpush1.msra.mxu0 0.0
        %1926 = vmatprep.subr.mxu0 0.0
        %1927 = vmatpush1.msra.mxu0 0.0
        %1928 = vmatprep.mubr.f32.mxu0 0.0
        %1929 = vmatmul.mubr.f32.gmra.mrb[0].mxu0 %v1847
        %v1930 = vpop.f32.mrb[0].mxu0
        %v1931 = vadd.f32 0.0, %v1930
        %v1932 = vpop.f32.mrb[0].mxu0
        %1933 = vmatprep.mubr.f32.mxu0 0.0
        %1934 = vmatmul.mubr.f32.gmra.mrb[0].mxu0 %v1850
        %v1935 = vpop.f32.mrb[0].mxu0
        %v1936 = vadd.f32 0.0, %v1935
        %v1937 = vpop.f32.mrb[0].mxu0
        %1938 = vmatprep.mubr.f32.mxu0 0.0
        %1939 = vmatmul.mubr.f32.gmra.mrb[0].mxu0 %v1853
        %v1940 = vpop.f32.mrb[0].mxu0
        %v1941 = vadd.f32 0.0, %v1940
        %v1942 = vpop.f32.mrb[0].mxu0
        %1943 = vmatprep.mubr.f32.mxu0 0.0
        %1944 = vmatmul.mubr.f32.gmra.mrb[0].mxu0 %v1856
        %v1945 = vpop.f32.mrb[0].mxu0
        %v1946 = vadd.f32 0.0, %v1945
        %v1947 = vpop.f32.mrb[0].mxu0
        %1948 = vmatprep.mubr.f32.mxu0 0.0
        %1949 = vmatmul.mubr.f32.gmra.mrb[0].mxu0 %v1859
        %v1950 = vpop.f32.mrb[0].mxu0
        %v1951 = vadd.f32 0.0, %v1950
        %v1952 = vpop.f32.mrb[0].mxu0
        %1953 = vmatprep.mubr.f32.mxu0 0.0
        %1954 = vmatmul.mubr.f32.gmra.mrb[0].mxu0 %v1862
        %v1955 = vpop.f32.mrb[0].mxu0
        %v1956 = vadd.f32 0.0, %v1955
        %v1957 = vpop.f32.mrb[0].mxu0
        %1958 = vdwg.mxu0
        %v1959 = vmul.f32 %v1931, %v1480
        %v1960 = vmul.f32 %v1936, %v1483
        %v1961 = vmul.f32 %v1941, %v1488
        %v1962 = vmul.f32 %v1946, %v1491
        %v1963 = vmul.f32 %v1951, %v1496
        %v1964 = vmul.f32 %v1956, %v1499
        %v1965 = vmul.f32 %v1810, %v1828
        %v1966 = vmul.f32 %v1812, %v1830
        %v1967 = vmul.f32 %v1814, %v1832
        %v1968 = vmul.f32 %v1816, %v1834
        %v1969 = vmul.f32 %v1818, %v1836
        %v1970 = vmul.f32 %v1820, %v1838
        %v1972 = vsel %vm1845, %v1965, 0
        %v1975 = vsel %vm1845, %v1966, 0
        %v1978 = vsel %vm1845, %v1967, 0
        %v1981 = vsel %vm1845, %v1968, 0
        %v1984 = vsel %vm1845, %v1969, 0
        %v1987 = vsel %vm1845, %v1970, 0
        %1989 = vmatprep.subr.mxu0 0.0
        %1990 = vmatpush1.msra.mxu0 %v1540
        %1991 = vmatprep.subr.mxu0 0.0
        %1992 = vmatpush1.msra.mxu0 0.0
        %1993 = vmatprep.subr.mxu0 0.0
        %1994 = vmatpush1.msra.mxu0 0.0
        %1995 = vmatprep.subr.mxu0 0.0
        %1996 = vmatpush1.msra.mxu0 0.0
        %1997 = vmatprep.subr.mxu0 0.0
        %1998 = vmatpush1.msra.mxu0 0.0
        %1999 = vmatprep.subr.mxu0 0.0
        %2000 = vmatpush1.msra.mxu0 0.0
        %2001 = vmatprep.subr.mxu0 0.0
        %2002 = vmatpush1.msra.mxu0 0.0
        %2003 = vmatprep.subr.mxu0 0.0
        %2004 = vmatpush1.msra.mxu0 0.0
        %2005 = vmatprep.subr.mxu0 0.0
        %2006 = vmatpush1.msra.mxu0 0.0
        %2007 = vmatprep.subr.mxu0 0.0
        %2008 = vmatpush1.msra.mxu0 0.0
        %2009 = vmatprep.subr.mxu0 0.0
        %2010 = vmatpush1.msra.mxu0 0.0
        %2011 = vmatprep.subr.mxu0 0.0
        %2012 = vmatpush1.msra.mxu0 0.0
        %2013 = vmatprep.subr.mxu0 0.0
        %2014 = vmatpush1.msra.mxu0 0.0
        %2015 = vmatprep.subr.mxu0 0.0
        %2016 = vmatpush1.msra.mxu0 0.0
        %2017 = vmatprep.subr.mxu0 0.0
        %2018 = vmatpush1.msra.mxu0 0.0
        %2019 = vmatprep.subr.mxu0 0.0
        %2020 = vmatpush1.msra.mxu0 0.0
        %2021 = vmatprep.subr.mxu0 0.0
        %2022 = vmatpush1.msra.mxu0 0.0
        %2023 = vmatprep.subr.mxu0 0.0
        %2024 = vmatpush1.msra.mxu0 0.0
        %2025 = vmatprep.subr.mxu0 0.0
        %2026 = vmatpush1.msra.mxu0 0.0
        %2027 = vmatprep.subr.mxu0 0.0
        %2028 = vmatpush1.msra.mxu0 0.0
        %2029 = vmatprep.subr.mxu0 0.0
        %2030 = vmatpush1.msra.mxu0 0.0
        %2031 = vmatprep.subr.mxu0 0.0
        %2032 = vmatpush1.msra.mxu0 0.0
        %2033 = vmatprep.subr.mxu0 0.0
        %2034 = vmatpush1.msra.mxu0 0.0
        %2035 = vmatprep.subr.mxu0 0.0
        %2036 = vmatpush1.msra.mxu0 0.0
        %2037 = vmatprep.subr.mxu0 0.0
        %2038 = vmatpush1.msra.mxu0 0.0
        %2039 = vmatprep.subr.mxu0 0.0
        %2040 = vmatpush1.msra.mxu0 0.0
        %2041 = vmatprep.subr.mxu0 0.0
        %2042 = vmatpush1.msra.mxu0 0.0
        %2043 = vmatprep.subr.mxu0 0.0
        %2044 = vmatpush1.msra.mxu0 0.0
        %2045 = vmatprep.subr.mxu0 0.0
        %2046 = vmatpush1.msra.mxu0 0.0
        %2047 = vmatprep.subr.mxu0 0.0
        %2048 = vmatpush1.msra.mxu0 0.0
        %2049 = vmatprep.subr.mxu0 0.0
        %2050 = vmatpush1.msra.mxu0 0.0
        %2051 = vmatprep.subr.mxu0 0.0
        %2052 = vmatpush1.msra.mxu0 0.0
        %2053 = vmatprep.mubr.f32.mxu0 0.0
        %2054 = vmatmul.mubr.f32.gmra.mrb[0].mxu0 %v1972
        %v2055 = vpop.f32.mrb[0].mxu0
        %v2056 = vadd.f32 0.0, %v2055
        %v2057 = vpop.f32.mrb[0].mxu0
        %2058 = vmatprep.mubr.f32.mxu0 0.0
        %2059 = vmatmul.mubr.f32.gmra.mrb[0].mxu0 %v1975
        %v2060 = vpop.f32.mrb[0].mxu0
        %v2061 = vadd.f32 0.0, %v2060
        %v2062 = vpop.f32.mrb[0].mxu0
        %2063 = vmatprep.mubr.f32.mxu0 0.0
        %2064 = vmatmul.mubr.f32.gmra.mrb[0].mxu0 %v1978
        %v2065 = vpop.f32.mrb[0].mxu0
        %v2066 = vadd.f32 0.0, %v2065
        %v2067 = vpop.f32.mrb[0].mxu0
        %2068 = vmatprep.mubr.f32.mxu0 0.0
        %2069 = vmatmul.mubr.f32.gmra.mrb[0].mxu0 %v1981
        %v2070 = vpop.f32.mrb[0].mxu0
        %v2071 = vadd.f32 0.0, %v2070
        %v2072 = vpop.f32.mrb[0].mxu0
        %2073 = vmatprep.mubr.f32.mxu0 0.0
        %2074 = vmatmul.mubr.f32.gmra.mrb[0].mxu0 %v1984
        %v2075 = vpop.f32.mrb[0].mxu0
        %v2076 = vadd.f32 0.0, %v2075
        %v2077 = vpop.f32.mrb[0].mxu0
        %2078 = vmatprep.mubr.f32.mxu0 0.0
        %2079 = vmatmul.mubr.f32.gmra.mrb[0].mxu0 %v1987
        %v2080 = vpop.f32.mrb[0].mxu0
        %v2081 = vadd.f32 0.0, %v2080
        %v2082 = vpop.f32.mrb[0].mxu0
        %2083 = vdwg.mxu0
        %v2084 = vmul.f32 %v2056, %v1504
        %v2085 = vmul.f32 %v2061, %v1507
        %v2086 = vmul.f32 %v2066, %v1512
        %v2087 = vmul.f32 %v2071, %v1515
        %v2088 = vmul.f32 %v2076, %v1520
        %v2089 = vmul.f32 %v2081, %v1523
        %v2090 = vadd.f32 %v1959, %v2084
        %v2091 = vadd.f32 %v1960, %v2085
        %v2092 = vadd.f32 %v1961, %v2086
        %v2093 = vadd.f32 %v1962, %v2087
        %v2094 = vadd.f32 %v1963, %v2088
        %v2095 = vadd.f32 %v1964, %v2089
        %v2096 = vmul.f32 %v1532, %v1384
        %v2097 = vmul.f32 %v1533, %v1387
        %v2098 = vmul.f32 %v1534, %v1392
        %v2099 = vmul.f32 %v1535, %v1395
        %v2100 = vmul.f32 %v1536, %v1400
        %v2101 = vmul.f32 %v1537, %v1403
        %v2103 = vsel %vm1234, %v2096, 0
        %v2106 = vsel %vm1234, %v2097, 0
        %v2109 = vsel %vm1234, %v2098, 0
        %v2112 = vsel %vm1234, %v2099, 0
        %v2115 = vsel %vm1234, %v2100, 0
        %v2118 = vsel %vm1234, %v2101, 0
        %2120 = vmatprep.subr.mxu0 0.0
        %2121 = vmatpush1.msra.mxu0 %v1538
        %2122 = vmatprep.subr.mxu0 0.0
        %2123 = vmatpush1.msra.mxu0 %v1539
        %2124 = vmatprep.subr.mxu0 0.0
        %2125 = vmatpush1.msra.mxu0 0.0
        %2126 = vmatprep.subr.mxu0 0.0
        %2127 = vmatpush1.msra.mxu0 0.0
        %2128 = vmatprep.subr.mxu0 0.0
        %2129 = vmatpush1.msra.mxu0 0.0
        %2130 = vmatprep.subr.mxu0 0.0
        %2131 = vmatpush1.msra.mxu0 0.0
        %2132 = vmatprep.subr.mxu0 0.0
        %2133 = vmatpush1.msra.mxu0 0.0
        %2134 = vmatprep.subr.mxu0 0.0
        %2135 = vmatpush1.msra.mxu0 0.0
        %2136 = vmatprep.subr.mxu0 0.0
        %2137 = vmatpush1.msra.mxu0 0.0
        %2138 = vmatprep.subr.mxu0 0.0
        %2139 = vmatpush1.msra.mxu0 0.0
        %2140 = vmatprep.subr.mxu0 0.0
        %2141 = vmatpush1.msra.mxu0 0.0
        %2142 = vmatprep.subr.mxu0 0.0
        %2143 = vmatpush1.msra.mxu0 0.0
        %2144 = vmatprep.subr.mxu0 0.0
        %2145 = vmatpush1.msra.mxu0 0.0
        %2146 = vmatprep.subr.mxu0 0.0
        %2147 = vmatpush1.msra.mxu0 0.0
        %2148 = vmatprep.subr.mxu0 0.0
        %2149 = vmatpush1.msra.mxu0 0.0
        %2150 = vmatprep.subr.mxu0 0.0
        %2151 = vmatpush1.msra.mxu0 0.0
        %2152 = vmatprep.subr.mxu0 0.0
        %2153 = vmatpush1.msra.mxu0 0.0
        %2154 = vmatprep.subr.mxu0 0.0
        %2155 = vmatpush1.msra.mxu0 0.0
        %2156 = vmatprep.subr.mxu0 0.0
        %2157 = vmatpush1.msra.mxu0 0.0
        %2158 = vmatprep.subr.mxu0 0.0
        %2159 = vmatpush1.msra.mxu0 0.0
        %2160 = vmatprep.subr.mxu0 0.0
        %2161 = vmatpush1.msra.mxu0 0.0
        %2162 = vmatprep.subr.mxu0 0.0
        %2163 = vmatpush1.msra.mxu0 0.0
        %2164 = vmatprep.subr.mxu0 0.0
        %2165 = vmatpush1.msra.mxu0 0.0
        %2166 = vmatprep.subr.mxu0 0.0
        %2167 = vmatpush1.msra.mxu0 0.0
        %2168 = vmatprep.subr.mxu0 0.0
        %2169 = vmatpush1.msra.mxu0 0.0
        %2170 = vmatprep.subr.mxu0 0.0
        %2171 = vmatpush1.msra.mxu0 0.0
        %2172 = vmatprep.subr.mxu0 0.0
        %2173 = vmatpush1.msra.mxu0 0.0
        %2174 = vmatprep.subr.mxu0 0.0
        %2175 = vmatpush1.msra.mxu0 0.0
        %2176 = vmatprep.subr.mxu0 0.0
        %2177 = vmatpush1.msra.mxu0 0.0
        %2178 = vmatprep.subr.mxu0 0.0
        %2179 = vmatpush1.msra.mxu0 0.0
        %2180 = vmatprep.subr.mxu0 0.0
        %2181 = vmatpush1.msra.mxu0 0.0
        %2182 = vmatprep.subr.mxu0 0.0
        %2183 = vmatpush1.msra.mxu0 0.0
        %2184 = vmatprep.mubr.f32.mxu0 0.0
        %2185 = vmatmul.mubr.f32.gmra.mrb[0].mxu0 %v2103
        %v2186 = vpop.f32.mrb[0].mxu0
        %v2187 = vadd.f32 0.0, %v2186
        %v2188 = vpop.f32.mrb[0].mxu0
        %2189 = vmatprep.mubr.f32.mxu0 0.0
        %2190 = vmatmul.mubr.f32.gmra.mrb[0].mxu0 %v2106
        %v2191 = vpop.f32.mrb[0].mxu0
        %v2192 = vadd.f32 0.0, %v2191
        %v2193 = vpop.f32.mrb[0].mxu0
        %2194 = vmatprep.mubr.f32.mxu0 0.0
        %2195 = vmatmul.mubr.f32.gmra.mrb[0].mxu0 %v2109
        %v2196 = vpop.f32.mrb[0].mxu0
        %v2197 = vadd.f32 0.0, %v2196
        %v2198 = vpop.f32.mrb[0].mxu0
        %2199 = vmatprep.mubr.f32.mxu0 0.0
        %2200 = vmatmul.mubr.f32.gmra.mrb[0].mxu0 %v2112
        %v2201 = vpop.f32.mrb[0].mxu0
        %v2202 = vadd.f32 0.0, %v2201
        %v2203 = vpop.f32.mrb[0].mxu0
        %2204 = vmatprep.mubr.f32.mxu0 0.0
        %2205 = vmatmul.mubr.f32.gmra.mrb[0].mxu0 %v2115
        %v2206 = vpop.f32.mrb[0].mxu0
        %v2207 = vadd.f32 0.0, %v2206
        %v2208 = vpop.f32.mrb[0].mxu0
        %2209 = vmatprep.mubr.f32.mxu0 0.0
        %2210 = vmatmul.mubr.f32.gmra.mrb[0].mxu0 %v2118
        %v2211 = vpop.f32.mrb[0].mxu0
        %v2212 = vadd.f32 0.0, %v2211
        %v2213 = vpop.f32.mrb[0].mxu0
        %2214 = vdwg.mxu0
        %v2215 = vmul.f32 %v1532, %v1408
        %v2216 = vmul.f32 %v1533, %v1411
        %v2217 = vmul.f32 %v1534, %v1416
        %v2218 = vmul.f32 %v1535, %v1419
        %v2219 = vmul.f32 %v1536, %v1424
        %v2220 = vmul.f32 %v1537, %v1427
        %v2222 = vsel %vm1234, %v2215, 0
        %v2225 = vsel %vm1234, %v2216, 0
        %v2228 = vsel %vm1234, %v2217, 0
        %v2231 = vsel %vm1234, %v2218, 0
        %v2234 = vsel %vm1234, %v2219, 0
        %v2237 = vsel %vm1234, %v2220, 0
        %2239 = vmatprep.subr.mxu0 0.0
        %2240 = vmatpush1.msra.mxu0 %v1538
        %2241 = vmatprep.subr.mxu0 0.0
        %2242 = vmatpush1.msra.mxu0 %v1539
        %2243 = vmatprep.subr.mxu0 0.0
        %2244 = vmatpush1.msra.mxu0 0.0
        %2245 = vmatprep.subr.mxu0 0.0
        %2246 = vmatpush1.msra.mxu0 0.0
        %2247 = vmatprep.subr.mxu0 0.0
        %2248 = vmatpush1.msra.mxu0 0.0
        %2249 = vmatprep.subr.mxu0 0.0
        %2250 = vmatpush1.msra.mxu0 0.0
        %2251 = vmatprep.subr.mxu0 0.0
        %2252 = vmatpush1.msra.mxu0 0.0
        %2253 = vmatprep.subr.mxu0 0.0
        %2254 = vmatpush1.msra.mxu0 0.0
        %2255 = vmatprep.subr.mxu0 0.0
        %2256 = vmatpush1.msra.mxu0 0.0
        %2257 = vmatprep.subr.mxu0 0.0
        %2258 = vmatpush1.msra.mxu0 0.0
        %2259 = vmatprep.subr.mxu0 0.0
        %2260 = vmatpush1.msra.mxu0 0.0
        %2261 = vmatprep.subr.mxu0 0.0
        %2262 = vmatpush1.msra.mxu0 0.0
        %2263 = vmatprep.subr.mxu0 0.0
        %2264 = vmatpush1.msra.mxu0 0.0
        %2265 = vmatprep.subr.mxu0 0.0
        %2266 = vmatpush1.msra.mxu0 0.0
        %2267 = vmatprep.subr.mxu0 0.0
        %2268 = vmatpush1.msra.mxu0 0.0
        %2269 = vmatprep.subr.mxu0 0.0
        %2270 = vmatpush1.msra.mxu0 0.0
        %2271 = vmatprep.subr.mxu0 0.0
        %2272 = vmatpush1.msra.mxu0 0.0
        %2273 = vmatprep.subr.mxu0 0.0
        %2274 = vmatpush1.msra.mxu0 0.0
        %2275 = vmatprep.subr.mxu0 0.0
        %2276 = vmatpush1.msra.mxu0 0.0
        %2277 = vmatprep.subr.mxu0 0.0
        %2278 = vmatpush1.msra.mxu0 0.0
        %2279 = vmatprep.subr.mxu0 0.0
        %2280 = vmatpush1.msra.mxu0 0.0
        %2281 = vmatprep.subr.mxu0 0.0
        %2282 = vmatpush1.msra.mxu0 0.0
        %2283 = vmatprep.subr.mxu0 0.0
        %2284 = vmatpush1.msra.mxu0 0.0
        %2285 = vmatprep.subr.mxu0 0.0
        %2286 = vmatpush1.msra.mxu0 0.0
        %2287 = vmatprep.subr.mxu0 0.0
        %2288 = vmatpush1.msra.mxu0 0.0
        %2289 = vmatprep.subr.mxu0 0.0
        %2290 = vmatpush1.msra.mxu0 0.0
        %2291 = vmatprep.subr.mxu0 0.0
        %2292 = vmatpush1.msra.mxu0 0.0
        %2293 = vmatprep.subr.mxu0 0.0
        %2294 = vmatpush1.msra.mxu0 0.0
        %2295 = vmatprep.subr.mxu0 0.0
        %2296 = vmatpush1.msra.mxu0 0.0
        %2297 = vmatprep.subr.mxu0 0.0
        %2298 = vmatpush1.msra.mxu0 0.0
        %2299 = vmatprep.subr.mxu0 0.0
        %2300 = vmatpush1.msra.mxu0 0.0
        %2301 = vmatprep.subr.mxu0 0.0
        %2302 = vmatpush1.msra.mxu0 0.0
        %2303 = vmatprep.mubr.f32.mxu0 0.0
        %2304 = vmatmul.mubr.f32.gmra.mrb[0].mxu0 %v2222
        %v2305 = vpop.f32.mrb[0].mxu0
        %v2306 = vadd.f32 0.0, %v2305
        %v2307 = vpop.f32.mrb[0].mxu0
        %2308 = vmatprep.mubr.f32.mxu0 0.0
        %2309 = vmatmul.mubr.f32.gmra.mrb[0].mxu0 %v2225
        %v2310 = vpop.f32.mrb[0].mxu0
        %v2311 = vadd.f32 0.0, %v2310
        %v2312 = vpop.f32.mrb[0].mxu0
        %2313 = vmatprep.mubr.f32.mxu0 0.0
        %2314 = vmatmul.mubr.f32.gmra.mrb[0].mxu0 %v2228
        %v2315 = vpop.f32.mrb[0].mxu0
        %v2316 = vadd.f32 0.0, %v2315
        %v2317 = vpop.f32.mrb[0].mxu0
        %2318 = vmatprep.mubr.f32.mxu0 0.0
        %2319 = vmatmul.mubr.f32.gmra.mrb[0].mxu0 %v2231
        %v2320 = vpop.f32.mrb[0].mxu0
        %v2321 = vadd.f32 0.0, %v2320
        %v2322 = vpop.f32.mrb[0].mxu0
        %2323 = vmatprep.mubr.f32.mxu0 0.0
        %2324 = vmatmul.mubr.f32.gmra.mrb[0].mxu0 %v2234
        %v2325 = vpop.f32.mrb[0].mxu0
        %v2326 = vadd.f32 0.0, %v2325
        %v2327 = vpop.f32.mrb[0].mxu0
        %2328 = vmatprep.mubr.f32.mxu0 0.0
        %2329 = vmatmul.mubr.f32.gmra.mrb[0].mxu0 %v2237
        %v2330 = vpop.f32.mrb[0].mxu0
        %v2331 = vadd.f32 0.0, %v2330
        %v2332 = vpop.f32.mrb[0].mxu0
        %2333 = vdwg.mxu0
        %v2334 = vmax.f32 %v2187, %v2306
        %v2335 = vmax.f32 %v2192, %v2311
        %v2336 = vmax.f32 %v2197, %v2316
        %v2337 = vmax.f32 %v2202, %v2321
        %v2338 = vmax.f32 %v2207, %v2326
        %v2339 = vmax.f32 %v2212, %v2331
        %v2340 = vsub.f32 %v2187, %v2334
        %v2341 = vsub.f32 %v2192, %v2335
        %v2342 = vsub.f32 %v2197, %v2336
        %v2343 = vsub.f32 %v2202, %v2337
        %v2344 = vsub.f32 %v2207, %v2338
        %v2345 = vsub.f32 %v2212, %v2339
        %v2346 = vmul.f32 %v2340, 1.442695
        %v2347 = vpow.pop %v2346
        %v2348 = vmul.f32 %v2341, 1.442695
        %v2349 = vpow.pop %v2348
        %v2350 = vmul.f32 %v2342, 1.442695
        %v2351 = vpow.pop %v2350
        %v2352 = vmul.f32 %v2343, 1.442695
        %v2353 = vpow.pop %v2352
        %v2354 = vmul.f32 %v2344, 1.442695
        %v2355 = vpow.pop %v2354
        %v2356 = vmul.f32 %v2345, 1.442695
        %v2357 = vpow.pop %v2356
        %v2358 = vsub.f32 %v2306, %v2334
        %v2359 = vsub.f32 %v2311, %v2335
        %v2360 = vsub.f32 %v2316, %v2336
        %v2361 = vsub.f32 %v2321, %v2337
        %v2362 = vsub.f32 %v2326, %v2338
        %v2363 = vsub.f32 %v2331, %v2339
        %v2364 = vmul.f32 %v2358, 1.442695
        %v2365 = vpow.pop %v2364
        %v2366 = vmul.f32 %v2359, 1.442695
        %v2367 = vpow.pop %v2366
        %v2368 = vmul.f32 %v2360, 1.442695
        %v2369 = vpow.pop %v2368
        %v2370 = vmul.f32 %v2361, 1.442695
        %v2371 = vpow.pop %v2370
        %v2372 = vmul.f32 %v2362, 1.442695
        %v2373 = vpow.pop %v2372
        %v2374 = vmul.f32 %v2363, 1.442695
        %v2375 = vpow.pop %v2374
        %v2376 = vadd.f32 %v2347, %v2365
        %v2377 = vadd.f32 %v2349, %v2367
        %v2378 = vadd.f32 %v2351, %v2369
        %v2379 = vadd.f32 %v2353, %v2371
        %v2380 = vadd.f32 %v2355, %v2373
        %v2381 = vadd.f32 %v2357, %v2375
        %v2382 = vrcp.pop %v2376
        %v2383 = vmul.f32 1.0, %v2382
        %v2384 = vrcp.pop %v2377
        %v2385 = vmul.f32 1.0, %v2384
        %v2386 = vrcp.pop %v2378
        %v2387 = vmul.f32 1.0, %v2386
        %v2388 = vrcp.pop %v2379
        %v2389 = vmul.f32 1.0, %v2388
        %v2390 = vrcp.pop %v2380
        %v2391 = vmul.f32 1.0, %v2390
        %v2392 = vrcp.pop %v2381
        %v2393 = vmul.f32 1.0, %v2392
        %v2394 = vmul.f32 %v2347, %v2383
        %v2395 = vmul.f32 %v2349, %v2385
        %v2396 = vmul.f32 %v2351, %v2387
        %v2397 = vmul.f32 %v2353, %v2389
        %v2398 = vmul.f32 %v2355, %v2391
        %v2399 = vmul.f32 %v2357, %v2393
        %v2401 = vsel %vm1845, %v2394, 0
        %v2404 = vsel %vm1845, %v2395, 0
        %v2407 = vsel %vm1845, %v2396, 0
        %v2410 = vsel %vm1845, %v2397, 0
        %v2413 = vsel %vm1845, %v2398, 0
        %v2416 = vsel %vm1845, %v2399, 0
        %2418 = vmatprep.subr.mxu0 0.0
        %2419 = vmatpush1.msra.mxu0 %v1540
        %2420 = vmatprep.subr.mxu0 0.0
        %2421 = vmatpush1.msra.mxu0 0.0
        %2422 = vmatprep.subr.mxu0 0.0
        %2423 = vmatpush1.msra.mxu0 0.0
        %2424 = vmatprep.subr.mxu0 0.0
        %2425 = vmatpush1.msra.mxu0 0.0
        %2426 = vmatprep.subr.mxu0 0.0
        %2427 = vmatpush1.msra.mxu0 0.0
        %2428 = vmatprep.subr.mxu0 0.0
        %2429 = vmatpush1.msra.mxu0 0.0
        %2430 = vmatprep.subr.mxu0 0.0
        %2431 = vmatpush1.msra.mxu0 0.0
        %2432 = vmatprep.subr.mxu0 0.0
        %2433 = vmatpush1.msra.mxu0 0.0
        %2434 = vmatprep.subr.mxu0 0.0
        %2435 = vmatpush1.msra.mxu0 0.0
        %2436 = vmatprep.subr.mxu0 0.0
        %2437 = vmatpush1.msra.mxu0 0.0
        %2438 = vmatprep.subr.mxu0 0.0
        %2439 = vmatpush1.msra.mxu0 0.0
        %2440 = vmatprep.subr.mxu0 0.0
        %2441 = vmatpush1.msra.mxu0 0.0
        %2442 = vmatprep.subr.mxu0 0.0
        %2443 = vmatpush1.msra.mxu0 0.0
        %2444 = vmatprep.subr.mxu0 0.0
        %2445 = vmatpush1.msra.mxu0 0.0
        %2446 = vmatprep.subr.mxu0 0.0
        %2447 = vmatpush1.msra.mxu0 0.0
        %2448 = vmatprep.subr.mxu0 0.0
        %2449 = vmatpush1.msra.mxu0 0.0
        %2450 = vmatprep.subr.mxu0 0.0
        %2451 = vmatpush1.msra.mxu0 0.0
        %2452 = vmatprep.subr.mxu0 0.0
        %2453 = vmatpush1.msra.mxu0 0.0
        %2454 = vmatprep.subr.mxu0 0.0
        %2455 = vmatpush1.msra.mxu0 0.0
        %2456 = vmatprep.subr.mxu0 0.0
        %2457 = vmatpush1.msra.mxu0 0.0
        %2458 = vmatprep.subr.mxu0 0.0
        %2459 = vmatpush1.msra.mxu0 0.0
        %2460 = vmatprep.subr.mxu0 0.0
        %2461 = vmatpush1.msra.mxu0 0.0
        %2462 = vmatprep.subr.mxu0 0.0
        %2463 = vmatpush1.msra.mxu0 0.0
        %2464 = vmatprep.subr.mxu0 0.0
        %2465 = vmatpush1.msra.mxu0 0.0
        %2466 = vmatprep.subr.mxu0 0.0
        %2467 = vmatpush1.msra.mxu0 0.0
        %2468 = vmatprep.subr.mxu0 0.0
        %2469 = vmatpush1.msra.mxu0 0.0
        %2470 = vmatprep.subr.mxu0 0.0
        %2471 = vmatpush1.msra.mxu0 0.0
        %2472 = vmatprep.subr.mxu0 0.0
        %2473 = vmatpush1.msra.mxu0 0.0
        %2474 = vmatprep.subr.mxu0 0.0
        %2475 = vmatpush1.msra.mxu0 0.0
        %2476 = vmatprep.subr.mxu0 0.0
        %2477 = vmatpush1.msra.mxu0 0.0
        %2478 = vmatprep.subr.mxu0 0.0
        %2479 = vmatpush1.msra.mxu0 0.0
        %2480 = vmatprep.subr.mxu0 0.0
        %2481 = vmatpush1.msra.mxu0 0.0
        %2482 = vmatprep.mubr.f32.mxu0 0.0
        %2483 = vmatmul.mubr.f32.gmra.mrb[0].mxu0 %v2401
        %v2484 = vpop.f32.mrb[0].mxu0
        %v2485 = vadd.f32 0.0, %v2484
        %v2486 = vpop.f32.mrb[0].mxu0
        %2487 = vmatprep.mubr.f32.mxu0 0.0
        %2488 = vmatmul.mubr.f32.gmra.mrb[0].mxu0 %v2404
        %v2489 = vpop.f32.mrb[0].mxu0
        %v2490 = vadd.f32 0.0, %v2489
        %v2491 = vpop.f32.mrb[0].mxu0
        %2492 = vmatprep.mubr.f32.mxu0 0.0
        %2493 = vmatmul.mubr.f32.gmra.mrb[0].mxu0 %v2407
        %v2494 = vpop.f32.mrb[0].mxu0
        %v2495 = vadd.f32 0.0, %v2494
        %v2496 = vpop.f32.mrb[0].mxu0
        %2497 = vmatprep.mubr.f32.mxu0 0.0
        %2498 = vmatmul.mubr.f32.gmra.mrb[0].mxu0 %v2410
        %v2499 = vpop.f32.mrb[0].mxu0
        %v2500 = vadd.f32 0.0, %v2499
        %v2501 = vpop.f32.mrb[0].mxu0
        %2502 = vmatprep.mubr.f32.mxu0 0.0
        %2503 = vmatmul.mubr.f32.gmra.mrb[0].mxu0 %v2413
        %v2504 = vpop.f32.mrb[0].mxu0
        %v2505 = vadd.f32 0.0, %v2504
        %v2506 = vpop.f32.mrb[0].mxu0
        %2507 = vmatprep.mubr.f32.mxu0 0.0
        %2508 = vmatmul.mubr.f32.gmra.mrb[0].mxu0 %v2416
        %v2509 = vpop.f32.mrb[0].mxu0
        %v2510 = vadd.f32 0.0, %v2509
        %v2511 = vpop.f32.mrb[0].mxu0
        %2512 = vdwg.mxu0
        %v2513 = vmul.f32 %v2485, %v1480
        %v2514 = vmul.f32 %v2490, %v1483
        %v2515 = vmul.f32 %v2495, %v1488
        %v2516 = vmul.f32 %v2500, %v1491
        %v2517 = vmul.f32 %v2505, %v1496
        %v2518 = vmul.f32 %v2510, %v1499
        %v2519 = vmul.f32 %v2365, %v2383
        %v2520 = vmul.f32 %v2367, %v2385
        %v2521 = vmul.f32 %v2369, %v2387
        %v2522 = vmul.f32 %v2371, %v2389
        %v2523 = vmul.f32 %v2373, %v2391
        %v2524 = vmul.f32 %v2375, %v2393
        %v2526 = vsel %vm1845, %v2519, 0
        %v2529 = vsel %vm1845, %v2520, 0
        %v2532 = vsel %vm1845, %v2521, 0
        %v2535 = vsel %vm1845, %v2522, 0
        %v2538 = vsel %vm1845, %v2523, 0
        %v2541 = vsel %vm1845, %v2524, 0
        %2543 = vmatprep.subr.mxu0 0.0
        %2544 = vmatpush1.msra.mxu0 %v1540
        %2545 = vmatprep.subr.mxu0 0.0
        %2546 = vmatpush1.msra.mxu0 0.0
        %2547 = vmatprep.subr.mxu0 0.0
        %2548 = vmatpush1.msra.mxu0 0.0
        %2549 = vmatprep.subr.mxu0 0.0
        %2550 = vmatpush1.msra.mxu0 0.0
        %2551 = vmatprep.subr.mxu0 0.0
        %2552 = vmatpush1.msra.mxu0 0.0
        %2553 = vmatprep.subr.mxu0 0.0
        %2554 = vmatpush1.msra.mxu0 0.0
        %2555 = vmatprep.subr.mxu0 0.0
        %2556 = vmatpush1.msra.mxu0 0.0
        %2557 = vmatprep.subr.mxu0 0.0
        %2558 = vmatpush1.msra.mxu0 0.0
        %2559 = vmatprep.subr.mxu0 0.0
        %2560 = vmatpush1.msra.mxu0 0.0
        %2561 = vmatprep.subr.mxu0 0.0
        %2562 = vmatpush1.msra.mxu0 0.0
        %2563 = vmatprep.subr.mxu0 0.0
        %2564 = vmatpush1.msra.mxu0 0.0
        %2565 = vmatprep.subr.mxu0 0.0
        %2566 = vmatpush1.msra.mxu0 0.0
        %2567 = vmatprep.subr.mxu0 0.0
        %2568 = vmatpush1.msra.mxu0 0.0
        %2569 = vmatprep.subr.mxu0 0.0
        %2570 = vmatpush1.msra.mxu0 0.0
        %2571 = vmatprep.subr.mxu0 0.0
        %2572 = vmatpush1.msra.mxu0 0.0
        %2573 = vmatprep.subr.mxu0 0.0
        %2574 = vmatpush1.msra.mxu0 0.0
        %2575 = vmatprep.subr.mxu0 0.0
        %2576 = vmatpush1.msra.mxu0 0.0
        %2577 = vmatprep.subr.mxu0 0.0
        %2578 = vmatpush1.msra.mxu0 0.0
        %2579 = vmatprep.subr.mxu0 0.0
        %2580 = vmatpush1.msra.mxu0 0.0
        %2581 = vmatprep.subr.mxu0 0.0
        %2582 = vmatpush1.msra.mxu0 0.0
        %2583 = vmatprep.subr.mxu0 0.0
        %2584 = vmatpush1.msra.mxu0 0.0
        %2585 = vmatprep.subr.mxu0 0.0
        %2586 = vmatpush1.msra.mxu0 0.0
        %2587 = vmatprep.subr.mxu0 0.0
        %2588 = vmatpush1.msra.mxu0 0.0
        %2589 = vmatprep.subr.mxu0 0.0
        %2590 = vmatpush1.msra.mxu0 0.0
        %2591 = vmatprep.subr.mxu0 0.0
        %2592 = vmatpush1.msra.mxu0 0.0
        %2593 = vmatprep.subr.mxu0 0.0
        %2594 = vmatpush1.msra.mxu0 0.0
        %2595 = vmatprep.subr.mxu0 0.0
        %2596 = vmatpush1.msra.mxu0 0.0
        %2597 = vmatprep.subr.mxu0 0.0
        %2598 = vmatpush1.msra.mxu0 0.0
        %2599 = vmatprep.subr.mxu0 0.0
        %2600 = vmatpush1.msra.mxu0 0.0
        %2601 = vmatprep.subr.mxu0 0.0
        %2602 = vmatpush1.msra.mxu0 0.0
        %2603 = vmatprep.subr.mxu0 0.0
        %2604 = vmatpush1.msra.mxu0 0.0
        %2605 = vmatprep.subr.mxu0 0.0
        %2606 = vmatpush1.msra.mxu0 0.0
        %2607 = vmatprep.mubr.f32.mxu0 0.0
        %2608 = vmatmul.mubr.f32.gmra.mrb[0].mxu0 %v2526
        %v2609 = vpop.f32.mrb[0].mxu0
        %v2610 = vadd.f32 0.0, %v2609
        %v2611 = vpop.f32.mrb[0].mxu0
        %2612 = vmatprep.mubr.f32.mxu0 0.0
        %2613 = vmatmul.mubr.f32.gmra.mrb[0].mxu0 %v2529
        %v2614 = vpop.f32.mrb[0].mxu0
        %v2615 = vadd.f32 0.0, %v2614
        %v2616 = vpop.f32.mrb[0].mxu0
        %2617 = vmatprep.mubr.f32.mxu0 0.0
        %2618 = vmatmul.mubr.f32.gmra.mrb[0].mxu0 %v2532
        %v2619 = vpop.f32.mrb[0].mxu0
        %v2620 = vadd.f32 0.0, %v2619
        %v2621 = vpop.f32.mrb[0].mxu0
        %2622 = vmatprep.mubr.f32.mxu0 0.0
        %2623 = vmatmul.mubr.f32.gmra.mrb[0].mxu0 %v2535
        %v2624 = vpop.f32.mrb[0].mxu0
        %v2625 = vadd.f32 0.0, %v2624
        %v2626 = vpop.f32.mrb[0].mxu0
        %2627 = vmatprep.mubr.f32.mxu0 0.0
        %2628 = vmatmul.mubr.f32.gmra.mrb[0].mxu0 %v2538
        %v2629 = vpop.f32.mrb[0].mxu0
        %v2630 = vadd.f32 0.0, %v2629
        %v2631 = vpop.f32.mrb[0].mxu0
        %2632 = vmatprep.mubr.f32.mxu0 0.0
        %2633 = vmatmul.mubr.f32.gmra.mrb[0].mxu0 %v2541
        %v2634 = vpop.f32.mrb[0].mxu0
        %v2635 = vadd.f32 0.0, %v2634
        %v2636 = vpop.f32.mrb[0].mxu0
        %2637 = vdwg.mxu0
        %v2638 = vmul.f32 %v2610, %v1504
        %v2639 = vmul.f32 %v2615, %v1507
        %v2640 = vmul.f32 %v2620, %v1512
        %v2641 = vmul.f32 %v2625, %v1515
        %v2642 = vmul.f32 %v2630, %v1520
        %v2643 = vmul.f32 %v2635, %v1523
        %v2644 = vadd.f32 %v2513, %v2638
        %v2645 = vadd.f32 %v2514, %v2639
        %v2646 = vadd.f32 %v2515, %v2640
        %v2647 = vadd.f32 %v2516, %v2641
        %v2648 = vadd.f32 %v2517, %v2642
        %v2649 = vadd.f32 %v2518, %v2643
        %v2650 = vpack.c.bf16 %v2091, %v2090
        %v2651 = vpack.c.bf16 %v2093, %v2092
        %v2652 = vpack.c.bf16 %v2095, %v2094
        %v2653 = vpack.c.bf16 %v2645, %v2644
        %v2654 = vpack.c.bf16 %v2647, %v2646
        %v2655 = vpack.c.bf16 %v2649, %v2648
        %v2656 = vld [vmem:[%s980] sm:$0xf]
        %v2657 = vld [vmem:[%s980 + $0x4] sm:$0xf]
        %v2658 = vld [vmem:[%s988] sm:$0x1]
        %v2660 = vlaneseq
        %v2661 = vshrl.u32 %v2660, 7
        %v2662 = vsub.s32 0, %v2661
        %v2663 = vrot.slane %v2658, %v2662
        %v2667 = vunpack.c.l.b16 %v2656
        %v2668 = vunpack.c.l.b16 %v2657
        %v2669 = vpack.c.b16 %v2668, %v2667
        %v2672 = vsel %vm1234, %v2650, 0
        %v2675 = vsel %vm1234, %v2651, 0
        %v2678 = vsel %vm1234, %v2652, 0
        %v2681 = vsel %vm1234, %v2653, 0
        %v2684 = vsel %vm1234, %v2654, 0
        %v2687 = vsel %vm1234, %v2655, 0
        %2689 = vmatprep.subr.bf16.mxu0 0
        %2690 = vmatpush1.bf16.msra.mxu0 %v2669
        %2691 = vmatprep.subr.bf16.mxu0 0
        %2692 = vmatpush1.bf16.msra.mxu0 0
        %2693 = vmatprep.subr.bf16.mxu0 0
        %2694 = vmatpush1.bf16.msra.mxu0 0
        %2695 = vmatprep.subr.bf16.mxu0 0
        %2696 = vmatpush1.bf16.msra.mxu0 0
        %2697 = vmatprep.subr.bf16.mxu0 0
        %2698 = vmatpush1.bf16.msra.mxu0 0
        %2699 = vmatprep.subr.bf16.mxu0 0
        %2700 = vmatpush1.bf16.msra.mxu0 0
        %2701 = vmatprep.subr.bf16.mxu0 0
        %2702 = vmatpush1.bf16.msra.mxu0 0
        %2703 = vmatprep.subr.bf16.mxu0 0
        %2704 = vmatpush1.bf16.msra.mxu0 0
        %2705 = vmatprep.subr.bf16.mxu0 0
        %2706 = vmatpush1.bf16.msra.mxu0 0
        %2707 = vmatprep.subr.bf16.mxu0 0
        %2708 = vmatpush1.bf16.msra.mxu0 0
        %2709 = vmatprep.subr.bf16.mxu0 0
        %2710 = vmatpush1.bf16.msra.mxu0 0
        %2711 = vmatprep.subr.bf16.mxu0 0
        %2712 = vmatpush1.bf16.msra.mxu0 0
        %2713 = vmatprep.subr.bf16.mxu0 0
        %2714 = vmatpush1.bf16.msra.mxu0 0
        %2715 = vmatprep.subr.bf16.mxu0 0
        %2716 = vmatpush1.bf16.msra.mxu0 0
        %2717 = vmatprep.subr.bf16.mxu0 0
        %2718 = vmatpush1.bf16.msra.mxu0 0
        %2719 = vmatprep.subr.bf16.mxu0 0
        %2720 = vmatpush1.bf16.msra.mxu0 0
        %2721 = vmatprep.mubr.bf16.mxu0 0
        %2722 = vmatmul.mubr.bf16.gmra.mrb[0].mxu0 %v2672
        %v2723 = vpop.f32.mrb[0].mxu0
        %v2724 = vadd.f32 %v2663, %v2723
        %v2725 = vpop.f32.mrb[0].mxu0
        %v2726 = vpop.f32.mrb[0].mxu0
        %v2727 = vadd.f32 %v2663, %v2726
        %v2728 = vpop.f32.mrb[0].mxu0
        %2729 = vmatprep.mubr.bf16.mxu0 0
        %2730 = vmatmul.mubr.bf16.gmra.mrb[0].mxu0 %v2675
        %v2731 = vpop.f32.mrb[0].mxu0
        %v2732 = vadd.f32 %v2663, %v2731
        %v2733 = vpop.f32.mrb[0].mxu0
        %v2734 = vpop.f32.mrb[0].mxu0
        %v2735 = vadd.f32 %v2663, %v2734
        %v2736 = vpop.f32.mrb[0].mxu0
        %2737 = vmatprep.mubr.bf16.mxu0 0
        %2738 = vmatmul.mubr.bf16.gmra.mrb[0].mxu0 %v2678
        %v2739 = vpop.f32.mrb[0].mxu0
        %v2740 = vadd.f32 %v2663, %v2739
        %v2741 = vpop.f32.mrb[0].mxu0
        %v2742 = vpop.f32.mrb[0].mxu0
        %v2743 = vadd.f32 %v2663, %v2742
        %v2744 = vpop.f32.mrb[0].mxu0
        %2745 = vmatprep.mubr.bf16.mxu0 0
        %2746 = vmatmul.mubr.bf16.gmra.mrb[0].mxu0 %v2681
        %v2747 = vpop.f32.mrb[0].mxu0
        %v2748 = vadd.f32 %v2663, %v2747
        %v2749 = vpop.f32.mrb[0].mxu0
        %v2750 = vpop.f32.mrb[0].mxu0
        %v2751 = vadd.f32 %v2663, %v2750
        %v2752 = vpop.f32.mrb[0].mxu0
        %2753 = vmatprep.mubr.bf16.mxu0 0
        %2754 = vmatmul.mubr.bf16.gmra.mrb[0].mxu0 %v2684
        %v2755 = vpop.f32.mrb[0].mxu0
        %v2756 = vadd.f32 %v2663, %v2755
        %v2757 = vpop.f32.mrb[0].mxu0
        %v2758 = vpop.f32.mrb[0].mxu0
        %v2759 = vadd.f32 %v2663, %v2758
        %v2760 = vpop.f32.mrb[0].mxu0
        %2761 = vmatprep.mubr.bf16.mxu0 0
        %2762 = vmatmul.mubr.bf16.gmra.mrb[0].mxu0 %v2687
        %v2763 = vpop.f32.mrb[0].mxu0
        %v2764 = vadd.f32 %v2663, %v2763
        %v2765 = vpop.f32.mrb[0].mxu0
        %v2766 = vpop.f32.mrb[0].mxu0
        %v2767 = vadd.f32 %v2663, %v2766
        %v2768 = vpop.f32.mrb[0].mxu0
        %2769 = vdwg.mxu0
        %v2770 = vadd.f32 %v1201, %v2724
        %v2771 = vadd.f32 %v1202, %v2727
        %v2772 = vadd.f32 %v1203, %v2732
        %v2773 = vadd.f32 %v1204, %v2735
        %v2774 = vadd.f32 %v1205, %v2740
        %v2775 = vadd.f32 %v1206, %v2743
        %v2776 = vadd.f32 %v1207, %v2748
        %v2777 = vadd.f32 %v1208, %v2751
        %v2778 = vadd.f32 %v1209, %v2756
        %v2779 = vadd.f32 %v1210, %v2759
        %v2780 = vadd.f32 %v1211, %v2764
        %v2781 = vadd.f32 %v1212, %v2767
        %v2782 = vsel %vm1234, %v2770, 0.0
        %2783 = vadd.xlane.f32.xlu0 %v2782
        %v2784 = vpop.xlane.xlu0 %2783
        %v2785 = vsel %vm1234, %v2771, 0.0
        %2786 = vadd.xlane.f32.xlu0 %v2785
        %v2787 = vpop.xlane.xlu0 %2786
        %v2788 = vsel %vm1234, %v2772, 0.0
        %2789 = vadd.xlane.f32.xlu0 %v2788
        %v2790 = vpop.xlane.xlu0 %2789
        %v2791 = vsel %vm1234, %v2773, 0.0
        %2792 = vadd.xlane.f32.xlu0 %v2791
        %v2793 = vpop.xlane.xlu0 %2792
        %v2794 = vsel %vm1234, %v2774, 0.0
        %2795 = vadd.xlane.f32.xlu0 %v2794
        %v2796 = vpop.xlane.xlu0 %2795
        %v2797 = vsel %vm1234, %v2775, 0.0
        %2798 = vadd.xlane.f32.xlu0 %v2797
        %v2799 = vpop.xlane.xlu0 %2798
        %v2800 = vsel %vm1234, %v2776, 0.0
        %2801 = vadd.xlane.f32.xlu0 %v2800
        %v2802 = vpop.xlane.xlu0 %2801
        %v2803 = vsel %vm1234, %v2777, 0.0
        %2804 = vadd.xlane.f32.xlu0 %v2803
        %v2805 = vpop.xlane.xlu0 %2804
        %v2806 = vsel %vm1234, %v2778, 0.0
        %2807 = vadd.xlane.f32.xlu0 %v2806
        %v2808 = vpop.xlane.xlu0 %2807
        %v2809 = vsel %vm1234, %v2779, 0.0
        %2810 = vadd.xlane.f32.xlu0 %v2809
        %v2811 = vpop.xlane.xlu0 %2810
        %v2812 = vsel %vm1234, %v2780, 0.0
        %2813 = vadd.xlane.f32.xlu0 %v2812
        %v2814 = vpop.xlane.xlu0 %2813
        %v2815 = vsel %vm1234, %v2781, 0.0
        %2816 = vadd.xlane.f32.xlu0 %v2815
        %v2817 = vpop.xlane.xlu0 %2816
        %v2818 = vrcp.pop 16.0
        %v2819 = vmul.f32 %v2784, %v2818
        %v2820 = vmul.f32 %v2787, %v2818
        %v2821 = vmul.f32 %v2790, %v2818
        %v2822 = vmul.f32 %v2793, %v2818
        %v2823 = vmul.f32 %v2796, %v2818
        %v2824 = vmul.f32 %v2799, %v2818
        %v2825 = vmul.f32 %v2802, %v2818
        %v2826 = vmul.f32 %v2805, %v2818
        %v2827 = vmul.f32 %v2808, %v2818
        %v2828 = vmul.f32 %v2811, %v2818
        %v2829 = vmul.f32 %v2814, %v2818
        %v2830 = vmul.f32 %v2817, %v2818
        %v2831 = vsub.f32 %v2770, %v2819
        %v2832 = vsub.f32 %v2771, %v2820
        %v2833 = vsub.f32 %v2772, %v2821
        %v2834 = vsub.f32 %v2773, %v2822
        %v2835 = vsub.f32 %v2774, %v2823
        %v2836 = vsub.f32 %v2775, %v2824
        %v2837 = vsub.f32 %v2776, %v2825
        %v2838 = vsub.f32 %v2777, %v2826
        %v2839 = vsub.f32 %v2778, %v2827
        %v2840 = vsub.f32 %v2779, %v2828
        %v2841 = vsub.f32 %v2780, %v2829
        %v2842 = vsub.f32 %v2781, %v2830
        %v2843 = vmul.f32 %v2831, %v2831
        %v2844 = vmul.f32 %v2832, %v2832
        %v2845 = vmul.f32 %v2833, %v2833
        %v2846 = vmul.f32 %v2834, %v2834
        %v2847 = vmul.f32 %v2835, %v2835
        %v2848 = vmul.f32 %v2836, %v2836
        %v2849 = vmul.f32 %v2837, %v2837
        %v2850 = vmul.f32 %v2838, %v2838
        %v2851 = vmul.f32 %v2839, %v2839
        %v2852 = vmul.f32 %v2840, %v2840
        %v2853 = vmul.f32 %v2841, %v2841
        %v2854 = vmul.f32 %v2842, %v2842
        %v2855 = vsel %vm1234, %v2843, 0.0
        %2856 = vadd.xlane.f32.xlu0 %v2855
        %v2857 = vpop.xlane.xlu0 %2856
        %v2858 = vsel %vm1234, %v2844, 0.0
        %2859 = vadd.xlane.f32.xlu0 %v2858
        %v2860 = vpop.xlane.xlu0 %2859
        %v2861 = vsel %vm1234, %v2845, 0.0
        %2862 = vadd.xlane.f32.xlu0 %v2861
        %v2863 = vpop.xlane.xlu0 %2862
        %v2864 = vsel %vm1234, %v2846, 0.0
        %2865 = vadd.xlane.f32.xlu0 %v2864
        %v2866 = vpop.xlane.xlu0 %2865
        %v2867 = vsel %vm1234, %v2847, 0.0
        %2868 = vadd.xlane.f32.xlu0 %v2867
        %v2869 = vpop.xlane.xlu0 %2868
        %v2870 = vsel %vm1234, %v2848, 0.0
        %2871 = vadd.xlane.f32.xlu0 %v2870
        %v2872 = vpop.xlane.xlu0 %2871
        %v2873 = vsel %vm1234, %v2849, 0.0
        %2874 = vadd.xlane.f32.xlu0 %v2873
        %v2875 = vpop.xlane.xlu0 %2874
        %v2876 = vsel %vm1234, %v2850, 0.0
        %2877 = vadd.xlane.f32.xlu0 %v2876
        %v2878 = vpop.xlane.xlu0 %2877
        %v2879 = vsel %vm1234, %v2851, 0.0
        %2880 = vadd.xlane.f32.xlu0 %v2879
        %v2881 = vpop.xlane.xlu0 %2880
        %v2882 = vsel %vm1234, %v2852, 0.0
        %2883 = vadd.xlane.f32.xlu0 %v2882
        %v2884 = vpop.xlane.xlu0 %2883
        %v2885 = vsel %vm1234, %v2853, 0.0
        %2886 = vadd.xlane.f32.xlu0 %v2885
        %v2887 = vpop.xlane.xlu0 %2886
        %v2888 = vsel %vm1234, %v2854, 0.0
        %2889 = vadd.xlane.f32.xlu0 %v2888
        %v2890 = vpop.xlane.xlu0 %2889
        %v2891 = vmul.f32 %v2857, %v2818
        %v2892 = vmul.f32 %v2860, %v2818
        %v2893 = vmul.f32 %v2863, %v2818
        %v2894 = vmul.f32 %v2866, %v2818
        %v2895 = vmul.f32 %v2869, %v2818
        %v2896 = vmul.f32 %v2872, %v2818
        %v2897 = vmul.f32 %v2875, %v2818
        %v2898 = vmul.f32 %v2878, %v2818
        %v2899 = vmul.f32 %v2881, %v2818
        %v2900 = vmul.f32 %v2884, %v2818
        %v2901 = vmul.f32 %v2887, %v2818
        %v2902 = vmul.f32 %v2890, %v2818
        %v2903 = vadd.f32 %v2891, 1e-05
        %v2904 = vadd.f32 %v2892, 1e-05
        %v2905 = vadd.f32 %v2893, 1e-05
        %v2906 = vadd.f32 %v2894, 1e-05
        %v2907 = vadd.f32 %v2895, 1e-05
        %v2908 = vadd.f32 %v2896, 1e-05
        %v2909 = vadd.f32 %v2897, 1e-05
        %v2910 = vadd.f32 %v2898, 1e-05
        %v2911 = vadd.f32 %v2899, 1e-05
        %v2912 = vadd.f32 %v2900, 1e-05
        %v2913 = vadd.f32 %v2901, 1e-05
        %v2914 = vadd.f32 %v2902, 1e-05
        %v2915 = vrsqrt.pop %v2903
        %v2916 = vrsqrt.pop %v2904
        %v2917 = vrsqrt.pop %v2905
        %v2918 = vrsqrt.pop %v2906
        %v2919 = vrsqrt.pop %v2907
        %v2920 = vrsqrt.pop %v2908
        %v2921 = vrsqrt.pop %v2909
        %v2922 = vrsqrt.pop %v2910
        %v2923 = vrsqrt.pop %v2911
        %v2924 = vrsqrt.pop %v2912
        %v2925 = vrsqrt.pop %v2913
        %v2926 = vrsqrt.pop %v2914
        %v2927 = vmul.f32 %v2831, %v2915
        %v2928 = vmul.f32 %v2832, %v2916
        %v2929 = vmul.f32 %v2833, %v2917
        %v2930 = vmul.f32 %v2834, %v2918
        %v2931 = vmul.f32 %v2835, %v2919
        %v2932 = vmul.f32 %v2836, %v2920
        %v2933 = vmul.f32 %v2837, %v2921
        %v2934 = vmul.f32 %v2838, %v2922
        %v2935 = vmul.f32 %v2839, %v2923
        %v2936 = vmul.f32 %v2840, %v2924
        %v2937 = vmul.f32 %v2841, %v2925
        %v2938 = vmul.f32 %v2842, %v2926
        %v2939 = vld [vmem:[%s996] sm:$0x1]
        %v2941 = vlaneseq
        %v2942 = vshrl.u32 %v2941, 7
        %v2943 = vsub.s32 0, %v2942
        %v2944 = vrot.slane %v2939, %v2943
        %v2946 = vmul.f32 %v2927, %v2944
        %v2947 = vmul.f32 %v2928, %v2944
        %v2948 = vmul.f32 %v2929, %v2944
        %v2949 = vmul.f32 %v2930, %v2944
        %v2950 = vmul.f32 %v2931, %v2944
        %v2951 = vmul.f32 %v2932, %v2944
        %v2952 = vmul.f32 %v2933, %v2944
        %v2953 = vmul.f32 %v2934, %v2944
        %v2954 = vmul.f32 %v2935, %v2944
        %v2955 = vmul.f32 %v2936, %v2944
        %v2956 = vmul.f32 %v2937, %v2944
        %v2957 = vmul.f32 %v2938, %v2944
        %v2958 = vld [vmem:[%s1004] sm:$0x1]
        %v2960 = vlaneseq
        %v2961 = vshrl.u32 %v2960, 7
        %v2962 = vsub.s32 0, %v2961
        %v2963 = vrot.slane %v2958, %v2962
        %v2965 = vadd.f32 %v2946, %v2963
        %v2966 = vadd.f32 %v2947, %v2963
        %v2967 = vadd.f32 %v2948, %v2963
        %v2968 = vadd.f32 %v2949, %v2963
        %v2969 = vadd.f32 %v2950, %v2963
        %v2970 = vadd.f32 %v2951, %v2963
        %v2971 = vadd.f32 %v2952, %v2963
        %v2972 = vadd.f32 %v2953, %v2963
        %v2973 = vadd.f32 %v2954, %v2963
        %v2974 = vadd.f32 %v2955, %v2963
        %v2975 = vadd.f32 %v2956, %v2963
        %v2976 = vadd.f32 %v2957, %v2963
        %v2977 = vpack.c.bf16 %v2966, %v2965
        %v2978 = vpack.c.bf16 %v2968, %v2967
        %v2979 = vpack.c.bf16 %v2970, %v2969
        %v2980 = vpack.c.bf16 %v2972, %v2971
        %v2981 = vpack.c.bf16 %v2974, %v2973
        %v2982 = vpack.c.bf16 %v2976, %v2975
        %v2983 = vld [vmem:[%s1013] sm:$0xff]
        %v2984 = vld [vmem:[%s1013 + $0x8] sm:$0xff]
        %v2985 = vld [vmem:[%s1013 + $0x10] sm:$0xff]
        %v2986 = vld [vmem:[%s1013 + $0x18] sm:$0xff]
        %v2987 = vld [vmem:[%s1013 + $0x20] sm:$0xff]
        %v2988 = vld [vmem:[%s1013 + $0x28] sm:$0xff]
        %v2989 = vld [vmem:[%s1013 + $0x30] sm:$0xff]
        %v2990 = vld [vmem:[%s1013 + $0x38] sm:$0xff]
        %v2991 = vld [vmem:[%s1013 + $0x40] sm:$0xff]
        %v2992 = vld [vmem:[%s1013 + $0x48] sm:$0xff]
        %v2993 = vld [vmem:[%s1013 + $0x50] sm:$0xff]
        %v2994 = vld [vmem:[%s1013 + $0x58] sm:$0xff]
        %v2995 = vld [vmem:[%s1013 + $0x60] sm:$0xff]
        %v2996 = vld [vmem:[%s1013 + $0x68] sm:$0xff]
        %v2997 = vld [vmem:[%s1013 + $0x70] sm:$0xff]
        %v2998 = vld [vmem:[%s1013 + $0x78] sm:$0xff]
        %v2999 = vld [vmem:[%s1022] sm:$0xff]
        %v3000 = vld [vmem:[%s1022 + $0x8] sm:$0xff]
        %v3003 = vlaneseq
        %v3004 = vshrl.u32 %v3003, 7
        %v3005 = vsub.s32 0, %v3004
        %v3006 = vrot.slane %v2999, %v3005
        %v3007 = vlaneseq
        %v3008 = vshrl.u32 %v3007, 7
        %v3009 = vsub.s32 1, %v3008
        %v3010 = vrot.slane %v2999, %v3009
        %v3011 = vlaneseq
        %v3012 = vshrl.u32 %v3011, 7
        %v3013 = vsub.s32 2, %v3012
        %v3014 = vrot.slane %v2999, %v3013
        %v3015 = vlaneseq
        %v3016 = vshrl.u32 %v3015, 7
        %v3017 = vsub.s32 3, %v3016
        %v3018 = vrot.slane %v2999, %v3017
        %v3019 = vlaneseq
        %v3020 = vshrl.u32 %v3019, 7
        %v3021 = vsub.s32 4, %v3020
        %v3022 = vrot.slane %v2999, %v3021
        %v3023 = vlaneseq
        %v3024 = vshrl.u32 %v3023, 7
        %v3025 = vsub.s32 5, %v3024
        %v3026 = vrot.slane %v2999, %v3025
        %v3027 = vlaneseq
        %v3028 = vshrl.u32 %v3027, 7
        %v3029 = vsub.s32 6, %v3028
        %v3030 = vrot.slane %v2999, %v3029
        %v3031 = vlaneseq
        %v3032 = vshrl.u32 %v3031, 7
        %v3033 = vsub.s32 7, %v3032
        %v3034 = vrot.slane %v2999, %v3033
        %v3035 = vlaneseq
        %v3036 = vshrl.u32 %v3035, 7
        %v3037 = vsub.s32 0, %v3036
        %v3038 = vrot.slane %v3000, %v3037
        %v3039 = vlaneseq
        %v3040 = vshrl.u32 %v3039, 7
        %v3041 = vsub.s32 1, %v3040
        %v3042 = vrot.slane %v3000, %v3041
        %v3043 = vlaneseq
        %v3044 = vshrl.u32 %v3043, 7
        %v3045 = vsub.s32 2, %v3044
        %v3046 = vrot.slane %v3000, %v3045
        %v3047 = vlaneseq
        %v3048 = vshrl.u32 %v3047, 7
        %v3049 = vsub.s32 3, %v3048
        %v3050 = vrot.slane %v3000, %v3049
        %v3051 = vlaneseq
        %v3052 = vshrl.u32 %v3051, 7
        %v3053 = vsub.s32 4, %v3052
        %v3054 = vrot.slane %v3000, %v3053
        %v3055 = vlaneseq
        %v3056 = vshrl.u32 %v3055, 7
        %v3057 = vsub.s32 5, %v3056
        %v3058 = vrot.slane %v3000, %v3057
        %v3059 = vlaneseq
        %v3060 = vshrl.u32 %v3059, 7
        %v3061 = vsub.s32 6, %v3060
        %v3062 = vrot.slane %v3000, %v3061
        %v3063 = vlaneseq
        %v3064 = vshrl.u32 %v3063, 7
        %v3065 = vsub.s32 7, %v3064
        %v3066 = vrot.slane %v3000, %v3065
        %v3099 = vunpack.c.l.b16 %v2983
        %v3100 = vunpack.c.h.b16 %v2983
        %v3101 = vunpack.c.l.b16 %v2984
        %v3102 = vunpack.c.h.b16 %v2984
        %v3103 = vunpack.c.l.b16 %v2985
        %v3104 = vunpack.c.h.b16 %v2985
        %v3105 = vunpack.c.l.b16 %v2986
        %v3106 = vunpack.c.h.b16 %v2986
        %v3107 = vunpack.c.l.b16 %v2987
        %v3108 = vunpack.c.h.b16 %v2987
        %v3109 = vunpack.c.l.b16 %v2988
        %v3110 = vunpack.c.h.b16 %v2988
        %v3111 = vunpack.c.l.b16 %v2989
        %v3112 = vunpack.c.h.b16 %v2989
        %v3113 = vunpack.c.l.b16 %v2990
        %v3114 = vunpack.c.h.b16 %v2990
        %v3115 = vunpack.c.l.b16 %v2991
        %v3116 = vunpack.c.h.b16 %v2991
        %v3117 = vunpack.c.l.b16 %v2992
        %v3118 = vunpack.c.h.b16 %v2992
        %v3119 = vunpack.c.l.b16 %v2993
        %v3120 = vunpack.c.h.b16 %v2993
        %v3121 = vunpack.c.l.b16 %v2994
        %v3122 = vunpack.c.h.b16 %v2994
        %v3123 = vunpack.c.l.b16 %v2995
        %v3124 = vunpack.c.h.b16 %v2995
        %v3125 = vunpack.c.l.b16 %v2996
        %v3126 = vunpack.c.h.b16 %v2996
        %v3127 = vunpack.c.l.b16 %v2997
        %v3128 = vunpack.c.h.b16 %v2997
        %v3129 = vunpack.c.l.b16 %v2998
        %v3130 = vunpack.c.h.b16 %v2998
        %v3131 = vpack.c.b16 %v3115, %v3099
        %v3132 = vpack.c.b16 %v3116, %v3100
        %v3133 = vpack.c.b16 %v3117, %v3101
        %v3134 = vpack.c.b16 %v3118, %v3102
        %v3135 = vpack.c.b16 %v3119, %v3103
        %v3136 = vpack.c.b16 %v3120, %v3104
        %v3137 = vpack.c.b16 %v3121, %v3105
        %v3138 = vpack.c.b16 %v3122, %v3106
        %v3139 = vpack.c.b16 %v3123, %v3107
        %v3140 = vpack.c.b16 %v3124, %v3108
        %v3141 = vpack.c.b16 %v3125, %v3109
        %v3142 = vpack.c.b16 %v3126, %v3110
        %v3143 = vpack.c.b16 %v3127, %v3111
        %v3144 = vpack.c.b16 %v3128, %v3112
        %v3145 = vpack.c.b16 %v3129, %v3113
        %v3146 = vpack.c.b16 %v3130, %v3114
        %v3164 = vsel %vm1234, %v2977, 0
        %v3167 = vsel %vm1234, %v2978, 0
        %v3170 = vsel %vm1234, %v2979, 0
        %v3173 = vsel %vm1234, %v2980, 0
        %v3176 = vsel %vm1234, %v2981, 0
        %v3179 = vsel %vm1234, %v2982, 0
        %3181 = vmatprep.subr.bf16.mxu0 %v3132
        %3182 = vmatpush1.bf16.msra.mxu0 %v3131
        %3183 = vmatprep.subr.bf16.mxu0 0
        %3184 = vmatpush1.bf16.msra.mxu0 0
        %3185 = vmatprep.subr.bf16.mxu0 0
        %3186 = vmatpush1.bf16.msra.mxu0 0
        %3187 = vmatprep.subr.bf16.mxu0 0
        %3188 = vmatpush1.bf16.msra.mxu0 0
        %3189 = vmatprep.subr.bf16.mxu0 0
        %3190 = vmatpush1.bf16.msra.mxu0 0
        %3191 = vmatprep.subr.bf16.mxu0 0
        %3192 = vmatpush1.bf16.msra.mxu0 0
        %3193 = vmatprep.subr.bf16.mxu0 0
        %3194 = vmatpush1.bf16.msra.mxu0 0
        %3195 = vmatprep.subr.bf16.mxu0 0
        %3196 = vmatpush1.bf16.msra.mxu0 0
        %3197 = vmatprep.subr.bf16.mxu0 0
        %3198 = vmatpush1.bf16.msra.mxu0 0
        %3199 = vmatprep.subr.bf16.mxu0 0
        %3200 = vmatpush1.bf16.msra.mxu0 0
        %3201 = vmatprep.subr.bf16.mxu0 0
        %3202 = vmatpush1.bf16.msra.mxu0 0
        %3203 = vmatprep.subr.bf16.mxu0 0
        %3204 = vmatpush1.bf16.msra.mxu0 0
        %3205 = vmatprep.subr.bf16.mxu0 0
        %3206 = vmatpush1.bf16.msra.mxu0 0
        %3207 = vmatprep.subr.bf16.mxu0 0
        %3208 = vmatpush1.bf16.msra.mxu0 0
        %3209 = vmatprep.subr.bf16.mxu0 0
        %3210 = vmatpush1.bf16.msra.mxu0 0
        %3211 = vmatprep.subr.bf16.mxu0 0
        %3212 = vmatpush1.bf16.msra.mxu0 0
        %3213 = vmatprep.mubr.bf16.mxu0 0
        %3214 = vmatmul.mubr.bf16.gmra.mrb[0].mxu0 %v3164
        %v3215 = vpop.f32.mrb[0].mxu0
        %v3216 = vadd.f32 %v3006, %v3215
        %v3217 = vpop.f32.mrb[0].mxu0
        %v3218 = vadd.f32 %v3010, %v3217
        %v3219 = vpop.f32.mrb[0].mxu0
        %v3220 = vadd.f32 %v3006, %v3219
        %v3221 = vpop.f32.mrb[0].mxu0
        %v3222 = vadd.f32 %v3010, %v3221
        %3223 = vmatprep.mubr.bf16.mxu0 0
        %3224 = vmatmul.mubr.bf16.gmra.mrb[0].mxu0 %v3167
        %v3225 = vpop.f32.mrb[0].mxu0
        %v3226 = vadd.f32 %v3006, %v3225
        %v3227 = vpop.f32.mrb[0].mxu0
        %v3228 = vadd.f32 %v3010, %v3227
        %v3229 = vpop.f32.mrb[0].mxu0
        %v3230 = vadd.f32 %v3006, %v3229
        %v3231 = vpop.f32.mrb[0].mxu0
        %v3232 = vadd.f32 %v3010, %v3231
        %3233 = vmatprep.mubr.bf16.mxu0 0
        %3234 = vmatmul.mubr.bf16.gmra.mrb[0].mxu0 %v3170
        %v3235 = vpop.f32.mrb[0].mxu0
        %v3236 = vadd.f32 %v3006, %v3235
        %v3237 = vpop.f32.mrb[0].mxu0
        %v3238 = vadd.f32 %v3010, %v3237
        %v3239 = vpop.f32.mrb[0].mxu0
        %v3240 = vadd.f32 %v3006, %v3239
        %v3241 = vpop.f32.mrb[0].mxu0
        %v3242 = vadd.f32 %v3010, %v3241
        %3243 = vmatprep.mubr.bf16.mxu0 0
        %3244 = vmatmul.mubr.bf16.gmra.mrb[0].mxu0 %v3173
        %v3245 = vpop.f32.mrb[0].mxu0
        %v3246 = vadd.f32 %v3006, %v3245
        %v3247 = vpop.f32.mrb[0].mxu0
        %v3248 = vadd.f32 %v3010, %v3247
        %v3249 = vpop.f32.mrb[0].mxu0
        %v3250 = vadd.f32 %v3006, %v3249
        %v3251 = vpop.f32.mrb[0].mxu0
        %v3252 = vadd.f32 %v3010, %v3251
        %3253 = vmatprep.mubr.bf16.mxu0 0
        %3254 = vmatmul.mubr.bf16.gmra.mrb[0].mxu0 %v3176
        %v3255 = vpop.f32.mrb[0].mxu0
        %v3256 = vadd.f32 %v3006, %v3255
        %v3257 = vpop.f32.mrb[0].mxu0
        %v3258 = vadd.f32 %v3010, %v3257
        %v3259 = vpop.f32.mrb[0].mxu0
        %v3260 = vadd.f32 %v3006, %v3259
        %v3261 = vpop.f32.mrb[0].mxu0
        %v3262 = vadd.f32 %v3010, %v3261
        %3263 = vmatprep.mubr.bf16.mxu0 0
        %3264 = vmatmul.mubr.bf16.gmra.mrb[0].mxu0 %v3179
        %v3265 = vpop.f32.mrb[0].mxu0
        %v3266 = vadd.f32 %v3006, %v3265
        %v3267 = vpop.f32.mrb[0].mxu0
        %v3268 = vadd.f32 %v3010, %v3267
        %v3269 = vpop.f32.mrb[0].mxu0
        %v3270 = vadd.f32 %v3006, %v3269
        %v3271 = vpop.f32.mrb[0].mxu0
        %v3272 = vadd.f32 %v3010, %v3271
        %3273 = vdwg.mxu0
        %3274 = vmatprep.subr.bf16.mxu0 %v3134
        %3275 = vmatpush1.bf16.msra.mxu0 %v3133
        %3276 = vmatprep.subr.bf16.mxu0 0
        %3277 = vmatpush1.bf16.msra.mxu0 0
        %3278 = vmatprep.subr.bf16.mxu0 0
        %3279 = vmatpush1.bf16.msra.mxu0 0
        %3280 = vmatprep.subr.bf16.mxu0 0
        %3281 = vmatpush1.bf16.msra.mxu0 0
        %3282 = vmatprep.subr.bf16.mxu0 0
        %3283 = vmatpush1.bf16.msra.mxu0 0
        %3284 = vmatprep.subr.bf16.mxu0 0
        %3285 = vmatpush1.bf16.msra.mxu0 0
        %3286 = vmatprep.subr.bf16.mxu0 0
        %3287 = vmatpush1.bf16.msra.mxu0 0
        %3288 = vmatprep.subr.bf16.mxu0 0
        %3289 = vmatpush1.bf16.msra.mxu0 0
        %3290 = vmatprep.subr.bf16.mxu0 0
        %3291 = vmatpush1.bf16.msra.mxu0 0
        %3292 = vmatprep.subr.bf16.mxu0 0
        %3293 = vmatpush1.bf16.msra.mxu0 0
        %3294 = vmatprep.subr.bf16.mxu0 0
        %3295 = vmatpush1.bf16.msra.mxu0 0
        %3296 = vmatprep.subr.bf16.mxu0 0
        %3297 = vmatpush1.bf16.msra.mxu0 0
        %3298 = vmatprep.subr.bf16.mxu0 0
        %3299 = vmatpush1.bf16.msra.mxu0 0
        %3300 = vmatprep.subr.bf16.mxu0 0
        %3301 = vmatpush1.bf16.msra.mxu0 0
        %3302 = vmatprep.subr.bf16.mxu0 0
        %3303 = vmatpush1.bf16.msra.mxu0 0
        %3304 = vmatprep.subr.bf16.mxu0 0
        %3305 = vmatpush1.bf16.msra.mxu0 0
        %3306 = vmatprep.mubr.bf16.mxu0 0
        %3307 = vmatmul.mubr.bf16.gmra.mrb[0].mxu0 %v3164
        %v3308 = vpop.f32.mrb[0].mxu0
        %v3309 = vadd.f32 %v3014, %v3308
        %v3310 = vpop.f32.mrb[0].mxu0
        %v3311 = vadd.f32 %v3018, %v3310
        %v3312 = vpop.f32.mrb[0].mxu0
        %v3313 = vadd.f32 %v3014, %v3312
        %v3314 = vpop.f32.mrb[0].mxu0
        %v3315 = vadd.f32 %v3018, %v3314
        %3316 = vmatprep.mubr.bf16.mxu0 0
        %3317 = vmatmul.mubr.bf16.gmra.mrb[0].mxu0 %v3167
        %v3318 = vpop.f32.mrb[0].mxu0
        %v3319 = vadd.f32 %v3014, %v3318
        %v3320 = vpop.f32.mrb[0].mxu0
        %v3321 = vadd.f32 %v3018, %v3320
        %v3322 = vpop.f32.mrb[0].mxu0
        %v3323 = vadd.f32 %v3014, %v3322
        %v3324 = vpop.f32.mrb[0].mxu0
        %v3325 = vadd.f32 %v3018, %v3324
        %3326 = vmatprep.mubr.bf16.mxu0 0
        %3327 = vmatmul.mubr.bf16.gmra.mrb[0].mxu0 %v3170
        %v3328 = vpop.f32.mrb[0].mxu0
        %v3329 = vadd.f32 %v3014, %v3328
        %v3330 = vpop.f32.mrb[0].mxu0
        %v3331 = vadd.f32 %v3018, %v3330
        %v3332 = vpop.f32.mrb[0].mxu0
        %v3333 = vadd.f32 %v3014, %v3332
        %v3334 = vpop.f32.mrb[0].mxu0
        %v3335 = vadd.f32 %v3018, %v3334
        %3336 = vmatprep.mubr.bf16.mxu0 0
        %3337 = vmatmul.mubr.bf16.gmra.mrb[0].mxu0 %v3173
        %v3338 = vpop.f32.mrb[0].mxu0
        %v3339 = vadd.f32 %v3014, %v3338
        %v3340 = vpop.f32.mrb[0].mxu0
        %v3341 = vadd.f32 %v3018, %v3340
        %v3342 = vpop.f32.mrb[0].mxu0
        %v3343 = vadd.f32 %v3014, %v3342
        %v3344 = vpop.f32.mrb[0].mxu0
        %v3345 = vadd.f32 %v3018, %v3344
        %3346 = vmatprep.mubr.bf16.mxu0 0
        %3347 = vmatmul.mubr.bf16.gmra.mrb[0].mxu0 %v3176
        %v3348 = vpop.f32.mrb[0].mxu0
        %v3349 = vadd.f32 %v3014, %v3348
        %v3350 = vpop.f32.mrb[0].mxu0
        %v3351 = vadd.f32 %v3018, %v3350
        %v3352 = vpop.f32.mrb[0].mxu0
        %v3353 = vadd.f32 %v3014, %v3352
        %v3354 = vpop.f32.mrb[0].mxu0
        %v3355 = vadd.f32 %v3018, %v3354
        %3356 = vmatprep.mubr.bf16.mxu0 0
        %3357 = vmatmul.mubr.bf16.gmra.mrb[0].mxu0 %v3179
        %v3358 = vpop.f32.mrb[0].mxu0
        %v3359 = vadd.f32 %v3014, %v3358
        %v3360 = vpop.f32.mrb[0].mxu0
        %v3361 = vadd.f32 %v3018, %v3360
        %v3362 = vpop.f32.mrb[0].mxu0
        %v3363 = vadd.f32 %v3014, %v3362
        %v3364 = vpop.f32.mrb[0].mxu0
        %v3365 = vadd.f32 %v3018, %v3364
        %3366 = vdwg.mxu0
        %3367 = vmatprep.subr.bf16.mxu0 %v3136
        %3368 = vmatpush1.bf16.msra.mxu0 %v3135
        %3369 = vmatprep.subr.bf16.mxu0 0
        %3370 = vmatpush1.bf16.msra.mxu0 0
        %3371 = vmatprep.subr.bf16.mxu0 0
        %3372 = vmatpush1.bf16.msra.mxu0 0
        %3373 = vmatprep.subr.bf16.mxu0 0
        %3374 = vmatpush1.bf16.msra.mxu0 0
        %3375 = vmatprep.subr.bf16.mxu0 0
        %3376 = vmatpush1.bf16.msra.mxu0 0
        %3377 = vmatprep.subr.bf16.mxu0 0
        %3378 = vmatpush1.bf16.msra.mxu0 0
        %3379 = vmatprep.subr.bf16.mxu0 0
        %3380 = vmatpush1.bf16.msra.mxu0 0
        %3381 = vmatprep.subr.bf16.mxu0 0
        %3382 = vmatpush1.bf16.msra.mxu0 0
        %3383 = vmatprep.subr.bf16.mxu0 0
        %3384 = vmatpush1.bf16.msra.mxu0 0
        %3385 = vmatprep.subr.bf16.mxu0 0
        %3386 = vmatpush1.bf16.msra.mxu0 0
        %3387 = vmatprep.subr.bf16.mxu0 0
        %3388 = vmatpush1.bf16.msra.mxu0 0
        %3389 = vmatprep.subr.bf16.mxu0 0
        %3390 = vmatpush1.bf16.msra.mxu0 0
        %3391 = vmatprep.subr.bf16.mxu0 0
        %3392 = vmatpush1.bf16.msra.mxu0 0
        %3393 = vmatprep.subr.bf16.mxu0 0
        %3394 = vmatpush1.bf16.msra.mxu0 0
        %3395 = vmatprep.subr.bf16.mxu0 0
        %3396 = vmatpush1.bf16.msra.mxu0 0
        %3397 = vmatprep.subr.bf16.mxu0 0
        %3398 = vmatpush1.bf16.msra.mxu0 0
        %3399 = vmatprep.mubr.bf16.mxu0 0
        %3400 = vmatmul.mubr.bf16.gmra.mrb[0].mxu0 %v3164
        %v3401 = vpop.f32.mrb[0].mxu0
        %v3402 = vadd.f32 %v3022, %v3401
        %v3403 = vpop.f32.mrb[0].mxu0
        %v3404 = vadd.f32 %v3026, %v3403
        %v3405 = vpop.f32.mrb[0].mxu0
        %v3406 = vadd.f32 %v3022, %v3405
        %v3407 = vpop.f32.mrb[0].mxu0
        %v3408 = vadd.f32 %v3026, %v3407
        %3409 = vmatprep.mubr.bf16.mxu0 0
        %3410 = vmatmul.mubr.bf16.gmra.mrb[0].mxu0 %v3167
        %v3411 = vpop.f32.mrb[0].mxu0
        %v3412 = vadd.f32 %v3022, %v3411
        %v3413 = vpop.f32.mrb[0].mxu0
        %v3414 = vadd.f32 %v3026, %v3413
        %v3415 = vpop.f32.mrb[0].mxu0
        %v3416 = vadd.f32 %v3022, %v3415
        %v3417 = vpop.f32.mrb[0].mxu0
        %v3418 = vadd.f32 %v3026, %v3417
        %3419 = vmatprep.mubr.bf16.mxu0 0
        %3420 = vmatmul.mubr.bf16.gmra.mrb[0].mxu0 %v3170
        %v3421 = vpop.f32.mrb[0].mxu0
        %v3422 = vadd.f32 %v3022, %v3421
        %v3423 = vpop.f32.mrb[0].mxu0
        %v3424 = vadd.f32 %v3026, %v3423
        %v3425 = vpop.f32.mrb[0].mxu0
        %v3426 = vadd.f32 %v3022, %v3425
        %v3427 = vpop.f32.mrb[0].mxu0
        %v3428 = vadd.f32 %v3026, %v3427
        %3429 = vmatprep.mubr.bf16.mxu0 0
        %3430 = vmatmul.mubr.bf16.gmra.mrb[0].mxu0 %v3173
        %v3431 = vpop.f32.mrb[0].mxu0
        %v3432 = vadd.f32 %v3022, %v3431
        %v3433 = vpop.f32.mrb[0].mxu0
        %v3434 = vadd.f32 %v3026, %v3433
        %v3435 = vpop.f32.mrb[0].mxu0
        %v3436 = vadd.f32 %v3022, %v3435
        %v3437 = vpop.f32.mrb[0].mxu0
        %v3438 = vadd.f32 %v3026, %v3437
        %3439 = vmatprep.mubr.bf16.mxu0 0
        %3440 = vmatmul.mubr.bf16.gmra.mrb[0].mxu0 %v3176
        %v3441 = vpop.f32.mrb[0].mxu0
        %v3442 = vadd.f32 %v3022, %v3441
        %v3443 = vpop.f32.mrb[0].mxu0
        %v3444 = vadd.f32 %v3026, %v3443
        %v3445 = vpop.f32.mrb[0].mxu0
        %v3446 = vadd.f32 %v3022, %v3445
        %v3447 = vpop.f32.mrb[0].mxu0
        %v3448 = vadd.f32 %v3026, %v3447
        %3449 = vmatprep.mubr.bf16.mxu0 0
        %3450 = vmatmul.mubr.bf16.gmra.mrb[0].mxu0 %v3179
        %v3451 = vpop.f32.mrb[0].mxu0
        %v3452 = vadd.f32 %v3022, %v3451
        %v3453 = vpop.f32.mrb[0].mxu0
        %v3454 = vadd.f32 %v3026, %v3453
        %v3455 = vpop.f32.mrb[0].mxu0
        %v3456 = vadd.f32 %v3022, %v3455
        %v3457 = vpop.f32.mrb[0].mxu0
        %v3458 = vadd.f32 %v3026, %v3457
        %3459 = vdwg.mxu0
        %3460 = vmatprep.subr.bf16.mxu0 %v3138
        %3461 = vmatpush1.bf16.msra.mxu0 %v3137
        %3462 = vmatprep.subr.bf16.mxu0 0
        %3463 = vmatpush1.bf16.msra.mxu0 0
        %3464 = vmatprep.subr.bf16.mxu0 0
        %3465 = vmatpush1.bf16.msra.mxu0 0
        %3466 = vmatprep.subr.bf16.mxu0 0
        %3467 = vmatpush1.bf16.msra.mxu0 0
        %3468 = vmatprep.subr.bf16.mxu0 0
        %3469 = vmatpush1.bf16.msra.mxu0 0
        %3470 = vmatprep.subr.bf16.mxu0 0
        %3471 = vmatpush1.bf16.msra.mxu0 0
        %3472 = vmatprep.subr.bf16.mxu0 0
        %3473 = vmatpush1.bf16.msra.mxu0 0
        %3474 = vmatprep.subr.bf16.mxu0 0
        %3475 = vmatpush1.bf16.msra.mxu0 0
        %3476 = vmatprep.subr.bf16.mxu0 0
        %3477 = vmatpush1.bf16.msra.mxu0 0
        %3478 = vmatprep.subr.bf16.mxu0 0
        %3479 = vmatpush1.bf16.msra.mxu0 0
        %3480 = vmatprep.subr.bf16.mxu0 0
        %3481 = vmatpush1.bf16.msra.mxu0 0
        %3482 = vmatprep.subr.bf16.mxu0 0
        %3483 = vmatpush1.bf16.msra.mxu0 0
        %3484 = vmatprep.subr.bf16.mxu0 0
        %3485 = vmatpush1.bf16.msra.mxu0 0
        %3486 = vmatprep.subr.bf16.mxu0 0
        %3487 = vmatpush1.bf16.msra.mxu0 0
        %3488 = vmatprep.subr.bf16.mxu0 0
        %3489 = vmatpush1.bf16.msra.mxu0 0
        %3490 = vmatprep.subr.bf16.mxu0 0
        %3491 = vmatpush1.bf16.msra.mxu0 0
        %3492 = vmatprep.mubr.bf16.mxu0 0
        %3493 = vmatmul.mubr.bf16.gmra.mrb[0].mxu0 %v3164
        %v3494 = vpop.f32.mrb[0].mxu0
        %v3495 = vadd.f32 %v3030, %v3494
        %v3496 = vpop.f32.mrb[0].mxu0
        %v3497 = vadd.f32 %v3034, %v3496
        %v3498 = vpop.f32.mrb[0].mxu0
        %v3499 = vadd.f32 %v3030, %v3498
        %v3500 = vpop.f32.mrb[0].mxu0
        %v3501 = vadd.f32 %v3034, %v3500
        %3502 = vmatprep.mubr.bf16.mxu0 0
        %3503 = vmatmul.mubr.bf16.gmra.mrb[0].mxu0 %v3167
        %v3504 = vpop.f32.mrb[0].mxu0
        %v3505 = vadd.f32 %v3030, %v3504
        %v3506 = vpop.f32.mrb[0].mxu0
        %v3507 = vadd.f32 %v3034, %v3506
        %v3508 = vpop.f32.mrb[0].mxu0
        %v3509 = vadd.f32 %v3030, %v3508
        %v3510 = vpop.f32.mrb[0].mxu0
        %v3511 = vadd.f32 %v3034, %v3510
        %3512 = vmatprep.mubr.bf16.mxu0 0
        %3513 = vmatmul.mubr.bf16.gmra.mrb[0].mxu0 %v3170
        %v3514 = vpop.f32.mrb[0].mxu0
        %v3515 = vadd.f32 %v3030, %v3514
        %v3516 = vpop.f32.mrb[0].mxu0
        %v3517 = vadd.f32 %v3034, %v3516
        %v3518 = vpop.f32.mrb[0].mxu0
        %v3519 = vadd.f32 %v3030, %v3518
        %v3520 = vpop.f32.mrb[0].mxu0
        %v3521 = vadd.f32 %v3034, %v3520
        %3522 = vmatprep.mubr.bf16.mxu0 0
        %3523 = vmatmul.mubr.bf16.gmra.mrb[0].mxu0 %v3173
        %v3524 = vpop.f32.mrb[0].mxu0
        %v3525 = vadd.f32 %v3030, %v3524
        %v3526 = vpop.f32.mrb[0].mxu0
        %v3527 = vadd.f32 %v3034, %v3526
        %v3528 = vpop.f32.mrb[0].mxu0
        %v3529 = vadd.f32 %v3030, %v3528
        %v3530 = vpop.f32.mrb[0].mxu0
        %v3531 = vadd.f32 %v3034, %v3530
        %3532 = vmatprep.mubr.bf16.mxu0 0
        %3533 = vmatmul.mubr.bf16.gmra.mrb[0].mxu0 %v3176
        %v3534 = vpop.f32.mrb[0].mxu0
        %v3535 = vadd.f32 %v3030, %v3534
        %v3536 = vpop.f32.mrb[0].mxu0
        %v3537 = vadd.f32 %v3034, %v3536
        %v3538 = vpop.f32.mrb[0].mxu0
        %v3539 = vadd.f32 %v3030, %v3538
        %v3540 = vpop.f32.mrb[0].mxu0
        %v3541 = vadd.f32 %v3034, %v3540
        %3542 = vmatprep.mubr.bf16.mxu0 0
        %3543 = vmatmul.mubr.bf16.gmra.mrb[0].mxu0 %v3179
        %v3544 = vpop.f32.mrb[0].mxu0
        %v3545 = vadd.f32 %v3030, %v3544
        %v3546 = vpop.f32.mrb[0].mxu0
        %v3547 = vadd.f32 %v3034, %v3546
        %v3548 = vpop.f32.mrb[0].mxu0
        %v3549 = vadd.f32 %v3030, %v3548
        %v3550 = vpop.f32.mrb[0].mxu0
        %v3551 = vadd.f32 %v3034, %v3550
        %3552 = vdwg.mxu0
        %3553 = vmatprep.subr.bf16.mxu0 %v3140
        %3554 = vmatpush1.bf16.msra.mxu0 %v3139
        %3555 = vmatprep.subr.bf16.mxu0 0
        %3556 = vmatpush1.bf16.msra.mxu0 0
        %3557 = vmatprep.subr.bf16.mxu0 0
        %3558 = vmatpush1.bf16.msra.mxu0 0
        %3559 = vmatprep.subr.bf16.mxu0 0
        %3560 = vmatpush1.bf16.msra.mxu0 0
        %3561 = vmatprep.subr.bf16.mxu0 0
        %3562 = vmatpush1.bf16.msra.mxu0 0
        %3563 = vmatprep.subr.bf16.mxu0 0
        %3564 = vmatpush1.bf16.msra.mxu0 0
        %3565 = vmatprep.subr.bf16.mxu0 0
        %3566 = vmatpush1.bf16.msra.mxu0 0
        %3567 = vmatprep.subr.bf16.mxu0 0
        %3568 = vmatpush1.bf16.msra.mxu0 0
        %3569 = vmatprep.subr.bf16.mxu0 0
        %3570 = vmatpush1.bf16.msra.mxu0 0
        %3571 = vmatprep.subr.bf16.mxu0 0
        %3572 = vmatpush1.bf16.msra.mxu0 0
        %3573 = vmatprep.subr.bf16.mxu0 0
        %3574 = vmatpush1.bf16.msra.mxu0 0
        %3575 = vmatprep.subr.bf16.mxu0 0
        %3576 = vmatpush1.bf16.msra.mxu0 0
        %3577 = vmatprep.subr.bf16.mxu0 0
        %3578 = vmatpush1.bf16.msra.mxu0 0
        %3579 = vmatprep.subr.bf16.mxu0 0
        %3580 = vmatpush1.bf16.msra.mxu0 0
        %3581 = vmatprep.subr.bf16.mxu0 0
        %3582 = vmatpush1.bf16.msra.mxu0 0
        %3583 = vmatprep.subr.bf16.mxu0 0
        %3584 = vmatpush1.bf16.msra.mxu0 0
        %3585 = vmatprep.mubr.bf16.mxu0 0
        %3586 = vmatmul.mubr.bf16.gmra.mrb[0].mxu0 %v3164
        %v3587 = vpop.f32.mrb[0].mxu0
        %v3588 = vadd.f32 %v3038, %v3587
        %v3589 = vpop.f32.mrb[0].mxu0
        %v3590 = vadd.f32 %v3042, %v3589
        %v3591 = vpop.f32.mrb[0].mxu0
        %v3592 = vadd.f32 %v3038, %v3591
        %v3593 = vpop.f32.mrb[0].mxu0
        %v3594 = vadd.f32 %v3042, %v3593
        %3595 = vmatprep.mubr.bf16.mxu0 0
        %3596 = vmatmul.mubr.bf16.gmra.mrb[0].mxu0 %v3167
        %v3597 = vpop.f32.mrb[0].mxu0
        %v3598 = vadd.f32 %v3038, %v3597
        %v3599 = vpop.f32.mrb[0].mxu0
        %v3600 = vadd.f32 %v3042, %v3599
        %v3601 = vpop.f32.mrb[0].mxu0
        %v3602 = vadd.f32 %v3038, %v3601
        %v3603 = vpop.f32.mrb[0].mxu0
        %v3604 = vadd.f32 %v3042, %v3603
        %3605 = vmatprep.mubr.bf16.mxu0 0
        %3606 = vmatmul.mubr.bf16.gmra.mrb[0].mxu0 %v3170
        %v3607 = vpop.f32.mrb[0].mxu0
        %v3608 = vadd.f32 %v3038, %v3607
        %v3609 = vpop.f32.mrb[0].mxu0
        %v3610 = vadd.f32 %v3042, %v3609
        %v3611 = vpop.f32.mrb[0].mxu0
        %v3612 = vadd.f32 %v3038, %v3611
        %v3613 = vpop.f32.mrb[0].mxu0
        %v3614 = vadd.f32 %v3042, %v3613
        %3615 = vmatprep.mubr.bf16.mxu0 0
        %3616 = vmatmul.mubr.bf16.gmra.mrb[0].mxu0 %v3173
        %v3617 = vpop.f32.mrb[0].mxu0
        %v3618 = vadd.f32 %v3038, %v3617
        %v3619 = vpop.f32.mrb[0].mxu0
        %v3620 = vadd.f32 %v3042, %v3619
        %v3621 = vpop.f32.mrb[0].mxu0
        %v3622 = vadd.f32 %v3038, %v3621
        %v3623 = vpop.f32.mrb[0].mxu0
        %v3624 = vadd.f32 %v3042, %v3623
        %3625 = vmatprep.mubr.bf16.mxu0 0
        %3626 = vmatmul.mubr.bf16.gmra.mrb[0].mxu0 %v3176
        %v3627 = vpop.f32.mrb[0].mxu0
        %v3628 = vadd.f32 %v3038, %v3627
        %v3629 = vpop.f32.mrb[0].mxu0
        %v3630 = vadd.f32 %v3042, %v3629
        %v3631 = vpop.f32.mrb[0].mxu0
        %v3632 = vadd.f32 %v3038, %v3631
        %v3633 = vpop.f32.mrb[0].mxu0
        %v3634 = vadd.f32 %v3042, %v3633
        %3635 = vmatprep.mubr.bf16.mxu0 0
        %3636 = vmatmul.mubr.bf16.gmra.mrb[0].mxu0 %v3179
        %v3637 = vpop.f32.mrb[0].mxu0
        %v3638 = vadd.f32 %v3038, %v3637
        %v3639 = vpop.f32.mrb[0].mxu0
        %v3640 = vadd.f32 %v3042, %v3639
        %v3641 = vpop.f32.mrb[0].mxu0
        %v3642 = vadd.f32 %v3038, %v3641
        %v3643 = vpop.f32.mrb[0].mxu0
        %v3644 = vadd.f32 %v3042, %v3643
        %3645 = vdwg.mxu0
        %3646 = vmatprep.subr.bf16.mxu0 %v3142
        %3647 = vmatpush1.bf16.msra.mxu0 %v3141
        %3648 = vmatprep.subr.bf16.mxu0 0
        %3649 = vmatpush1.bf16.msra.mxu0 0
        %3650 = vmatprep.subr.bf16.mxu0 0
        %3651 = vmatpush1.bf16.msra.mxu0 0
        %3652 = vmatprep.subr.bf16.mxu0 0
        %3653 = vmatpush1.bf16.msra.mxu0 0
        %3654 = vmatprep.subr.bf16.mxu0 0
        %3655 = vmatpush1.bf16.msra.mxu0 0
        %3656 = vmatprep.subr.bf16.mxu0 0
        %3657 = vmatpush1.bf16.msra.mxu0 0
        %3658 = vmatprep.subr.bf16.mxu0 0
        %3659 = vmatpush1.bf16.msra.mxu0 0
        %3660 = vmatprep.subr.bf16.mxu0 0
        %3661 = vmatpush1.bf16.msra.mxu0 0
        %3662 = vmatprep.subr.bf16.mxu0 0
        %3663 = vmatpush1.bf16.msra.mxu0 0
        %3664 = vmatprep.subr.bf16.mxu0 0
        %3665 = vmatpush1.bf16.msra.mxu0 0
        %3666 = vmatprep.subr.bf16.mxu0 0
        %3667 = vmatpush1.bf16.msra.mxu0 0
        %3668 = vmatprep.subr.bf16.mxu0 0
        %3669 = vmatpush1.bf16.msra.mxu0 0
        %3670 = vmatprep.subr.bf16.mxu0 0
        %3671 = vmatpush1.bf16.msra.mxu0 0
        %3672 = vmatprep.subr.bf16.mxu0 0
        %3673 = vmatpush1.bf16.msra.mxu0 0
        %3674 = vmatprep.subr.bf16.mxu0 0
        %3675 = vmatpush1.bf16.msra.mxu0 0
        %3676 = vmatprep.subr.bf16.mxu0 0
        %3677 = vmatpush1.bf16.msra.mxu0 0
        %3678 = vmatprep.mubr.bf16.mxu0 0
        %3679 = vmatmul.mubr.bf16.gmra.mrb[0].mxu0 %v3164
        %v3680 = vpop.f32.mrb[0].mxu0
        %v3681 = vadd.f32 %v3046, %v3680
        %v3682 = vpop.f32.mrb[0].mxu0
        %v3683 = vadd.f32 %v3050, %v3682
        %v3684 = vpop.f32.mrb[0].mxu0
        %v3685 = vadd.f32 %v3046, %v3684
        %v3686 = vpop.f32.mrb[0].mxu0
        %v3687 = vadd.f32 %v3050, %v3686
        %3688 = vmatprep.mubr.bf16.mxu0 0
        %3689 = vmatmul.mubr.bf16.gmra.mrb[0].mxu0 %v3167
        %v3690 = vpop.f32.mrb[0].mxu0
        %v3691 = vadd.f32 %v3046, %v3690
        %v3692 = vpop.f32.mrb[0].mxu0
        %v3693 = vadd.f32 %v3050, %v3692
        %v3694 = vpop.f32.mrb[0].mxu0
        %v3695 = vadd.f32 %v3046, %v3694
        %v3696 = vpop.f32.mrb[0].mxu0
        %v3697 = vadd.f32 %v3050, %v3696
        %3698 = vmatprep.mubr.bf16.mxu0 0
        %3699 = vmatmul.mubr.bf16.gmra.mrb[0].mxu0 %v3170
        %v3700 = vpop.f32.mrb[0].mxu0
        %v3701 = vadd.f32 %v3046, %v3700
        %v3702 = vpop.f32.mrb[0].mxu0
        %v3703 = vadd.f32 %v3050, %v3702
        %v3704 = vpop.f32.mrb[0].mxu0
        %v3705 = vadd.f32 %v3046, %v3704
        %v3706 = vpop.f32.mrb[0].mxu0
        %v3707 = vadd.f32 %v3050, %v3706
        %3708 = vmatprep.mubr.bf16.mxu0 0
        %3709 = vmatmul.mubr.bf16.gmra.mrb[0].mxu0 %v3173
        %v3710 = vpop.f32.mrb[0].mxu0
        %v3711 = vadd.f32 %v3046, %v3710
        %v3712 = vpop.f32.mrb[0].mxu0
        %v3713 = vadd.f32 %v3050, %v3712
        %v3714 = vpop.f32.mrb[0].mxu0
        %v3715 = vadd.f32 %v3046, %v3714
        %v3716 = vpop.f32.mrb[0].mxu0
        %v3717 = vadd.f32 %v3050, %v3716
        %3718 = vmatprep.mubr.bf16.mxu0 0
        %3719 = vmatmul.mubr.bf16.gmra.mrb[0].mxu0 %v3176
        %v3720 = vpop.f32.mrb[0].mxu0
        %v3721 = vadd.f32 %v3046, %v3720
        %v3722 = vpop.f32.mrb[0].mxu0
        %v3723 = vadd.f32 %v3050, %v3722
        %v3724 = vpop.f32.mrb[0].mxu0
        %v3725 = vadd.f32 %v3046, %v3724
        %v3726 = vpop.f32.mrb[0].mxu0
        %v3727 = vadd.f32 %v3050, %v3726
        %3728 = vmatprep.mubr.bf16.mxu0 0
        %3729 = vmatmul.mubr.bf16.gmra.mrb[0].mxu0 %v3179
        %v3730 = vpop.f32.mrb[0].mxu0
        %v3731 = vadd.f32 %v3046, %v3730
        %v3732 = vpop.f32.mrb[0].mxu0
        %v3733 = vadd.f32 %v3050, %v3732
        %v3734 = vpop.f32.mrb[0].mxu0
        %v3735 = vadd.f32 %v3046, %v3734
        %v3736 = vpop.f32.mrb[0].mxu0
        %v3737 = vadd.f32 %v3050, %v3736
        %3738 = vdwg.mxu0
        %3739 = vmatprep.subr.bf16.mxu0 %v3144
        %3740 = vmatpush1.bf16.msra.mxu0 %v3143
        %3741 = vmatprep.subr.bf16.mxu0 0
        %3742 = vmatpush1.bf16.msra.mxu0 0
        %3743 = vmatprep.subr.bf16.mxu0 0
        %3744 = vmatpush1.bf16.msra.mxu0 0
        %3745 = vmatprep.subr.bf16.mxu0 0
        %3746 = vmatpush1.bf16.msra.mxu0 0
        %3747 = vmatprep.subr.bf16.mxu0 0
        %3748 = vmatpush1.bf16.msra.mxu0 0
        %3749 = vmatprep.subr.bf16.mxu0 0
        %3750 = vmatpush1.bf16.msra.mxu0 0
        %3751 = vmatprep.subr.bf16.mxu0 0
        %3752 = vmatpush1.bf16.msra.mxu0 0
        %3753 = vmatprep.subr.bf16.mxu0 0
        %3754 = vmatpush1.bf16.msra.mxu0 0
        %3755 = vmatprep.subr.bf16.mxu0 0
        %3756 = vmatpush1.bf16.msra.mxu0 0
        %3757 = vmatprep.subr.bf16.mxu0 0
        %3758 = vmatpush1.bf16.msra.mxu0 0
        %3759 = vmatprep.subr.bf16.mxu0 0
        %3760 = vmatpush1.bf16.msra.mxu0 0
        %3761 = vmatprep.subr.bf16.mxu0 0
        %3762 = vmatpush1.bf16.msra.mxu0 0
        %3763 = vmatprep.subr.bf16.mxu0 0
        %3764 = vmatpush1.bf16.msra.mxu0 0
        %3765 = vmatprep.subr.bf16.mxu0 0
        %3766 = vmatpush1.bf16.msra.mxu0 0
        %3767 = vmatprep.subr.bf16.mxu0 0
        %3768 = vmatpush1.bf16.msra.mxu0 0
        %3769 = vmatprep.subr.bf16.mxu0 0
        %3770 = vmatpush1.bf16.msra.mxu0 0
        %3771 = vmatprep.mubr.bf16.mxu0 0
        %3772 = vmatmul.mubr.bf16.gmra.mrb[0].mxu0 %v3164
        %v3773 = vpop.f32.mrb[0].mxu0
        %v3774 = vadd.f32 %v3054, %v3773
        %v3775 = vpop.f32.mrb[0].mxu0
        %v3776 = vadd.f32 %v3058, %v3775
        %v3777 = vpop.f32.mrb[0].mxu0
        %v3778 = vadd.f32 %v3054, %v3777
        %v3779 = vpop.f32.mrb[0].mxu0
        %v3780 = vadd.f32 %v3058, %v3779
        %3781 = vmatprep.mubr.bf16.mxu0 0
        %3782 = vmatmul.mubr.bf16.gmra.mrb[0].mxu0 %v3167
        %v3783 = vpop.f32.mrb[0].mxu0
        %v3784 = vadd.f32 %v3054, %v3783
        %v3785 = vpop.f32.mrb[0].mxu0
        %v3786 = vadd.f32 %v3058, %v3785
        %v3787 = vpop.f32.mrb[0].mxu0
        %v3788 = vadd.f32 %v3054, %v3787
        %v3789 = vpop.f32.mrb[0].mxu0
        %v3790 = vadd.f32 %v3058, %v3789
        %3791 = vmatprep.mubr.bf16.mxu0 0
        %3792 = vmatmul.mubr.bf16.gmra.mrb[0].mxu0 %v3170
        %v3793 = vpop.f32.mrb[0].mxu0
        %v3794 = vadd.f32 %v3054, %v3793
        %v3795 = vpop.f32.mrb[0].mxu0
        %v3796 = vadd.f32 %v3058, %v3795
        %v3797 = vpop.f32.mrb[0].mxu0
        %v3798 = vadd.f32 %v3054, %v3797
        %v3799 = vpop.f32.mrb[0].mxu0
        %v3800 = vadd.f32 %v3058, %v3799
        %3801 = vmatprep.mubr.bf16.mxu0 0
        %3802 = vmatmul.mubr.bf16.gmra.mrb[0].mxu0 %v3173
        %v3803 = vpop.f32.mrb[0].mxu0
        %v3804 = vadd.f32 %v3054, %v3803
        %v3805 = vpop.f32.mrb[0].mxu0
        %v3806 = vadd.f32 %v3058, %v3805
        %v3807 = vpop.f32.mrb[0].mxu0
        %v3808 = vadd.f32 %v3054, %v3807
        %v3809 = vpop.f32.mrb[0].mxu0
        %v3810 = vadd.f32 %v3058, %v3809
        %3811 = vmatprep.mubr.bf16.mxu0 0
        %3812 = vmatmul.mubr.bf16.gmra.mrb[0].mxu0 %v3176
        %v3813 = vpop.f32.mrb[0].mxu0
        %v3814 = vadd.f32 %v3054, %v3813
        %v3815 = vpop.f32.mrb[0].mxu0
        %v3816 = vadd.f32 %v3058, %v3815
        %v3817 = vpop.f32.mrb[0].mxu0
        %v3818 = vadd.f32 %v3054, %v3817
        %v3819 = vpop.f32.mrb[0].mxu0
        %v3820 = vadd.f32 %v3058, %v3819
        %3821 = vmatprep.mubr.bf16.mxu0 0
        %3822 = vmatmul.mubr.bf16.gmra.mrb[0].mxu0 %v3179
        %v3823 = vpop.f32.mrb[0].mxu0
        %v3824 = vadd.f32 %v3054, %v3823
        %v3825 = vpop.f32.mrb[0].mxu0
        %v3826 = vadd.f32 %v3058, %v3825
        %v3827 = vpop.f32.mrb[0].mxu0
        %v3828 = vadd.f32 %v3054, %v3827
        %v3829 = vpop.f32.mrb[0].mxu0
        %v3830 = vadd.f32 %v3058, %v3829
        %3831 = vdwg.mxu0
        %3832 = vmatprep.subr.bf16.mxu0 %v3146
        %3833 = vmatpush1.bf16.msra.mxu0 %v3145
        %3834 = vmatprep.subr.bf16.mxu0 0
        %3835 = vmatpush1.bf16.msra.mxu0 0
        %3836 = vmatprep.subr.bf16.mxu0 0
        %3837 = vmatpush1.bf16.msra.mxu0 0
        %3838 = vmatprep.subr.bf16.mxu0 0
        %3839 = vmatpush1.bf16.msra.mxu0 0
        %3840 = vmatprep.subr.bf16.mxu0 0
        %3841 = vmatpush1.bf16.msra.mxu0 0
        %3842 = vmatprep.subr.bf16.mxu0 0
        %3843 = vmatpush1.bf16.msra.mxu0 0
        %3844 = vmatprep.subr.bf16.mxu0 0
        %3845 = vmatpush1.bf16.msra.mxu0 0
        %3846 = vmatprep.subr.bf16.mxu0 0
        %3847 = vmatpush1.bf16.msra.mxu0 0
        %3848 = vmatprep.subr.bf16.mxu0 0
        %3849 = vmatpush1.bf16.msra.mxu0 0
        %3850 = vmatprep.subr.bf16.mxu0 0
        %3851 = vmatpush1.bf16.msra.mxu0 0
        %3852 = vmatprep.subr.bf16.mxu0 0
        %3853 = vmatpush1.bf16.msra.mxu0 0
        %3854 = vmatprep.subr.bf16.mxu0 0
        %3855 = vmatpush1.bf16.msra.mxu0 0
        %3856 = vmatprep.subr.bf16.mxu0 0
        %3857 = vmatpush1.bf16.msra.mxu0 0
        %3858 = vmatprep.subr.bf16.mxu0 0
        %3859 = vmatpush1.bf16.msra.mxu0 0
        %3860 = vmatprep.subr.bf16.mxu0 0
        %3861 = vmatpush1.bf16.msra.mxu0 0
        %3862 = vmatprep.subr.bf16.mxu0 0
        %3863 = vmatpush1.bf16.msra.mxu0 0
        %3864 = vmatprep.mubr.bf16.mxu0 0
        %3865 = vmatmul.mubr.bf16.gmra.mrb[0].mxu0 %v3164
        %v3866 = vpop.f32.mrb[0].mxu0
        %v3867 = vadd.f32 %v3062, %v3866
        %v3868 = vpop.f32.mrb[0].mxu0
        %v3869 = vadd.f32 %v3066, %v3868
        %v3870 = vpop.f32.mrb[0].mxu0
        %v3871 = vadd.f32 %v3062, %v3870
        %v3872 = vpop.f32.mrb[0].mxu0
        %v3873 = vadd.f32 %v3066, %v3872
        %3874 = vmatprep.mubr.bf16.mxu0 0
        %3875 = vmatmul.mubr.bf16.gmra.mrb[0].mxu0 %v3167
        %v3876 = vpop.f32.mrb[0].mxu0
        %v3877 = vadd.f32 %v3062, %v3876
        %v3878 = vpop.f32.mrb[0].mxu0
        %v3879 = vadd.f32 %v3066, %v3878
        %v3880 = vpop.f32.mrb[0].mxu0
        %v3881 = vadd.f32 %v3062, %v3880
        %v3882 = vpop.f32.mrb[0].mxu0
        %v3883 = vadd.f32 %v3066, %v3882
        %3884 = vmatprep.mubr.bf16.mxu0 0
        %3885 = vmatmul.mubr.bf16.gmra.mrb[0].mxu0 %v3170
        %v3886 = vpop.f32.mrb[0].mxu0
        %v3887 = vadd.f32 %v3062, %v3886
        %v3888 = vpop.f32.mrb[0].mxu0
        %v3889 = vadd.f32 %v3066, %v3888
        %v3890 = vpop.f32.mrb[0].mxu0
        %v3891 = vadd.f32 %v3062, %v3890
        %v3892 = vpop.f32.mrb[0].mxu0
        %v3893 = vadd.f32 %v3066, %v3892
        %3894 = vmatprep.mubr.bf16.mxu0 0
        %3895 = vmatmul.mubr.bf16.gmra.mrb[0].mxu0 %v3173
        %v3896 = vpop.f32.mrb[0].mxu0
        %v3897 = vadd.f32 %v3062, %v3896
        %v3898 = vpop.f32.mrb[0].mxu0
        %v3899 = vadd.f32 %v3066, %v3898
        %v3900 = vpop.f32.mrb[0].mxu0
        %v3901 = vadd.f32 %v3062, %v3900
        %v3902 = vpop.f32.mrb[0].mxu0
        %v3903 = vadd.f32 %v3066, %v3902
        %3904 = vmatprep.mubr.bf16.mxu0 0
        %3905 = vmatmul.mubr.bf16.gmra.mrb[0].mxu0 %v3176
        %v3906 = vpop.f32.mrb[0].mxu0
        %v3907 = vadd.f32 %v3062, %v3906
        %v3908 = vpop.f32.mrb[0].mxu0
        %v3909 = vadd.f32 %v3066, %v3908
        %v3910 = vpop.f32.mrb[0].mxu0
        %v3911 = vadd.f32 %v3062, %v3910
        %v3912 = vpop.f32.mrb[0].mxu0
        %v3913 = vadd.f32 %v3066, %v3912
        %3914 = vmatprep.mubr.bf16.mxu0 0
        %3915 = vmatmul.mubr.bf16.gmra.mrb[0].mxu0 %v3179
        %v3916 = vpop.f32.mrb[0].mxu0
        %v3917 = vadd.f32 %v3062, %v3916
        %v3918 = vpop.f32.mrb[0].mxu0
        %v3919 = vadd.f32 %v3066, %v3918
        %v3920 = vpop.f32.mrb[0].mxu0
        %v3921 = vadd.f32 %v3062, %v3920
        %v3922 = vpop.f32.mrb[0].mxu0
        %v3923 = vadd.f32 %v3066, %v3922
        %3924 = vdwg.mxu0
        %v3925 = vmax.f32 %v3216, 0.0
        %v3926 = vmax.f32 %v3218, 0.0
        %v3927 = vmax.f32 %v3309, 0.0
        %v3928 = vmax.f32 %v3311, 0.0
        %v3929 = vmax.f32 %v3402, 0.0
        %v3930 = vmax.f32 %v3404, 0.0
        %v3931 = vmax.f32 %v3495, 0.0
        %v3932 = vmax.f32 %v3497, 0.0
        %v3933 = vmax.f32 %v3588, 0.0
        %v3934 = vmax.f32 %v3590, 0.0
        %v3935 = vmax.f32 %v3681, 0.0
        %v3936 = vmax.f32 %v3683, 0.0
        %v3937 = vmax.f32 %v3774, 0.0
        %v3938 = vmax.f32 %v3776, 0.0
        %v3939 = vmax.f32 %v3867, 0.0
        %v3940 = vmax.f32 %v3869, 0.0
        %v3941 = vmax.f32 %v3220, 0.0
        %v3942 = vmax.f32 %v3222, 0.0
        %v3943 = vmax.f32 %v3313, 0.0
        %v3944 = vmax.f32 %v3315, 0.0
        %v3945 = vmax.f32 %v3406, 0.0
        %v3946 = vmax.f32 %v3408, 0.0
        %v3947 = vmax.f32 %v3499, 0.0
        %v3948 = vmax.f32 %v3501, 0.0
        %v3949 = vmax.f32 %v3592, 0.0
        %v3950 = vmax.f32 %v3594, 0.0
        %v3951 = vmax.f32 %v3685, 0.0
        %v3952 = vmax.f32 %v3687, 0.0
        %v3953 = vmax.f32 %v3778, 0.0
        %v3954 = vmax.f32 %v3780, 0.0
        %v3955 = vmax.f32 %v3871, 0.0
        %v3956 = vmax.f32 %v3873, 0.0
        %v3957 = vmax.f32 %v3226, 0.0
        %v3958 = vmax.f32 %v3228, 0.0
        %v3959 = vmax.f32 %v3319, 0.0
        %v3960 = vmax.f32 %v3321, 0.0
        %v3961 = vmax.f32 %v3412, 0.0
        %v3962 = vmax.f32 %v3414, 0.0
        %v3963 = vmax.f32 %v3505, 0.0
        %v3964 = vmax.f32 %v3507, 0.0
        %v3965 = vmax.f32 %v3598, 0.0
        %v3966 = vmax.f32 %v3600, 0.0
        %v3967 = vmax.f32 %v3691, 0.0
        %v3968 = vmax.f32 %v3693, 0.0
        %v3969 = vmax.f32 %v3784, 0.0
        %v3970 = vmax.f32 %v3786, 0.0
        %v3971 = vmax.f32 %v3877, 0.0
        %v3972 = vmax.f32 %v3879, 0.0
        %v3973 = vmax.f32 %v3230, 0.0
        %v3974 = vmax.f32 %v3232, 0.0
        %v3975 = vmax.f32 %v3323, 0.0
        %v3976 = vmax.f32 %v3325, 0.0
        %v3977 = vmax.f32 %v3416, 0.0
        %v3978 = vmax.f32 %v3418, 0.0
        %v3979 = vmax.f32 %v3509, 0.0
        %v3980 = vmax.f32 %v3511, 0.0
        %v3981 = vmax.f32 %v3602, 0.0
        %v3982 = vmax.f32 %v3604, 0.0
        %v3983 = vmax.f32 %v3695, 0.0
        %v3984 = vmax.f32 %v3697, 0.0
        %v3985 = vmax.f32 %v3788, 0.0
        %v3986 = vmax.f32 %v3790, 0.0
        %v3987 = vmax.f32 %v3881, 0.0
        %v3988 = vmax.f32 %v3883, 0.0
        %v3989 = vmax.f32 %v3236, 0.0
        %v3990 = vmax.f32 %v3238, 0.0
        %v3991 = vmax.f32 %v3329, 0.0
        %v3992 = vmax.f32 %v3331, 0.0
        %v3993 = vmax.f32 %v3422, 0.0
        %v3994 = vmax.f32 %v3424, 0.0
        %v3995 = vmax.f32 %v3515, 0.0
        %v3996 = vmax.f32 %v3517, 0.0
        %v3997 = vmax.f32 %v3608, 0.0
        %v3998 = vmax.f32 %v3610, 0.0
        %v3999 = vmax.f32 %v3701, 0.0
        %v4000 = vmax.f32 %v3703, 0.0
        %v4001 = vmax.f32 %v3794, 0.0
        %v4002 = vmax.f32 %v3796, 0.0
        %v4003 = vmax.f32 %v3887, 0.0
        %v4004 = vmax.f32 %v3889, 0.0
        %v4005 = vmax.f32 %v3240, 0.0
        %v4006 = vmax.f32 %v3242, 0.0
        %v4007 = vmax.f32 %v3333, 0.0
        %v4008 = vmax.f32 %v3335, 0.0
        %v4009 = vmax.f32 %v3426, 0.0
        %v4010 = vmax.f32 %v3428, 0.0
        %v4011 = vmax.f32 %v3519, 0.0
        %v4012 = vmax.f32 %v3521, 0.0
        %v4013 = vmax.f32 %v3612, 0.0
        %v4014 = vmax.f32 %v3614, 0.0
        %v4015 = vmax.f32 %v3705, 0.0
        %v4016 = vmax.f32 %v3707, 0.0
        %v4017 = vmax.f32 %v3798, 0.0
        %v4018 = vmax.f32 %v3800, 0.0
        %v4019 = vmax.f32 %v3891, 0.0
        %v4020 = vmax.f32 %v3893, 0.0
        %v4021 = vmax.f32 %v3246, 0.0
        %v4022 = vmax.f32 %v3248, 0.0
        %v4023 = vmax.f32 %v3339, 0.0
        %v4024 = vmax.f32 %v3341, 0.0
        %v4025 = vmax.f32 %v3432, 0.0
        %v4026 = vmax.f32 %v3434, 0.0
        %v4027 = vmax.f32 %v3525, 0.0
        %v4028 = vmax.f32 %v3527, 0.0
        %v4029 = vmax.f32 %v3618, 0.0
        %v4030 = vmax.f32 %v3620, 0.0
        %v4031 = vmax.f32 %v3711, 0.0
        %v4032 = vmax.f32 %v3713, 0.0
        %v4033 = vmax.f32 %v3804, 0.0
        %v4034 = vmax.f32 %v3806, 0.0
        %v4035 = vmax.f32 %v3897, 0.0
        %v4036 = vmax.f32 %v3899, 0.0
        %v4037 = vmax.f32 %v3250, 0.0
        %v4038 = vmax.f32 %v3252, 0.0
        %v4039 = vmax.f32 %v3343, 0.0
        %v4040 = vmax.f32 %v3345, 0.0
        %v4041 = vmax.f32 %v3436, 0.0
        %v4042 = vmax.f32 %v3438, 0.0
        %v4043 = vmax.f32 %v3529, 0.0
        %v4044 = vmax.f32 %v3531, 0.0
        %v4045 = vmax.f32 %v3622, 0.0
        %v4046 = vmax.f32 %v3624, 0.0
        %v4047 = vmax.f32 %v3715, 0.0
        %v4048 = vmax.f32 %v3717, 0.0
        %v4049 = vmax.f32 %v3808, 0.0
        %v4050 = vmax.f32 %v3810, 0.0
        %v4051 = vmax.f32 %v3901, 0.0
        %v4052 = vmax.f32 %v3903, 0.0
        %v4053 = vmax.f32 %v3256, 0.0
        %v4054 = vmax.f32 %v3258, 0.0
        %v4055 = vmax.f32 %v3349, 0.0
        %v4056 = vmax.f32 %v3351, 0.0
        %v4057 = vmax.f32 %v3442, 0.0
        %v4058 = vmax.f32 %v3444, 0.0
        %v4059 = vmax.f32 %v3535, 0.0
        %v4060 = vmax.f32 %v3537, 0.0
        %v4061 = vmax.f32 %v3628, 0.0
        %v4062 = vmax.f32 %v3630, 0.0
        %v4063 = vmax.f32 %v3721, 0.0
        %v4064 = vmax.f32 %v3723, 0.0
        %v4065 = vmax.f32 %v3814, 0.0
        %v4066 = vmax.f32 %v3816, 0.0
        %v4067 = vmax.f32 %v3907, 0.0
        %v4068 = vmax.f32 %v3909, 0.0
        %v4069 = vmax.f32 %v3260, 0.0
        %v4070 = vmax.f32 %v3262, 0.0
        %v4071 = vmax.f32 %v3353, 0.0
        %v4072 = vmax.f32 %v3355, 0.0
        %v4073 = vmax.f32 %v3446, 0.0
        %v4074 = vmax.f32 %v3448, 0.0
        %v4075 = vmax.f32 %v3539, 0.0
        %v4076 = vmax.f32 %v3541, 0.0
        %v4077 = vmax.f32 %v3632, 0.0
        %v4078 = vmax.f32 %v3634, 0.0
        %v4079 = vmax.f32 %v3725, 0.0
        %v4080 = vmax.f32 %v3727, 0.0
        %v4081 = vmax.f32 %v3818, 0.0
        %v4082 = vmax.f32 %v3820, 0.0
        %v4083 = vmax.f32 %v3911, 0.0
        %v4084 = vmax.f32 %v3913, 0.0
        %v4085 = vmax.f32 %v3266, 0.0
        %v4086 = vmax.f32 %v3268, 0.0
        %v4087 = vmax.f32 %v3359, 0.0
        %v4088 = vmax.f32 %v3361, 0.0
        %v4089 = vmax.f32 %v3452, 0.0
        %v4090 = vmax.f32 %v3454, 0.0
        %v4091 = vmax.f32 %v3545, 0.0
        %v4092 = vmax.f32 %v3547, 0.0
        %v4093 = vmax.f32 %v3638, 0.0
        %v4094 = vmax.f32 %v3640, 0.0
        %v4095 = vmax.f32 %v3731, 0.0
        %v4096 = vmax.f32 %v3733, 0.0
        %v4097 = vmax.f32 %v3824, 0.0
        %v4098 = vmax.f32 %v3826, 0.0
        %v4099 = vmax.f32 %v3917, 0.0
        %v4100 = vmax.f32 %v3919, 0.0
        %v4101 = vmax.f32 %v3270, 0.0
        %v4102 = vmax.f32 %v3272, 0.0
        %v4103 = vmax.f32 %v3363, 0.0
        %v4104 = vmax.f32 %v3365, 0.0
        %v4105 = vmax.f32 %v3456, 0.0
        %v4106 = vmax.f32 %v3458, 0.0
        %v4107 = vmax.f32 %v3549, 0.0
        %v4108 = vmax.f32 %v3551, 0.0
        %v4109 = vmax.f32 %v3642, 0.0
        %v4110 = vmax.f32 %v3644, 0.0
        %v4111 = vmax.f32 %v3735, 0.0
        %v4112 = vmax.f32 %v3737, 0.0
        %v4113 = vmax.f32 %v3828, 0.0
        %v4114 = vmax.f32 %v3830, 0.0
        %v4115 = vmax.f32 %v3921, 0.0
        %v4116 = vmax.f32 %v3923, 0.0
        %v4117 = vpack.c.bf16 %v3941, %v3925
        %v4118 = vpack.c.bf16 %v3942, %v3926
        %v4119 = vpack.c.bf16 %v3943, %v3927
        %v4120 = vpack.c.bf16 %v3944, %v3928
        %v4121 = vpack.c.bf16 %v3945, %v3929
        %v4122 = vpack.c.bf16 %v3946, %v3930
        %v4123 = vpack.c.bf16 %v3947, %v3931
        %v4124 = vpack.c.bf16 %v3948, %v3932
        %v4125 = vpack.c.bf16 %v3949, %v3933
        %v4126 = vpack.c.bf16 %v3950, %v3934
        %v4127 = vpack.c.bf16 %v3951, %v3935
        %v4128 = vpack.c.bf16 %v3952, %v3936
        %v4129 = vpack.c.bf16 %v3953, %v3937
        %v4130 = vpack.c.bf16 %v3954, %v3938
        %v4131 = vpack.c.bf16 %v3955, %v3939
        %v4132 = vpack.c.bf16 %v3956, %v3940
        %v4133 = vpack.c.bf16 %v3973, %v3957
        %v4134 = vpack.c.bf16 %v3974, %v3958
        %v4135 = vpack.c.bf16 %v3975, %v3959
        %v4136 = vpack.c.bf16 %v3976, %v3960
        %v4137 = vpack.c.bf16 %v3977, %v3961
        %v4138 = vpack.c.bf16 %v3978, %v3962
        %v4139 = vpack.c.bf16 %v3979, %v3963
        %v4140 = vpack.c.bf16 %v3980, %v3964
        %v4141 = vpack.c.bf16 %v3981, %v3965
        %v4142 = vpack.c.bf16 %v3982, %v3966
        %v4143 = vpack.c.bf16 %v3983, %v3967
        %v4144 = vpack.c.bf16 %v3984, %v3968
        %v4145 = vpack.c.bf16 %v3985, %v3969
        %v4146 = vpack.c.bf16 %v3986, %v3970
        %v4147 = vpack.c.bf16 %v3987, %v3971
        %v4148 = vpack.c.bf16 %v3988, %v3972
        %v4149 = vpack.c.bf16 %v4005, %v3989
        %v4150 = vpack.c.bf16 %v4006, %v3990
        %v4151 = vpack.c.bf16 %v4007, %v3991
        %v4152 = vpack.c.bf16 %v4008, %v3992
        %v4153 = vpack.c.bf16 %v4009, %v3993
        %v4154 = vpack.c.bf16 %v4010, %v3994
        %v4155 = vpack.c.bf16 %v4011, %v3995
        %v4156 = vpack.c.bf16 %v4012, %v3996
        %v4157 = vpack.c.bf16 %v4013, %v3997
        %v4158 = vpack.c.bf16 %v4014, %v3998
        %v4159 = vpack.c.bf16 %v4015, %v3999
        %v4160 = vpack.c.bf16 %v4016, %v4000
        %v4161 = vpack.c.bf16 %v4017, %v4001
        %v4162 = vpack.c.bf16 %v4018, %v4002
        %v4163 = vpack.c.bf16 %v4019, %v4003
        %v4164 = vpack.c.bf16 %v4020, %v4004
        %v4165 = vpack.c.bf16 %v4037, %v4021
        %v4166 = vpack.c.bf16 %v4038, %v4022
        %v4167 = vpack.c.bf16 %v4039, %v4023
        %v4168 = vpack.c.bf16 %v4040, %v4024
        %v4169 = vpack.c.bf16 %v4041, %v4025
        %v4170 = vpack.c.bf16 %v4042, %v4026
        %v4171 = vpack.c.bf16 %v4043, %v4027
        %v4172 = vpack.c.bf16 %v4044, %v4028
        %v4173 = vpack.c.bf16 %v4045, %v4029
        %v4174 = vpack.c.bf16 %v4046, %v4030
        %v4175 = vpack.c.bf16 %v4047, %v4031
        %v4176 = vpack.c.bf16 %v4048, %v4032
        %v4177 = vpack.c.bf16 %v4049, %v4033
        %v4178 = vpack.c.bf16 %v4050, %v4034
        %v4179 = vpack.c.bf16 %v4051, %v4035
        %v4180 = vpack.c.bf16 %v4052, %v4036
        %v4181 = vpack.c.bf16 %v4069, %v4053
        %v4182 = vpack.c.bf16 %v4070, %v4054
        %v4183 = vpack.c.bf16 %v4071, %v4055
        %v4184 = vpack.c.bf16 %v4072, %v4056
        %v4185 = vpack.c.bf16 %v4073, %v4057
        %v4186 = vpack.c.bf16 %v4074, %v4058
        %v4187 = vpack.c.bf16 %v4075, %v4059
        %v4188 = vpack.c.bf16 %v4076, %v4060
        %v4189 = vpack.c.bf16 %v4077, %v4061
        %v4190 = vpack.c.bf16 %v4078, %v4062
        %v4191 = vpack.c.bf16 %v4079, %v4063
        %v4192 = vpack.c.bf16 %v4080, %v4064
        %v4193 = vpack.c.bf16 %v4081, %v4065
        %v4194 = vpack.c.bf16 %v4082, %v4066
        %v4195 = vpack.c.bf16 %v4083, %v4067
        %v4196 = vpack.c.bf16 %v4084, %v4068
        %v4197 = vpack.c.bf16 %v4101, %v4085
        %v4198 = vpack.c.bf16 %v4102, %v4086
        %v4199 = vpack.c.bf16 %v4103, %v4087
        %v4200 = vpack.c.bf16 %v4104, %v4088
        %v4201 = vpack.c.bf16 %v4105, %v4089
        %v4202 = vpack.c.bf16 %v4106, %v4090
        %v4203 = vpack.c.bf16 %v4107, %v4091
        %v4204 = vpack.c.bf16 %v4108, %v4092
        %v4205 = vpack.c.bf16 %v4109, %v4093
        %v4206 = vpack.c.bf16 %v4110, %v4094
        %v4207 = vpack.c.bf16 %v4111, %v4095
        %v4208 = vpack.c.bf16 %v4112, %v4096
        %v4209 = vpack.c.bf16 %v4113, %v4097
        %v4210 = vpack.c.bf16 %v4114, %v4098
        %v4211 = vpack.c.bf16 %v4115, %v4099
        %v4212 = vpack.c.bf16 %v4116, %v4100
        %v4213 = vld [vmem:[%s1031] sm:$0xf]
        %v4214 = vld [vmem:[%s1031 + $0x4] sm:$0xf]
        %v4215 = vld [vmem:[%s1031 + $0x8] sm:$0xf]
        %v4216 = vld [vmem:[%s1031 + $0xc] sm:$0xf]
        %v4217 = vld [vmem:[%s1031 + $0x10] sm:$0xf]
        %v4218 = vld [vmem:[%s1031 + $0x14] sm:$0xf]
        %v4219 = vld [vmem:[%s1031 + $0x18] sm:$0xf]
        %v4220 = vld [vmem:[%s1031 + $0x1c] sm:$0xf]
        %v4221 = vld [vmem:[%s1031 + $0x20] sm:$0xf]
        %v4222 = vld [vmem:[%s1031 + $0x24] sm:$0xf]
        %v4223 = vld [vmem:[%s1031 + $0x28] sm:$0xf]
        %v4224 = vld [vmem:[%s1031 + $0x2c] sm:$0xf]
        %v4225 = vld [vmem:[%s1031 + $0x30] sm:$0xf]
        %v4226 = vld [vmem:[%s1031 + $0x34] sm:$0xf]
        %v4227 = vld [vmem:[%s1031 + $0x38] sm:$0xf]
        %v4228 = vld [vmem:[%s1031 + $0x3c] sm:$0xf]
        %v4229 = vld [vmem:[%s1031 + $0x40] sm:$0xf]
        %v4230 = vld [vmem:[%s1031 + $0x44] sm:$0xf]
        %v4231 = vld [vmem:[%s1031 + $0x48] sm:$0xf]
        %v4232 = vld [vmem:[%s1031 + $0x4c] sm:$0xf]
        %v4233 = vld [vmem:[%s1031 + $0x50] sm:$0xf]
        %v4234 = vld [vmem:[%s1031 + $0x54] sm:$0xf]
        %v4235 = vld [vmem:[%s1031 + $0x58] sm:$0xf]
        %v4236 = vld [vmem:[%s1031 + $0x5c] sm:$0xf]
        %v4237 = vld [vmem:[%s1031 + $0x60] sm:$0xf]
        %v4238 = vld [vmem:[%s1031 + $0x64] sm:$0xf]
        %v4239 = vld [vmem:[%s1031 + $0x68] sm:$0xf]
        %v4240 = vld [vmem:[%s1031 + $0x6c] sm:$0xf]
        %v4241 = vld [vmem:[%s1031 + $0x70] sm:$0xf]
        %v4242 = vld [vmem:[%s1031 + $0x74] sm:$0xf]
        %v4243 = vld [vmem:[%s1031 + $0x78] sm:$0xf]
        %v4244 = vld [vmem:[%s1031 + $0x7c] sm:$0xf]
        %v4245 = vld [vmem:[%s1031 + $0x80] sm:$0xf]
        %v4246 = vld [vmem:[%s1031 + $0x84] sm:$0xf]
        %v4247 = vld [vmem:[%s1031 + $0x88] sm:$0xf]
        %v4248 = vld [vmem:[%s1031 + $0x8c] sm:$0xf]
        %v4249 = vld [vmem:[%s1031 + $0x90] sm:$0xf]
        %v4250 = vld [vmem:[%s1031 + $0x94] sm:$0xf]
        %v4251 = vld [vmem:[%s1031 + $0x98] sm:$0xf]
        %v4252 = vld [vmem:[%s1031 + $0x9c] sm:$0xf]
        %v4253 = vld [vmem:[%s1031 + $0xa0] sm:$0xf]
        %v4254 = vld [vmem:[%s1031 + $0xa4] sm:$0xf]
        %v4255 = vld [vmem:[%s1031 + $0xa8] sm:$0xf]
        %v4256 = vld [vmem:[%s1031 + $0xac] sm:$0xf]
        %v4257 = vld [vmem:[%s1031 + $0xb0] sm:$0xf]
        %v4258 = vld [vmem:[%s1031 + $0xb4] sm:$0xf]
        %v4259 = vld [vmem:[%s1031 + $0xb8] sm:$0xf]
        %v4260 = vld [vmem:[%s1031 + $0xbc] sm:$0xf]
        %v4261 = vld [vmem:[%s1031 + $0xc0] sm:$0xf]
        %v4262 = vld [vmem:[%s1031 + $0xc4] sm:$0xf]
        %v4263 = vld [vmem:[%s1031 + $0xc8] sm:$0xf]
        %v4264 = vld [vmem:[%s1031 + $0xcc] sm:$0xf]
        %v4265 = vld [vmem:[%s1031 + $0xd0] sm:$0xf]
        %v4266 = vld [vmem:[%s1031 + $0xd4] sm:$0xf]
        %v4267 = vld [vmem:[%s1031 + $0xd8] sm:$0xf]
        %v4268 = vld [vmem:[%s1031 + $0xdc] sm:$0xf]
        %v4269 = vld [vmem:[%s1031 + $0xe0] sm:$0xf]
        %v4270 = vld [vmem:[%s1031 + $0xe4] sm:$0xf]
        %v4271 = vld [vmem:[%s1031 + $0xe8] sm:$0xf]
        %v4272 = vld [vmem:[%s1031 + $0xec] sm:$0xf]
        %v4273 = vld [vmem:[%s1031 + $0xf0] sm:$0xf]
        %v4274 = vld [vmem:[%s1031 + $0xf4] sm:$0xf]
        %v4275 = vld [vmem:[%s1031 + $0xf8] sm:$0xf]
        %v4276 = vld [vmem:[%s1031 + $0xfc] sm:$0xf]
        %v4277 = vld [vmem:[%s1031 + $0x100] sm:$0xf]
        %v4278 = vld [vmem:[%s1031 + $0x104] sm:$0xf]
        %v4279 = vld [vmem:[%s1031 + $0x108] sm:$0xf]
        %v4280 = vld [vmem:[%s1031 + $0x10c] sm:$0xf]
        %v4281 = vld [vmem:[%s1031 + $0x110] sm:$0xf]
        %v4282 = vld [vmem:[%s1031 + $0x114] sm:$0xf]
        %v4283 = vld [vmem:[%s1031 + $0x118] sm:$0xf]
        %v4284 = vld [vmem:[%s1031 + $0x11c] sm:$0xf]
        %v4285 = vld [vmem:[%s1031 + $0x120] sm:$0xf]
        %v4286 = vld [vmem:[%s1031 + $0x124] sm:$0xf]
        %v4287 = vld [vmem:[%s1031 + $0x128] sm:$0xf]
        %v4288 = vld [vmem:[%s1031 + $0x12c] sm:$0xf]
        %v4289 = vld [vmem:[%s1031 + $0x130] sm:$0xf]
        %v4290 = vld [vmem:[%s1031 + $0x134] sm:$0xf]
        %v4291 = vld [vmem:[%s1031 + $0x138] sm:$0xf]
        %v4292 = vld [vmem:[%s1031 + $0x13c] sm:$0xf]
        %v4293 = vld [vmem:[%s1031 + $0x140] sm:$0xf]
        %v4294 = vld [vmem:[%s1031 + $0x144] sm:$0xf]
        %v4295 = vld [vmem:[%s1031 + $0x148] sm:$0xf]
        %v4296 = vld [vmem:[%s1031 + $0x14c] sm:$0xf]
        %v4297 = vld [vmem:[%s1031 + $0x150] sm:$0xf]
        %v4298 = vld [vmem:[%s1031 + $0x154] sm:$0xf]
        %v4299 = vld [vmem:[%s1031 + $0x158] sm:$0xf]
        %v4300 = vld [vmem:[%s1031 + $0x15c] sm:$0xf]
        %v4301 = vld [vmem:[%s1031 + $0x160] sm:$0xf]
        %v4302 = vld [vmem:[%s1031 + $0x164] sm:$0xf]
        %v4303 = vld [vmem:[%s1031 + $0x168] sm:$0xf]
        %v4304 = vld [vmem:[%s1031 + $0x16c] sm:$0xf]
        %v4305 = vld [vmem:[%s1031 + $0x170] sm:$0xf]
        %v4306 = vld [vmem:[%s1031 + $0x174] sm:$0xf]
        %v4307 = vld [vmem:[%s1031 + $0x178] sm:$0xf]
        %v4308 = vld [vmem:[%s1031 + $0x17c] sm:$0xf]
        %v4309 = vld [vmem:[%s1031 + $0x180] sm:$0xf]
        %v4310 = vld [vmem:[%s1031 + $0x184] sm:$0xf]
        %v4311 = vld [vmem:[%s1031 + $0x188] sm:$0xf]
        %v4312 = vld [vmem:[%s1031 + $0x18c] sm:$0xf]
        %v4313 = vld [vmem:[%s1031 + $0x190] sm:$0xf]
        %v4314 = vld [vmem:[%s1031 + $0x194] sm:$0xf]
        %v4315 = vld [vmem:[%s1031 + $0x198] sm:$0xf]
        %v4316 = vld [vmem:[%s1031 + $0x19c] sm:$0xf]
        %v4317 = vld [vmem:[%s1031 + $0x1a0] sm:$0xf]
        %v4318 = vld [vmem:[%s1031 + $0x1a4] sm:$0xf]
        %v4319 = vld [vmem:[%s1031 + $0x1a8] sm:$0xf]
        %v4320 = vld [vmem:[%s1031 + $0x1ac] sm:$0xf]
        %v4321 = vld [vmem:[%s1031 + $0x1b0] sm:$0xf]
        %v4322 = vld [vmem:[%s1031 + $0x1b4] sm:$0xf]
        %v4323 = vld [vmem:[%s1031 + $0x1b8] sm:$0xf]
        %v4324 = vld [vmem:[%s1031 + $0x1bc] sm:$0xf]
        %v4325 = vld [vmem:[%s1031 + $0x1c0] sm:$0xf]
        %v4326 = vld [vmem:[%s1031 + $0x1c4] sm:$0xf]
        %v4327 = vld [vmem:[%s1031 + $0x1c8] sm:$0xf]
        %v4328 = vld [vmem:[%s1031 + $0x1cc] sm:$0xf]
        %v4329 = vld [vmem:[%s1031 + $0x1d0] sm:$0xf]
        %v4330 = vld [vmem:[%s1031 + $0x1d4] sm:$0xf]
        %v4331 = vld [vmem:[%s1031 + $0x1d8] sm:$0xf]
        %v4332 = vld [vmem:[%s1031 + $0x1dc] sm:$0xf]
        %v4333 = vld [vmem:[%s1031 + $0x1e0] sm:$0xf]
        %v4334 = vld [vmem:[%s1031 + $0x1e4] sm:$0xf]
        %v4335 = vld [vmem:[%s1031 + $0x1e8] sm:$0xf]
        %v4336 = vld [vmem:[%s1031 + $0x1ec] sm:$0xf]
        %v4337 = vld [vmem:[%s1031 + $0x1f0] sm:$0xf]
        %v4338 = vld [vmem:[%s1031 + $0x1f4] sm:$0xf]
        %v4339 = vld [vmem:[%s1031 + $0x1f8] sm:$0xf]
        %v4340 = vld [vmem:[%s1031 + $0x1fc] sm:$0xf]
        %v4341 = vld [vmem:[%s1031 + $0x200] sm:$0xf]
        %v4342 = vld [vmem:[%s1031 + $0x204] sm:$0xf]
        %v4343 = vld [vmem:[%s1031 + $0x208] sm:$0xf]
        %v4344 = vld [vmem:[%s1031 + $0x20c] sm:$0xf]
        %v4345 = vld [vmem:[%s1031 + $0x210] sm:$0xf]
        %v4346 = vld [vmem:[%s1031 + $0x214] sm:$0xf]
        %v4347 = vld [vmem:[%s1031 + $0x218] sm:$0xf]
        %v4348 = vld [vmem:[%s1031 + $0x21c] sm:$0xf]
        %v4349 = vld [vmem:[%s1031 + $0x220] sm:$0xf]
        %v4350 = vld [vmem:[%s1031 + $0x224] sm:$0xf]
        %v4351 = vld [vmem:[%s1031 + $0x228] sm:$0xf]
        %v4352 = vld [vmem:[%s1031 + $0x22c] sm:$0xf]
        %v4353 = vld [vmem:[%s1031 + $0x230] sm:$0xf]
        %v4354 = vld [vmem:[%s1031 + $0x234] sm:$0xf]
        %v4355 = vld [vmem:[%s1031 + $0x238] sm:$0xf]
        %v4356 = vld [vmem:[%s1031 + $0x23c] sm:$0xf]
        %v4357 = vld [vmem:[%s1031 + $0x240] sm:$0xf]
        %v4358 = vld [vmem:[%s1031 + $0x244] sm:$0xf]
        %v4359 = vld [vmem:[%s1031 + $0x248] sm:$0xf]
        %v4360 = vld [vmem:[%s1031 + $0x24c] sm:$0xf]
        %v4361 = vld [vmem:[%s1031 + $0x250] sm:$0xf]
        %v4362 = vld [vmem:[%s1031 + $0x254] sm:$0xf]
        %v4363 = vld [vmem:[%s1031 + $0x258] sm:$0xf]
        %v4364 = vld [vmem:[%s1031 + $0x25c] sm:$0xf]
        %v4365 = vld [vmem:[%s1031 + $0x260] sm:$0xf]
        %v4366 = vld [vmem:[%s1031 + $0x264] sm:$0xf]
        %v4367 = vld [vmem:[%s1031 + $0x268] sm:$0xf]
        %v4368 = vld [vmem:[%s1031 + $0x26c] sm:$0xf]
        %v4369 = vld [vmem:[%s1031 + $0x270] sm:$0xf]
        %v4370 = vld [vmem:[%s1031 + $0x274] sm:$0xf]
        %v4371 = vld [vmem:[%s1031 + $0x278] sm:$0xf]
        %v4372 = vld [vmem:[%s1031 + $0x27c] sm:$0xf]
        %v4373 = vld [vmem:[%s1031 + $0x280] sm:$0xf]
        %v4374 = vld [vmem:[%s1031 + $0x284] sm:$0xf]
        %v4375 = vld [vmem:[%s1031 + $0x288] sm:$0xf]
        %v4376 = vld [vmem:[%s1031 + $0x28c] sm:$0xf]
        %v4377 = vld [vmem:[%s1031 + $0x290] sm:$0xf]
        %v4378 = vld [vmem:[%s1031 + $0x294] sm:$0xf]
        %v4379 = vld [vmem:[%s1031 + $0x298] sm:$0xf]
        %v4380 = vld [vmem:[%s1031 + $0x29c] sm:$0xf]
        %v4381 = vld [vmem:[%s1031 + $0x2a0] sm:$0xf]
        %v4382 = vld [vmem:[%s1031 + $0x2a4] sm:$0xf]
        %v4383 = vld [vmem:[%s1031 + $0x2a8] sm:$0xf]
        %v4384 = vld [vmem:[%s1031 + $0x2ac] sm:$0xf]
        %v4385 = vld [vmem:[%s1031 + $0x2b0] sm:$0xf]
        %v4386 = vld [vmem:[%s1031 + $0x2b4] sm:$0xf]
        %v4387 = vld [vmem:[%s1031 + $0x2b8] sm:$0xf]
        %v4388 = vld [vmem:[%s1031 + $0x2bc] sm:$0xf]
        %v4389 = vld [vmem:[%s1031 + $0x2c0] sm:$0xf]
        %v4390 = vld [vmem:[%s1031 + $0x2c4] sm:$0xf]
        %v4391 = vld [vmem:[%s1031 + $0x2c8] sm:$0xf]
        %v4392 = vld [vmem:[%s1031 + $0x2cc] sm:$0xf]
        %v4393 = vld [vmem:[%s1031 + $0x2d0] sm:$0xf]
        %v4394 = vld [vmem:[%s1031 + $0x2d4] sm:$0xf]
        %v4395 = vld [vmem:[%s1031 + $0x2d8] sm:$0xf]
        %v4396 = vld [vmem:[%s1031 + $0x2dc] sm:$0xf]
        %v4397 = vld [vmem:[%s1031 + $0x2e0] sm:$0xf]
        %v4398 = vld [vmem:[%s1031 + $0x2e4] sm:$0xf]
        %v4399 = vld [vmem:[%s1031 + $0x2e8] sm:$0xf]
        %v4400 = vld [vmem:[%s1031 + $0x2ec] sm:$0xf]
        %v4401 = vld [vmem:[%s1031 + $0x2f0] sm:$0xf]
        %v4402 = vld [vmem:[%s1031 + $0x2f4] sm:$0xf]
        %v4403 = vld [vmem:[%s1031 + $0x2f8] sm:$0xf]
        %v4404 = vld [vmem:[%s1031 + $0x2fc] sm:$0xf]
        %v4405 = vld [vmem:[%s1031 + $0x300] sm:$0xf]
        %v4406 = vld [vmem:[%s1031 + $0x304] sm:$0xf]
        %v4407 = vld [vmem:[%s1031 + $0x308] sm:$0xf]
        %v4408 = vld [vmem:[%s1031 + $0x30c] sm:$0xf]
        %v4409 = vld [vmem:[%s1031 + $0x310] sm:$0xf]
        %v4410 = vld [vmem:[%s1031 + $0x314] sm:$0xf]
        %v4411 = vld [vmem:[%s1031 + $0x318] sm:$0xf]
        %v4412 = vld [vmem:[%s1031 + $0x31c] sm:$0xf]
        %v4413 = vld [vmem:[%s1031 + $0x320] sm:$0xf]
        %v4414 = vld [vmem:[%s1031 + $0x324] sm:$0xf]
        %v4415 = vld [vmem:[%s1031 + $0x328] sm:$0xf]
        %v4416 = vld [vmem:[%s1031 + $0x32c] sm:$0xf]
        %v4417 = vld [vmem:[%s1031 + $0x330] sm:$0xf]
        %v4418 = vld [vmem:[%s1031 + $0x334] sm:$0xf]
        %v4419 = vld [vmem:[%s1031 + $0x338] sm:$0xf]
        %v4420 = vld [vmem:[%s1031 + $0x33c] sm:$0xf]
        %v4421 = vld [vmem:[%s1031 + $0x340] sm:$0xf]
        %v4422 = vld [vmem:[%s1031 + $0x344] sm:$0xf]
        %v4423 = vld [vmem:[%s1031 + $0x348] sm:$0xf]
        %v4424 = vld [vmem:[%s1031 + $0x34c] sm:$0xf]
        %v4425 = vld [vmem:[%s1031 + $0x350] sm:$0xf]
        %v4426 = vld [vmem:[%s1031 + $0x354] sm:$0xf]
        %v4427 = vld [vmem:[%s1031 + $0x358] sm:$0xf]
        %v4428 = vld [vmem:[%s1031 + $0x35c] sm:$0xf]
        %v4429 = vld [vmem:[%s1031 + $0x360] sm:$0xf]
        %v4430 = vld [vmem:[%s1031 + $0x364] sm:$0xf]
        %v4431 = vld [vmem:[%s1031 + $0x368] sm:$0xf]
        %v4432 = vld [vmem:[%s1031 + $0x36c] sm:$0xf]
        %v4433 = vld [vmem:[%s1031 + $0x370] sm:$0xf]
        %v4434 = vld [vmem:[%s1031 + $0x374] sm:$0xf]
        %v4435 = vld [vmem:[%s1031 + $0x378] sm:$0xf]
        %v4436 = vld [vmem:[%s1031 + $0x37c] sm:$0xf]
        %v4437 = vld [vmem:[%s1031 + $0x380] sm:$0xf]
        %v4438 = vld [vmem:[%s1031 + $0x384] sm:$0xf]
        %v4439 = vld [vmem:[%s1031 + $0x388] sm:$0xf]
        %v4440 = vld [vmem:[%s1031 + $0x38c] sm:$0xf]
        %v4441 = vld [vmem:[%s1031 + $0x390] sm:$0xf]
        %v4442 = vld [vmem:[%s1031 + $0x394] sm:$0xf]
        %v4443 = vld [vmem:[%s1031 + $0x398] sm:$0xf]
        %v4444 = vld [vmem:[%s1031 + $0x39c] sm:$0xf]
        %v4445 = vld [vmem:[%s1031 + $0x3a0] sm:$0xf]
        %v4446 = vld [vmem:[%s1031 + $0x3a4] sm:$0xf]
        %v4447 = vld [vmem:[%s1031 + $0x3a8] sm:$0xf]
        %v4448 = vld [vmem:[%s1031 + $0x3ac] sm:$0xf]
        %v4449 = vld [vmem:[%s1031 + $0x3b0] sm:$0xf]
        %v4450 = vld [vmem:[%s1031 + $0x3b4] sm:$0xf]
        %v4451 = vld [vmem:[%s1031 + $0x3b8] sm:$0xf]
        %v4452 = vld [vmem:[%s1031 + $0x3bc] sm:$0xf]
        %v4453 = vld [vmem:[%s1031 + $0x3c0] sm:$0xf]
        %v4454 = vld [vmem:[%s1031 + $0x3c4] sm:$0xf]
        %v4455 = vld [vmem:[%s1031 + $0x3c8] sm:$0xf]
        %v4456 = vld [vmem:[%s1031 + $0x3cc] sm:$0xf]
        %v4457 = vld [vmem:[%s1031 + $0x3d0] sm:$0xf]
        %v4458 = vld [vmem:[%s1031 + $0x3d4] sm:$0xf]
        %v4459 = vld [vmem:[%s1031 + $0x3d8] sm:$0xf]
        %v4460 = vld [vmem:[%s1031 + $0x3dc] sm:$0xf]
        %v4461 = vld [vmem:[%s1031 + $0x3e0] sm:$0xf]
        %v4462 = vld [vmem:[%s1031 + $0x3e4] sm:$0xf]
        %v4463 = vld [vmem:[%s1031 + $0x3e8] sm:$0xf]
        %v4464 = vld [vmem:[%s1031 + $0x3ec] sm:$0xf]
        %v4465 = vld [vmem:[%s1031 + $0x3f0] sm:$0xf]
        %v4466 = vld [vmem:[%s1031 + $0x3f4] sm:$0xf]
        %v4467 = vld [vmem:[%s1031 + $0x3f8] sm:$0xf]
        %v4468 = vld [vmem:[%s1031 + $0x3fc] sm:$0xf]
        %v4469 = vld [vmem:[%s1039] sm:$0x1]
        %v4471 = vlaneseq
        %v4472 = vshrl.u32 %v4471, 7
        %v4473 = vsub.s32 0, %v4472
        %v4474 = vrot.slane %v4469, %v4473
        %v4732 = vunpack.c.l.b16 %v4213
        %v4733 = vunpack.c.l.b16 %v4214
        %v4734 = vunpack.c.l.b16 %v4215
        %v4735 = vunpack.c.l.b16 %v4216
        %v4736 = vunpack.c.l.b16 %v4217
        %v4737 = vunpack.c.l.b16 %v4218
        %v4738 = vunpack.c.l.b16 %v4219
        %v4739 = vunpack.c.l.b16 %v4220
        %v4740 = vunpack.c.l.b16 %v4221
        %v4741 = vunpack.c.l.b16 %v4222
        %v4742 = vunpack.c.l.b16 %v4223
        %v4743 = vunpack.c.l.b16 %v4224
        %v4744 = vunpack.c.l.b16 %v4225
        %v4745 = vunpack.c.l.b16 %v4226
        %v4746 = vunpack.c.l.b16 %v4227
        %v4747 = vunpack.c.l.b16 %v4228
        %v4748 = vunpack.c.l.b16 %v4229
        %v4749 = vunpack.c.l.b16 %v4230
        %v4750 = vunpack.c.l.b16 %v4231
        %v4751 = vunpack.c.l.b16 %v4232
        %v4752 = vunpack.c.l.b16 %v4233
        %v4753 = vunpack.c.l.b16 %v4234
        %v4754 = vunpack.c.l.b16 %v4235
        %v4755 = vunpack.c.l.b16 %v4236
        %v4756 = vunpack.c.l.b16 %v4237
        %v4757 = vunpack.c.l.b16 %v4238
        %v4758 = vunpack.c.l.b16 %v4239
        %v4759 = vunpack.c.l.b16 %v4240
        %v4760 = vunpack.c.l.b16 %v4241
        %v4761 = vunpack.c.l.b16 %v4242
        %v4762 = vunpack.c.l.b16 %v4243
        %v4763 = vunpack.c.l.b16 %v4244
        %v4764 = vunpack.c.l.b16 %v4245
        %v4765 = vunpack.c.l.b16 %v4246
        %v4766 = vunpack.c.l.b16 %v4247
        %v4767 = vunpack.c.l.b16 %v4248
        %v4768 = vunpack.c.l.b16 %v4249
        %v4769 = vunpack.c.l.b16 %v4250
        %v4770 = vunpack.c.l.b16 %v4251
        %v4771 = vunpack.c.l.b16 %v4252
        %v4772 = vunpack.c.l.b16 %v4253
        %v4773 = vunpack.c.l.b16 %v4254
        %v4774 = vunpack.c.l.b16 %v4255
        %v4775 = vunpack.c.l.b16 %v4256
        %v4776 = vunpack.c.l.b16 %v4257
        %v4777 = vunpack.c.l.b16 %v4258
        %v4778 = vunpack.c.l.b16 %v4259
        %v4779 = vunpack.c.l.b16 %v4260
        %v4780 = vunpack.c.l.b16 %v4261
        %v4781 = vunpack.c.l.b16 %v4262
        %v4782 = vunpack.c.l.b16 %v4263
        %v4783 = vunpack.c.l.b16 %v4264
        %v4784 = vunpack.c.l.b16 %v4265
        %v4785 = vunpack.c.l.b16 %v4266
        %v4786 = vunpack.c.l.b16 %v4267
        %v4787 = vunpack.c.l.b16 %v4268
        %v4788 = vunpack.c.l.b16 %v4269
        %v4789 = vunpack.c.l.b16 %v4270
        %v4790 = vunpack.c.l.b16 %v4271
        %v4791 = vunpack.c.l.b16 %v4272
        %v4792 = vunpack.c.l.b16 %v4273
        %v4793 = vunpack.c.l.b16 %v4274
        %v4794 = vunpack.c.l.b16 %v4275
        %v4795 = vunpack.c.l.b16 %v4276
        %v4796 = vunpack.c.l.b16 %v4277
        %v4797 = vunpack.c.l.b16 %v4278
        %v4798 = vunpack.c.l.b16 %v4279
        %v4799 = vunpack.c.l.b16 %v4280
        %v4800 = vunpack.c.l.b16 %v4281
        %v4801 = vunpack.c.l.b16 %v4282
        %v4802 = vunpack.c.l.b16 %v4283
        %v4803 = vunpack.c.l.b16 %v4284
        %v4804 = vunpack.c.l.b16 %v4285
        %v4805 = vunpack.c.l.b16 %v4286
        %v4806 = vunpack.c.l.b16 %v4287
        %v4807 = vunpack.c.l.b16 %v4288
        %v4808 = vunpack.c.l.b16 %v4289
        %v4809 = vunpack.c.l.b16 %v4290
        %v4810 = vunpack.c.l.b16 %v4291
        %v4811 = vunpack.c.l.b16 %v4292
        %v4812 = vunpack.c.l.b16 %v4293
        %v4813 = vunpack.c.l.b16 %v4294
        %v4814 = vunpack.c.l.b16 %v4295
        %v4815 = vunpack.c.l.b16 %v4296
        %v4816 = vunpack.c.l.b16 %v4297
        %v4817 = vunpack.c.l.b16 %v4298
        %v4818 = vunpack.c.l.b16 %v4299
        %v4819 = vunpack.c.l.b16 %v4300
        %v4820 = vunpack.c.l.b16 %v4301
        %v4821 = vunpack.c.l.b16 %v4302
        %v4822 = vunpack.c.l.b16 %v4303
        %v4823 = vunpack.c.l.b16 %v4304
        %v4824 = vunpack.c.l.b16 %v4305
        %v4825 = vunpack.c.l.b16 %v4306
        %v4826 = vunpack.c.l.b16 %v4307
        %v4827 = vunpack.c.l.b16 %v4308
        %v4828 = vunpack.c.l.b16 %v4309
        %v4829 = vunpack.c.l.b16 %v4310
        %v4830 = vunpack.c.l.b16 %v4311
        %v4831 = vunpack.c.l.b16 %v4312
        %v4832 = vunpack.c.l.b16 %v4313
        %v4833 = vunpack.c.l.b16 %v4314
        %v4834 = vunpack.c.l.b16 %v4315
        %v4835 = vunpack.c.l.b16 %v4316
        %v4836 = vunpack.c.l.b16 %v4317
        %v4837 = vunpack.c.l.b16 %v4318
        %v4838 = vunpack.c.l.b16 %v4319
        %v4839 = vunpack.c.l.b16 %v4320
        %v4840 = vunpack.c.l.b16 %v4321
        %v4841 = vunpack.c.l.b16 %v4322
        %v4842 = vunpack.c.l.b16 %v4323
        %v4843 = vunpack.c.l.b16 %v4324
        %v4844 = vunpack.c.l.b16 %v4325
        %v4845 = vunpack.c.l.b16 %v4326
        %v4846 = vunpack.c.l.b16 %v4327
        %v4847 = vunpack.c.l.b16 %v4328
        %v4848 = vunpack.c.l.b16 %v4329
        %v4849 = vunpack.c.l.b16 %v4330
        %v4850 = vunpack.c.l.b16 %v4331
        %v4851 = vunpack.c.l.b16 %v4332
        %v4852 = vunpack.c.l.b16 %v4333
        %v4853 = vunpack.c.l.b16 %v4334
        %v4854 = vunpack.c.l.b16 %v4335
        %v4855 = vunpack.c.l.b16 %v4336
        %v4856 = vunpack.c.l.b16 %v4337
        %v4857 = vunpack.c.l.b16 %v4338
        %v4858 = vunpack.c.l.b16 %v4339
        %v4859 = vunpack.c.l.b16 %v4340
        %v4860 = vunpack.c.l.b16 %v4341
        %v4861 = vunpack.c.l.b16 %v4342
        %v4862 = vunpack.c.l.b16 %v4343
        %v4863 = vunpack.c.l.b16 %v4344
        %v4864 = vunpack.c.l.b16 %v4345
        %v4865 = vunpack.c.l.b16 %v4346
        %v4866 = vunpack.c.l.b16 %v4347
        %v4867 = vunpack.c.l.b16 %v4348
        %v4868 = vunpack.c.l.b16 %v4349
        %v4869 = vunpack.c.l.b16 %v4350
        %v4870 = vunpack.c.l.b16 %v4351
        %v4871 = vunpack.c.l.b16 %v4352
        %v4872 = vunpack.c.l.b16 %v4353
        %v4873 = vunpack.c.l.b16 %v4354
        %v4874 = vunpack.c.l.b16 %v4355
        %v4875 = vunpack.c.l.b16 %v4356
        %v4876 = vunpack.c.l.b16 %v4357
        %v4877 = vunpack.c.l.b16 %v4358
        %v4878 = vunpack.c.l.b16 %v4359
        %v4879 = vunpack.c.l.b16 %v4360
        %v4880 = vunpack.c.l.b16 %v4361
        %v4881 = vunpack.c.l.b16 %v4362
        %v4882 = vunpack.c.l.b16 %v4363
        %v4883 = vunpack.c.l.b16 %v4364
        %v4884 = vunpack.c.l.b16 %v4365
        %v4885 = vunpack.c.l.b16 %v4366
        %v4886 = vunpack.c.l.b16 %v4367
        %v4887 = vunpack.c.l.b16 %v4368
        %v4888 = vunpack.c.l.b16 %v4369
        %v4889 = vunpack.c.l.b16 %v4370
        %v4890 = vunpack.c.l.b16 %v4371
        %v4891 = vunpack.c.l.b16 %v4372
        %v4892 = vunpack.c.l.b16 %v4373
        %v4893 = vunpack.c.l.b16 %v4374
        %v4894 = vunpack.c.l.b16 %v4375
        %v4895 = vunpack.c.l.b16 %v4376
        %v4896 = vunpack.c.l.b16 %v4377
        %v4897 = vunpack.c.l.b16 %v4378
        %v4898 = vunpack.c.l.b16 %v4379
        %v4899 = vunpack.c.l.b16 %v4380
        %v4900 = vunpack.c.l.b16 %v4381
        %v4901 = vunpack.c.l.b16 %v4382
        %v4902 = vunpack.c.l.b16 %v4383
        %v4903 = vunpack.c.l.b16 %v4384
        %v4904 = vunpack.c.l.b16 %v4385
        %v4905 = vunpack.c.l.b16 %v4386
        %v4906 = vunpack.c.l.b16 %v4387
        %v4907 = vunpack.c.l.b16 %v4388
        %v4908 = vunpack.c.l.b16 %v4389
        %v4909 = vunpack.c.l.b16 %v4390
        %v4910 = vunpack.c.l.b16 %v4391
        %v4911 = vunpack.c.l.b16 %v4392
        %v4912 = vunpack.c.l.b16 %v4393
        %v4913 = vunpack.c.l.b16 %v4394
        %v4914 = vunpack.c.l.b16 %v4395
        %v4915 = vunpack.c.l.b16 %v4396
        %v4916 = vunpack.c.l.b16 %v4397
        %v4917 = vunpack.c.l.b16 %v4398
        %v4918 = vunpack.c.l.b16 %v4399
        %v4919 = vunpack.c.l.b16 %v4400
        %v4920 = vunpack.c.l.b16 %v4401
        %v4921 = vunpack.c.l.b16 %v4402
        %v4922 = vunpack.c.l.b16 %v4403
        %v4923 = vunpack.c.l.b16 %v4404
        %v4924 = vunpack.c.l.b16 %v4405
        %v4925 = vunpack.c.l.b16 %v4406
        %v4926 = vunpack.c.l.b16 %v4407
        %v4927 = vunpack.c.l.b16 %v4408
        %v4928 = vunpack.c.l.b16 %v4409
        %v4929 = vunpack.c.l.b16 %v4410
        %v4930 = vunpack.c.l.b16 %v4411
        %v4931 = vunpack.c.l.b16 %v4412
        %v4932 = vunpack.c.l.b16 %v4413
        %v4933 = vunpack.c.l.b16 %v4414
        %v4934 = vunpack.c.l.b16 %v4415
        %v4935 = vunpack.c.l.b16 %v4416
        %v4936 = vunpack.c.l.b16 %v4417
        %v4937 = vunpack.c.l.b16 %v4418
        %v4938 = vunpack.c.l.b16 %v4419
        %v4939 = vunpack.c.l.b16 %v4420
        %v4940 = vunpack.c.l.b16 %v4421
        %v4941 = vunpack.c.l.b16 %v4422
        %v4942 = vunpack.c.l.b16 %v4423
        %v4943 = vunpack.c.l.b16 %v4424
        %v4944 = vunpack.c.l.b16 %v4425
        %v4945 = vunpack.c.l.b16 %v4426
        %v4946 = vunpack.c.l.b16 %v4427
        %v4947 = vunpack.c.l.b16 %v4428
        %v4948 = vunpack.c.l.b16 %v4429
        %v4949 = vunpack.c.l.b16 %v4430
        %v4950 = vunpack.c.l.b16 %v4431
        %v4951 = vunpack.c.l.b16 %v4432
        %v4952 = vunpack.c.l.b16 %v4433
        %v4953 = vunpack.c.l.b16 %v4434
        %v4954 = vunpack.c.l.b16 %v4435
        %v4955 = vunpack.c.l.b16 %v4436
        %v4956 = vunpack.c.l.b16 %v4437
        %v4957 = vunpack.c.l.b16 %v4438
        %v4958 = vunpack.c.l.b16 %v4439
        %v4959 = vunpack.c.l.b16 %v4440
        %v4960 = vunpack.c.l.b16 %v4441
        %v4961 = vunpack.c.l.b16 %v4442
        %v4962 = vunpack.c.l.b16 %v4443
        %v4963 = vunpack.c.l.b16 %v4444
        %v4964 = vunpack.c.l.b16 %v4445
        %v4965 = vunpack.c.l.b16 %v4446
        %v4966 = vunpack.c.l.b16 %v4447
        %v4967 = vunpack.c.l.b16 %v4448
        %v4968 = vunpack.c.l.b16 %v4449
        %v4969 = vunpack.c.l.b16 %v4450
        %v4970 = vunpack.c.l.b16 %v4451
        %v4971 = vunpack.c.l.b16 %v4452
        %v4972 = vunpack.c.l.b16 %v4453
        %v4973 = vunpack.c.l.b16 %v4454
        %v4974 = vunpack.c.l.b16 %v4455
        %v4975 = vunpack.c.l.b16 %v4456
        %v4976 = vunpack.c.l.b16 %v4457
        %v4977 = vunpack.c.l.b16 %v4458
        %v4978 = vunpack.c.l.b16 %v4459
        %v4979 = vunpack.c.l.b16 %v4460
        %v4980 = vunpack.c.l.b16 %v4461
        %v4981 = vunpack.c.l.b16 %v4462
        %v4982 = vunpack.c.l.b16 %v4463
        %v4983 = vunpack.c.l.b16 %v4464
        %v4984 = vunpack.c.l.b16 %v4465
        %v4985 = vunpack.c.l.b16 %v4466
        %v4986 = vunpack.c.l.b16 %v4467
        %v4987 = vunpack.c.l.b16 %v4468
        %v4988 = vpack.c.b16 %v4733, %v4732
        %v4989 = vpack.c.b16 %v4735, %v4734
        %v4990 = vpack.c.b16 %v4737, %v4736
        %v4991 = vpack.c.b16 %v4739, %v4738
        %v4992 = vpack.c.b16 %v4741, %v4740
        %v4993 = vpack.c.b16 %v4743, %v4742
        %v4994 = vpack.c.b16 %v4745, %v4744
        %v4995 = vpack.c.b16 %v4747, %v4746
        %v4996 = vpack.c.b16 %v4749, %v4748
        %v4997 = vpack.c.b16 %v4751, %v4750
        %v4998 = vpack.c.b16 %v4753, %v4752
        %v4999 = vpack.c.b16 %v4755, %v4754
        %v5000 = vpack.c.b16 %v4757, %v4756
        %v5001 = vpack.c.b16 %v4759, %v4758
        %v5002 = vpack.c.b16 %v4761, %v4760
        %v5003 = vpack.c.b16 %v4763, %v4762
        %v5004 = vpack.c.b16 %v4765, %v4764
        %v5005 = vpack.c.b16 %v4767, %v4766
        %v5006 = vpack.c.b16 %v4769, %v4768
        %v5007 = vpack.c.b16 %v4771, %v4770
        %v5008 = vpack.c.b16 %v4773, %v4772
        %v5009 = vpack.c.b16 %v4775, %v4774
        %v5010 = vpack.c.b16 %v4777, %v4776
        %v5011 = vpack.c.b16 %v4779, %v4778
        %v5012 = vpack.c.b16 %v4781, %v4780
        %v5013 = vpack.c.b16 %v4783, %v4782
        %v5014 = vpack.c.b16 %v4785, %v4784
        %v5015 = vpack.c.b16 %v4787, %v4786
        %v5016 = vpack.c.b16 %v4789, %v4788
        %v5017 = vpack.c.b16 %v4791, %v4790
        %v5018 = vpack.c.b16 %v4793, %v4792
        %v5019 = vpack.c.b16 %v4795, %v4794
        %v5020 = vpack.c.b16 %v4797, %v4796
        %v5021 = vpack.c.b16 %v4799, %v4798
        %v5022 = vpack.c.b16 %v4801, %v4800
        %v5023 = vpack.c.b16 %v4803, %v4802
        %v5024 = vpack.c.b16 %v4805, %v4804
        %v5025 = vpack.c.b16 %v4807, %v4806
        %v5026 = vpack.c.b16 %v4809, %v4808
        %v5027 = vpack.c.b16 %v4811, %v4810
        %v5028 = vpack.c.b16 %v4813, %v4812
        %v5029 = vpack.c.b16 %v4815, %v4814
        %v5030 = vpack.c.b16 %v4817, %v4816
        %v5031 = vpack.c.b16 %v4819, %v4818
        %v5032 = vpack.c.b16 %v4821, %v4820
        %v5033 = vpack.c.b16 %v4823, %v4822
        %v5034 = vpack.c.b16 %v4825, %v4824
        %v5035 = vpack.c.b16 %v4827, %v4826
        %v5036 = vpack.c.b16 %v4829, %v4828
        %v5037 = vpack.c.b16 %v4831, %v4830
        %v5038 = vpack.c.b16 %v4833, %v4832
        %v5039 = vpack.c.b16 %v4835, %v4834
        %v5040 = vpack.c.b16 %v4837, %v4836
        %v5041 = vpack.c.b16 %v4839, %v4838
        %v5042 = vpack.c.b16 %v4841, %v4840
        %v5043 = vpack.c.b16 %v4843, %v4842
        %v5044 = vpack.c.b16 %v4845, %v4844
        %v5045 = vpack.c.b16 %v4847, %v4846
        %v5046 = vpack.c.b16 %v4849, %v4848
        %v5047 = vpack.c.b16 %v4851, %v4850
        %v5048 = vpack.c.b16 %v4853, %v4852
        %v5049 = vpack.c.b16 %v4855, %v4854
        %v5050 = vpack.c.b16 %v4857, %v4856
        %v5051 = vpack.c.b16 %v4859, %v4858
        %v5052 = vpack.c.b16 %v4861, %v4860
        %v5053 = vpack.c.b16 %v4863, %v4862
        %v5054 = vpack.c.b16 %v4865, %v4864
        %v5055 = vpack.c.b16 %v4867, %v4866
        %v5056 = vpack.c.b16 %v4869, %v4868
        %v5057 = vpack.c.b16 %v4871, %v4870
        %v5058 = vpack.c.b16 %v4873, %v4872
        %v5059 = vpack.c.b16 %v4875, %v4874
        %v5060 = vpack.c.b16 %v4877, %v4876
        %v5061 = vpack.c.b16 %v4879, %v4878
        %v5062 = vpack.c.b16 %v4881, %v4880
        %v5063 = vpack.c.b16 %v4883, %v4882
        %v5064 = vpack.c.b16 %v4885, %v4884
        %v5065 = vpack.c.b16 %v4887, %v4886
        %v5066 = vpack.c.b16 %v4889, %v4888
        %v5067 = vpack.c.b16 %v4891, %v4890
        %v5068 = vpack.c.b16 %v4893, %v4892
        %v5069 = vpack.c.b16 %v4895, %v4894
        %v5070 = vpack.c.b16 %v4897, %v4896
        %v5071 = vpack.c.b16 %v4899, %v4898
        %v5072 = vpack.c.b16 %v4901, %v4900
        %v5073 = vpack.c.b16 %v4903, %v4902
        %v5074 = vpack.c.b16 %v4905, %v4904
        %v5075 = vpack.c.b16 %v4907, %v4906
        %v5076 = vpack.c.b16 %v4909, %v4908
        %v5077 = vpack.c.b16 %v4911, %v4910
        %v5078 = vpack.c.b16 %v4913, %v4912
        %v5079 = vpack.c.b16 %v4915, %v4914
        %v5080 = vpack.c.b16 %v4917, %v4916
        %v5081 = vpack.c.b16 %v4919, %v4918
        %v5082 = vpack.c.b16 %v4921, %v4920
        %v5083 = vpack.c.b16 %v4923, %v4922
        %v5084 = vpack.c.b16 %v4925, %v4924
        %v5085 = vpack.c.b16 %v4927, %v4926
        %v5086 = vpack.c.b16 %v4929, %v4928
        %v5087 = vpack.c.b16 %v4931, %v4930
        %v5088 = vpack.c.b16 %v4933, %v4932
        %v5089 = vpack.c.b16 %v4935, %v4934
        %v5090 = vpack.c.b16 %v4937, %v4936
        %v5091 = vpack.c.b16 %v4939, %v4938
        %v5092 = vpack.c.b16 %v4941, %v4940
        %v5093 = vpack.c.b16 %v4943, %v4942
        %v5094 = vpack.c.b16 %v4945, %v4944
        %v5095 = vpack.c.b16 %v4947, %v4946
        %v5096 = vpack.c.b16 %v4949, %v4948
        %v5097 = vpack.c.b16 %v4951, %v4950
        %v5098 = vpack.c.b16 %v4953, %v4952
        %v5099 = vpack.c.b16 %v4955, %v4954
        %v5100 = vpack.c.b16 %v4957, %v4956
        %v5101 = vpack.c.b16 %v4959, %v4958
        %v5102 = vpack.c.b16 %v4961, %v4960
        %v5103 = vpack.c.b16 %v4963, %v4962
        %v5104 = vpack.c.b16 %v4965, %v4964
        %v5105 = vpack.c.b16 %v4967, %v4966
        %v5106 = vpack.c.b16 %v4969, %v4968
        %v5107 = vpack.c.b16 %v4971, %v4970
        %v5108 = vpack.c.b16 %v4973, %v4972
        %v5109 = vpack.c.b16 %v4975, %v4974
        %v5110 = vpack.c.b16 %v4977, %v4976
        %v5111 = vpack.c.b16 %v4979, %v4978
        %v5112 = vpack.c.b16 %v4981, %v4980
        %v5113 = vpack.c.b16 %v4983, %v4982
        %v5114 = vpack.c.b16 %v4985, %v4984
        %v5115 = vpack.c.b16 %v4987, %v4986
        %5244 = vmatprep.subr.bf16.mxu0 0
        %5245 = vmatpush1.bf16.msra.mxu0 %v4988
        %5246 = vmatprep.subr.bf16.mxu0 0
        %5247 = vmatpush1.bf16.msra.mxu0 %v4989
        %5248 = vmatprep.subr.bf16.mxu0 0
        %5249 = vmatpush1.bf16.msra.mxu0 %v4990
        %5250 = vmatprep.subr.bf16.mxu0 0
        %5251 = vmatpush1.bf16.msra.mxu0 %v4991
        %5252 = vmatprep.subr.bf16.mxu0 0
        %5253 = vmatpush1.bf16.msra.mxu0 %v4992
        %5254 = vmatprep.subr.bf16.mxu0 0
        %5255 = vmatpush1.bf16.msra.mxu0 %v4993
        %5256 = vmatprep.subr.bf16.mxu0 0
        %5257 = vmatpush1.bf16.msra.mxu0 %v4994
        %5258 = vmatprep.subr.bf16.mxu0 0
        %5259 = vmatpush1.bf16.msra.mxu0 %v4995
        %5260 = vmatprep.subr.bf16.mxu0 0
        %5261 = vmatpush1.bf16.msra.mxu0 %v4996
        %5262 = vmatprep.subr.bf16.mxu0 0
        %5263 = vmatpush1.bf16.msra.mxu0 %v4997
        %5264 = vmatprep.subr.bf16.mxu0 0
        %5265 = vmatpush1.bf16.msra.mxu0 %v4998
        %5266 = vmatprep.subr.bf16.mxu0 0
        %5267 = vmatpush1.bf16.msra.mxu0 %v4999
        %5268 = vmatprep.subr.bf16.mxu0 0
        %5269 = vmatpush1.bf16.msra.mxu0 %v5000
        %5270 = vmatprep.subr.bf16.mxu0 0
        %5271 = vmatpush1.bf16.msra.mxu0 %v5001
        %5272 = vmatprep.subr.bf16.mxu0 0
        %5273 = vmatpush1.bf16.msra.mxu0 %v5002
        %5274 = vmatprep.subr.bf16.mxu0 0
        %5275 = vmatpush1.bf16.msra.mxu0 %v5003
        %5276 = vmatprep.mubr.bf16.mxu0 %v4118
        %5277 = vmatmul.mubr.bf16.gmra.mrb[0].mxu0 %v4117
        %v5278 = vpop.f32.mrb[0].mxu0
        %v5279 = vadd.f32 %v4474, %v5278
        %v5280 = vpop.f32.mrb[0].mxu0
        %v5281 = vpop.f32.mrb[0].mxu0
        %v5282 = vadd.f32 %v4474, %v5281
        %v5283 = vpop.f32.mrb[0].mxu0
        %5284 = vmatprep.mubr.bf16.mxu0 %v4134
        %5285 = vmatmul.mubr.bf16.gmra.mrb[0].mxu0 %v4133
        %v5286 = vpop.f32.mrb[0].mxu0
        %v5287 = vadd.f32 %v4474, %v5286
        %v5288 = vpop.f32.mrb[0].mxu0
        %v5289 = vpop.f32.mrb[0].mxu0
        %v5290 = vadd.f32 %v4474, %v5289
        %v5291 = vpop.f32.mrb[0].mxu0
        %5292 = vmatprep.mubr.bf16.mxu0 %v4150
        %5293 = vmatmul.mubr.bf16.gmra.mrb[0].mxu0 %v4149
        %v5294 = vpop.f32.mrb[0].mxu0
        %v5295 = vadd.f32 %v4474, %v5294
        %v5296 = vpop.f32.mrb[0].mxu0
        %v5297 = vpop.f32.mrb[0].mxu0
        %v5298 = vadd.f32 %v4474, %v5297
        %v5299 = vpop.f32.mrb[0].mxu0
        %5300 = vmatprep.mubr.bf16.mxu0 %v4166
        %5301 = vmatmul.mubr.bf16.gmra.mrb[0].mxu0 %v4165
        %v5302 = vpop.f32.mrb[0].mxu0
        %v5303 = vadd.f32 %v4474, %v5302
        %v5304 = vpop.f32.mrb[0].mxu0
        %v5305 = vpop.f32.mrb[0].mxu0
        %v5306 = vadd.f32 %v4474, %v5305
        %v5307 = vpop.f32.mrb[0].mxu0
        %5308 = vmatprep.mubr.bf16.mxu0 %v4182
        %5309 = vmatmul.mubr.bf16.gmra.mrb[0].mxu0 %v4181
        %v5310 = vpop.f32.mrb[0].mxu0
        %v5311 = vadd.f32 %v4474, %v5310
        %v5312 = vpop.f32.mrb[0].mxu0
        %v5313 = vpop.f32.mrb[0].mxu0
        %v5314 = vadd.f32 %v4474, %v5313
        %v5315 = vpop.f32.mrb[0].mxu0
        %5316 = vmatprep.mubr.bf16.mxu0 %v4198
        %5317 = vmatmul.mubr.bf16.gmra.mrb[0].mxu0 %v4197
        %v5318 = vpop.f32.mrb[0].mxu0
        %v5319 = vadd.f32 %v4474, %v5318
        %v5320 = vpop.f32.mrb[0].mxu0
        %v5321 = vpop.f32.mrb[0].mxu0
        %v5322 = vadd.f32 %v4474, %v5321
        %v5323 = vpop.f32.mrb[0].mxu0
        %5324 = vdwg.mxu0
        %5325 = vmatprep.subr.bf16.mxu0 0
        %5326 = vmatpush1.bf16.msra.mxu0 %v5004
        %5327 = vmatprep.subr.bf16.mxu0 0
        %5328 = vmatpush1.bf16.msra.mxu0 %v5005
        %5329 = vmatprep.subr.bf16.mxu0 0
        %5330 = vmatpush1.bf16.msra.mxu0 %v5006
        %5331 = vmatprep.subr.bf16.mxu0 0
        %5332 = vmatpush1.bf16.msra.mxu0 %v5007
        %5333 = vmatprep.subr.bf16.mxu0 0
        %5334 = vmatpush1.bf16.msra.mxu0 %v5008
        %5335 = vmatprep.subr.bf16.mxu0 0
        %5336 = vmatpush1.bf16.msra.mxu0 %v5009
        %5337 = vmatprep.subr.bf16.mxu0 0
        %5338 = vmatpush1.bf16.msra.mxu0 %v5010
        %5339 = vmatprep.subr.bf16.mxu0 0
        %5340 = vmatpush1.bf16.msra.mxu0 %v5011
        %5341 = vmatprep.subr.bf16.mxu0 0
        %5342 = vmatpush1.bf16.msra.mxu0 %v5012
        %5343 = vmatprep.subr.bf16.mxu0 0
        %5344 = vmatpush1.bf16.msra.mxu0 %v5013
        %5345 = vmatprep.subr.bf16.mxu0 0
        %5346 = vmatpush1.bf16.msra.mxu0 %v5014
        %5347 = vmatprep.subr.bf16.mxu0 0
        %5348 = vmatpush1.bf16.msra.mxu0 %v5015
        %5349 = vmatprep.subr.bf16.mxu0 0
        %5350 = vmatpush1.bf16.msra.mxu0 %v5016
        %5351 = vmatprep.subr.bf16.mxu0 0
        %5352 = vmatpush1.bf16.msra.mxu0 %v5017
        %5353 = vmatprep.subr.bf16.mxu0 0
        %5354 = vmatpush1.bf16.msra.mxu0 %v5018
        %5355 = vmatprep.subr.bf16.mxu0 0
        %5356 = vmatpush1.bf16.msra.mxu0 %v5019
        %5357 = vmatprep.mubr.bf16.mxu0 %v4120
        %5358 = vmatmul.mubr.bf16.gmra.mrb[0].mxu0 %v4119
        %v5359 = vpop.f32.mrb[0].mxu0
        %v5360 = vadd.f32 %v5279, %v5359
        %v5361 = vpop.f32.mrb[0].mxu0
        %v5362 = vpop.f32.mrb[0].mxu0
        %v5363 = vadd.f32 %v5282, %v5362
        %v5364 = vpop.f32.mrb[0].mxu0
        %5365 = vmatprep.mubr.bf16.mxu0 %v4136
        %5366 = vmatmul.mubr.bf16.gmra.mrb[0].mxu0 %v4135
        %v5367 = vpop.f32.mrb[0].mxu0
        %v5368 = vadd.f32 %v5287, %v5367
        %v5369 = vpop.f32.mrb[0].mxu0
        %v5370 = vpop.f32.mrb[0].mxu0
        %v5371 = vadd.f32 %v5290, %v5370
        %v5372 = vpop.f32.mrb[0].mxu0
        %5373 = vmatprep.mubr.bf16.mxu0 %v4152
        %5374 = vmatmul.mubr.bf16.gmra.mrb[0].mxu0 %v4151
        %v5375 = vpop.f32.mrb[0].mxu0
        %v5376 = vadd.f32 %v5295, %v5375
        %v5377 = vpop.f32.mrb[0].mxu0
        %v5378 = vpop.f32.mrb[0].mxu0
        %v5379 = vadd.f32 %v5298, %v5378
        %v5380 = vpop.f32.mrb[0].mxu0
        %5381 = vmatprep.mubr.bf16.mxu0 %v4168
        %5382 = vmatmul.mubr.bf16.gmra.mrb[0].mxu0 %v4167
        %v5383 = vpop.f32.mrb[0].mxu0
        %v5384 = vadd.f32 %v5303, %v5383
        %v5385 = vpop.f32.mrb[0].mxu0
        %v5386 = vpop.f32.mrb[0].mxu0
        %v5387 = vadd.f32 %v5306, %v5386
        %v5388 = vpop.f32.mrb[0].mxu0
        %5389 = vmatprep.mubr.bf16.mxu0 %v4184
        %5390 = vmatmul.mubr.bf16.gmra.mrb[0].mxu0 %v4183
        %v5391 = vpop.f32.mrb[0].mxu0
        %v5392 = vadd.f32 %v5311, %v5391
        %v5393 = vpop.f32.mrb[0].mxu0
        %v5394 = vpop.f32.mrb[0].mxu0
        %v5395 = vadd.f32 %v5314, %v5394
        %v5396 = vpop.f32.mrb[0].mxu0
        %5397 = vmatprep.mubr.bf16.mxu0 %v4200
        %5398 = vmatmul.mubr.bf16.gmra.mrb[0].mxu0 %v4199
        %v5399 = vpop.f32.mrb[0].mxu0
        %v5400 = vadd.f32 %v5319, %v5399
        %v5401 = vpop.f32.mrb[0].mxu0
        %v5402 = vpop.f32.mrb[0].mxu0
        %v5403 = vadd.f32 %v5322, %v5402
        %v5404 = vpop.f32.mrb[0].mxu0
        %5405 = vdwg.mxu0
        %5406 = vmatprep.subr.bf16.mxu0 0
        %5407 = vmatpush1.bf16.msra.mxu0 %v5020
        %5408 = vmatprep.subr.bf16.mxu0 0
        %5409 = vmatpush1.bf16.msra.mxu0 %v5021
        %5410 = vmatprep.subr.bf16.mxu0 0
        %5411 = vmatpush1.bf16.msra.mxu0 %v5022
        %5412 = vmatprep.subr.bf16.mxu0 0
        %5413 = vmatpush1.bf16.msra.mxu0 %v5023
        %5414 = vmatprep.subr.bf16.mxu0 0
        %5415 = vmatpush1.bf16.msra.mxu0 %v5024
        %5416 = vmatprep.subr.bf16.mxu0 0
        %5417 = vmatpush1.bf16.msra.mxu0 %v5025
        %5418 = vmatprep.subr.bf16.mxu0 0
        %5419 = vmatpush1.bf16.msra.mxu0 %v5026
        %5420 = vmatprep.subr.bf16.mxu0 0
        %5421 = vmatpush1.bf16.msra.mxu0 %v5027
        %5422 = vmatprep.subr.bf16.mxu0 0
        %5423 = vmatpush1.bf16.msra.mxu0 %v5028
        %5424 = vmatprep.subr.bf16.mxu0 0
        %5425 = vmatpush1.bf16.msra.mxu0 %v5029
        %5426 = vmatprep.subr.bf16.mxu0 0
        %5427 = vmatpush1.bf16.msra.mxu0 %v5030
        %5428 = vmatprep.subr.bf16.mxu0 0
        %5429 = vmatpush1.bf16.msra.mxu0 %v5031
        %5430 = vmatprep.subr.bf16.mxu0 0
        %5431 = vmatpush1.bf16.msra.mxu0 %v5032
        %5432 = vmatprep.subr.bf16.mxu0 0
        %5433 = vmatpush1.bf16.msra.mxu0 %v5033
        %5434 = vmatprep.subr.bf16.mxu0 0
        %5435 = vmatpush1.bf16.msra.mxu0 %v5034
        %5436 = vmatprep.subr.bf16.mxu0 0
        %5437 = vmatpush1.bf16.msra.mxu0 %v5035
        %5438 = vmatprep.mubr.bf16.mxu0 %v4122
        %5439 = vmatmul.mubr.bf16.gmra.mrb[0].mxu0 %v4121
        %v5440 = vpop.f32.mrb[0].mxu0
        %v5441 = vadd.f32 %v5360, %v5440
        %v5442 = vpop.f32.mrb[0].mxu0
        %v5443 = vpop.f32.mrb[0].mxu0
        %v5444 = vadd.f32 %v5363, %v5443
        %v5445 = vpop.f32.mrb[0].mxu0
        %5446 = vmatprep.mubr.bf16.mxu0 %v4138
        %5447 = vmatmul.mubr.bf16.gmra.mrb[0].mxu0 %v4137
        %v5448 = vpop.f32.mrb[0].mxu0
        %v5449 = vadd.f32 %v5368, %v5448
        %v5450 = vpop.f32.mrb[0].mxu0
        %v5451 = vpop.f32.mrb[0].mxu0
        %v5452 = vadd.f32 %v5371, %v5451
        %v5453 = vpop.f32.mrb[0].mxu0
        %5454 = vmatprep.mubr.bf16.mxu0 %v4154
        %5455 = vmatmul.mubr.bf16.gmra.mrb[0].mxu0 %v4153
        %v5456 = vpop.f32.mrb[0].mxu0
        %v5457 = vadd.f32 %v5376, %v5456
        %v5458 = vpop.f32.mrb[0].mxu0
        %v5459 = vpop.f32.mrb[0].mxu0
        %v5460 = vadd.f32 %v5379, %v5459
        %v5461 = vpop.f32.mrb[0].mxu0
        %5462 = vmatprep.mubr.bf16.mxu0 %v4170
        %5463 = vmatmul.mubr.bf16.gmra.mrb[0].mxu0 %v4169
        %v5464 = vpop.f32.mrb[0].mxu0
        %v5465 = vadd.f32 %v5384, %v5464
        %v5466 = vpop.f32.mrb[0].mxu0
        %v5467 = vpop.f32.mrb[0].mxu0
        %v5468 = vadd.f32 %v5387, %v5467
        %v5469 = vpop.f32.mrb[0].mxu0
        %5470 = vmatprep.mubr.bf16.mxu0 %v4186
        %5471 = vmatmul.mubr.bf16.gmra.mrb[0].mxu0 %v4185
        %v5472 = vpop.f32.mrb[0].mxu0
        %v5473 = vadd.f32 %v5392, %v5472
        %v5474 = vpop.f32.mrb[0].mxu0
        %v5475 = vpop.f32.mrb[0].mxu0
        %v5476 = vadd.f32 %v5395, %v5475
        %v5477 = vpop.f32.mrb[0].mxu0
        %5478 = vmatprep.mubr.bf16.mxu0 %v4202
        %5479 = vmatmul.mubr.bf16.gmra.mrb[0].mxu0 %v4201
        %v5480 = vpop.f32.mrb[0].mxu0
        %v5481 = vadd.f32 %v5400, %v5480
        %v5482 = vpop.f32.mrb[0].mxu0
        %v5483 = vpop.f32.mrb[0].mxu0
        %v5484 = vadd.f32 %v5403, %v5483
        %v5485 = vpop.f32.mrb[0].mxu0
        %5486 = vdwg.mxu0
        %5487 = vmatprep.subr.bf16.mxu0 0
        %5488 = vmatpush1.bf16.msra.mxu0 %v5036
        %5489 = vmatprep.subr.bf16.mxu0 0
        %5490 = vmatpush1.bf16.msra.mxu0 %v5037
        %5491 = vmatprep.subr.bf16.mxu0 0
        %5492 = vmatpush1.bf16.msra.mxu0 %v5038
        %5493 = vmatprep.subr.bf16.mxu0 0
        %5494 = vmatpush1.bf16.msra.mxu0 %v5039
        %5495 = vmatprep.subr.bf16.mxu0 0
        %5496 = vmatpush1.bf16.msra.mxu0 %v5040
        %5497 = vmatprep.subr.bf16.mxu0 0
        %5498 = vmatpush1.bf16.msra.mxu0 %v5041
        %5499 = vmatprep.subr.bf16.mxu0 0
        %5500 = vmatpush1.bf16.msra.mxu0 %v5042
        %5501 = vmatprep.subr.bf16.mxu0 0
        %5502 = vmatpush1.bf16.msra.mxu0 %v5043
        %5503 = vmatprep.subr.bf16.mxu0 0
        %5504 = vmatpush1.bf16.msra.mxu0 %v5044
        %5505 = vmatprep.subr.bf16.mxu0 0
        %5506 = vmatpush1.bf16.msra.mxu0 %v5045
        %5507 = vmatprep.subr.bf16.mxu0 0
        %5508 = vmatpush1.bf16.msra.mxu0 %v5046
        %5509 = vmatprep.subr.bf16.mxu0 0
        %5510 = vmatpush1.bf16.msra.mxu0 %v5047
        %5511 = vmatprep.subr.bf16.mxu0 0
        %5512 = vmatpush1.bf16.msra.mxu0 %v5048
        %5513 = vmatprep.subr.bf16.mxu0 0
        %5514 = vmatpush1.bf16.msra.mxu0 %v5049
        %5515 = vmatprep.subr.bf16.mxu0 0
        %5516 = vmatpush1.bf16.msra.mxu0 %v5050
        %5517 = vmatprep.subr.bf16.mxu0 0
        %5518 = vmatpush1.bf16.msra.mxu0 %v5051
        %5519 = vmatprep.mubr.bf16.mxu0 %v4124
        %5520 = vmatmul.mubr.bf16.gmra.mrb[0].mxu0 %v4123
        %v5521 = vpop.f32.mrb[0].mxu0
        %v5522 = vadd.f32 %v5441, %v5521
        %v5523 = vpop.f32.mrb[0].mxu0
        %v5524 = vpop.f32.mrb[0].mxu0
        %v5525 = vadd.f32 %v5444, %v5524
        %v5526 = vpop.f32.mrb[0].mxu0
        %5527 = vmatprep.mubr.bf16.mxu0 %v4140
        %5528 = vmatmul.mubr.bf16.gmra.mrb[0].mxu0 %v4139
        %v5529 = vpop.f32.mrb[0].mxu0
        %v5530 = vadd.f32 %v5449, %v5529
        %v5531 = vpop.f32.mrb[0].mxu0
        %v5532 = vpop.f32.mrb[0].mxu0
        %v5533 = vadd.f32 %v5452, %v5532
        %v5534 = vpop.f32.mrb[0].mxu0
        %5535 = vmatprep.mubr.bf16.mxu0 %v4156
        %5536 = vmatmul.mubr.bf16.gmra.mrb[0].mxu0 %v4155
        %v5537 = vpop.f32.mrb[0].mxu0
        %v5538 = vadd.f32 %v5457, %v5537
        %v5539 = vpop.f32.mrb[0].mxu0
        %v5540 = vpop.f32.mrb[0].mxu0
        %v5541 = vadd.f32 %v5460, %v5540
        %v5542 = vpop.f32.mrb[0].mxu0
        %5543 = vmatprep.mubr.bf16.mxu0 %v4172
        %5544 = vmatmul.mubr.bf16.gmra.mrb[0].mxu0 %v4171
        %v5545 = vpop.f32.mrb[0].mxu0
        %v5546 = vadd.f32 %v5465, %v5545
        %v5547 = vpop.f32.mrb[0].mxu0
        %v5548 = vpop.f32.mrb[0].mxu0
        %v5549 = vadd.f32 %v5468, %v5548
        %v5550 = vpop.f32.mrb[0].mxu0
        %5551 = vmatprep.mubr.bf16.mxu0 %v4188
        %5552 = vmatmul.mubr.bf16.gmra.mrb[0].mxu0 %v4187
        %v5553 = vpop.f32.mrb[0].mxu0
        %v5554 = vadd.f32 %v5473, %v5553
        %v5555 = vpop.f32.mrb[0].mxu0
        %v5556 = vpop.f32.mrb[0].mxu0
        %v5557 = vadd.f32 %v5476, %v5556
        %v5558 = vpop.f32.mrb[0].mxu0
        %5559 = vmatprep.mubr.bf16.mxu0 %v4204
        %5560 = vmatmul.mubr.bf16.gmra.mrb[0].mxu0 %v4203
        %v5561 = vpop.f32.mrb[0].mxu0
        %v5562 = vadd.f32 %v5481, %v5561
        %v5563 = vpop.f32.mrb[0].mxu0
        %v5564 = vpop.f32.mrb[0].mxu0
        %v5565 = vadd.f32 %v5484, %v5564
        %v5566 = vpop.f32.mrb[0].mxu0
        %5567 = vdwg.mxu0
        %5568 = vmatprep.subr.bf16.mxu0 0
        %5569 = vmatpush1.bf16.msra.mxu0 %v5052
        %5570 = vmatprep.subr.bf16.mxu0 0
        %5571 = vmatpush1.bf16.msra.mxu0 %v5053
        %5572 = vmatprep.subr.bf16.mxu0 0
        %5573 = vmatpush1.bf16.msra.mxu0 %v5054
        %5574 = vmatprep.subr.bf16.mxu0 0
        %5575 = vmatpush1.bf16.msra.mxu0 %v5055
        %5576 = vmatprep.subr.bf16.mxu0 0
        %5577 = vmatpush1.bf16.msra.mxu0 %v5056
        %5578 = vmatprep.subr.bf16.mxu0 0
        %5579 = vmatpush1.bf16.msra.mxu0 %v5057
        %5580 = vmatprep.subr.bf16.mxu0 0
        %5581 = vmatpush1.bf16.msra.mxu0 %v5058
        %5582 = vmatprep.subr.bf16.mxu0 0
        %5583 = vmatpush1.bf16.msra.mxu0 %v5059
        %5584 = vmatprep.subr.bf16.mxu0 0
        %5585 = vmatpush1.bf16.msra.mxu0 %v5060
        %5586 = vmatprep.subr.bf16.mxu0 0
        %5587 = vmatpush1.bf16.msra.mxu0 %v5061
        %5588 = vmatprep.subr.bf16.mxu0 0
        %5589 = vmatpush1.bf16.msra.mxu0 %v5062
        %5590 = vmatprep.subr.bf16.mxu0 0
        %5591 = vmatpush1.bf16.msra.mxu0 %v5063
        %5592 = vmatprep.subr.bf16.mxu0 0
        %5593 = vmatpush1.bf16.msra.mxu0 %v5064
        %5594 = vmatprep.subr.bf16.mxu0 0
        %5595 = vmatpush1.bf16.msra.mxu0 %v5065
        %5596 = vmatprep.subr.bf16.mxu0 0
        %5597 = vmatpush1.bf16.msra.mxu0 %v5066
        %5598 = vmatprep.subr.bf16.mxu0 0
        %5599 = vmatpush1.bf16.msra.mxu0 %v5067
        %5600 = vmatprep.mubr.bf16.mxu0 %v4126
        %5601 = vmatmul.mubr.bf16.gmra.mrb[0].mxu0 %v4125
        %v5602 = vpop.f32.mrb[0].mxu0
        %v5603 = vadd.f32 %v5522, %v5602
        %v5604 = vpop.f32.mrb[0].mxu0
        %v5605 = vpop.f32.mrb[0].mxu0
        %v5606 = vadd.f32 %v5525, %v5605
        %v5607 = vpop.f32.mrb[0].mxu0
        %5608 = vmatprep.mubr.bf16.mxu0 %v4142
        %5609 = vmatmul.mubr.bf16.gmra.mrb[0].mxu0 %v4141
        %v5610 = vpop.f32.mrb[0].mxu0
        %v5611 = vadd.f32 %v5530, %v5610
        %v5612 = vpop.f32.mrb[0].mxu0
        %v5613 = vpop.f32.mrb[0].mxu0
        %v5614 = vadd.f32 %v5533, %v5613
        %v5615 = vpop.f32.mrb[0].mxu0
        %5616 = vmatprep.mubr.bf16.mxu0 %v4158
        %5617 = vmatmul.mubr.bf16.gmra.mrb[0].mxu0 %v4157
        %v5618 = vpop.f32.mrb[0].mxu0
        %v5619 = vadd.f32 %v5538, %v5618
        %v5620 = vpop.f32.mrb[0].mxu0
        %v5621 = vpop.f32.mrb[0].mxu0
        %v5622 = vadd.f32 %v5541, %v5621
        %v5623 = vpop.f32.mrb[0].mxu0
        %5624 = vmatprep.mubr.bf16.mxu0 %v4174
        %5625 = vmatmul.mubr.bf16.gmra.mrb[0].mxu0 %v4173
        %v5626 = vpop.f32.mrb[0].mxu0
        %v5627 = vadd.f32 %v5546, %v5626
        %v5628 = vpop.f32.mrb[0].mxu0
        %v5629 = vpop.f32.mrb[0].mxu0
        %v5630 = vadd.f32 %v5549, %v5629
        %v5631 = vpop.f32.mrb[0].mxu0
        %5632 = vmatprep.mubr.bf16.mxu0 %v4190
        %5633 = vmatmul.mubr.bf16.gmra.mrb[0].mxu0 %v4189
        %v5634 = vpop.f32.mrb[0].mxu0
        %v5635 = vadd.f32 %v5554, %v5634
        %v5636 = vpop.f32.mrb[0].mxu0
        %v5637 = vpop.f32.mrb[0].mxu0
        %v5638 = vadd.f32 %v5557, %v5637
        %v5639 = vpop.f32.mrb[0].mxu0
        %5640 = vmatprep.mubr.bf16.mxu0 %v4206
        %5641 = vmatmul.mubr.bf16.gmra.mrb[0].mxu0 %v4205
        %v5642 = vpop.f32.mrb[0].mxu0
        %v5643 = vadd.f32 %v5562, %v5642
        %v5644 = vpop.f32.mrb[0].mxu0
        %v5645 = vpop.f32.mrb[0].mxu0
        %v5646 = vadd.f32 %v5565, %v5645
        %v5647 = vpop.f32.mrb[0].mxu0
        %5648 = vdwg.mxu0
        %5649 = vmatprep.subr.bf16.mxu0 0
        %5650 = vmatpush1.bf16.msra.mxu0 %v5068
        %5651 = vmatprep.subr.bf16.mxu0 0
        %5652 = vmatpush1.bf16.msra.mxu0 %v5069
        %5653 = vmatprep.subr.bf16.mxu0 0
        %5654 = vmatpush1.bf16.msra.mxu0 %v5070
        %5655 = vmatprep.subr.bf16.mxu0 0
        %5656 = vmatpush1.bf16.msra.mxu0 %v5071
        %5657 = vmatprep.subr.bf16.mxu0 0
        %5658 = vmatpush1.bf16.msra.mxu0 %v5072
        %5659 = vmatprep.subr.bf16.mxu0 0
        %5660 = vmatpush1.bf16.msra.mxu0 %v5073
        %5661 = vmatprep.subr.bf16.mxu0 0
        %5662 = vmatpush1.bf16.msra.mxu0 %v5074
        %5663 = vmatprep.subr.bf16.mxu0 0
        %5664 = vmatpush1.bf16.msra.mxu0 %v5075
        %5665 = vmatprep.subr.bf16.mxu0 0
        %5666 = vmatpush1.bf16.msra.mxu0 %v5076
        %5667 = vmatprep.subr.bf16.mxu0 0
        %5668 = vmatpush1.bf16.msra.mxu0 %v5077
        %5669 = vmatprep.subr.bf16.mxu0 0
        %5670 = vmatpush1.bf16.msra.mxu0 %v5078
        %5671 = vmatprep.subr.bf16.mxu0 0
        %5672 = vmatpush1.bf16.msra.mxu0 %v5079
        %5673 = vmatprep.subr.bf16.mxu0 0
        %5674 = vmatpush1.bf16.msra.mxu0 %v5080
        %5675 = vmatprep.subr.bf16.mxu0 0
        %5676 = vmatpush1.bf16.msra.mxu0 %v5081
        %5677 = vmatprep.subr.bf16.mxu0 0
        %5678 = vmatpush1.bf16.msra.mxu0 %v5082
        %5679 = vmatprep.subr.bf16.mxu0 0
        %5680 = vmatpush1.bf16.msra.mxu0 %v5083
        %5681 = vmatprep.mubr.bf16.mxu0 %v4128
        %5682 = vmatmul.mubr.bf16.gmra.mrb[0].mxu0 %v4127
        %v5683 = vpop.f32.mrb[0].mxu0
        %v5684 = vadd.f32 %v5603, %v5683
        %v5685 = vpop.f32.mrb[0].mxu0
        %v5686 = vpop.f32.mrb[0].mxu0
        %v5687 = vadd.f32 %v5606, %v5686
        %v5688 = vpop.f32.mrb[0].mxu0
        %5689 = vmatprep.mubr.bf16.mxu0 %v4144
        %5690 = vmatmul.mubr.bf16.gmra.mrb[0].mxu0 %v4143
        %v5691 = vpop.f32.mrb[0].mxu0
        %v5692 = vadd.f32 %v5611, %v5691
        %v5693 = vpop.f32.mrb[0].mxu0
        %v5694 = vpop.f32.mrb[0].mxu0
        %v5695 = vadd.f32 %v5614, %v5694
        %v5696 = vpop.f32.mrb[0].mxu0
        %5697 = vmatprep.mubr.bf16.mxu0 %v4160
        %5698 = vmatmul.mubr.bf16.gmra.mrb[0].mxu0 %v4159
        %v5699 = vpop.f32.mrb[0].mxu0
        %v5700 = vadd.f32 %v5619, %v5699
        %v5701 = vpop.f32.mrb[0].mxu0
        %v5702 = vpop.f32.mrb[0].mxu0
        %v5703 = vadd.f32 %v5622, %v5702
        %v5704 = vpop.f32.mrb[0].mxu0
        %5705 = vmatprep.mubr.bf16.mxu0 %v4176
        %5706 = vmatmul.mubr.bf16.gmra.mrb[0].mxu0 %v4175
        %v5707 = vpop.f32.mrb[0].mxu0
        %v5708 = vadd.f32 %v5627, %v5707
        %v5709 = vpop.f32.mrb[0].mxu0
        %v5710 = vpop.f32.mrb[0].mxu0
        %v5711 = vadd.f32 %v5630, %v5710
        %v5712 = vpop.f32.mrb[0].mxu0
        %5713 = vmatprep.mubr.bf16.mxu0 %v4192
        %5714 = vmatmul.mubr.bf16.gmra.mrb[0].mxu0 %v4191
        %v5715 = vpop.f32.mrb[0].mxu0
        %v5716 = vadd.f32 %v5635, %v5715
        %v5717 = vpop.f32.mrb[0].mxu0
        %v5718 = vpop.f32.mrb[0].mxu0
        %v5719 = vadd.f32 %v5638, %v5718
        %v5720 = vpop.f32.mrb[0].mxu0
        %5721 = vmatprep.mubr.bf16.mxu0 %v4208
        %5722 = vmatmul.mubr.bf16.gmra.mrb[0].mxu0 %v4207
        %v5723 = vpop.f32.mrb[0].mxu0
        %v5724 = vadd.f32 %v5643, %v5723
        %v5725 = vpop.f32.mrb[0].mxu0
        %v5726 = vpop.f32.mrb[0].mxu0
        %v5727 = vadd.f32 %v5646, %v5726
        %v5728 = vpop.f32.mrb[0].mxu0
        %5729 = vdwg.mxu0
        %5730 = vmatprep.subr.bf16.mxu0 0
        %5731 = vmatpush1.bf16.msra.mxu0 %v5084
        %5732 = vmatprep.subr.bf16.mxu0 0
        %5733 = vmatpush1.bf16.msra.mxu0 %v5085
        %5734 = vmatprep.subr.bf16.mxu0 0
        %5735 = vmatpush1.bf16.msra.mxu0 %v5086
        %5736 = vmatprep.subr.bf16.mxu0 0
        %5737 = vmatpush1.bf16.msra.mxu0 %v5087
        %5738 = vmatprep.subr.bf16.mxu0 0
        %5739 = vmatpush1.bf16.msra.mxu0 %v5088
        %5740 = vmatprep.subr.bf16.mxu0 0
        %5741 = vmatpush1.bf16.msra.mxu0 %v5089
        %5742 = vmatprep.subr.bf16.mxu0 0
        %5743 = vmatpush1.bf16.msra.mxu0 %v5090
        %5744 = vmatprep.subr.bf16.mxu0 0
        %5745 = vmatpush1.bf16.msra.mxu0 %v5091
        %5746 = vmatprep.subr.bf16.mxu0 0
        %5747 = vmatpush1.bf16.msra.mxu0 %v5092
        %5748 = vmatprep.subr.bf16.mxu0 0
        %5749 = vmatpush1.bf16.msra.mxu0 %v5093
        %5750 = vmatprep.subr.bf16.mxu0 0
        %5751 = vmatpush1.bf16.msra.mxu0 %v5094
        %5752 = vmatprep.subr.bf16.mxu0 0
        %5753 = vmatpush1.bf16.msra.mxu0 %v5095
        %5754 = vmatprep.subr.bf16.mxu0 0
        %5755 = vmatpush1.bf16.msra.mxu0 %v5096
        %5756 = vmatprep.subr.bf16.mxu0 0
        %5757 = vmatpush1.bf16.msra.mxu0 %v5097
        %5758 = vmatprep.subr.bf16.mxu0 0
        %5759 = vmatpush1.bf16.msra.mxu0 %v5098
        %5760 = vmatprep.subr.bf16.mxu0 0
        %5761 = vmatpush1.bf16.msra.mxu0 %v5099
        %5762 = vmatprep.mubr.bf16.mxu0 %v4130
        %5763 = vmatmul.mubr.bf16.gmra.mrb[0].mxu0 %v4129
        %v5764 = vpop.f32.mrb[0].mxu0
        %v5765 = vadd.f32 %v5684, %v5764
        %v5766 = vpop.f32.mrb[0].mxu0
        %v5767 = vpop.f32.mrb[0].mxu0
        %v5768 = vadd.f32 %v5687, %v5767
        %v5769 = vpop.f32.mrb[0].mxu0
        %5770 = vmatprep.mubr.bf16.mxu0 %v4146
        %5771 = vmatmul.mubr.bf16.gmra.mrb[0].mxu0 %v4145
        %v5772 = vpop.f32.mrb[0].mxu0
        %v5773 = vadd.f32 %v5692, %v5772
        %v5774 = vpop.f32.mrb[0].mxu0
        %v5775 = vpop.f32.mrb[0].mxu0
        %v5776 = vadd.f32 %v5695, %v5775
        %v5777 = vpop.f32.mrb[0].mxu0
        %5778 = vmatprep.mubr.bf16.mxu0 %v4162
        %5779 = vmatmul.mubr.bf16.gmra.mrb[0].mxu0 %v4161
        %v5780 = vpop.f32.mrb[0].mxu0
        %v5781 = vadd.f32 %v5700, %v5780
        %v5782 = vpop.f32.mrb[0].mxu0
        %v5783 = vpop.f32.mrb[0].mxu0
        %v5784 = vadd.f32 %v5703, %v5783
        %v5785 = vpop.f32.mrb[0].mxu0
        %5786 = vmatprep.mubr.bf16.mxu0 %v4178
        %5787 = vmatmul.mubr.bf16.gmra.mrb[0].mxu0 %v4177
        %v5788 = vpop.f32.mrb[0].mxu0
        %v5789 = vadd.f32 %v5708, %v5788
        %v5790 = vpop.f32.mrb[0].mxu0
        %v5791 = vpop.f32.mrb[0].mxu0
        %v5792 = vadd.f32 %v5711, %v5791
        %v5793 = vpop.f32.mrb[0].mxu0
        %5794 = vmatprep.mubr.bf16.mxu0 %v4194
        %5795 = vmatmul.mubr.bf16.gmra.mrb[0].mxu0 %v4193
        %v5796 = vpop.f32.mrb[0].mxu0
        %v5797 = vadd.f32 %v5716, %v5796
        %v5798 = vpop.f32.mrb[0].mxu0
        %v5799 = vpop.f32.mrb[0].mxu0
        %v5800 = vadd.f32 %v5719, %v5799
        %v5801 = vpop.f32.mrb[0].mxu0
        %5802 = vmatprep.mubr.bf16.mxu0 %v4210
        %5803 = vmatmul.mubr.bf16.gmra.mrb[0].mxu0 %v4209
        %v5804 = vpop.f32.mrb[0].mxu0
        %v5805 = vadd.f32 %v5724, %v5804
        %v5806 = vpop.f32.mrb[0].mxu0
        %v5807 = vpop.f32.mrb[0].mxu0
        %v5808 = vadd.f32 %v5727, %v5807
        %v5809 = vpop.f32.mrb[0].mxu0
        %5810 = vdwg.mxu0
        %5811 = vmatprep.subr.bf16.mxu0 0
        %5812 = vmatpush1.bf16.msra.mxu0 %v5100
        %5813 = vmatprep.subr.bf16.mxu0 0
        %5814 = vmatpush1.bf16.msra.mxu0 %v5101
        %5815 = vmatprep.subr.bf16.mxu0 0
        %5816 = vmatpush1.bf16.msra.mxu0 %v5102
        %5817 = vmatprep.subr.bf16.mxu0 0
        %5818 = vmatpush1.bf16.msra.mxu0 %v5103
        %5819 = vmatprep.subr.bf16.mxu0 0
        %5820 = vmatpush1.bf16.msra.mxu0 %v5104
        %5821 = vmatprep.subr.bf16.mxu0 0
        %5822 = vmatpush1.bf16.msra.mxu0 %v5105
        %5823 = vmatprep.subr.bf16.mxu0 0
        %5824 = vmatpush1.bf16.msra.mxu0 %v5106
        %5825 = vmatprep.subr.bf16.mxu0 0
        %5826 = vmatpush1.bf16.msra.mxu0 %v5107
        %5827 = vmatprep.subr.bf16.mxu0 0
        %5828 = vmatpush1.bf16.msra.mxu0 %v5108
        %5829 = vmatprep.subr.bf16.mxu0 0
        %5830 = vmatpush1.bf16.msra.mxu0 %v5109
        %5831 = vmatprep.subr.bf16.mxu0 0
        %5832 = vmatpush1.bf16.msra.mxu0 %v5110
        %5833 = vmatprep.subr.bf16.mxu0 0
        %5834 = vmatpush1.bf16.msra.mxu0 %v5111
        %5835 = vmatprep.subr.bf16.mxu0 0
        %5836 = vmatpush1.bf16.msra.mxu0 %v5112
        %5837 = vmatprep.subr.bf16.mxu0 0
        %5838 = vmatpush1.bf16.msra.mxu0 %v5113
        %5839 = vmatprep.subr.bf16.mxu0 0
        %5840 = vmatpush1.bf16.msra.mxu0 %v5114
        %5841 = vmatprep.subr.bf16.mxu0 0
        %5842 = vmatpush1.bf16.msra.mxu0 %v5115
        %5843 = vmatprep.mubr.bf16.mxu0 %v4132
        %5844 = vmatmul.mubr.bf16.gmra.mrb[0].mxu0 %v4131
        %v5845 = vpop.f32.mrb[0].mxu0
        %v5846 = vadd.f32 %v5765, %v5845
        %v5847 = vpop.f32.mrb[0].mxu0
        %v5848 = vpop.f32.mrb[0].mxu0
        %v5849 = vadd.f32 %v5768, %v5848
        %v5850 = vpop.f32.mrb[0].mxu0
        %5851 = vmatprep.mubr.bf16.mxu0 %v4148
        %5852 = vmatmul.mubr.bf16.gmra.mrb[0].mxu0 %v4147
        %v5853 = vpop.f32.mrb[0].mxu0
        %v5854 = vadd.f32 %v5773, %v5853
        %v5855 = vpop.f32.mrb[0].mxu0
        %v5856 = vpop.f32.mrb[0].mxu0
        %v5857 = vadd.f32 %v5776, %v5856
        %v5858 = vpop.f32.mrb[0].mxu0
        %5859 = vmatprep.mubr.bf16.mxu0 %v4164
        %5860 = vmatmul.mubr.bf16.gmra.mrb[0].mxu0 %v4163
        %v5861 = vpop.f32.mrb[0].mxu0
        %v5862 = vadd.f32 %v5781, %v5861
        %v5863 = vpop.f32.mrb[0].mxu0
        %v5864 = vpop.f32.mrb[0].mxu0
        %v5865 = vadd.f32 %v5784, %v5864
        %v5866 = vpop.f32.mrb[0].mxu0
        %5867 = vmatprep.mubr.bf16.mxu0 %v4180
        %5868 = vmatmul.mubr.bf16.gmra.mrb[0].mxu0 %v4179
        %v5869 = vpop.f32.mrb[0].mxu0
        %v5870 = vadd.f32 %v5789, %v5869
        %v5871 = vpop.f32.mrb[0].mxu0
        %v5872 = vpop.f32.mrb[0].mxu0
        %v5873 = vadd.f32 %v5792, %v5872
        %v5874 = vpop.f32.mrb[0].mxu0
        %5875 = vmatprep.mubr.bf16.mxu0 %v4196
        %5876 = vmatmul.mubr.bf16.gmra.mrb[0].mxu0 %v4195
        %v5877 = vpop.f32.mrb[0].mxu0
        %v5878 = vadd.f32 %v5797, %v5877
        %v5879 = vpop.f32.mrb[0].mxu0
        %v5880 = vpop.f32.mrb[0].mxu0
        %v5881 = vadd.f32 %v5800, %v5880
        %v5882 = vpop.f32.mrb[0].mxu0
        %5883 = vmatprep.mubr.bf16.mxu0 %v4212
        %5884 = vmatmul.mubr.bf16.gmra.mrb[0].mxu0 %v4211
        %v5885 = vpop.f32.mrb[0].mxu0
        %v5886 = vadd.f32 %v5805, %v5885
        %v5887 = vpop.f32.mrb[0].mxu0
        %v5888 = vpop.f32.mrb[0].mxu0
        %v5889 = vadd.f32 %v5808, %v5888
        %v5890 = vpop.f32.mrb[0].mxu0
        %5891 = vdwg.mxu0
        %v5892 = vadd.f32 %v2965, %v5846
        %v5893 = vadd.f32 %v2966, %v5849
        %v5894 = vadd.f32 %v2967, %v5854
        %v5895 = vadd.f32 %v2968, %v5857
        %v5896 = vadd.f32 %v2969, %v5862
        %v5897 = vadd.f32 %v2970, %v5865
        %v5898 = vadd.f32 %v2971, %v5870
        %v5899 = vadd.f32 %v2972, %v5873
        %v5900 = vadd.f32 %v2973, %v5878
        %v5901 = vadd.f32 %v2974, %v5881
        %v5902 = vadd.f32 %v2975, %v5886
        %v5903 = vadd.f32 %v2976, %v5889
        %v5904 = vsel %vm1234, %v5892, 0.0
        %5905 = vadd.xlane.f32.xlu0 %v5904
        %v5906 = vpop.xlane.xlu0 %5905
        %v5907 = vsel %vm1234, %v5893, 0.0
        %5908 = vadd.xlane.f32.xlu0 %v5907
        %v5909 = vpop.xlane.xlu0 %5908
        %v5910 = vsel %vm1234, %v5894, 0.0
        %5911 = vadd.xlane.f32.xlu0 %v5910
        %v5912 = vpop.xlane.xlu0 %5911
        %v5913 = vsel %vm1234, %v5895, 0.0
        %5914 = vadd.xlane.f32.xlu0 %v5913
        %v5915 = vpop.xlane.xlu0 %5914
        %v5916 = vsel %vm1234, %v5896, 0.0
        %5917 = vadd.xlane.f32.xlu0 %v5916
        %v5918 = vpop.xlane.xlu0 %5917
        %v5919 = vsel %vm1234, %v5897, 0.0
        %5920 = vadd.xlane.f32.xlu0 %v5919
        %v5921 = vpop.xlane.xlu0 %5920
        %v5922 = vsel %vm1234, %v5898, 0.0
        %5923 = vadd.xlane.f32.xlu0 %v5922
        %v5924 = vpop.xlane.xlu0 %5923
        %v5925 = vsel %vm1234, %v5899, 0.0
        %5926 = vadd.xlane.f32.xlu0 %v5925
        %v5927 = vpop.xlane.xlu0 %5926
        %v5928 = vsel %vm1234, %v5900, 0.0
        %5929 = vadd.xlane.f32.xlu0 %v5928
        %v5930 = vpop.xlane.xlu0 %5929
        %v5931 = vsel %vm1234, %v5901, 0.0
        %5932 = vadd.xlane.f32.xlu0 %v5931
        %v5933 = vpop.xlane.xlu0 %5932
        %v5934 = vsel %vm1234, %v5902, 0.0
        %5935 = vadd.xlane.f32.xlu0 %v5934
        %v5936 = vpop.xlane.xlu0 %5935
        %v5937 = vsel %vm1234, %v5903, 0.0
        %5938 = vadd.xlane.f32.xlu0 %v5937
        %v5939 = vpop.xlane.xlu0 %5938
        %v5940 = vmul.f32 %v5906, %v2818
        %v5941 = vmul.f32 %v5909, %v2818
        %v5942 = vmul.f32 %v5912, %v2818
        %v5943 = vmul.f32 %v5915, %v2818
        %v5944 = vmul.f32 %v5918, %v2818
        %v5945 = vmul.f32 %v5921, %v2818
        %v5946 = vmul.f32 %v5924, %v2818
        %v5947 = vmul.f32 %v5927, %v2818
        %v5948 = vmul.f32 %v5930, %v2818
        %v5949 = vmul.f32 %v5933, %v2818
        %v5950 = vmul.f32 %v5936, %v2818
        %v5951 = vmul.f32 %v5939, %v2818
        %v5952 = vsub.f32 %v5892, %v5940
        %v5953 = vsub.f32 %v5893, %v5941
        %v5954 = vsub.f32 %v5894, %v5942
        %v5955 = vsub.f32 %v5895, %v5943
        %v5956 = vsub.f32 %v5896, %v5944
        %v5957 = vsub.f32 %v5897, %v5945
        %v5958 = vsub.f32 %v5898, %v5946
        %v5959 = vsub.f32 %v5899, %v5947
        %v5960 = vsub.f32 %v5900, %v5948
        %v5961 = vsub.f32 %v5901, %v5949
        %v5962 = vsub.f32 %v5902, %v5950
        %v5963 = vsub.f32 %v5903, %v5951
        %v5964 = vmul.f32 %v5952, %v5952
        %v5965 = vmul.f32 %v5953, %v5953
        %v5966 = vmul.f32 %v5954, %v5954
        %v5967 = vmul.f32 %v5955, %v5955
        %v5968 = vmul.f32 %v5956, %v5956
        %v5969 = vmul.f32 %v5957, %v5957
        %v5970 = vmul.f32 %v5958, %v5958
        %v5971 = vmul.f32 %v5959, %v5959
        %v5972 = vmul.f32 %v5960, %v5960
        %v5973 = vmul.f32 %v5961, %v5961
        %v5974 = vmul.f32 %v5962, %v5962
        %v5975 = vmul.f32 %v5963, %v5963
        %v5976 = vsel %vm1234, %v5964, 0.0
        %5977 = vadd.xlane.f32.xlu0 %v5976
        %v5978 = vpop.xlane.xlu0 %5977
        %v5979 = vsel %vm1234, %v5965, 0.0
        %5980 = vadd.xlane.f32.xlu0 %v5979
        %v5981 = vpop.xlane.xlu0 %5980
        %v5982 = vsel %vm1234, %v5966, 0.0
        %5983 = vadd.xlane.f32.xlu0 %v5982
        %v5984 = vpop.xlane.xlu0 %5983
        %v5985 = vsel %vm1234, %v5967, 0.0
        %5986 = vadd.xlane.f32.xlu0 %v5985
        %v5987 = vpop.xlane.xlu0 %5986
        %v5988 = vsel %vm1234, %v5968, 0.0
        %5989 = vadd.xlane.f32.xlu0 %v5988
        %v5990 = vpop.xlane.xlu0 %5989
        %v5991 = vsel %vm1234, %v5969, 0.0
        %5992 = vadd.xlane.f32.xlu0 %v5991
        %v5993 = vpop.xlane.xlu0 %5992
        %v5994 = vsel %vm1234, %v5970, 0.0
        %5995 = vadd.xlane.f32.xlu0 %v5994
        %v5996 = vpop.xlane.xlu0 %5995
        %v5997 = vsel %vm1234, %v5971, 0.0
        %5998 = vadd.xlane.f32.xlu0 %v5997
        %v5999 = vpop.xlane.xlu0 %5998
        %v6000 = vsel %vm1234, %v5972, 0.0
        %6001 = vadd.xlane.f32.xlu0 %v6000
        %v6002 = vpop.xlane.xlu0 %6001
        %v6003 = vsel %vm1234, %v5973, 0.0
        %6004 = vadd.xlane.f32.xlu0 %v6003
        %v6005 = vpop.xlane.xlu0 %6004
        %v6006 = vsel %vm1234, %v5974, 0.0
        %6007 = vadd.xlane.f32.xlu0 %v6006
        %v6008 = vpop.xlane.xlu0 %6007
        %v6009 = vsel %vm1234, %v5975, 0.0
        %6010 = vadd.xlane.f32.xlu0 %v6009
        %v6011 = vpop.xlane.xlu0 %6010
        %v6012 = vmul.f32 %v5978, %v2818
        %v6013 = vmul.f32 %v5981, %v2818
        %v6014 = vmul.f32 %v5984, %v2818
        %v6015 = vmul.f32 %v5987, %v2818
        %v6016 = vmul.f32 %v5990, %v2818
        %v6017 = vmul.f32 %v5993, %v2818
        %v6018 = vmul.f32 %v5996, %v2818
        %v6019 = vmul.f32 %v5999, %v2818
        %v6020 = vmul.f32 %v6002, %v2818
        %v6021 = vmul.f32 %v6005, %v2818
        %v6022 = vmul.f32 %v6008, %v2818
        %v6023 = vmul.f32 %v6011, %v2818
        %v6024 = vadd.f32 %v6012, 1e-05
        %v6025 = vadd.f32 %v6013, 1e-05
        %v6026 = vadd.f32 %v6014, 1e-05
        %v6027 = vadd.f32 %v6015, 1e-05
        %v6028 = vadd.f32 %v6016, 1e-05
        %v6029 = vadd.f32 %v6017, 1e-05
        %v6030 = vadd.f32 %v6018, 1e-05
        %v6031 = vadd.f32 %v6019, 1e-05
        %v6032 = vadd.f32 %v6020, 1e-05
        %v6033 = vadd.f32 %v6021, 1e-05
        %v6034 = vadd.f32 %v6022, 1e-05
        %v6035 = vadd.f32 %v6023, 1e-05
        %v6036 = vrsqrt.pop %v6024
        %v6037 = vrsqrt.pop %v6025
        %v6038 = vrsqrt.pop %v6026
        %v6039 = vrsqrt.pop %v6027
        %v6040 = vrsqrt.pop %v6028
        %v6041 = vrsqrt.pop %v6029
        %v6042 = vrsqrt.pop %v6030
        %v6043 = vrsqrt.pop %v6031
        %v6044 = vrsqrt.pop %v6032
        %v6045 = vrsqrt.pop %v6033
        %v6046 = vrsqrt.pop %v6034
        %v6047 = vrsqrt.pop %v6035
        %v6048 = vmul.f32 %v5952, %v6036
        %v6049 = vmul.f32 %v5953, %v6037
        %v6050 = vmul.f32 %v5954, %v6038
        %v6051 = vmul.f32 %v5955, %v6039
        %v6052 = vmul.f32 %v5956, %v6040
        %v6053 = vmul.f32 %v5957, %v6041
        %v6054 = vmul.f32 %v5958, %v6042
        %v6055 = vmul.f32 %v5959, %v6043
        %v6056 = vmul.f32 %v5960, %v6044
        %v6057 = vmul.f32 %v5961, %v6045
        %v6058 = vmul.f32 %v5962, %v6046
        %v6059 = vmul.f32 %v5963, %v6047
        %v6060 = vld [vmem:[%s1047] sm:$0x1]
        %v6062 = vlaneseq
        %v6063 = vshrl.u32 %v6062, 7
        %v6064 = vsub.s32 0, %v6063
        %v6065 = vrot.slane %v6060, %v6064
        %v6067 = vmul.f32 %v6048, %v6065
        %v6068 = vmul.f32 %v6049, %v6065
        %v6069 = vmul.f32 %v6050, %v6065
        %v6070 = vmul.f32 %v6051, %v6065
        %v6071 = vmul.f32 %v6052, %v6065
        %v6072 = vmul.f32 %v6053, %v6065
        %v6073 = vmul.f32 %v6054, %v6065
        %v6074 = vmul.f32 %v6055, %v6065
        %v6075 = vmul.f32 %v6056, %v6065
        %v6076 = vmul.f32 %v6057, %v6065
        %v6077 = vmul.f32 %v6058, %v6065
        %v6078 = vmul.f32 %v6059, %v6065
        %v6079 = vld [vmem:[%s1055] sm:$0x1]
        %v6081 = vlaneseq
        %v6082 = vshrl.u32 %v6081, 7
        %v6083 = vsub.s32 0, %v6082
        %v6084 = vrot.slane %v6079, %v6083
        %v6086 = vadd.f32 %v6067, %v6084
        %v6087 = vadd.f32 %v6068, %v6084
        %v6088 = vadd.f32 %v6069, %v6084
        %v6089 = vadd.f32 %v6070, %v6084
        %v6090 = vadd.f32 %v6071, %v6084
        %v6091 = vadd.f32 %v6072, %v6084
        %v6092 = vadd.f32 %v6073, %v6084
        %v6093 = vadd.f32 %v6074, %v6084
        %v6094 = vadd.f32 %v6075, %v6084
        %v6095 = vadd.f32 %v6076, %v6084
        %v6096 = vadd.f32 %v6077, %v6084
        %v6097 = vadd.f32 %v6078, %v6084
        %6098 = vst.msk [vmem:[#allocation2] sm:$0xff] %vm1234, %v6086
        %6099 = vst.msk [vmem:[#allocation2 + $0x8] sm:$0xff] %vm1234, %v6087
        %6100 = vst.msk [vmem:[#allocation2 + $0x10] sm:$0xff] %vm1234, %v6088
        %6101 = vst.msk [vmem:[#allocation2 + $0x18] sm:$0xff] %vm1234, %v6089
        %6102 = vst.msk [vmem:[#allocation2 + $0x20] sm:$0xff] %vm1234, %v6090
        %6103 = vst.msk [vmem:[#allocation2 + $0x28] sm:$0xff] %vm1234, %v6091
        %6104 = vst.msk [vmem:[#allocation2 + $0x30] sm:$0xff] %vm1234, %v6092
        %6105 = vst.msk [vmem:[#allocation2 + $0x38] sm:$0xff] %vm1234, %v6093
        %6106 = vst.msk [vmem:[#allocation2 + $0x40] sm:$0xff] %vm1234, %v6094
        %6107 = vst.msk [vmem:[#allocation2 + $0x48] sm:$0xff] %vm1234, %v6095
        %6108 = vst.msk [vmem:[#allocation2 + $0x50] sm:$0xff] %vm1234, %v6096
        %6109 = vst.msk [vmem:[#allocation2 + $0x58] sm:$0xff] %vm1234, %v6097
        %p6110 = scmp.eq.s32.totalorder %s57, 7
        // Predicated region
        $region177: #{discriminator_forward.8} parent=95 // pred_check
          %p6111 = pneg %p6110
        $region178: #{discriminator_forward.8} parent=95 // pred_check_branch
          %6113 = sbr.rel (%p6111) target = $region180
        $region179: #{discriminator_forward.8} parent=95 // pred_region
          %6114 = vst.msk [vmem:[#allocation33] sm:$0xff] %vm1234, %v6086
          %6115 = vst.msk [vmem:[#allocation33 + $0x8] sm:$0xff] %vm1234, %v6087
          %6116 = vst.msk [vmem:[#allocation33 + $0x10] sm:$0xff] %vm1234, %v6088
          %6117 = vst.msk [vmem:[#allocation33 + $0x18] sm:$0xff] %vm1234, %v6089
          %6118 = vst.msk [vmem:[#allocation33 + $0x20] sm:$0xff] %vm1234, %v6090
          %6119 = vst.msk [vmem:[#allocation33 + $0x28] sm:$0xff] %vm1234, %v6091
          %6120 = vst.msk [vmem:[#allocation33 + $0x30] sm:$0xff] %vm1234, %v6092
          %6121 = vst.msk [vmem:[#allocation33 + $0x38] sm:$0xff] %vm1234, %v6093
          %6122 = vst.msk [vmem:[#allocation33 + $0x40] sm:$0xff] %vm1234, %v6094
          %6123 = vst.msk [vmem:[#allocation33 + $0x48] sm:$0xff] %vm1234, %v6095
          %6124 = vst.msk [vmem:[#allocation33 + $0x50] sm:$0xff] %vm1234, %v6096
          %6125 = vst.msk [vmem:[#allocation33 + $0x58] sm:$0xff] %vm1234, %v6097
        $region180: #{discriminator_forward.8} parent=95 // pred_fallthru
          _
        // Predicated region
        $region181: #{discriminator_forward.8} parent=95 // pred_check
          %p6126 = pneg %p549
        $region182: #{discriminator_forward.8} parent=95 // pred_check_branch
          %6128 = sbr.rel (%p6126) target = $region184
        $region183: #{discriminator_forward.8} parent=95 // pred_region
          %s6130 = ssub.s32 1536, 1536
          %6131 = vsyncadd [#allocation5], %s6130
          %s6132 = sshll.u32 [#allocation33], 4
          %s6133 = int_to_ptr.vmem [resolvable:$true] %s6132
          %6138 = dma.vmem_to_hbm [thread:$0]  %s6133, 1536, %s19, [#allocation5], 128, 128, 8
        $region184: #{discriminator_forward.8} parent=95 // pred_fallthru
          _
        // Predicated region
        $region185: #{discriminator_forward.8} parent=95 // pred_check
          %p6139 = pneg %p549
        $region186: #{discriminator_forward.8} parent=95 // pred_check_branch
          %6141 = sbr.rel (%p6139) target = $region188
        $region187: #{discriminator_forward.8} parent=95 // pred_region
          %6142 = dma.done [#allocation5], 1536
        $region188: #{discriminator_forward.8} parent=95 // pred_fallthru
          _
      $region96: #{discriminator_forward.8} parent=5 // pred_fallthru
        _
      %p6143 = scmp.le.s32.totalorder 2, %s52
      // Predicated region
      $region189: #{discriminator_forward.8} parent=5 // pred_check
        %p6144 = pneg %p6143
      $region190: #{discriminator_forward.8} parent=5 // pred_check_branch
        %6146 = sbr.rel (%p6144) target = $region192
      $region191: #{discriminator_forward.8} parent=5 // pred_region
        %s6147 = ssub.s32 %s52, 2
      $region192: #{discriminator_forward.8} parent=5 // pred_fallthru
        _
    $region6: #{discriminator_forward.8} parent=1 // loop_footer
      %s56 = sadd.s32 1, %s52
    $region7: #{discriminator_forward.8} parent=1 // loop_footer_branch
      %51 = sbr.rel target = $region3
    $region8: #{discriminator_forward.8} parent=1 // loop_exit
      _
    %6148 = vsyncpa [#allocation4], 1
    %s6149 = scalar_lea.sflag [#allocation4], 1
    %6150 = vsyncpa %s6149, 1
    %6151 = vsyncpa [#allocation7], 1
    %6152 = vsyncpa [#allocation10], 1
    %s6153 = scalar_lea.sflag [#allocation10], 1
    %6154 = vsyncpa %s6153, 1
    %6155 = vsyncpa [#allocation13], 1
    %s6156 = scalar_lea.sflag [#allocation13], 1
    %6157 = vsyncpa %s6156, 1
    %6158 = vsyncpa [#allocation16], 1
    %s6159 = scalar_lea.sflag [#allocation16], 1
    %6160 = vsyncpa %s6159, 1
    %6161 = vsyncpa [#allocation19], 1
    %s6162 = scalar_lea.sflag [#allocation19], 1
    %6163 = vsyncpa %s6162, 1
    %6164 = vsyncpa [#allocation22], 1
    %s6165 = scalar_lea.sflag [#allocation22], 1
    %6166 = vsyncpa %s6165, 1
    %6167 = vsyncpa [#allocation25], 1
    %s6168 = scalar_lea.sflag [#allocation25], 1
    %6169 = vsyncpa %s6168, 1
    %6170 = vsyncpa [#allocation28], 1
    %s6171 = scalar_lea.sflag [#allocation28], 1
    %6172 = vsyncpa %s6171, 1
    %6173 = vsyncpa [#allocation31], 1
    %s6174 = scalar_lea.sflag [#allocation31], 1
    %6175 = vsyncpa %s6174, 1
    %6176 = vsyncpa [#allocation5], 1
    %s6177 = scalar_lea.sflag [#allocation5], 1
    %6178 = vsyncpa %s6177, 1

// kernel: discriminator_forward.9
$region0: #{discriminator_forward.9}
  #allocation0 [shape = 'u32[]', space=smem, size = 0x4, offset = 0x4, fixed_abs, tag = 'smem constant byte address 0x4 - core index']
  #allocation1 [shape = 'u32[144,128]{1,0:T(1,128)}', space=vmem, size = 0x12000, scoped, tag = 'internal scratch']
  #allocation2 [shape = 'f32[128,128]{1,0:T(8,128)}', space=vmem, size = 0x10000, scoped, tag = 'scratch operand']
  %s0 = inlined_call_operand.hbm [shape: bf16[128,816], index: 0, kind: input, shape index: {}]
  %s1 = inlined_call_operand.hbm [shape: bf16[816,128], index: 1, kind: input, shape index: {}]
  %s2 = inlined_call_operand.hbm [shape: f32[128,128], index: 2, kind: output, shape index: {0}]
  %s3 = inlined_call_operand.hbm [shape: f32[1,128], index: 3, kind: output, shape index: {1}]
  %s4 = inlined_call_operand.hbm [shape: f32[1,128], index: 4, kind: output, shape index: {2}]
  %5 = xla_tuple %s2, %s3, %s4
  %s6 = sld [smem:[#allocation0]]
  $region54: #{discriminator_forward.9} parent=0
    _
  %s8 = ssub.s32 1, %s6
  %s9 = scalar_select 0, %s8, %s6
  $region1: #{discriminator_forward.9} parent=0
    #allocation3 [shape = 'u8[229376]{0}', space=vmem, size = 0x38000, scoped, tag = 'input window, operand 0, single buffered']
    #allocation4 [shape = 's32[1]{0}', space=sflag, size = 0x4, scoped, tag = 'scoped memory for discriminator_forward.9']
    #allocation5 [shape = 's32[1]{0}', space=sflag, size = 0x4, scoped, tag = 'scoped memory for discriminator_forward.9']
    #allocation6 [shape = 'u8[208896]{0}', space=vmem, size = 0x33000, scoped, tag = 'input window, operand 1, single buffered']
    #allocation7 [shape = 's32[1]{0}', space=sflag, size = 0x4, scoped, tag = 'scoped memory for discriminator_forward.9']
    #allocation8 [shape = 'u8[65536]{0}', space=vmem, size = 0x10000, scoped, tag = 'output window, operand 0, single buffered']
    #allocation9 [shape = 'u8[512]{0}', space=vmem, size = 0x400, scoped, tag = 'output window, operand 1, single buffered']
    #allocation10 [shape = 's32[1]{0}', space=sflag, size = 0x4, scoped, tag = 'scoped memory for discriminator_forward.9']
    #allocation11 [shape = 'u8[512]{0}', space=vmem, size = 0x400, scoped, tag = 'output window, operand 2, single buffered']
    %10 = vsyncpa [#allocation4], 0
    %11 = vsyncpa [#allocation7], 0
    %12 = vsyncpa [#allocation5], 0
    %13 = vsyncpa [#allocation10], 0
    // Predicated region
    $region2: #{discriminator_forward.9} parent=1 // pred_check
      _
    $region3: #{discriminator_forward.9} parent=1 // pred_check_branch
      %15 = sbr.rel (0) target = $region5
    $region4: #{discriminator_forward.9} parent=1 // pred_region
      %s17 = ssub.s32 7168, 7168
      %18 = vsyncadd [#allocation4], %s17
      %s19 = sshll.u32 [#allocation3], 4
      %s20 = int_to_ptr.vmem [resolvable:$true] %s19
      %25 = dma.hbm_to_vmem [thread:$0]  %s0, 7168, %s20, [#allocation4], 448, 448, 28
    $region5: #{discriminator_forward.9} parent=1 // pred_fallthru
      _
    // Predicated region
    $region6: #{discriminator_forward.9} parent=1 // pred_check
      _
    $region7: #{discriminator_forward.9} parent=1 // pred_check_branch
      %27 = sbr.rel (0) target = $region9
    $region8: #{discriminator_forward.9} parent=1 // pred_region
      %s29 = ssub.s32 6528, 6528
      %30 = vsyncadd [#allocation7], %s29
      %s31 = sshll.u32 [#allocation6], 4
      %s32 = int_to_ptr.vmem [resolvable:$true] %s31
      %37 = dma.hbm_to_vmem [thread:$0]  %s1, 6528, %s32, [#allocation7], 64, 64, 4
    $region9: #{discriminator_forward.9} parent=1 // pred_fallthru
      _
    // Predicated region
    $region10: #{discriminator_forward.9} parent=1 // pred_check
      _
    $region11: #{discriminator_forward.9} parent=1 // pred_check_branch
      %39 = sbr.rel (0) target = $region13
    $region12: #{discriminator_forward.9} parent=1 // pred_region
      %40 = dma.done [#allocation4], 7168
    $region13: #{discriminator_forward.9} parent=1 // pred_fallthru
      _
    // Predicated region
    $region14: #{discriminator_forward.9} parent=1 // pred_check
      _
    $region15: #{discriminator_forward.9} parent=1 // pred_check_branch
      %42 = sbr.rel (0) target = $region17
    $region16: #{discriminator_forward.9} parent=1 // pred_region
      %43 = dma.done [#allocation7], 6528
    $region17: #{discriminator_forward.9} parent=1 // pred_fallthru
      _
    %p45 = scmp.eq.s32.totalorder 0, 0
    // Predicated region
    $region18: #{discriminator_forward.9} parent=1 // pred_check
      %p46 = pneg %p45
    $region19: #{discriminator_forward.9} parent=1 // pred_check_branch
      %48 = sbr.rel (%p46) target = $region21
    $region20: #{discriminator_forward.9} parent=1 // pred_region
      %49 = vst [vmem:[#allocation2] sm:$0xff] 0.0
      %50 = vst [vmem:[#allocation2 + $0x8] sm:$0xff] 0.0
      %51 = vst [vmem:[#allocation2 + $0x10] sm:$0xff] 0.0
      %52 = vst [vmem:[#allocation2 + $0x18] sm:$0xff] 0.0
      %53 = vst [vmem:[#allocation2 + $0x20] sm:$0xff] 0.0
      %54 = vst [vmem:[#allocation2 + $0x28] sm:$0xff] 0.0
      %55 = vst [vmem:[#allocation2 + $0x30] sm:$0xff] 0.0
      %56 = vst [vmem:[#allocation2 + $0x38] sm:$0xff] 0.0
      %57 = vst [vmem:[#allocation2 + $0x40] sm:$0xff] 0.0
      %58 = vst [vmem:[#allocation2 + $0x48] sm:$0xff] 0.0
      %59 = vst [vmem:[#allocation2 + $0x50] sm:$0xff] 0.0
      %60 = vst [vmem:[#allocation2 + $0x58] sm:$0xff] 0.0
      %61 = vst [vmem:[#allocation2 + $0x60] sm:$0xff] 0.0
      %62 = vst [vmem:[#allocation2 + $0x68] sm:$0xff] 0.0
      %63 = vst [vmem:[#allocation2 + $0x70] sm:$0xff] 0.0
      %64 = vst [vmem:[#allocation2 + $0x78] sm:$0xff] 0.0
    $region21: #{discriminator_forward.9} parent=1 // pred_fallthru
      _
    %p65 = scmp.eq.s32.totalorder 0, 0
    %p66 = pnand %p65, %p45
    %p67 = pneg %p66
    // Predicated region
    $region22: #{discriminator_forward.9} parent=1 // pred_check
      _
    $region23: #{discriminator_forward.9} parent=1 // pred_check_branch
      %69 = sbr.rel (%p66) target = $region25
    $region24: #{discriminator_forward.9} parent=1 // pred_region
      %70 = vst [vmem:[#allocation9] sm:$0x1] 0.0
      %71 = vst [vmem:[#allocation11] sm:$0x1] 0.0
    $region25: #{discriminator_forward.9} parent=1 // pred_fallthru
      _
    %v72 = vld [vmem:[#allocation2] sm:$0xff]
    %v73 = vld [vmem:[#allocation2 + $0x8] sm:$0xff]
    %v74 = vld [vmem:[#allocation2 + $0x10] sm:$0xff]
    %v75 = vld [vmem:[#allocation2 + $0x18] sm:$0xff]
    %v76 = vld [vmem:[#allocation2 + $0x20] sm:$0xff]
    %v77 = vld [vmem:[#allocation2 + $0x28] sm:$0xff]
    %v78 = vld [vmem:[#allocation2 + $0x30] sm:$0xff]
    %v79 = vld [vmem:[#allocation2 + $0x38] sm:$0xff]
    %v80 = vld [vmem:[#allocation2 + $0x40] sm:$0xff]
    %v81 = vld [vmem:[#allocation2 + $0x48] sm:$0xff]
    %v82 = vld [vmem:[#allocation2 + $0x50] sm:$0xff]
    %v83 = vld [vmem:[#allocation2 + $0x58] sm:$0xff]
    %v84 = vld [vmem:[#allocation2 + $0x60] sm:$0xff]
    %v85 = vld [vmem:[#allocation2 + $0x68] sm:$0xff]
    %v86 = vld [vmem:[#allocation2 + $0x70] sm:$0xff]
    %v87 = vld [vmem:[#allocation2 + $0x78] sm:$0xff]
    %v88 = vld [vmem:[#allocation3] sm:$0xff]
    %v89 = vld [vmem:[#allocation3 + $0x8] sm:$0xff]
    %v90 = vld [vmem:[#allocation3 + $0x10] sm:$0xff]
    %v91 = vld [vmem:[#allocation3 + $0x18] sm:$0xf]
    %v92 = vld [vmem:[#allocation3 + $0x1c] sm:$0xff]
    %v93 = vld [vmem:[#allocation3 + $0x24] sm:$0xff]
    %v94 = vld [vmem:[#allocation3 + $0x2c] sm:$0xff]
    %v95 = vld [vmem:[#allocation3 + $0x34] sm:$0xf]
    %v96 = vld [vmem:[#allocation3 + $0x38] sm:$0xff]
    %v97 = vld [vmem:[#allocation3 + $0x40] sm:$0xff]
    %v98 = vld [vmem:[#allocation3 + $0x48] sm:$0xff]
    %v99 = vld [vmem:[#allocation3 + $0x50] sm:$0xf]
    %v100 = vld [vmem:[#allocation3 + $0x54] sm:$0xff]
    %v101 = vld [vmem:[#allocation3 + $0x5c] sm:$0xff]
    %v102 = vld [vmem:[#allocation3 + $0x64] sm:$0xff]
    %v103 = vld [vmem:[#allocation3 + $0x6c] sm:$0xf]
    %v104 = vld [vmem:[#allocation3 + $0x70] sm:$0xff]
    %v105 = vld [vmem:[#allocation3 + $0x78] sm:$0xff]
    %v106 = vld [vmem:[#allocation3 + $0x80] sm:$0xff]
    %v107 = vld [vmem:[#allocation3 + $0x88] sm:$0xf]
    %v108 = vld [vmem:[#allocation3 + $0x8c] sm:$0xff]
    %v109 = vld [vmem:[#allocation3 + $0x94] sm:$0xff]
    %v110 = vld [vmem:[#allocation3 + $0x9c] sm:$0xff]
    %v111 = vld [vmem:[#allocation3 + $0xa4] sm:$0xf]
    %v112 = vld [vmem:[#allocation3 + $0xa8] sm:$0xff]
    %v113 = vld [vmem:[#allocation3 + $0xb0] sm:$0xff]
    %v114 = vld [vmem:[#allocation3 + $0xb8] sm:$0xff]
    %v115 = vld [vmem:[#allocation3 + $0xc0] sm:$0xf]
    %v116 = vld [vmem:[#allocation3 + $0xc4] sm:$0xff]
    %v117 = vld [vmem:[#allocation3 + $0xcc] sm:$0xff]
    %v118 = vld [vmem:[#allocation3 + $0xd4] sm:$0xff]
    %v119 = vld [vmem:[#allocation3 + $0xdc] sm:$0xf]
    %v120 = vld [vmem:[#allocation3 + $0xe0] sm:$0xff]
    %v121 = vld [vmem:[#allocation3 + $0xe8] sm:$0xff]
    %v122 = vld [vmem:[#allocation3 + $0xf0] sm:$0xff]
    %v123 = vld [vmem:[#allocation3 + $0xf8] sm:$0xf]
    %v124 = vld [vmem:[#allocation3 + $0xfc] sm:$0xff]
    %v125 = vld [vmem:[#allocation3 + $0x104] sm:$0xff]
    %v126 = vld [vmem:[#allocation3 + $0x10c] sm:$0xff]
    %v127 = vld [vmem:[#allocation3 + $0x114] sm:$0xf]
    %v128 = vld [vmem:[#allocation3 + $0x118] sm:$0xff]
    %v129 = vld [vmem:[#allocation3 + $0x120] sm:$0xff]
    %v130 = vld [vmem:[#allocation3 + $0x128] sm:$0xff]
    %v131 = vld [vmem:[#allocation3 + $0x130] sm:$0xf]
    %v132 = vld [vmem:[#allocation3 + $0x134] sm:$0xff]
    %v133 = vld [vmem:[#allocation3 + $0x13c] sm:$0xff]
    %v134 = vld [vmem:[#allocation3 + $0x144] sm:$0xff]
    %v135 = vld [vmem:[#allocation3 + $0x14c] sm:$0xf]
    %v136 = vld [vmem:[#allocation3 + $0x150] sm:$0xff]
    %v137 = vld [vmem:[#allocation3 + $0x158] sm:$0xff]
    %v138 = vld [vmem:[#allocation3 + $0x160] sm:$0xff]
    %v139 = vld [vmem:[#allocation3 + $0x168] sm:$0xf]
    %v140 = vld [vmem:[#allocation3 + $0x16c] sm:$0xff]
    %v141 = vld [vmem:[#allocation3 + $0x174] sm:$0xff]
    %v142 = vld [vmem:[#allocation3 + $0x17c] sm:$0xff]
    %v143 = vld [vmem:[#allocation3 + $0x184] sm:$0xf]
    %v144 = vld [vmem:[#allocation3 + $0x188] sm:$0xff]
    %v145 = vld [vmem:[#allocation3 + $0x190] sm:$0xff]
    %v146 = vld [vmem:[#allocation3 + $0x198] sm:$0xff]
    %v147 = vld [vmem:[#allocation3 + $0x1a0] sm:$0xf]
    %v148 = vld [vmem:[#allocation3 + $0x1a4] sm:$0xff]
    %v149 = vld [vmem:[#allocation3 + $0x1ac] sm:$0xff]
    %v150 = vld [vmem:[#allocation3 + $0x1b4] sm:$0xff]
    %v151 = vld [vmem:[#allocation3 + $0x1bc] sm:$0xf]
    %v152 = vld [vmem:[#allocation6] sm:$0xf]
    %v153 = vld [vmem:[#allocation6 + $0x4] sm:$0xf]
    %v154 = vld [vmem:[#allocation6 + $0x8] sm:$0xf]
    %v155 = vld [vmem:[#allocation6 + $0xc] sm:$0xf]
    %v156 = vld [vmem:[#allocation6 + $0x10] sm:$0xf]
    %v157 = vld [vmem:[#allocation6 + $0x14] sm:$0xf]
    %v158 = vld [vmem:[#allocation6 + $0x18] sm:$0xf]
    %v159 = vld [vmem:[#allocation6 + $0x1c] sm:$0xf]
    %v160 = vld [vmem:[#allocation6 + $0x20] sm:$0xf]
    %v161 = vld [vmem:[#allocation6 + $0x24] sm:$0xf]
    %v162 = vld [vmem:[#allocation6 + $0x28] sm:$0xf]
    %v163 = vld [vmem:[#allocation6 + $0x2c] sm:$0xf]
    %v164 = vld [vmem:[#allocation6 + $0x30] sm:$0xf]
    %v165 = vld [vmem:[#allocation6 + $0x34] sm:$0xf]
    %v166 = vld [vmem:[#allocation6 + $0x38] sm:$0xf]
    %v167 = vld [vmem:[#allocation6 + $0x3c] sm:$0xf]
    %v168 = vld [vmem:[#allocation6 + $0x40] sm:$0xf]
    %v169 = vld [vmem:[#allocation6 + $0x44] sm:$0xf]
    %v170 = vld [vmem:[#allocation6 + $0x48] sm:$0xf]
    %v171 = vld [vmem:[#allocation6 + $0x4c] sm:$0xf]
    %v172 = vld [vmem:[#allocation6 + $0x50] sm:$0xf]
    %v173 = vld [vmem:[#allocation6 + $0x54] sm:$0xf]
    %v174 = vld [vmem:[#allocation6 + $0x58] sm:$0xf]
    %v175 = vld [vmem:[#allocation6 + $0x5c] sm:$0xf]
    %v176 = vld [vmem:[#allocation6 + $0x60] sm:$0xf]
    %v177 = vld [vmem:[#allocation6 + $0x64] sm:$0xf]
    %v178 = vld [vmem:[#allocation6 + $0x68] sm:$0xf]
    %v179 = vld [vmem:[#allocation6 + $0x6c] sm:$0xf]
    %v180 = vld [vmem:[#allocation6 + $0x70] sm:$0xf]
    %v181 = vld [vmem:[#allocation6 + $0x74] sm:$0xf]
    %v182 = vld [vmem:[#allocation6 + $0x78] sm:$0xf]
    %v183 = vld [vmem:[#allocation6 + $0x7c] sm:$0xf]
    %v184 = vld [vmem:[#allocation6 + $0x80] sm:$0xf]
    %v185 = vld [vmem:[#allocation6 + $0x84] sm:$0xf]
    %v186 = vld [vmem:[#allocation6 + $0x88] sm:$0xf]
    %v187 = vld [vmem:[#allocation6 + $0x8c] sm:$0xf]
    %v188 = vld [vmem:[#allocation6 + $0x90] sm:$0xf]
    %v189 = vld [vmem:[#allocation6 + $0x94] sm:$0xf]
    %v190 = vld [vmem:[#allocation6 + $0x98] sm:$0xf]
    %v191 = vld [vmem:[#allocation6 + $0x9c] sm:$0xf]
    %v192 = vld [vmem:[#allocation6 + $0xa0] sm:$0xf]
    %v193 = vld [vmem:[#allocation6 + $0xa4] sm:$0xf]
    %v194 = vld [vmem:[#allocation6 + $0xa8] sm:$0xf]
    %v195 = vld [vmem:[#allocation6 + $0xac] sm:$0xf]
    %v196 = vld [vmem:[#allocation6 + $0xb0] sm:$0xf]
    %v197 = vld [vmem:[#allocation6 + $0xb4] sm:$0xf]
    %v198 = vld [vmem:[#allocation6 + $0xb8] sm:$0xf]
    %v199 = vld [vmem:[#allocation6 + $0xbc] sm:$0xf]
    %v200 = vld [vmem:[#allocation6 + $0xc0] sm:$0xf]
    %v201 = vld [vmem:[#allocation6 + $0xc4] sm:$0xf]
    %v202 = vld [vmem:[#allocation6 + $0xc8] sm:$0xf]
    %v203 = vld [vmem:[#allocation6 + $0xcc] sm:$0xf]
    %v204 = vld [vmem:[#allocation6 + $0xd0] sm:$0xf]
    %v205 = vld [vmem:[#allocation6 + $0xd4] sm:$0xf]
    %v206 = vld [vmem:[#allocation6 + $0xd8] sm:$0xf]
    %v207 = vld [vmem:[#allocation6 + $0xdc] sm:$0xf]
    %v208 = vld [vmem:[#allocation6 + $0xe0] sm:$0xf]
    %v209 = vld [vmem:[#allocation6 + $0xe4] sm:$0xf]
    %v210 = vld [vmem:[#allocation6 + $0xe8] sm:$0xf]
    %v211 = vld [vmem:[#allocation6 + $0xec] sm:$0xf]
    %v212 = vld [vmem:[#allocation6 + $0xf0] sm:$0xf]
    %v213 = vld [vmem:[#allocation6 + $0xf4] sm:$0xf]
    %v214 = vld [vmem:[#allocation6 + $0xf8] sm:$0xf]
    %v215 = vld [vmem:[#allocation6 + $0xfc] sm:$0xf]
    %v216 = vld [vmem:[#allocation6 + $0x100] sm:$0xf]
    %v217 = vld [vmem:[#allocation6 + $0x104] sm:$0xf]
    %v218 = vld [vmem:[#allocation6 + $0x108] sm:$0xf]
    %v219 = vld [vmem:[#allocation6 + $0x10c] sm:$0xf]
    %v220 = vld [vmem:[#allocation6 + $0x110] sm:$0xf]
    %v221 = vld [vmem:[#allocation6 + $0x114] sm:$0xf]
    %v222 = vld [vmem:[#allocation6 + $0x118] sm:$0xf]
    %v223 = vld [vmem:[#allocation6 + $0x11c] sm:$0xf]
    %v224 = vld [vmem:[#allocation6 + $0x120] sm:$0xf]
    %v225 = vld [vmem:[#allocation6 + $0x124] sm:$0xf]
    %v226 = vld [vmem:[#allocation6 + $0x128] sm:$0xf]
    %v227 = vld [vmem:[#allocation6 + $0x12c] sm:$0xf]
    %v228 = vld [vmem:[#allocation6 + $0x130] sm:$0xf]
    %v229 = vld [vmem:[#allocation6 + $0x134] sm:$0xf]
    %v230 = vld [vmem:[#allocation6 + $0x138] sm:$0xf]
    %v231 = vld [vmem:[#allocation6 + $0x13c] sm:$0xf]
    %v232 = vld [vmem:[#allocation6 + $0x140] sm:$0xf]
    %v233 = vld [vmem:[#allocation6 + $0x144] sm:$0xf]
    %v234 = vld [vmem:[#allocation6 + $0x148] sm:$0xf]
    %v235 = vld [vmem:[#allocation6 + $0x14c] sm:$0xf]
    %v236 = vld [vmem:[#allocation6 + $0x150] sm:$0xf]
    %v237 = vld [vmem:[#allocation6 + $0x154] sm:$0xf]
    %v238 = vld [vmem:[#allocation6 + $0x158] sm:$0xf]
    %v239 = vld [vmem:[#allocation6 + $0x15c] sm:$0xf]
    %v240 = vld [vmem:[#allocation6 + $0x160] sm:$0xf]
    %v241 = vld [vmem:[#allocation6 + $0x164] sm:$0xf]
    %v242 = vld [vmem:[#allocation6 + $0x168] sm:$0xf]
    %v243 = vld [vmem:[#allocation6 + $0x16c] sm:$0xf]
    %v244 = vld [vmem:[#allocation6 + $0x170] sm:$0xf]
    %v245 = vld [vmem:[#allocation6 + $0x174] sm:$0xf]
    %v246 = vld [vmem:[#allocation6 + $0x178] sm:$0xf]
    %v247 = vld [vmem:[#allocation6 + $0x17c] sm:$0xf]
    %v248 = vld [vmem:[#allocation6 + $0x180] sm:$0xf]
    %v249 = vld [vmem:[#allocation6 + $0x184] sm:$0xf]
    %v250 = vld [vmem:[#allocation6 + $0x188] sm:$0xf]
    %v251 = vld [vmem:[#allocation6 + $0x18c] sm:$0xf]
    %v252 = vld [vmem:[#allocation6 + $0x190] sm:$0xf]
    %v253 = vld [vmem:[#allocation6 + $0x194] sm:$0xf]
    %v318 = vunpack.c.l.b16 %v88
    %v319 = vunpack.c.h.b16 %v88
    %v320 = vunpack.c.l.b16 %v89
    %v321 = vunpack.c.h.b16 %v89
    %v322 = vunpack.c.l.b16 %v90
    %v323 = vunpack.c.h.b16 %v90
    %v324 = vunpack.c.l.b16 %v91
    %v325 = vunpack.c.l.b16 %v92
    %v326 = vunpack.c.h.b16 %v92
    %v327 = vunpack.c.l.b16 %v93
    %v328 = vunpack.c.h.b16 %v93
    %v329 = vunpack.c.l.b16 %v94
    %v330 = vunpack.c.h.b16 %v94
    %v331 = vunpack.c.l.b16 %v95
    %v332 = vunpack.c.l.b16 %v96
    %v333 = vunpack.c.h.b16 %v96
    %v334 = vunpack.c.l.b16 %v97
    %v335 = vunpack.c.h.b16 %v97
    %v336 = vunpack.c.l.b16 %v98
    %v337 = vunpack.c.h.b16 %v98
    %v338 = vunpack.c.l.b16 %v99
    %v339 = vunpack.c.l.b16 %v100
    %v340 = vunpack.c.h.b16 %v100
    %v341 = vunpack.c.l.b16 %v101
    %v342 = vunpack.c.h.b16 %v101
    %v343 = vunpack.c.l.b16 %v102
    %v344 = vunpack.c.h.b16 %v102
    %v345 = vunpack.c.l.b16 %v103
    %v346 = vunpack.c.l.b16 %v104
    %v347 = vunpack.c.h.b16 %v104
    %v348 = vunpack.c.l.b16 %v105
    %v349 = vunpack.c.h.b16 %v105
    %v350 = vunpack.c.l.b16 %v106
    %v351 = vunpack.c.h.b16 %v106
    %v352 = vunpack.c.l.b16 %v107
    %v353 = vunpack.c.l.b16 %v108
    %v354 = vunpack.c.h.b16 %v108
    %v355 = vunpack.c.l.b16 %v109
    %v356 = vunpack.c.h.b16 %v109
    %v357 = vunpack.c.l.b16 %v110
    %v358 = vunpack.c.h.b16 %v110
    %v359 = vunpack.c.l.b16 %v111
    %v360 = vunpack.c.l.b16 %v112
    %v361 = vunpack.c.h.b16 %v112
    %v362 = vunpack.c.l.b16 %v113
    %v363 = vunpack.c.h.b16 %v113
    %v364 = vunpack.c.l.b16 %v114
    %v365 = vunpack.c.h.b16 %v114
    %v366 = vunpack.c.l.b16 %v115
    %v367 = vunpack.c.l.b16 %v116
    %v368 = vunpack.c.h.b16 %v116
    %v369 = vunpack.c.l.b16 %v117
    %v370 = vunpack.c.h.b16 %v117
    %v371 = vunpack.c.l.b16 %v118
    %v372 = vunpack.c.h.b16 %v118
    %v373 = vunpack.c.l.b16 %v119
    %v374 = vunpack.c.l.b16 %v120
    %v375 = vunpack.c.h.b16 %v120
    %v376 = vunpack.c.l.b16 %v121
    %v377 = vunpack.c.h.b16 %v121
    %v378 = vunpack.c.l.b16 %v122
    %v379 = vunpack.c.h.b16 %v122
    %v380 = vunpack.c.l.b16 %v123
    %v381 = vunpack.c.l.b16 %v124
    %v382 = vunpack.c.h.b16 %v124
    %v383 = vunpack.c.l.b16 %v125
    %v384 = vunpack.c.h.b16 %v125
    %v385 = vunpack.c.l.b16 %v126
    %v386 = vunpack.c.h.b16 %v126
    %v387 = vunpack.c.l.b16 %v127
    %v388 = vunpack.c.l.b16 %v128
    %v389 = vunpack.c.h.b16 %v128
    %v390 = vunpack.c.l.b16 %v129
    %v391 = vunpack.c.h.b16 %v129
    %v392 = vunpack.c.l.b16 %v130
    %v393 = vunpack.c.h.b16 %v130
    %v394 = vunpack.c.l.b16 %v131
    %v395 = vunpack.c.l.b16 %v132
    %v396 = vunpack.c.h.b16 %v132
    %v397 = vunpack.c.l.b16 %v133
    %v398 = vunpack.c.h.b16 %v133
    %v399 = vunpack.c.l.b16 %v134
    %v400 = vunpack.c.h.b16 %v134
    %v401 = vunpack.c.l.b16 %v135
    %v402 = vunpack.c.l.b16 %v136
    %v403 = vunpack.c.h.b16 %v136
    %v404 = vunpack.c.l.b16 %v137
    %v405 = vunpack.c.h.b16 %v137
    %v406 = vunpack.c.l.b16 %v138
    %v407 = vunpack.c.h.b16 %v138
    %v408 = vunpack.c.l.b16 %v139
    %v409 = vunpack.c.l.b16 %v140
    %v410 = vunpack.c.h.b16 %v140
    %v411 = vunpack.c.l.b16 %v141
    %v412 = vunpack.c.h.b16 %v141
    %v413 = vunpack.c.l.b16 %v142
    %v414 = vunpack.c.h.b16 %v142
    %v415 = vunpack.c.l.b16 %v143
    %v416 = vunpack.c.l.b16 %v144
    %v417 = vunpack.c.h.b16 %v144
    %v418 = vunpack.c.l.b16 %v145
    %v419 = vunpack.c.h.b16 %v145
    %v420 = vunpack.c.l.b16 %v146
    %v421 = vunpack.c.h.b16 %v146
    %v422 = vunpack.c.l.b16 %v147
    %v423 = vunpack.c.l.b16 %v148
    %v424 = vunpack.c.h.b16 %v148
    %v425 = vunpack.c.l.b16 %v149
    %v426 = vunpack.c.h.b16 %v149
    %v427 = vunpack.c.l.b16 %v150
    %v428 = vunpack.c.h.b16 %v150
    %v429 = vunpack.c.l.b16 %v151
    %v430 = vpack.c.b16 %v325, %v318
    %v431 = vpack.c.b16 %v326, %v319
    %v432 = vpack.c.b16 %v327, %v320
    %v433 = vpack.c.b16 %v328, %v321
    %v434 = vpack.c.b16 %v329, %v322
    %v435 = vpack.c.b16 %v330, %v323
    %v436 = vpack.c.b16 %v331, %v324
    %v437 = vpack.c.b16 %v339, %v332
    %v438 = vpack.c.b16 %v340, %v333
    %v439 = vpack.c.b16 %v341, %v334
    %v440 = vpack.c.b16 %v342, %v335
    %v441 = vpack.c.b16 %v343, %v336
    %v442 = vpack.c.b16 %v344, %v337
    %v443 = vpack.c.b16 %v345, %v338
    %v444 = vpack.c.b16 %v353, %v346
    %v445 = vpack.c.b16 %v354, %v347
    %v446 = vpack.c.b16 %v355, %v348
    %v447 = vpack.c.b16 %v356, %v349
    %v448 = vpack.c.b16 %v357, %v350
    %v449 = vpack.c.b16 %v358, %v351
    %v450 = vpack.c.b16 %v359, %v352
    %v451 = vpack.c.b16 %v367, %v360
    %v452 = vpack.c.b16 %v368, %v361
    %v453 = vpack.c.b16 %v369, %v362
    %v454 = vpack.c.b16 %v370, %v363
    %v455 = vpack.c.b16 %v371, %v364
    %v456 = vpack.c.b16 %v372, %v365
    %v457 = vpack.c.b16 %v373, %v366
    %v458 = vpack.c.b16 %v381, %v374
    %v459 = vpack.c.b16 %v382, %v375
    %v460 = vpack.c.b16 %v383, %v376
    %v461 = vpack.c.b16 %v384, %v377
    %v462 = vpack.c.b16 %v385, %v378
    %v463 = vpack.c.b16 %v386, %v379
    %v464 = vpack.c.b16 %v387, %v380
    %v465 = vpack.c.b16 %v395, %v388
    %v466 = vpack.c.b16 %v396, %v389
    %v467 = vpack.c.b16 %v397, %v390
    %v468 = vpack.c.b16 %v398, %v391
    %v469 = vpack.c.b16 %v399, %v392
    %v470 = vpack.c.b16 %v400, %v393
    %v471 = vpack.c.b16 %v401, %v394
    %v472 = vpack.c.b16 %v409, %v402
    %v473 = vpack.c.b16 %v410, %v403
    %v474 = vpack.c.b16 %v411, %v404
    %v475 = vpack.c.b16 %v412, %v405
    %v476 = vpack.c.b16 %v413, %v406
    %v477 = vpack.c.b16 %v414, %v407
    %v478 = vpack.c.b16 %v415, %v408
    %v479 = vpack.c.b16 %v423, %v416
    %v480 = vpack.c.b16 %v424, %v417
    %v481 = vpack.c.b16 %v425, %v418
    %v482 = vpack.c.b16 %v426, %v419
    %v483 = vpack.c.b16 %v427, %v420
    %v484 = vpack.c.b16 %v428, %v421
    %v485 = vpack.c.b16 %v429, %v422
    %v636 = vunpack.c.l.b16 %v152
    %v637 = vunpack.c.l.b16 %v153
    %v638 = vunpack.c.l.b16 %v154
    %v639 = vunpack.c.l.b16 %v155
    %v640 = vunpack.c.l.b16 %v156
    %v641 = vunpack.c.l.b16 %v157
    %v642 = vunpack.c.l.b16 %v158
    %v643 = vunpack.c.l.b16 %v159
    %v644 = vunpack.c.l.b16 %v160
    %v645 = vunpack.c.l.b16 %v161
    %v646 = vunpack.c.l.b16 %v162
    %v647 = vunpack.c.l.b16 %v163
    %v648 = vunpack.c.l.b16 %v164
    %v649 = vunpack.c.l.b16 %v165
    %v650 = vunpack.c.l.b16 %v166
    %v651 = vunpack.c.l.b16 %v167
    %v652 = vunpack.c.l.b16 %v168
    %v653 = vunpack.c.l.b16 %v169
    %v654 = vunpack.c.l.b16 %v170
    %v655 = vunpack.c.l.b16 %v171
    %v656 = vunpack.c.l.b16 %v172
    %v657 = vunpack.c.l.b16 %v173
    %v658 = vunpack.c.l.b16 %v174
    %v659 = vunpack.c.l.b16 %v175
    %v660 = vunpack.c.l.b16 %v176
    %v661 = vunpack.c.l.b16 %v177
    %v662 = vunpack.c.l.b16 %v178
    %v663 = vunpack.c.l.b16 %v179
    %v664 = vunpack.c.l.b16 %v180
    %v665 = vunpack.c.l.b16 %v181
    %v666 = vunpack.c.l.b16 %v182
    %v667 = vunpack.c.l.b16 %v183
    %v668 = vunpack.c.l.b16 %v184
    %v669 = vunpack.c.l.b16 %v185
    %v670 = vunpack.c.l.b16 %v186
    %v671 = vunpack.c.l.b16 %v187
    %v672 = vunpack.c.l.b16 %v188
    %v673 = vunpack.c.l.b16 %v189
    %v674 = vunpack.c.l.b16 %v190
    %v675 = vunpack.c.l.b16 %v191
    %v676 = vunpack.c.l.b16 %v192
    %v677 = vunpack.c.l.b16 %v193
    %v678 = vunpack.c.l.b16 %v194
    %v679 = vunpack.c.l.b16 %v195
    %v680 = vunpack.c.l.b16 %v196
    %v681 = vunpack.c.l.b16 %v197
    %v682 = vunpack.c.l.b16 %v198
    %v683 = vunpack.c.l.b16 %v199
    %v684 = vunpack.c.l.b16 %v200
    %v685 = vunpack.c.l.b16 %v201
    %v686 = vunpack.c.l.b16 %v202
    %v687 = vunpack.c.l.b16 %v203
    %v688 = vunpack.c.l.b16 %v204
    %v689 = vunpack.c.l.b16 %v205
    %v690 = vunpack.c.l.b16 %v206
    %v691 = vunpack.c.l.b16 %v207
    %v692 = vunpack.c.l.b16 %v208
    %v693 = vunpack.c.l.b16 %v209
    %v694 = vunpack.c.l.b16 %v210
    %v695 = vunpack.c.l.b16 %v211
    %v696 = vunpack.c.l.b16 %v212
    %v697 = vunpack.c.l.b16 %v213
    %v698 = vunpack.c.l.b16 %v214
    %v699 = vunpack.c.l.b16 %v215
    %v700 = vunpack.c.l.b16 %v216
    %v701 = vunpack.c.l.b16 %v217
    %v702 = vunpack.c.l.b16 %v218
    %v703 = vunpack.c.l.b16 %v219
    %v704 = vunpack.c.l.b16 %v220
    %v705 = vunpack.c.l.b16 %v221
    %v706 = vunpack.c.l.b16 %v222
    %v707 = vunpack.c.l.b16 %v223
    %v708 = vunpack.c.l.b16 %v224
    %v709 = vunpack.c.l.b16 %v225
    %v710 = vunpack.c.l.b16 %v226
    %v711 = vunpack.c.l.b16 %v227
    %v712 = vunpack.c.l.b16 %v228
    %v713 = vunpack.c.l.b16 %v229
    %v714 = vunpack.c.l.b16 %v230
    %v715 = vunpack.c.l.b16 %v231
    %v716 = vunpack.c.l.b16 %v232
    %v717 = vunpack.c.l.b16 %v233
    %v718 = vunpack.c.l.b16 %v234
    %v719 = vunpack.c.l.b16 %v235
    %v720 = vunpack.c.l.b16 %v236
    %v721 = vunpack.c.l.b16 %v237
    %v722 = vunpack.c.l.b16 %v238
    %v723 = vunpack.c.l.b16 %v239
    %v724 = vunpack.c.l.b16 %v240
    %v725 = vunpack.c.l.b16 %v241
    %v726 = vunpack.c.l.b16 %v242
    %v727 = vunpack.c.l.b16 %v243
    %v728 = vunpack.c.l.b16 %v244
    %v729 = vunpack.c.l.b16 %v245
    %v730 = vunpack.c.l.b16 %v246
    %v731 = vunpack.c.l.b16 %v247
    %v732 = vunpack.c.l.b16 %v248
    %v733 = vunpack.c.l.b16 %v249
    %v734 = vunpack.c.l.b16 %v250
    %v735 = vunpack.c.l.b16 %v251
    %v736 = vunpack.c.l.b16 %v252
    %v737 = vunpack.c.l.b16 %v253
    %v738 = vpack.c.b16 %v637, %v636
    %v739 = vpack.c.b16 %v639, %v638
    %v740 = vpack.c.b16 %v641, %v640
    %v741 = vpack.c.b16 %v643, %v642
    %v742 = vpack.c.b16 %v645, %v644
    %v743 = vpack.c.b16 %v647, %v646
    %v744 = vpack.c.b16 %v649, %v648
    %v745 = vpack.c.b16 %v651, %v650
    %v746 = vpack.c.b16 %v653, %v652
    %v747 = vpack.c.b16 %v655, %v654
    %v748 = vpack.c.b16 %v657, %v656
    %v749 = vpack.c.b16 %v659, %v658
    %v750 = vpack.c.b16 %v661, %v660
    %v751 = vpack.c.b16 %v663, %v662
    %v752 = vpack.c.b16 %v665, %v664
    %v753 = vpack.c.b16 %v667, %v666
    %v754 = vpack.c.b16 %v669, %v668
    %v755 = vpack.c.b16 %v671, %v670
    %v756 = vpack.c.b16 %v673, %v672
    %v757 = vpack.c.b16 %v675, %v674
    %v758 = vpack.c.b16 %v677, %v676
    %v759 = vpack.c.b16 %v679, %v678
    %v760 = vpack.c.b16 %v681, %v680
    %v761 = vpack.c.b16 %v683, %v682
    %v762 = vpack.c.b16 %v685, %v684
    %v763 = vpack.c.b16 %v687, %v686
    %v764 = vpack.c.b16 %v689, %v688
    %v765 = vpack.c.b16 %v691, %v690
    %v766 = vpack.c.b16 %v693, %v692
    %v767 = vpack.c.b16 %v695, %v694
    %v768 = vpack.c.b16 %v697, %v696
    %v769 = vpack.c.b16 %v699, %v698
    %v770 = vpack.c.b16 %v701, %v700
    %v771 = vpack.c.b16 %v703, %v702
    %v772 = vpack.c.b16 %v705, %v704
    %v773 = vpack.c.b16 %v707, %v706
    %v774 = vpack.c.b16 %v709, %v708
    %v775 = vpack.c.b16 %v711, %v710
    %v776 = vpack.c.b16 %v713, %v712
    %v777 = vpack.c.b16 %v715, %v714
    %v778 = vpack.c.b16 %v717, %v716
    %v779 = vpack.c.b16 %v719, %v718
    %v780 = vpack.c.b16 %v721, %v720
    %v781 = vpack.c.b16 %v723, %v722
    %v782 = vpack.c.b16 %v725, %v724
    %v783 = vpack.c.b16 %v727, %v726
    %v784 = vpack.c.b16 %v729, %v728
    %v785 = vpack.c.b16 %v731, %v730
    %v786 = vpack.c.b16 %v733, %v732
    %v787 = vpack.c.b16 %v735, %v734
    %v788 = vpack.c.b16 %v737, %v736
    %vm840 = vcmask 392192
    %v842 = vsel %vm840, %v436, 0
    %v845 = vsel %vm840, %v443, 0
    %v848 = vsel %vm840, %v450, 0
    %v851 = vsel %vm840, %v457, 0
    %v854 = vsel %vm840, %v464, 0
    %v857 = vsel %vm840, %v471, 0
    %v860 = vsel %vm840, %v478, 0
    %v863 = vsel %vm840, %v485, 0
    %865 = vmatprep.subr.bf16.mxu0 0
    %866 = vmatpush1.bf16.msra.mxu0 %v738
    %867 = vmatprep.subr.bf16.mxu0 0
    %868 = vmatpush1.bf16.msra.mxu0 %v739
    %869 = vmatprep.subr.bf16.mxu0 0
    %870 = vmatpush1.bf16.msra.mxu0 %v740
    %871 = vmatprep.subr.bf16.mxu0 0
    %872 = vmatpush1.bf16.msra.mxu0 %v741
    %873 = vmatprep.subr.bf16.mxu0 0
    %874 = vmatpush1.bf16.msra.mxu0 %v742
    %875 = vmatprep.subr.bf16.mxu0 0
    %876 = vmatpush1.bf16.msra.mxu0 %v743
    %877 = vmatprep.subr.bf16.mxu0 0
    %878 = vmatpush1.bf16.msra.mxu0 %v744
    %879 = vmatprep.subr.bf16.mxu0 0
    %880 = vmatpush1.bf16.msra.mxu0 %v745
    %881 = vmatprep.subr.bf16.mxu0 0
    %882 = vmatpush1.bf16.msra.mxu0 %v746
    %883 = vmatprep.subr.bf16.mxu0 0
    %884 = vmatpush1.bf16.msra.mxu0 %v747
    %885 = vmatprep.subr.bf16.mxu0 0
    %886 = vmatpush1.bf16.msra.mxu0 %v748
    %887 = vmatprep.subr.bf16.mxu0 0
    %888 = vmatpush1.bf16.msra.mxu0 %v749
    %889 = vmatprep.subr.bf16.mxu0 0
    %890 = vmatpush1.bf16.msra.mxu0 %v750
    %891 = vmatprep.subr.bf16.mxu0 0
    %892 = vmatpush1.bf16.msra.mxu0 %v751
    %893 = vmatprep.subr.bf16.mxu0 0
    %894 = vmatpush1.bf16.msra.mxu0 %v752
    %895 = vmatprep.subr.bf16.mxu0 0
    %896 = vmatpush1.bf16.msra.mxu0 %v753
    %897 = vmatprep.mubr.bf16.mxu0 %v431
    %898 = vmatmul.mubr.bf16.gmra.mrb[0].mxu0 %v430
    %v899 = vpop.f32.mrb[0].mxu0
    %v900 = vadd.f32 0.0, %v899
    %v901 = vpop.f32.mrb[0].mxu0
    %v902 = vpop.f32.mrb[0].mxu0
    %v903 = vadd.f32 0.0, %v902
    %v904 = vpop.f32.mrb[0].mxu0
    %905 = vmatprep.mubr.bf16.mxu0 %v438
    %906 = vmatmul.mubr.bf16.gmra.mrb[0].mxu0 %v437
    %v907 = vpop.f32.mrb[0].mxu0
    %v908 = vadd.f32 0.0, %v907
    %v909 = vpop.f32.mrb[0].mxu0
    %v910 = vpop.f32.mrb[0].mxu0
    %v911 = vadd.f32 0.0, %v910
    %v912 = vpop.f32.mrb[0].mxu0
    %913 = vmatprep.mubr.bf16.mxu0 %v445
    %914 = vmatmul.mubr.bf16.gmra.mrb[0].mxu0 %v444
    %v915 = vpop.f32.mrb[0].mxu0
    %v916 = vadd.f32 0.0, %v915
    %v917 = vpop.f32.mrb[0].mxu0
    %v918 = vpop.f32.mrb[0].mxu0
    %v919 = vadd.f32 0.0, %v918
    %v920 = vpop.f32.mrb[0].mxu0
    %921 = vmatprep.mubr.bf16.mxu0 %v452
    %922 = vmatmul.mubr.bf16.gmra.mrb[0].mxu0 %v451
    %v923 = vpop.f32.mrb[0].mxu0
    %v924 = vadd.f32 0.0, %v923
    %v925 = vpop.f32.mrb[0].mxu0
    %v926 = vpop.f32.mrb[0].mxu0
    %v927 = vadd.f32 0.0, %v926
    %v928 = vpop.f32.mrb[0].mxu0
    %929 = vmatprep.mubr.bf16.mxu0 %v459
    %930 = vmatmul.mubr.bf16.gmra.mrb[0].mxu0 %v458
    %v931 = vpop.f32.mrb[0].mxu0
    %v932 = vadd.f32 0.0, %v931
    %v933 = vpop.f32.mrb[0].mxu0
    %v934 = vpop.f32.mrb[0].mxu0
    %v935 = vadd.f32 0.0, %v934
    %v936 = vpop.f32.mrb[0].mxu0
    %937 = vmatprep.mubr.bf16.mxu0 %v466
    %938 = vmatmul.mubr.bf16.gmra.mrb[0].mxu0 %v465
    %v939 = vpop.f32.mrb[0].mxu0
    %v940 = vadd.f32 0.0, %v939
    %v941 = vpop.f32.mrb[0].mxu0
    %v942 = vpop.f32.mrb[0].mxu0
    %v943 = vadd.f32 0.0, %v942
    %v944 = vpop.f32.mrb[0].mxu0
    %945 = vmatprep.mubr.bf16.mxu0 %v473
    %946 = vmatmul.mubr.bf16.gmra.mrb[0].mxu0 %v472
    %v947 = vpop.f32.mrb[0].mxu0
    %v948 = vadd.f32 0.0, %v947
    %v949 = vpop.f32.mrb[0].mxu0
    %v950 = vpop.f32.mrb[0].mxu0
    %v951 = vadd.f32 0.0, %v950
    %v952 = vpop.f32.mrb[0].mxu0
    %953 = vmatprep.mubr.bf16.mxu0 %v480
    %954 = vmatmul.mubr.bf16.gmra.mrb[0].mxu0 %v479
    %v955 = vpop.f32.mrb[0].mxu0
    %v956 = vadd.f32 0.0, %v955
    %v957 = vpop.f32.mrb[0].mxu0
    %v958 = vpop.f32.mrb[0].mxu0
    %v959 = vadd.f32 0.0, %v958
    %v960 = vpop.f32.mrb[0].mxu0
    %961 = vdwg.mxu0
    %962 = vmatprep.subr.bf16.mxu0 0
    %963 = vmatpush1.bf16.msra.mxu0 %v754
    %964 = vmatprep.subr.bf16.mxu0 0
    %965 = vmatpush1.bf16.msra.mxu0 %v755
    %966 = vmatprep.subr.bf16.mxu0 0
    %967 = vmatpush1.bf16.msra.mxu0 %v756
    %968 = vmatprep.subr.bf16.mxu0 0
    %969 = vmatpush1.bf16.msra.mxu0 %v757
    %970 = vmatprep.subr.bf16.mxu0 0
    %971 = vmatpush1.bf16.msra.mxu0 %v758
    %972 = vmatprep.subr.bf16.mxu0 0
    %973 = vmatpush1.bf16.msra.mxu0 %v759
    %974 = vmatprep.subr.bf16.mxu0 0
    %975 = vmatpush1.bf16.msra.mxu0 %v760
    %976 = vmatprep.subr.bf16.mxu0 0
    %977 = vmatpush1.bf16.msra.mxu0 %v761
    %978 = vmatprep.subr.bf16.mxu0 0
    %979 = vmatpush1.bf16.msra.mxu0 %v762
    %980 = vmatprep.subr.bf16.mxu0 0
    %981 = vmatpush1.bf16.msra.mxu0 %v763
    %982 = vmatprep.subr.bf16.mxu0 0
    %983 = vmatpush1.bf16.msra.mxu0 %v764
    %984 = vmatprep.subr.bf16.mxu0 0
    %985 = vmatpush1.bf16.msra.mxu0 %v765
    %986 = vmatprep.subr.bf16.mxu0 0
    %987 = vmatpush1.bf16.msra.mxu0 %v766
    %988 = vmatprep.subr.bf16.mxu0 0
    %989 = vmatpush1.bf16.msra.mxu0 %v767
    %990 = vmatprep.subr.bf16.mxu0 0
    %991 = vmatpush1.bf16.msra.mxu0 %v768
    %992 = vmatprep.subr.bf16.mxu0 0
    %993 = vmatpush1.bf16.msra.mxu0 %v769
    %994 = vmatprep.mubr.bf16.mxu0 %v433
    %995 = vmatmul.mubr.bf16.gmra.mrb[0].mxu0 %v432
    %v996 = vpop.f32.mrb[0].mxu0
    %v997 = vadd.f32 %v900, %v996
    %v998 = vpop.f32.mrb[0].mxu0
    %v999 = vpop.f32.mrb[0].mxu0
    %v1000 = vadd.f32 %v903, %v999
    %v1001 = vpop.f32.mrb[0].mxu0
    %1002 = vmatprep.mubr.bf16.mxu0 %v440
    %1003 = vmatmul.mubr.bf16.gmra.mrb[0].mxu0 %v439
    %v1004 = vpop.f32.mrb[0].mxu0
    %v1005 = vadd.f32 %v908, %v1004
    %v1006 = vpop.f32.mrb[0].mxu0
    %v1007 = vpop.f32.mrb[0].mxu0
    %v1008 = vadd.f32 %v911, %v1007
    %v1009 = vpop.f32.mrb[0].mxu0
    %1010 = vmatprep.mubr.bf16.mxu0 %v447
    %1011 = vmatmul.mubr.bf16.gmra.mrb[0].mxu0 %v446
    %v1012 = vpop.f32.mrb[0].mxu0
    %v1013 = vadd.f32 %v916, %v1012
    %v1014 = vpop.f32.mrb[0].mxu0
    %v1015 = vpop.f32.mrb[0].mxu0
    %v1016 = vadd.f32 %v919, %v1015
    %v1017 = vpop.f32.mrb[0].mxu0
    %1018 = vmatprep.mubr.bf16.mxu0 %v454
    %1019 = vmatmul.mubr.bf16.gmra.mrb[0].mxu0 %v453
    %v1020 = vpop.f32.mrb[0].mxu0
    %v1021 = vadd.f32 %v924, %v1020
    %v1022 = vpop.f32.mrb[0].mxu0
    %v1023 = vpop.f32.mrb[0].mxu0
    %v1024 = vadd.f32 %v927, %v1023
    %v1025 = vpop.f32.mrb[0].mxu0
    %1026 = vmatprep.mubr.bf16.mxu0 %v461
    %1027 = vmatmul.mubr.bf16.gmra.mrb[0].mxu0 %v460
    %v1028 = vpop.f32.mrb[0].mxu0
    %v1029 = vadd.f32 %v932, %v1028
    %v1030 = vpop.f32.mrb[0].mxu0
    %v1031 = vpop.f32.mrb[0].mxu0
    %v1032 = vadd.f32 %v935, %v1031
    %v1033 = vpop.f32.mrb[0].mxu0
    %1034 = vmatprep.mubr.bf16.mxu0 %v468
    %1035 = vmatmul.mubr.bf16.gmra.mrb[0].mxu0 %v467
    %v1036 = vpop.f32.mrb[0].mxu0
    %v1037 = vadd.f32 %v940, %v1036
    %v1038 = vpop.f32.mrb[0].mxu0
    %v1039 = vpop.f32.mrb[0].mxu0
    %v1040 = vadd.f32 %v943, %v1039
    %v1041 = vpop.f32.mrb[0].mxu0
    %1042 = vmatprep.mubr.bf16.mxu0 %v475
    %1043 = vmatmul.mubr.bf16.gmra.mrb[0].mxu0 %v474
    %v1044 = vpop.f32.mrb[0].mxu0
    %v1045 = vadd.f32 %v948, %v1044
    %v1046 = vpop.f32.mrb[0].mxu0
    %v1047 = vpop.f32.mrb[0].mxu0
    %v1048 = vadd.f32 %v951, %v1047
    %v1049 = vpop.f32.mrb[0].mxu0
    %1050 = vmatprep.mubr.bf16.mxu0 %v482
    %1051 = vmatmul.mubr.bf16.gmra.mrb[0].mxu0 %v481
    %v1052 = vpop.f32.mrb[0].mxu0
    %v1053 = vadd.f32 %v956, %v1052
    %v1054 = vpop.f32.mrb[0].mxu0
    %v1055 = vpop.f32.mrb[0].mxu0
    %v1056 = vadd.f32 %v959, %v1055
    %v1057 = vpop.f32.mrb[0].mxu0
    %1058 = vdwg.mxu0
    %1059 = vmatprep.subr.bf16.mxu0 0
    %1060 = vmatpush1.bf16.msra.mxu0 %v770
    %1061 = vmatprep.subr.bf16.mxu0 0
    %1062 = vmatpush1.bf16.msra.mxu0 %v771
    %1063 = vmatprep.subr.bf16.mxu0 0
    %1064 = vmatpush1.bf16.msra.mxu0 %v772
    %1065 = vmatprep.subr.bf16.mxu0 0
    %1066 = vmatpush1.bf16.msra.mxu0 %v773
    %1067 = vmatprep.subr.bf16.mxu0 0
    %1068 = vmatpush1.bf16.msra.mxu0 %v774
    %1069 = vmatprep.subr.bf16.mxu0 0
    %1070 = vmatpush1.bf16.msra.mxu0 %v775
    %1071 = vmatprep.subr.bf16.mxu0 0
    %1072 = vmatpush1.bf16.msra.mxu0 %v776
    %1073 = vmatprep.subr.bf16.mxu0 0
    %1074 = vmatpush1.bf16.msra.mxu0 %v777
    %1075 = vmatprep.subr.bf16.mxu0 0
    %1076 = vmatpush1.bf16.msra.mxu0 %v778
    %1077 = vmatprep.subr.bf16.mxu0 0
    %1078 = vmatpush1.bf16.msra.mxu0 %v779
    %1079 = vmatprep.subr.bf16.mxu0 0
    %1080 = vmatpush1.bf16.msra.mxu0 %v780
    %1081 = vmatprep.subr.bf16.mxu0 0
    %1082 = vmatpush1.bf16.msra.mxu0 %v781
    %1083 = vmatprep.subr.bf16.mxu0 0
    %1084 = vmatpush1.bf16.msra.mxu0 %v782
    %1085 = vmatprep.subr.bf16.mxu0 0
    %1086 = vmatpush1.bf16.msra.mxu0 %v783
    %1087 = vmatprep.subr.bf16.mxu0 0
    %1088 = vmatpush1.bf16.msra.mxu0 %v784
    %1089 = vmatprep.subr.bf16.mxu0 0
    %1090 = vmatpush1.bf16.msra.mxu0 %v785
    %1091 = vmatprep.mubr.bf16.mxu0 %v435
    %1092 = vmatmul.mubr.bf16.gmra.mrb[0].mxu0 %v434
    %v1093 = vpop.f32.mrb[0].mxu0
    %v1094 = vadd.f32 %v997, %v1093
    %v1095 = vpop.f32.mrb[0].mxu0
    %v1096 = vpop.f32.mrb[0].mxu0
    %v1097 = vadd.f32 %v1000, %v1096
    %v1098 = vpop.f32.mrb[0].mxu0
    %1099 = vmatprep.mubr.bf16.mxu0 %v442
    %1100 = vmatmul.mubr.bf16.gmra.mrb[0].mxu0 %v441
    %v1101 = vpop.f32.mrb[0].mxu0
    %v1102 = vadd.f32 %v1005, %v1101
    %v1103 = vpop.f32.mrb[0].mxu0
    %v1104 = vpop.f32.mrb[0].mxu0
    %v1105 = vadd.f32 %v1008, %v1104
    %v1106 = vpop.f32.mrb[0].mxu0
    %1107 = vmatprep.mubr.bf16.mxu0 %v449
    %1108 = vmatmul.mubr.bf16.gmra.mrb[0].mxu0 %v448
    %v1109 = vpop.f32.mrb[0].mxu0
    %v1110 = vadd.f32 %v1013, %v1109
    %v1111 = vpop.f32.mrb[0].mxu0
    %v1112 = vpop.f32.mrb[0].mxu0
    %v1113 = vadd.f32 %v1016, %v1112
    %v1114 = vpop.f32.mrb[0].mxu0
    %1115 = vmatprep.mubr.bf16.mxu0 %v456
    %1116 = vmatmul.mubr.bf16.gmra.mrb[0].mxu0 %v455
    %v1117 = vpop.f32.mrb[0].mxu0
    %v1118 = vadd.f32 %v1021, %v1117
    %v1119 = vpop.f32.mrb[0].mxu0
    %v1120 = vpop.f32.mrb[0].mxu0
    %v1121 = vadd.f32 %v1024, %v1120
    %v1122 = vpop.f32.mrb[0].mxu0
    %1123 = vmatprep.mubr.bf16.mxu0 %v463
    %1124 = vmatmul.mubr.bf16.gmra.mrb[0].mxu0 %v462
    %v1125 = vpop.f32.mrb[0].mxu0
    %v1126 = vadd.f32 %v1029, %v1125
    %v1127 = vpop.f32.mrb[0].mxu0
    %v1128 = vpop.f32.mrb[0].mxu0
    %v1129 = vadd.f32 %v1032, %v1128
    %v1130 = vpop.f32.mrb[0].mxu0
    %1131 = vmatprep.mubr.bf16.mxu0 %v470
    %1132 = vmatmul.mubr.bf16.gmra.mrb[0].mxu0 %v469
    %v1133 = vpop.f32.mrb[0].mxu0
    %v1134 = vadd.f32 %v1037, %v1133
    %v1135 = vpop.f32.mrb[0].mxu0
    %v1136 = vpop.f32.mrb[0].mxu0
    %v1137 = vadd.f32 %v1040, %v1136
    %v1138 = vpop.f32.mrb[0].mxu0
    %1139 = vmatprep.mubr.bf16.mxu0 %v477
    %1140 = vmatmul.mubr.bf16.gmra.mrb[0].mxu0 %v476
    %v1141 = vpop.f32.mrb[0].mxu0
    %v1142 = vadd.f32 %v1045, %v1141
    %v1143 = vpop.f32.mrb[0].mxu0
    %v1144 = vpop.f32.mrb[0].mxu0
    %v1145 = vadd.f32 %v1048, %v1144
    %v1146 = vpop.f32.mrb[0].mxu0
    %1147 = vmatprep.mubr.bf16.mxu0 %v484
    %1148 = vmatmul.mubr.bf16.gmra.mrb[0].mxu0 %v483
    %v1149 = vpop.f32.mrb[0].mxu0
    %v1150 = vadd.f32 %v1053, %v1149
    %v1151 = vpop.f32.mrb[0].mxu0
    %v1152 = vpop.f32.mrb[0].mxu0
    %v1153 = vadd.f32 %v1056, %v1152
    %v1154 = vpop.f32.mrb[0].mxu0
    %1155 = vdwg.mxu0
    %1156 = vmatprep.subr.bf16.mxu0 0
    %1157 = vmatpush1.bf16.msra.mxu0 %v786
    %1158 = vmatprep.subr.bf16.mxu0 0
    %1159 = vmatpush1.bf16.msra.mxu0 %v787
    %1160 = vmatprep.subr.bf16.mxu0 0
    %1161 = vmatpush1.bf16.msra.mxu0 %v788
    %1162 = vmatprep.subr.bf16.mxu0 0
    %1163 = vmatpush1.bf16.msra.mxu0 0
    %1164 = vmatprep.subr.bf16.mxu0 0
    %1165 = vmatpush1.bf16.msra.mxu0 0
    %1166 = vmatprep.subr.bf16.mxu0 0
    %1167 = vmatpush1.bf16.msra.mxu0 0
    %1168 = vmatprep.subr.bf16.mxu0 0
    %1169 = vmatpush1.bf16.msra.mxu0 0
    %1170 = vmatprep.subr.bf16.mxu0 0
    %1171 = vmatpush1.bf16.msra.mxu0 0
    %1172 = vmatprep.subr.bf16.mxu0 0
    %1173 = vmatpush1.bf16.msra.mxu0 0
    %1174 = vmatprep.subr.bf16.mxu0 0
    %1175 = vmatpush1.bf16.msra.mxu0 0
    %1176 = vmatprep.subr.bf16.mxu0 0
    %1177 = vmatpush1.bf16.msra.mxu0 0
    %1178 = vmatprep.subr.bf16.mxu0 0
    %1179 = vmatpush1.bf16.msra.mxu0 0
    %1180 = vmatprep.subr.bf16.mxu0 0
    %1181 = vmatpush1.bf16.msra.mxu0 0
    %1182 = vmatprep.subr.bf16.mxu0 0
    %1183 = vmatpush1.bf16.msra.mxu0 0
    %1184 = vmatprep.subr.bf16.mxu0 0
    %1185 = vmatpush1.bf16.msra.mxu0 0
    %1186 = vmatprep.subr.bf16.mxu0 0
    %1187 = vmatpush1.bf16.msra.mxu0 0
    %1188 = vmatprep.mubr.bf16.mxu0 0
    %1189 = vmatmul.mubr.bf16.gmra.mrb[0].mxu0 %v842
    %v1190 = vpop.f32.mrb[0].mxu0
    %v1191 = vadd.f32 %v1094, %v1190
    %v1192 = vpop.f32.mrb[0].mxu0
    %v1193 = vpop.f32.mrb[0].mxu0
    %v1194 = vadd.f32 %v1097, %v1193
    %v1195 = vpop.f32.mrb[0].mxu0
    %1196 = vmatprep.mubr.bf16.mxu0 0
    %1197 = vmatmul.mubr.bf16.gmra.mrb[0].mxu0 %v845
    %v1198 = vpop.f32.mrb[0].mxu0
    %v1199 = vadd.f32 %v1102, %v1198
    %v1200 = vpop.f32.mrb[0].mxu0
    %v1201 = vpop.f32.mrb[0].mxu0
    %v1202 = vadd.f32 %v1105, %v1201
    %v1203 = vpop.f32.mrb[0].mxu0
    %1204 = vmatprep.mubr.bf16.mxu0 0
    %1205 = vmatmul.mubr.bf16.gmra.mrb[0].mxu0 %v848
    %v1206 = vpop.f32.mrb[0].mxu0
    %v1207 = vadd.f32 %v1110, %v1206
    %v1208 = vpop.f32.mrb[0].mxu0
    %v1209 = vpop.f32.mrb[0].mxu0
    %v1210 = vadd.f32 %v1113, %v1209
    %v1211 = vpop.f32.mrb[0].mxu0
    %1212 = vmatprep.mubr.bf16.mxu0 0
    %1213 = vmatmul.mubr.bf16.gmra.mrb[0].mxu0 %v851
    %v1214 = vpop.f32.mrb[0].mxu0
    %v1215 = vadd.f32 %v1118, %v1214
    %v1216 = vpop.f32.mrb[0].mxu0
    %v1217 = vpop.f32.mrb[0].mxu0
    %v1218 = vadd.f32 %v1121, %v1217
    %v1219 = vpop.f32.mrb[0].mxu0
    %1220 = vmatprep.mubr.bf16.mxu0 0
    %1221 = vmatmul.mubr.bf16.gmra.mrb[0].mxu0 %v854
    %v1222 = vpop.f32.mrb[0].mxu0
    %v1223 = vadd.f32 %v1126, %v1222
    %v1224 = vpop.f32.mrb[0].mxu0
    %v1225 = vpop.f32.mrb[0].mxu0
    %v1226 = vadd.f32 %v1129, %v1225
    %v1227 = vpop.f32.mrb[0].mxu0
    %1228 = vmatprep.mubr.bf16.mxu0 0
    %1229 = vmatmul.mubr.bf16.gmra.mrb[0].mxu0 %v857
    %v1230 = vpop.f32.mrb[0].mxu0
    %v1231 = vadd.f32 %v1134, %v1230
    %v1232 = vpop.f32.mrb[0].mxu0
    %v1233 = vpop.f32.mrb[0].mxu0
    %v1234 = vadd.f32 %v1137, %v1233
    %v1235 = vpop.f32.mrb[0].mxu0
    %1236 = vmatprep.mubr.bf16.mxu0 0
    %1237 = vmatmul.mubr.bf16.gmra.mrb[0].mxu0 %v860
    %v1238 = vpop.f32.mrb[0].mxu0
    %v1239 = vadd.f32 %v1142, %v1238
    %v1240 = vpop.f32.mrb[0].mxu0
    %v1241 = vpop.f32.mrb[0].mxu0
    %v1242 = vadd.f32 %v1145, %v1241
    %v1243 = vpop.f32.mrb[0].mxu0
    %1244 = vmatprep.mubr.bf16.mxu0 0
    %1245 = vmatmul.mubr.bf16.gmra.mrb[0].mxu0 %v863
    %v1246 = vpop.f32.mrb[0].mxu0
    %v1247 = vadd.f32 %v1150, %v1246
    %v1248 = vpop.f32.mrb[0].mxu0
    %v1249 = vpop.f32.mrb[0].mxu0
    %v1250 = vadd.f32 %v1153, %v1249
    %v1251 = vpop.f32.mrb[0].mxu0
    %1252 = vdwg.mxu0
    %v1253 = vadd.f32 %v72, %v1191
    %v1254 = vadd.f32 %v73, %v1194
    %v1255 = vadd.f32 %v74, %v1199
    %v1256 = vadd.f32 %v75, %v1202
    %v1257 = vadd.f32 %v76, %v1207
    %v1258 = vadd.f32 %v77, %v1210
    %v1259 = vadd.f32 %v78, %v1215
    %v1260 = vadd.f32 %v79, %v1218
    %v1261 = vadd.f32 %v80, %v1223
    %v1262 = vadd.f32 %v81, %v1226
    %v1263 = vadd.f32 %v82, %v1231
    %v1264 = vadd.f32 %v83, %v1234
    %v1265 = vadd.f32 %v84, %v1239
    %v1266 = vadd.f32 %v85, %v1242
    %v1267 = vadd.f32 %v86, %v1247
    %v1268 = vadd.f32 %v87, %v1250
    %1269 = vst [vmem:[#allocation2] sm:$0xff] %v1253
    %1270 = vst [vmem:[#allocation2 + $0x8] sm:$0xff] %v1254
    %1271 = vst [vmem:[#allocation2 + $0x10] sm:$0xff] %v1255
    %1272 = vst [vmem:[#allocation2 + $0x18] sm:$0xff] %v1256
    %1273 = vst [vmem:[#allocation2 + $0x20] sm:$0xff] %v1257
    %1274 = vst [vmem:[#allocation2 + $0x28] sm:$0xff] %v1258
    %1275 = vst [vmem:[#allocation2 + $0x30] sm:$0xff] %v1259
    %1276 = vst [vmem:[#allocation2 + $0x38] sm:$0xff] %v1260
    %1277 = vst [vmem:[#allocation2 + $0x40] sm:$0xff] %v1261
    %1278 = vst [vmem:[#allocation2 + $0x48] sm:$0xff] %v1262
    %1279 = vst [vmem:[#allocation2 + $0x50] sm:$0xff] %v1263
    %1280 = vst [vmem:[#allocation2 + $0x58] sm:$0xff] %v1264
    %1281 = vst [vmem:[#allocation2 + $0x60] sm:$0xff] %v1265
    %1282 = vst [vmem:[#allocation2 + $0x68] sm:$0xff] %v1266
    %1283 = vst [vmem:[#allocation2 + $0x70] sm:$0xff] %v1267
    %1284 = vst [vmem:[#allocation2 + $0x78] sm:$0xff] %v1268
    // Predicated region
    $region26: #{discriminator_forward.9} parent=1 // pred_check
      %p1285 = pneg %p45
    $region27: #{discriminator_forward.9} parent=1 // pred_check_branch
      %1287 = sbr.rel (%p1285) target = $region29
    $region28: #{discriminator_forward.9} parent=1 // pred_region
      %v1288 = vld [vmem:[#allocation2] sm:$0xff]
      %v1289 = vld [vmem:[#allocation2 + $0x8] sm:$0xff]
      %v1290 = vld [vmem:[#allocation2 + $0x10] sm:$0xff]
      %v1291 = vld [vmem:[#allocation2 + $0x18] sm:$0xff]
      %v1292 = vld [vmem:[#allocation2 + $0x20] sm:$0xff]
      %v1293 = vld [vmem:[#allocation2 + $0x28] sm:$0xff]
      %v1294 = vld [vmem:[#allocation2 + $0x30] sm:$0xff]
      %v1295 = vld [vmem:[#allocation2 + $0x38] sm:$0xff]
      %v1296 = vld [vmem:[#allocation2 + $0x40] sm:$0xff]
      %v1297 = vld [vmem:[#allocation2 + $0x48] sm:$0xff]
      %v1298 = vld [vmem:[#allocation2 + $0x50] sm:$0xff]
      %v1299 = vld [vmem:[#allocation2 + $0x58] sm:$0xff]
      %v1300 = vld [vmem:[#allocation2 + $0x60] sm:$0xff]
      %v1301 = vld [vmem:[#allocation2 + $0x68] sm:$0xff]
      %v1302 = vld [vmem:[#allocation2 + $0x70] sm:$0xff]
      %v1303 = vld [vmem:[#allocation2 + $0x78] sm:$0xff]
      %1304 = vst [vmem:[#allocation8] sm:$0xff] %v1288
      %1305 = vst [vmem:[#allocation8 + $0x8] sm:$0xff] %v1289
      %1306 = vst [vmem:[#allocation8 + $0x10] sm:$0xff] %v1290
      %1307 = vst [vmem:[#allocation8 + $0x18] sm:$0xff] %v1291
      %1308 = vst [vmem:[#allocation8 + $0x20] sm:$0xff] %v1292
      %1309 = vst [vmem:[#allocation8 + $0x28] sm:$0xff] %v1293
      %1310 = vst [vmem:[#allocation8 + $0x30] sm:$0xff] %v1294
      %1311 = vst [vmem:[#allocation8 + $0x38] sm:$0xff] %v1295
      %1312 = vst [vmem:[#allocation8 + $0x40] sm:$0xff] %v1296
      %1313 = vst [vmem:[#allocation8 + $0x48] sm:$0xff] %v1297
      %1314 = vst [vmem:[#allocation8 + $0x50] sm:$0xff] %v1298
      %1315 = vst [vmem:[#allocation8 + $0x58] sm:$0xff] %v1299
      %1316 = vst [vmem:[#allocation8 + $0x60] sm:$0xff] %v1300
      %1317 = vst [vmem:[#allocation8 + $0x68] sm:$0xff] %v1301
      %1318 = vst [vmem:[#allocation8 + $0x70] sm:$0xff] %v1302
      %1319 = vst [vmem:[#allocation8 + $0x78] sm:$0xff] %v1303
      %v1320 = vld [vmem:[#allocation9] sm:$0x1]
      %v1321 = vadd.f32 %v1288, %v1289
      %v1322 = vadd.f32 %v1321, %v1290
      %v1323 = vadd.f32 %v1322, %v1291
      %v1324 = vadd.f32 %v1323, %v1292
      %v1325 = vadd.f32 %v1324, %v1293
      %v1326 = vadd.f32 %v1325, %v1294
      %v1327 = vadd.f32 %v1326, %v1295
      %v1328 = vadd.f32 %v1327, %v1296
      %v1329 = vadd.f32 %v1328, %v1297
      %v1330 = vadd.f32 %v1329, %v1298
      %v1331 = vadd.f32 %v1330, %v1299
      %v1332 = vadd.f32 %v1331, %v1300
      %v1333 = vadd.f32 %v1332, %v1301
      %v1334 = vadd.f32 %v1333, %v1302
      %v1335 = vadd.f32 %v1334, %v1303
      %v1336 = vrot.slane %v1335, 4
      %v1337 = vadd.f32 %v1335, %v1336
      %v1338 = vrot.slane %v1337, 2
      %v1339 = vadd.f32 %v1337, %v1338
      %v1340 = vrot.slane %v1339, 1
      %v1341 = vadd.f32 %v1339, %v1340
      %v1342 = vadd.f32 %v1320, %v1341
      %1343 = vst [vmem:[#allocation9] sm:$0x1] %v1342
      %v1344 = vld [vmem:[#allocation11] sm:$0x1]
      %v1345 = vmul.f32 %v1288, %v1288
      %v1346 = vmul.f32 %v1289, %v1289
      %v1347 = vmul.f32 %v1290, %v1290
      %v1348 = vmul.f32 %v1291, %v1291
      %v1349 = vmul.f32 %v1292, %v1292
      %v1350 = vmul.f32 %v1293, %v1293
      %v1351 = vmul.f32 %v1294, %v1294
      %v1352 = vmul.f32 %v1295, %v1295
      %v1353 = vmul.f32 %v1296, %v1296
      %v1354 = vmul.f32 %v1297, %v1297
      %v1355 = vmul.f32 %v1298, %v1298
      %v1356 = vmul.f32 %v1299, %v1299
      %v1357 = vmul.f32 %v1300, %v1300
      %v1358 = vmul.f32 %v1301, %v1301
      %v1359 = vmul.f32 %v1302, %v1302
      %v1360 = vmul.f32 %v1303, %v1303
      %v1361 = vadd.f32 %v1345, %v1346
      %v1362 = vadd.f32 %v1361, %v1347
      %v1363 = vadd.f32 %v1362, %v1348
      %v1364 = vadd.f32 %v1363, %v1349
      %v1365 = vadd.f32 %v1364, %v1350
      %v1366 = vadd.f32 %v1365, %v1351
      %v1367 = vadd.f32 %v1366, %v1352
      %v1368 = vadd.f32 %v1367, %v1353
      %v1369 = vadd.f32 %v1368, %v1354
      %v1370 = vadd.f32 %v1369, %v1355
      %v1371 = vadd.f32 %v1370, %v1356
      %v1372 = vadd.f32 %v1371, %v1357
      %v1373 = vadd.f32 %v1372, %v1358
      %v1374 = vadd.f32 %v1373, %v1359
      %v1375 = vadd.f32 %v1374, %v1360
      %v1376 = vrot.slane %v1375, 4
      %v1377 = vadd.f32 %v1375, %v1376
      %v1378 = vrot.slane %v1377, 2
      %v1379 = vadd.f32 %v1377, %v1378
      %v1380 = vrot.slane %v1379, 1
      %v1381 = vadd.f32 %v1379, %v1380
      %v1382 = vadd.f32 %v1344, %v1381
      %1383 = vst [vmem:[#allocation11] sm:$0x1] %v1382
    $region29: #{discriminator_forward.9} parent=1 // pred_fallthru
      _
    // Predicated region
    $region30: #{discriminator_forward.9} parent=1 // pred_check
      _
    $region31: #{discriminator_forward.9} parent=1 // pred_check_branch
      %1385 = sbr.rel (0) target = $region33
    $region32: #{discriminator_forward.9} parent=1 // pred_region
      %s1387 = ssub.s32 2048, 2048
      %1388 = vsyncadd [#allocation5], %s1387
      %s1389 = sshll.u32 [#allocation8], 4
      %s1390 = int_to_ptr.vmem [resolvable:$true] %s1389
      %1395 = dma.vmem_to_hbm [thread:$0]  %s1390, 2048, %s2, [#allocation5], 128, 128, 8
    $region33: #{discriminator_forward.9} parent=1 // pred_fallthru
      _
    // Predicated region
    $region34: #{discriminator_forward.9} parent=1 // pred_check
      _
    $region35: #{discriminator_forward.9} parent=1 // pred_check_branch
      %1397 = sbr.rel (0) target = $region37
    $region36: #{discriminator_forward.9} parent=1 // pred_region
      %s1399 = ssub.s32 16, 16
      %1400 = vsyncadd [#allocation10], %s1399
      %s1402 = sshll.u32 [#allocation9], 4
      %s1403 = int_to_ptr.vmem [resolvable:$true] %s1402
      %1405 = dma.vmem_to_hbm [thread:$0]  %s1403, 16, %s3, [#allocation10]
    $region37: #{discriminator_forward.9} parent=1 // pred_fallthru
      _
    // Predicated region
    $region38: #{discriminator_forward.9} parent=1 // pred_check
      _
    $region39: #{discriminator_forward.9} parent=1 // pred_check_branch
      %1407 = sbr.rel (0) target = $region41
    $region40: #{discriminator_forward.9} parent=1 // pred_region
      %s1409 = ssub.s32 16, 16
      %1410 = vsyncadd [#allocation10], %s1409
      %s1412 = sshll.u32 [#allocation11], 4
      %s1413 = int_to_ptr.vmem [resolvable:$true] %s1412
      %1415 = dma.vmem_to_hbm [thread:$0]  %s1413, 16, %s4, [#allocation10]
    $region41: #{discriminator_forward.9} parent=1 // pred_fallthru
      _
    // Predicated region
    $region42: #{discriminator_forward.9} parent=1 // pred_check
      _
    $region43: #{discriminator_forward.9} parent=1 // pred_check_branch
      %1417 = sbr.rel (0) target = $region45
    $region44: #{discriminator_forward.9} parent=1 // pred_region
      %1418 = dma.done [#allocation5], 2048
    $region45: #{discriminator_forward.9} parent=1 // pred_fallthru
      _
    // Predicated region
    $region46: #{discriminator_forward.9} parent=1 // pred_check
      _
    $region47: #{discriminator_forward.9} parent=1 // pred_check_branch
      %1420 = sbr.rel (0) target = $region49
    $region48: #{discriminator_forward.9} parent=1 // pred_region
      %1421 = dma.done [#allocation10], 16
    $region49: #{discriminator_forward.9} parent=1 // pred_fallthru
      _
    // Predicated region
    $region50: #{discriminator_forward.9} parent=1 // pred_check
      _
    $region51: #{discriminator_forward.9} parent=1 // pred_check_branch
      %1423 = sbr.rel (0) target = $region53
    $region52: #{discriminator_forward.9} parent=1 // pred_region
      %1424 = dma.done [#allocation10], 16
    $region53: #{discriminator_forward.9} parent=1 // pred_fallthru
      _
    %1425 = vsyncpa [#allocation4], 1
    %1426 = vsyncpa [#allocation7], 1
    %1427 = vsyncpa [#allocation5], 1
    %1428 = vsyncpa [#allocation10], 1

// kernel: discriminator_forward.10
$region0: #{discriminator_forward.10}
  #allocation0 [shape = 'u32[]', space=smem, size = 0x4, offset = 0x4, fixed_abs, tag = 'smem constant byte address 0x4 - core index']
  #allocation1 [shape = 'u32[144,128]{1,0:T(1,128)}', space=vmem, size = 0x12000, scoped, tag = 'internal scratch']
  %s0 = inlined_call_operand.hbm [shape: f32[128,128], index: 0, kind: input, shape index: {}]
  %s1 = inlined_call_operand.hbm [shape: f32[1,128], index: 1, kind: input, shape index: {}]
  %s2 = inlined_call_operand.hbm [shape: f32[1,128], index: 2, kind: input, shape index: {}]
  %s3 = inlined_call_operand.hbm [shape: f32[1,128], index: 3, kind: input, shape index: {}]
  %s4 = inlined_call_operand.hbm [shape: f32[1,128], index: 4, kind: input, shape index: {}]
  %s5 = inlined_call_operand.hbm [shape: f32[128,128], index: 5, kind: output, shape index: {}]
  %s6 = sld [smem:[#allocation0]]
  $region50: #{discriminator_forward.10} parent=0
    _
  %s8 = ssub.s32 1, %s6
  %s9 = scalar_select 0, %s8, %s6
  $region1: #{discriminator_forward.10} parent=0
    #allocation2 [shape = 'u8[65536]{0}', space=vmem, size = 0x10000, scoped, tag = 'input window, operand 0, single buffered']
    #allocation3 [shape = 's32[1]{0}', space=sflag, size = 0x4, scoped, tag = 'scoped memory for discriminator_forward.10']
    #allocation4 [shape = 's32[1]{0}', space=sflag, size = 0x4, scoped, tag = 'scoped memory for discriminator_forward.10']
    #allocation5 [shape = 'u8[512]{0}', space=vmem, size = 0x400, scoped, tag = 'input window, operand 1, single buffered']
    #allocation6 [shape = 's32[1]{0}', space=sflag, size = 0x4, scoped, tag = 'scoped memory for discriminator_forward.10']
    #allocation7 [shape = 'u8[512]{0}', space=vmem, size = 0x400, scoped, tag = 'input window, operand 2, single buffered']
    #allocation8 [shape = 'u8[512]{0}', space=vmem, size = 0x400, scoped, tag = 'input window, operand 3, single buffered']
    #allocation9 [shape = 's32[1]{0}', space=sflag, size = 0x4, scoped, tag = 'scoped memory for discriminator_forward.10']
    #allocation10 [shape = 'u8[512]{0}', space=vmem, size = 0x400, scoped, tag = 'input window, operand 4, single buffered']
    #allocation11 [shape = 'u8[65536]{0}', space=vmem, size = 0x10000, scoped, tag = 'output window, operand 0, single buffered']
    %10 = vsyncpa [#allocation3], 0
    %11 = vsyncpa [#allocation6], 0
    %12 = vsyncpa [#allocation9], 0
    %13 = vsyncpa [#allocation4], 0
    // Predicated region
    $region2: #{discriminator_forward.10} parent=1 // pred_check
      _
    $region3: #{discriminator_forward.10} parent=1 // pred_check_branch
      %15 = sbr.rel (0) target = $region5
    $region4: #{discriminator_forward.10} parent=1 // pred_region
      %s17 = ssub.s32 2048, 2048
      %18 = vsyncadd [#allocation3], %s17
      %s19 = sshll.u32 [#allocation2], 4
      %s20 = int_to_ptr.vmem [resolvable:$true] %s19
      %25 = dma.hbm_to_vmem [thread:$0]  %s0, 2048, %s20, [#allocation3], 128, 128, 8
    $region5: #{discriminator_forward.10} parent=1 // pred_fallthru
      _
    // Predicated region
    $region6: #{discriminator_forward.10} parent=1 // pred_check
      _
    $region7: #{discriminator_forward.10} parent=1 // pred_check_branch
      %27 = sbr.rel (0) target = $region9
    $region8: #{discriminator_forward.10} parent=1 // pred_region
      %s29 = ssub.s32 16, 16
      %30 = vsyncadd [#allocation6], %s29
      %s32 = sshll.u32 [#allocation5], 4
      %s33 = int_to_ptr.vmem [resolvable:$true] %s32
      %35 = dma.hbm_to_vmem [thread:$0]  %s1, 16, %s33, [#allocation6]
    $region9: #{discriminator_forward.10} parent=1 // pred_fallthru
      _
    // Predicated region
    $region10: #{discriminator_forward.10} parent=1 // pred_check
      _
    $region11: #{discriminator_forward.10} parent=1 // pred_check_branch
      %37 = sbr.rel (0) target = $region13
    $region12: #{discriminator_forward.10} parent=1 // pred_region
      %s39 = ssub.s32 16, 16
      %40 = vsyncadd [#allocation6], %s39
      %s42 = sshll.u32 [#allocation7], 4
      %s43 = int_to_ptr.vmem [resolvable:$true] %s42
      %45 = dma.hbm_to_vmem [thread:$0]  %s2, 16, %s43, [#allocation6]
    $region13: #{discriminator_forward.10} parent=1 // pred_fallthru
      _
    // Predicated region
    $region14: #{discriminator_forward.10} parent=1 // pred_check
      _
    $region15: #{discriminator_forward.10} parent=1 // pred_check_branch
      %47 = sbr.rel (0) target = $region17
    $region16: #{discriminator_forward.10} parent=1 // pred_region
      %s49 = ssub.s32 16, 16
      %50 = vsyncadd [#allocation9], %s49
      %s52 = sshll.u32 [#allocation8], 4
      %s53 = int_to_ptr.vmem [resolvable:$true] %s52
      %55 = dma.hbm_to_vmem [thread:$0]  %s3, 16, %s53, [#allocation9]
    $region17: #{discriminator_forward.10} parent=1 // pred_fallthru
      _
    // Predicated region
    $region18: #{discriminator_forward.10} parent=1 // pred_check
      _
    $region19: #{discriminator_forward.10} parent=1 // pred_check_branch
      %57 = sbr.rel (0) target = $region21
    $region20: #{discriminator_forward.10} parent=1 // pred_region
      %s59 = ssub.s32 16, 16
      %60 = vsyncadd [#allocation9], %s59
      %s62 = sshll.u32 [#allocation10], 4
      %s63 = int_to_ptr.vmem [resolvable:$true] %s62
      %65 = dma.hbm_to_vmem [thread:$0]  %s4, 16, %s63, [#allocation9]
    $region21: #{discriminator_forward.10} parent=1 // pred_fallthru
      _
    // Predicated region
    $region22: #{discriminator_forward.10} parent=1 // pred_check
      _
    $region23: #{discriminator_forward.10} parent=1 // pred_check_branch
      %67 = sbr.rel (0) target = $region25
    $region24: #{discriminator_forward.10} parent=1 // pred_region
      %68 = dma.done [#allocation3], 2048
    $region25: #{discriminator_forward.10} parent=1 // pred_fallthru
      _
    // Predicated region
    $region26: #{discriminator_forward.10} parent=1 // pred_check
      _
    $region27: #{discriminator_forward.10} parent=1 // pred_check_branch
      %70 = sbr.rel (0) target = $region29
    $region28: #{discriminator_forward.10} parent=1 // pred_region
      %71 = dma.done [#allocation6], 16
    $region29: #{discriminator_forward.10} parent=1 // pred_fallthru
      _
    // Predicated region
    $region30: #{discriminator_forward.10} parent=1 // pred_check
      _
    $region31: #{discriminator_forward.10} parent=1 // pred_check_branch
      %73 = sbr.rel (0) target = $region33
    $region32: #{discriminator_forward.10} parent=1 // pred_region
      %74 = dma.done [#allocation6], 16
    $region33: #{discriminator_forward.10} parent=1 // pred_fallthru
      _
    // Predicated region
    $region34: #{discriminator_forward.10} parent=1 // pred_check
      _
    $region35: #{discriminator_forward.10} parent=1 // pred_check_branch
      %76 = sbr.rel (0) target = $region37
    $region36: #{discriminator_forward.10} parent=1 // pred_region
      %77 = dma.done [#allocation9], 16
    $region37: #{discriminator_forward.10} parent=1 // pred_fallthru
      _
    // Predicated region
    $region38: #{discriminator_forward.10} parent=1 // pred_check
      _
    $region39: #{discriminator_forward.10} parent=1 // pred_check_branch
      %79 = sbr.rel (0) target = $region41
    $region40: #{discriminator_forward.10} parent=1 // pred_region
      %80 = dma.done [#allocation9], 16
    $region41: #{discriminator_forward.10} parent=1 // pred_fallthru
      _
    %v81 = vld [vmem:[#allocation2] sm:$0xff]
    %v82 = vld [vmem:[#allocation2 + $0x8] sm:$0xff]
    %v83 = vld [vmem:[#allocation2 + $0x10] sm:$0xff]
    %v84 = vld [vmem:[#allocation2 + $0x18] sm:$0xff]
    %v85 = vld [vmem:[#allocation2 + $0x20] sm:$0xff]
    %v86 = vld [vmem:[#allocation2 + $0x28] sm:$0xff]
    %v87 = vld [vmem:[#allocation2 + $0x30] sm:$0xff]
    %v88 = vld [vmem:[#allocation2 + $0x38] sm:$0xff]
    %v89 = vld [vmem:[#allocation2 + $0x40] sm:$0xff]
    %v90 = vld [vmem:[#allocation2 + $0x48] sm:$0xff]
    %v91 = vld [vmem:[#allocation2 + $0x50] sm:$0xff]
    %v92 = vld [vmem:[#allocation2 + $0x58] sm:$0xff]
    %v93 = vld [vmem:[#allocation2 + $0x60] sm:$0xff]
    %v94 = vld [vmem:[#allocation2 + $0x68] sm:$0xff]
    %v95 = vld [vmem:[#allocation2 + $0x70] sm:$0xff]
    %v96 = vld [vmem:[#allocation2 + $0x78] sm:$0xff]
    %v97 = vld [vmem:[#allocation5] sm:$0x1]
    %v98 = vmul.f32 %v97, 0.0078125
    %v99 = vld [vmem:[#allocation7] sm:$0x1]
    %v100 = vmul.f32 %v99, 0.0078125
    %v101 = vmul.f32 %v98, %v98
    %v102 = vsub.f32 %v100, %v101
    %v103 = vmax.f32 %v102, 0.0
    %v105 = vlaneseq
    %v106 = vshrl.u32 %v105, 7
    %v107 = vsub.s32 0, %v106
    %v108 = vrot.slane %v98, %v107
    %v110 = vsub.f32 %v81, %v108
    %v111 = vsub.f32 %v82, %v108
    %v112 = vsub.f32 %v83, %v108
    %v113 = vsub.f32 %v84, %v108
    %v114 = vsub.f32 %v85, %v108
    %v115 = vsub.f32 %v86, %v108
    %v116 = vsub.f32 %v87, %v108
    %v117 = vsub.f32 %v88, %v108
    %v118 = vsub.f32 %v89, %v108
    %v119 = vsub.f32 %v90, %v108
    %v120 = vsub.f32 %v91, %v108
    %v121 = vsub.f32 %v92, %v108
    %v122 = vsub.f32 %v93, %v108
    %v123 = vsub.f32 %v94, %v108
    %v124 = vsub.f32 %v95, %v108
    %v125 = vsub.f32 %v96, %v108
    %v126 = vadd.f32 %v103, 1e-05
    %v127 = vrsqrt.pop %v126
    %v129 = vlaneseq
    %v130 = vshrl.u32 %v129, 7
    %v131 = vsub.s32 0, %v130
    %v132 = vrot.slane %v127, %v131
    %v134 = vmul.f32 %v110, %v132
    %v135 = vmul.f32 %v111, %v132
    %v136 = vmul.f32 %v112, %v132
    %v137 = vmul.f32 %v113, %v132
    %v138 = vmul.f32 %v114, %v132
    %v139 = vmul.f32 %v115, %v132
    %v140 = vmul.f32 %v116, %v132
    %v141 = vmul.f32 %v117, %v132
    %v142 = vmul.f32 %v118, %v132
    %v143 = vmul.f32 %v119, %v132
    %v144 = vmul.f32 %v120, %v132
    %v145 = vmul.f32 %v121, %v132
    %v146 = vmul.f32 %v122, %v132
    %v147 = vmul.f32 %v123, %v132
    %v148 = vmul.f32 %v124, %v132
    %v149 = vmul.f32 %v125, %v132
    %v150 = vld [vmem:[#allocation8] sm:$0x1]
    %v152 = vlaneseq
    %v153 = vshrl.u32 %v152, 7
    %v154 = vsub.s32 0, %v153
    %v155 = vrot.slane %v150, %v154
    %v157 = vmul.f32 %v134, %v155
    %v158 = vmul.f32 %v135, %v155
    %v159 = vmul.f32 %v136, %v155
    %v160 = vmul.f32 %v137, %v155
    %v161 = vmul.f32 %v138, %v155
    %v162 = vmul.f32 %v139, %v155
    %v163 = vmul.f32 %v140, %v155
    %v164 = vmul.f32 %v141, %v155
    %v165 = vmul.f32 %v142, %v155
    %v166 = vmul.f32 %v143, %v155
    %v167 = vmul.f32 %v144, %v155
    %v168 = vmul.f32 %v145, %v155
    %v169 = vmul.f32 %v146, %v155
    %v170 = vmul.f32 %v147, %v155
    %v171 = vmul.f32 %v148, %v155
    %v172 = vmul.f32 %v149, %v155
    %v173 = vld [vmem:[#allocation10] sm:$0x1]
    %v175 = vlaneseq
    %v176 = vshrl.u32 %v175, 7
    %v177 = vsub.s32 0, %v176
    %v178 = vrot.slane %v173, %v177
    %v180 = vadd.f32 %v157, %v178
    %v181 = vadd.f32 %v158, %v178
    %v182 = vadd.f32 %v159, %v178
    %v183 = vadd.f32 %v160, %v178
    %v184 = vadd.f32 %v161, %v178
    %v185 = vadd.f32 %v162, %v178
    %v186 = vadd.f32 %v163, %v178
    %v187 = vadd.f32 %v164, %v178
    %v188 = vadd.f32 %v165, %v178
    %v189 = vadd.f32 %v166, %v178
    %v190 = vadd.f32 %v167, %v178
    %v191 = vadd.f32 %v168, %v178
    %v192 = vadd.f32 %v169, %v178
    %v193 = vadd.f32 %v170, %v178
    %v194 = vadd.f32 %v171, %v178
    %v195 = vadd.f32 %v172, %v178
    %vm196 = vcmp.ge.f32.partialorder %v180, 0.0
    %vm197 = vcmp.ge.f32.partialorder %v181, 0.0
    %vm198 = vcmp.ge.f32.partialorder %v182, 0.0
    %vm199 = vcmp.ge.f32.partialorder %v183, 0.0
    %vm200 = vcmp.ge.f32.partialorder %v184, 0.0
    %vm201 = vcmp.ge.f32.partialorder %v185, 0.0
    %vm202 = vcmp.ge.f32.partialorder %v186, 0.0
    %vm203 = vcmp.ge.f32.partialorder %v187, 0.0
    %vm204 = vcmp.ge.f32.partialorder %v188, 0.0
    %vm205 = vcmp.ge.f32.partialorder %v189, 0.0
    %vm206 = vcmp.ge.f32.partialorder %v190, 0.0
    %vm207 = vcmp.ge.f32.partialorder %v191, 0.0
    %vm208 = vcmp.ge.f32.partialorder %v192, 0.0
    %vm209 = vcmp.ge.f32.partialorder %v193, 0.0
    %vm210 = vcmp.ge.f32.partialorder %v194, 0.0
    %vm211 = vcmp.ge.f32.partialorder %v195, 0.0
    %v212 = vmul.f32 %v180, 0.3
    %v213 = vmul.f32 %v181, 0.3
    %v214 = vmul.f32 %v182, 0.3
    %v215 = vmul.f32 %v183, 0.3
    %v216 = vmul.f32 %v184, 0.3
    %v217 = vmul.f32 %v185, 0.3
    %v218 = vmul.f32 %v186, 0.3
    %v219 = vmul.f32 %v187, 0.3
    %v220 = vmul.f32 %v188, 0.3
    %v221 = vmul.f32 %v189, 0.3
    %v222 = vmul.f32 %v190, 0.3
    %v223 = vmul.f32 %v191, 0.3
    %v224 = vmul.f32 %v192, 0.3
    %v225 = vmul.f32 %v193, 0.3
    %v226 = vmul.f32 %v194, 0.3
    %v227 = vmul.f32 %v195, 0.3
    %v228 = vsel %vm196, %v180, %v212
    %v229 = vsel %vm197, %v181, %v213
    %v230 = vsel %vm198, %v182, %v214
    %v231 = vsel %vm199, %v183, %v215
    %v232 = vsel %vm200, %v184, %v216
    %v233 = vsel %vm201, %v185, %v217
    %v234 = vsel %vm202, %v186, %v218
    %v235 = vsel %vm203, %v187, %v219
    %v236 = vsel %vm204, %v188, %v220
    %v237 = vsel %vm205, %v189, %v221
    %v238 = vsel %vm206, %v190, %v222
    %v239 = vsel %vm207, %v191, %v223
    %v240 = vsel %vm208, %v192, %v224
    %v241 = vsel %vm209, %v193, %v225
    %v242 = vsel %vm210, %v194, %v226
    %v243 = vsel %vm211, %v195, %v227
    %244 = vst [vmem:[#allocation11] sm:$0xff] %v228
    %245 = vst [vmem:[#allocation11 + $0x8] sm:$0xff] %v229
    %246 = vst [vmem:[#allocation11 + $0x10] sm:$0xff] %v230
    %247 = vst [vmem:[#allocation11 + $0x18] sm:$0xff] %v231
    %248 = vst [vmem:[#allocation11 + $0x20] sm:$0xff] %v232
    %249 = vst [vmem:[#allocation11 + $0x28] sm:$0xff] %v233
    %250 = vst [vmem:[#allocation11 + $0x30] sm:$0xff] %v234
    %251 = vst [vmem:[#allocation11 + $0x38] sm:$0xff] %v235
    %252 = vst [vmem:[#allocation11 + $0x40] sm:$0xff] %v236
    %253 = vst [vmem:[#allocation11 + $0x48] sm:$0xff] %v237
    %254 = vst [vmem:[#allocation11 + $0x50] sm:$0xff] %v238
    %255 = vst [vmem:[#allocation11 + $0x58] sm:$0xff] %v239
    %256 = vst [vmem:[#allocation11 + $0x60] sm:$0xff] %v240
    %257 = vst [vmem:[#allocation11 + $0x68] sm:$0xff] %v241
    %258 = vst [vmem:[#allocation11 + $0x70] sm:$0xff] %v242
    %259 = vst [vmem:[#allocation11 + $0x78] sm:$0xff] %v243
    // Predicated region
    $region42: #{discriminator_forward.10} parent=1 // pred_check
      _
    $region43: #{discriminator_forward.10} parent=1 // pred_check_branch
      %261 = sbr.rel (0) target = $region45
    $region44: #{discriminator_forward.10} parent=1 // pred_region
      %s263 = ssub.s32 2048, 2048
      %264 = vsyncadd [#allocation4], %s263
      %s265 = sshll.u32 [#allocation11], 4
      %s266 = int_to_ptr.vmem [resolvable:$true] %s265
      %271 = dma.vmem_to_hbm [thread:$0]  %s266, 2048, %s5, [#allocation4], 128, 128, 8
    $region45: #{discriminator_forward.10} parent=1 // pred_fallthru
      _
    // Predicated region
    $region46: #{discriminator_forward.10} parent=1 // pred_check
      _
    $region47: #{discriminator_forward.10} parent=1 // pred_check_branch
      %273 = sbr.rel (0) target = $region49
    $region48: #{discriminator_forward.10} parent=1 // pred_region
      %274 = dma.done [#allocation4], 2048
    $region49: #{discriminator_forward.10} parent=1 // pred_fallthru
      _
    %275 = vsyncpa [#allocation3], 1
    %276 = vsyncpa [#allocation6], 1
    %277 = vsyncpa [#allocation9], 1
    %278 = vsyncpa [#allocation4], 1

// kernel: discriminator_forward.11
$region0: #{discriminator_forward.11}
  #allocation0 [shape = 'u32[]', space=smem, size = 0x4, offset = 0x4, fixed_abs, tag = 'smem constant byte address 0x4 - core index']
  #allocation1 [shape = 'u32[144,128]{1,0:T(1,128)}', space=vmem, size = 0x12000, scoped, tag = 'internal scratch']
  #allocation2 [shape = 'f32[32,128]{1,0:T(8,128)}', space=vmem, size = 0x4000, scoped, tag = 'scratch operand']
  %s0 = inlined_call_operand.hbm [shape: bf16[32,128], index: 0, kind: input, shape index: {}]
  %s1 = inlined_call_operand.hbm [shape: bf16[128,128], index: 1, kind: input, shape index: {}]
  %s2 = inlined_call_operand.hbm [shape: f32[32,128], index: 2, kind: output, shape index: {0}]
  %s3 = inlined_call_operand.hbm [shape: f32[1,128], index: 3, kind: output, shape index: {1}]
  %s4 = inlined_call_operand.hbm [shape: f32[1,128], index: 4, kind: output, shape index: {2}]
  %5 = xla_tuple %s2, %s3, %s4
  %s6 = sld [smem:[#allocation0]]
  $region54: #{discriminator_forward.11} parent=0
    _
  %s8 = ssub.s32 1, %s6
  %s9 = scalar_select 0, %s8, %s6
  $region1: #{discriminator_forward.11} parent=0
    #allocation3 [shape = 'u8[8192]{0}', space=vmem, size = 0x2000, scoped, tag = 'input window, operand 0, single buffered']
    #allocation4 [shape = 's32[1]{0}', space=sflag, size = 0x4, scoped, tag = 'scoped memory for discriminator_forward.11']
    #allocation5 [shape = 's32[1]{0}', space=sflag, size = 0x4, scoped, tag = 'scoped memory for discriminator_forward.11']
    #allocation6 [shape = 'u8[32768]{0}', space=vmem, size = 0x8000, scoped, tag = 'input window, operand 1, single buffered']
    #allocation7 [shape = 's32[1]{0}', space=sflag, size = 0x4, scoped, tag = 'scoped memory for discriminator_forward.11']
    #allocation8 [shape = 'u8[16384]{0}', space=vmem, size = 0x4000, scoped, tag = 'output window, operand 0, single buffered']
    #allocation9 [shape = 'u8[512]{0}', space=vmem, size = 0x400, scoped, tag = 'output window, operand 1, single buffered']
    #allocation10 [shape = 's32[1]{0}', space=sflag, size = 0x4, scoped, tag = 'scoped memory for discriminator_forward.11']
    #allocation11 [shape = 'u8[512]{0}', space=vmem, size = 0x400, scoped, tag = 'output window, operand 2, single buffered']
    %10 = vsyncpa [#allocation4], 0
    %11 = vsyncpa [#allocation7], 0
    %12 = vsyncpa [#allocation5], 0
    %13 = vsyncpa [#allocation10], 0
    // Predicated region
    $region2: #{discriminator_forward.11} parent=1 // pred_check
      _
    $region3: #{discriminator_forward.11} parent=1 // pred_check_branch
      %15 = sbr.rel (0) target = $region5
    $region4: #{discriminator_forward.11} parent=1 // pred_region
      %s17 = ssub.s32 256, 256
      %18 = vsyncadd [#allocation4], %s17
      %s19 = sshll.u32 [#allocation3], 4
      %s20 = int_to_ptr.vmem [resolvable:$true] %s19
      %25 = dma.hbm_to_vmem [thread:$0]  %s0, 256, %s20, [#allocation4], 64, 64, 4
    $region5: #{discriminator_forward.11} parent=1 // pred_fallthru
      _
    // Predicated region
    $region6: #{discriminator_forward.11} parent=1 // pred_check
      _
    $region7: #{discriminator_forward.11} parent=1 // pred_check_branch
      %27 = sbr.rel (0) target = $region9
    $region8: #{discriminator_forward.11} parent=1 // pred_region
      %s29 = ssub.s32 1024, 1024
      %30 = vsyncadd [#allocation7], %s29
      %s31 = sshll.u32 [#allocation6], 4
      %s32 = int_to_ptr.vmem [resolvable:$true] %s31
      %37 = dma.hbm_to_vmem [thread:$0]  %s1, 1024, %s32, [#allocation7], 64, 64, 4
    $region9: #{discriminator_forward.11} parent=1 // pred_fallthru
      _
    // Predicated region
    $region10: #{discriminator_forward.11} parent=1 // pred_check
      _
    $region11: #{discriminator_forward.11} parent=1 // pred_check_branch
      %39 = sbr.rel (0) target = $region13
    $region12: #{discriminator_forward.11} parent=1 // pred_region
      %40 = dma.done [#allocation4], 256
    $region13: #{discriminator_forward.11} parent=1 // pred_fallthru
      _
    // Predicated region
    $region14: #{discriminator_forward.11} parent=1 // pred_check
      _
    $region15: #{discriminator_forward.11} parent=1 // pred_check_branch
      %42 = sbr.rel (0) target = $region17
    $region16: #{discriminator_forward.11} parent=1 // pred_region
      %43 = dma.done [#allocation7], 1024
    $region17: #{discriminator_forward.11} parent=1 // pred_fallthru
      _
    %p45 = scmp.eq.s32.totalorder 0, 0
    // Predicated region
    $region18: #{discriminator_forward.11} parent=1 // pred_check
      %p46 = pneg %p45
    $region19: #{discriminator_forward.11} parent=1 // pred_check_branch
      %48 = sbr.rel (%p46) target = $region21
    $region20: #{discriminator_forward.11} parent=1 // pred_region
      %49 = vst [vmem:[#allocation2] sm:$0xff] 0.0
      %50 = vst [vmem:[#allocation2 + $0x8] sm:$0xff] 0.0
      %51 = vst [vmem:[#allocation2 + $0x10] sm:$0xff] 0.0
      %52 = vst [vmem:[#allocation2 + $0x18] sm:$0xff] 0.0
    $region21: #{discriminator_forward.11} parent=1 // pred_fallthru
      _
    %p53 = scmp.eq.s32.totalorder 0, 0
    %p54 = pnand %p53, %p45
    %p55 = pneg %p54
    // Predicated region
    $region22: #{discriminator_forward.11} parent=1 // pred_check
      _
    $region23: #{discriminator_forward.11} parent=1 // pred_check_branch
      %57 = sbr.rel (%p54) target = $region25
    $region24: #{discriminator_forward.11} parent=1 // pred_region
      %58 = vst [vmem:[#allocation9] sm:$0x1] 0.0
      %59 = vst [vmem:[#allocation11] sm:$0x1] 0.0
    $region25: #{discriminator_forward.11} parent=1 // pred_fallthru
      _
    %v60 = vld [vmem:[#allocation2] sm:$0xff]
    %v61 = vld [vmem:[#allocation2 + $0x8] sm:$0xff]
    %v62 = vld [vmem:[#allocation2 + $0x10] sm:$0xff]
    %v63 = vld [vmem:[#allocation2 + $0x18] sm:$0xff]
    %v64 = vld [vmem:[#allocation3] sm:$0xf]
    %v65 = vld [vmem:[#allocation3 + $0x4] sm:$0xf]
    %v66 = vld [vmem:[#allocation3 + $0x8] sm:$0xf]
    %v67 = vld [vmem:[#allocation3 + $0xc] sm:$0xf]
    %v68 = vld [vmem:[#allocation6] sm:$0xf]
    %v69 = vld [vmem:[#allocation6 + $0x4] sm:$0xf]
    %v70 = vld [vmem:[#allocation6 + $0x8] sm:$0xf]
    %v71 = vld [vmem:[#allocation6 + $0xc] sm:$0xf]
    %v72 = vld [vmem:[#allocation6 + $0x10] sm:$0xf]
    %v73 = vld [vmem:[#allocation6 + $0x14] sm:$0xf]
    %v74 = vld [vmem:[#allocation6 + $0x18] sm:$0xf]
    %v75 = vld [vmem:[#allocation6 + $0x1c] sm:$0xf]
    %v76 = vld [vmem:[#allocation6 + $0x20] sm:$0xf]
    %v77 = vld [vmem:[#allocation6 + $0x24] sm:$0xf]
    %v78 = vld [vmem:[#allocation6 + $0x28] sm:$0xf]
    %v79 = vld [vmem:[#allocation6 + $0x2c] sm:$0xf]
    %v80 = vld [vmem:[#allocation6 + $0x30] sm:$0xf]
    %v81 = vld [vmem:[#allocation6 + $0x34] sm:$0xf]
    %v82 = vld [vmem:[#allocation6 + $0x38] sm:$0xf]
    %v83 = vld [vmem:[#allocation6 + $0x3c] sm:$0xf]
    %v88 = vunpack.c.l.b16 %v64
    %v89 = vunpack.c.l.b16 %v65
    %v90 = vunpack.c.l.b16 %v66
    %v91 = vunpack.c.l.b16 %v67
    %v92 = vpack.c.b16 %v89, %v88
    %v93 = vpack.c.b16 %v91, %v90
    %v112 = vunpack.c.l.b16 %v68
    %v113 = vunpack.c.l.b16 %v69
    %v114 = vunpack.c.l.b16 %v70
    %v115 = vunpack.c.l.b16 %v71
    %v116 = vunpack.c.l.b16 %v72
    %v117 = vunpack.c.l.b16 %v73
    %v118 = vunpack.c.l.b16 %v74
    %v119 = vunpack.c.l.b16 %v75
    %v120 = vunpack.c.l.b16 %v76
    %v121 = vunpack.c.l.b16 %v77
    %v122 = vunpack.c.l.b16 %v78
    %v123 = vunpack.c.l.b16 %v79
    %v124 = vunpack.c.l.b16 %v80
    %v125 = vunpack.c.l.b16 %v81
    %v126 = vunpack.c.l.b16 %v82
    %v127 = vunpack.c.l.b16 %v83
    %v128 = vpack.c.b16 %v113, %v112
    %v129 = vpack.c.b16 %v115, %v114
    %v130 = vpack.c.b16 %v117, %v116
    %v131 = vpack.c.b16 %v119, %v118
    %v132 = vpack.c.b16 %v121, %v120
    %v133 = vpack.c.b16 %v123, %v122
    %v134 = vpack.c.b16 %v125, %v124
    %v135 = vpack.c.b16 %v127, %v126
    %144 = vmatprep.subr.bf16.mxu0 0
    %145 = vmatpush1.bf16.msra.mxu0 %v128
    %146 = vmatprep.subr.bf16.mxu0 0
    %147 = vmatpush1.bf16.msra.mxu0 %v129
    %148 = vmatprep.subr.bf16.mxu0 0
    %149 = vmatpush1.bf16.msra.mxu0 %v130
    %150 = vmatprep.subr.bf16.mxu0 0
    %151 = vmatpush1.bf16.msra.mxu0 %v131
    %152 = vmatprep.subr.bf16.mxu0 0
    %153 = vmatpush1.bf16.msra.mxu0 %v132
    %154 = vmatprep.subr.bf16.mxu0 0
    %155 = vmatpush1.bf16.msra.mxu0 %v133
    %156 = vmatprep.subr.bf16.mxu0 0
    %157 = vmatpush1.bf16.msra.mxu0 %v134
    %158 = vmatprep.subr.bf16.mxu0 0
    %159 = vmatpush1.bf16.msra.mxu0 %v135
    %160 = vmatprep.subr.bf16.mxu0 0
    %161 = vmatpush1.bf16.msra.mxu0 0
    %162 = vmatprep.subr.bf16.mxu0 0
    %163 = vmatpush1.bf16.msra.mxu0 0
    %164 = vmatprep.subr.bf16.mxu0 0
    %165 = vmatpush1.bf16.msra.mxu0 0
    %166 = vmatprep.subr.bf16.mxu0 0
    %167 = vmatpush1.bf16.msra.mxu0 0
    %168 = vmatprep.subr.bf16.mxu0 0
    %169 = vmatpush1.bf16.msra.mxu0 0
    %170 = vmatprep.subr.bf16.mxu0 0
    %171 = vmatpush1.bf16.msra.mxu0 0
    %172 = vmatprep.subr.bf16.mxu0 0
    %173 = vmatpush1.bf16.msra.mxu0 0
    %174 = vmatprep.subr.bf16.mxu0 0
    %175 = vmatpush1.bf16.msra.mxu0 0
    %176 = vmatprep.mubr.bf16.mxu0 0
    %177 = vmatmul.mubr.bf16.gmra.mrb[0].mxu0 %v92
    %v178 = vpop.f32.mrb[0].mxu0
    %v179 = vadd.f32 0.0, %v178
    %v180 = vpop.f32.mrb[0].mxu0
    %v181 = vpop.f32.mrb[0].mxu0
    %v182 = vadd.f32 0.0, %v181
    %v183 = vpop.f32.mrb[0].mxu0
    %184 = vmatprep.mubr.bf16.mxu0 0
    %185 = vmatmul.mubr.bf16.gmra.mrb[0].mxu0 %v93
    %v186 = vpop.f32.mrb[0].mxu0
    %v187 = vadd.f32 0.0, %v186
    %v188 = vpop.f32.mrb[0].mxu0
    %v189 = vpop.f32.mrb[0].mxu0
    %v190 = vadd.f32 0.0, %v189
    %v191 = vpop.f32.mrb[0].mxu0
    %192 = vdwg.mxu0
    %v193 = vadd.f32 %v60, %v179
    %v194 = vadd.f32 %v61, %v182
    %v195 = vadd.f32 %v62, %v187
    %v196 = vadd.f32 %v63, %v190
    %197 = vst [vmem:[#allocation2] sm:$0xff] %v193
    %198 = vst [vmem:[#allocation2 + $0x8] sm:$0xff] %v194
    %199 = vst [vmem:[#allocation2 + $0x10] sm:$0xff] %v195
    %200 = vst [vmem:[#allocation2 + $0x18] sm:$0xff] %v196
    // Predicated region
    $region26: #{discriminator_forward.11} parent=1 // pred_check
      %p201 = pneg %p45
    $region27: #{discriminator_forward.11} parent=1 // pred_check_branch
      %203 = sbr.rel (%p201) target = $region29
    $region28: #{discriminator_forward.11} parent=1 // pred_region
      %v204 = vld [vmem:[#allocation2] sm:$0xff]
      %v205 = vld [vmem:[#allocation2 + $0x8] sm:$0xff]
      %v206 = vld [vmem:[#allocation2 + $0x10] sm:$0xff]
      %v207 = vld [vmem:[#allocation2 + $0x18] sm:$0xff]
      %208 = vst [vmem:[#allocation8] sm:$0xff] %v204
      %209 = vst [vmem:[#allocation8 + $0x8] sm:$0xff] %v205
      %210 = vst [vmem:[#allocation8 + $0x10] sm:$0xff] %v206
      %211 = vst [vmem:[#allocation8 + $0x18] sm:$0xff] %v207
      %v212 = vld [vmem:[#allocation9] sm:$0x1]
      %v213 = vadd.f32 %v204, %v205
      %v214 = vadd.f32 %v213, %v206
      %v215 = vadd.f32 %v214, %v207
      %v216 = vrot.slane %v215, 4
      %v217 = vadd.f32 %v215, %v216
      %v218 = vrot.slane %v217, 2
      %v219 = vadd.f32 %v217, %v218
      %v220 = vrot.slane %v219, 1
      %v221 = vadd.f32 %v219, %v220
      %v222 = vadd.f32 %v212, %v221
      %223 = vst [vmem:[#allocation9] sm:$0x1] %v222
      %v224 = vld [vmem:[#allocation11] sm:$0x1]
      %v225 = vmul.f32 %v204, %v204
      %v226 = vmul.f32 %v205, %v205
      %v227 = vmul.f32 %v206, %v206
      %v228 = vmul.f32 %v207, %v207
      %v229 = vadd.f32 %v225, %v226
      %v230 = vadd.f32 %v229, %v227
      %v231 = vadd.f32 %v230, %v228
      %v232 = vrot.slane %v231, 4
      %v233 = vadd.f32 %v231, %v232
      %v234 = vrot.slane %v233, 2
      %v235 = vadd.f32 %v233, %v234
      %v236 = vrot.slane %v235, 1
      %v237 = vadd.f32 %v235, %v236
      %v238 = vadd.f32 %v224, %v237
      %239 = vst [vmem:[#allocation11] sm:$0x1] %v238
    $region29: #{discriminator_forward.11} parent=1 // pred_fallthru
      _
    // Predicated region
    $region30: #{discriminator_forward.11} parent=1 // pred_check
      _
    $region31: #{discriminator_forward.11} parent=1 // pred_check_branch
      %241 = sbr.rel (0) target = $region33
    $region32: #{discriminator_forward.11} parent=1 // pred_region
      %s243 = ssub.s32 512, 512
      %244 = vsyncadd [#allocation5], %s243
      %s245 = sshll.u32 [#allocation8], 4
      %s246 = int_to_ptr.vmem [resolvable:$true] %s245
      %251 = dma.vmem_to_hbm [thread:$0]  %s246, 512, %s2, [#allocation5], 128, 128, 8
    $region33: #{discriminator_forward.11} parent=1 // pred_fallthru
      _
    // Predicated region
    $region34: #{discriminator_forward.11} parent=1 // pred_check
      _
    $region35: #{discriminator_forward.11} parent=1 // pred_check_branch
      %253 = sbr.rel (0) target = $region37
    $region36: #{discriminator_forward.11} parent=1 // pred_region
      %s255 = ssub.s32 16, 16
      %256 = vsyncadd [#allocation10], %s255
      %s258 = sshll.u32 [#allocation9], 4
      %s259 = int_to_ptr.vmem [resolvable:$true] %s258
      %261 = dma.vmem_to_hbm [thread:$0]  %s259, 16, %s3, [#allocation10]
    $region37: #{discriminator_forward.11} parent=1 // pred_fallthru
      _
    // Predicated region
    $region38: #{discriminator_forward.11} parent=1 // pred_check
      _
    $region39: #{discriminator_forward.11} parent=1 // pred_check_branch
      %263 = sbr.rel (0) target = $region41
    $region40: #{discriminator_forward.11} parent=1 // pred_region
      %s265 = ssub.s32 16, 16
      %266 = vsyncadd [#allocation10], %s265
      %s268 = sshll.u32 [#allocation11], 4
      %s269 = int_to_ptr.vmem [resolvable:$true] %s268
      %271 = dma.vmem_to_hbm [thread:$0]  %s269, 16, %s4, [#allocation10]
    $region41: #{discriminator_forward.11} parent=1 // pred_fallthru
      _
    // Predicated region
    $region42: #{discriminator_forward.11} parent=1 // pred_check
      _
    $region43: #{discriminator_forward.11} parent=1 // pred_check_branch
      %273 = sbr.rel (0) target = $region45
    $region44: #{discriminator_forward.11} parent=1 // pred_region
      %274 = dma.done [#allocation5], 512
    $region45: #{discriminator_forward.11} parent=1 // pred_fallthru
      _
    // Predicated region
    $region46: #{discriminator_forward.11} parent=1 // pred_check
      _
    $region47: #{discriminator_forward.11} parent=1 // pred_check_branch
      %276 = sbr.rel (0) target = $region49
    $region48: #{discriminator_forward.11} parent=1 // pred_region
      %277 = dma.done [#allocation10], 16
    $region49: #{discriminator_forward.11} parent=1 // pred_fallthru
      _
    // Predicated region
    $region50: #{discriminator_forward.11} parent=1 // pred_check
      _
    $region51: #{discriminator_forward.11} parent=1 // pred_check_branch
      %279 = sbr.rel (0) target = $region53
    $region52: #{discriminator_forward.11} parent=1 // pred_region
      %280 = dma.done [#allocation10], 16
    $region53: #{discriminator_forward.11} parent=1 // pred_fallthru
      _
    %281 = vsyncpa [#allocation4], 1
    %282 = vsyncpa [#allocation7], 1
    %283 = vsyncpa [#allocation5], 1
    %284 = vsyncpa [#allocation10], 1

// kernel: discriminator_forward.12
$region0: #{discriminator_forward.12}
  #allocation0 [shape = 'u32[]', space=smem, size = 0x4, offset = 0x4, fixed_abs, tag = 'smem constant byte address 0x4 - core index']
  #allocation1 [shape = 'u32[144,128]{1,0:T(1,128)}', space=vmem, size = 0x12000, scoped, tag = 'internal scratch']
  %s0 = inlined_call_operand.hbm [shape: f32[32,128], index: 0, kind: input, shape index: {}]
  %s1 = inlined_call_operand.hbm [shape: f32[1,128], index: 1, kind: input, shape index: {}]
  %s2 = inlined_call_operand.hbm [shape: f32[1,128], index: 2, kind: input, shape index: {}]
  %s3 = inlined_call_operand.hbm [shape: f32[1,128], index: 3, kind: input, shape index: {}]
  %s4 = inlined_call_operand.hbm [shape: f32[1,128], index: 4, kind: input, shape index: {}]
  %s5 = inlined_call_operand.hbm [shape: f32[32,128], index: 5, kind: output, shape index: {}]
  %s6 = sld [smem:[#allocation0]]
  $region50: #{discriminator_forward.12} parent=0
    _
  %s8 = ssub.s32 1, %s6
  %s9 = scalar_select 0, %s8, %s6
  $region1: #{discriminator_forward.12} parent=0
    #allocation2 [shape = 'u8[16384]{0}', space=vmem, size = 0x4000, scoped, tag = 'input window, operand 0, single buffered']
    #allocation3 [shape = 's32[1]{0}', space=sflag, size = 0x4, scoped, tag = 'scoped memory for discriminator_forward.12']
    #allocation4 [shape = 's32[1]{0}', space=sflag, size = 0x4, scoped, tag = 'scoped memory for discriminator_forward.12']
    #allocation5 [shape = 'u8[512]{0}', space=vmem, size = 0x400, scoped, tag = 'input window, operand 1, single buffered']
    #allocation6 [shape = 's32[1]{0}', space=sflag, size = 0x4, scoped, tag = 'scoped memory for discriminator_forward.12']
    #allocation7 [shape = 'u8[512]{0}', space=vmem, size = 0x400, scoped, tag = 'input window, operand 2, single buffered']
    #allocation8 [shape = 'u8[512]{0}', space=vmem, size = 0x400, scoped, tag = 'input window, operand 3, single buffered']
    #allocation9 [shape = 's32[1]{0}', space=sflag, size = 0x4, scoped, tag = 'scoped memory for discriminator_forward.12']
    #allocation10 [shape = 'u8[512]{0}', space=vmem, size = 0x400, scoped, tag = 'input window, operand 4, single buffered']
    #allocation11 [shape = 'u8[16384]{0}', space=vmem, size = 0x4000, scoped, tag = 'output window, operand 0, single buffered']
    %10 = vsyncpa [#allocation3], 0
    %11 = vsyncpa [#allocation6], 0
    %12 = vsyncpa [#allocation9], 0
    %13 = vsyncpa [#allocation4], 0
    // Predicated region
    $region2: #{discriminator_forward.12} parent=1 // pred_check
      _
    $region3: #{discriminator_forward.12} parent=1 // pred_check_branch
      %15 = sbr.rel (0) target = $region5
    $region4: #{discriminator_forward.12} parent=1 // pred_region
      %s17 = ssub.s32 512, 512
      %18 = vsyncadd [#allocation3], %s17
      %s19 = sshll.u32 [#allocation2], 4
      %s20 = int_to_ptr.vmem [resolvable:$true] %s19
      %25 = dma.hbm_to_vmem [thread:$0]  %s0, 512, %s20, [#allocation3], 128, 128, 8
    $region5: #{discriminator_forward.12} parent=1 // pred_fallthru
      _
    // Predicated region
    $region6: #{discriminator_forward.12} parent=1 // pred_check
      _
    $region7: #{discriminator_forward.12} parent=1 // pred_check_branch
      %27 = sbr.rel (0) target = $region9
    $region8: #{discriminator_forward.12} parent=1 // pred_region
      %s29 = ssub.s32 16, 16
      %30 = vsyncadd [#allocation6], %s29
      %s32 = sshll.u32 [#allocation5], 4
      %s33 = int_to_ptr.vmem [resolvable:$true] %s32
      %35 = dma.hbm_to_vmem [thread:$0]  %s1, 16, %s33, [#allocation6]
    $region9: #{discriminator_forward.12} parent=1 // pred_fallthru
      _
    // Predicated region
    $region10: #{discriminator_forward.12} parent=1 // pred_check
      _
    $region11: #{discriminator_forward.12} parent=1 // pred_check_branch
      %37 = sbr.rel (0) target = $region13
    $region12: #{discriminator_forward.12} parent=1 // pred_region
      %s39 = ssub.s32 16, 16
      %40 = vsyncadd [#allocation6], %s39
      %s42 = sshll.u32 [#allocation7], 4
      %s43 = int_to_ptr.vmem [resolvable:$true] %s42
      %45 = dma.hbm_to_vmem [thread:$0]  %s2, 16, %s43, [#allocation6]
    $region13: #{discriminator_forward.12} parent=1 // pred_fallthru
      _
    // Predicated region
    $region14: #{discriminator_forward.12} parent=1 // pred_check
      _
    $region15: #{discriminator_forward.12} parent=1 // pred_check_branch
      %47 = sbr.rel (0) target = $region17
    $region16: #{discriminator_forward.12} parent=1 // pred_region
      %s49 = ssub.s32 16, 16
      %50 = vsyncadd [#allocation9], %s49
      %s52 = sshll.u32 [#allocation8], 4
      %s53 = int_to_ptr.vmem [resolvable:$true] %s52
      %55 = dma.hbm_to_vmem [thread:$0]  %s3, 16, %s53, [#allocation9]
    $region17: #{discriminator_forward.12} parent=1 // pred_fallthru
      _
    // Predicated region
    $region18: #{discriminator_forward.12} parent=1 // pred_check
      _
    $region19: #{discriminator_forward.12} parent=1 // pred_check_branch
      %57 = sbr.rel (0) target = $region21
    $region20: #{discriminator_forward.12} parent=1 // pred_region
      %s59 = ssub.s32 16, 16
      %60 = vsyncadd [#allocation9], %s59
      %s62 = sshll.u32 [#allocation10], 4
      %s63 = int_to_ptr.vmem [resolvable:$true] %s62
      %65 = dma.hbm_to_vmem [thread:$0]  %s4, 16, %s63, [#allocation9]
    $region21: #{discriminator_forward.12} parent=1 // pred_fallthru
      _
    // Predicated region
    $region22: #{discriminator_forward.12} parent=1 // pred_check
      _
    $region23: #{discriminator_forward.12} parent=1 // pred_check_branch
      %67 = sbr.rel (0) target = $region25
    $region24: #{discriminator_forward.12} parent=1 // pred_region
      %68 = dma.done [#allocation3], 512
    $region25: #{discriminator_forward.12} parent=1 // pred_fallthru
      _
    // Predicated region
    $region26: #{discriminator_forward.12} parent=1 // pred_check
      _
    $region27: #{discriminator_forward.12} parent=1 // pred_check_branch
      %70 = sbr.rel (0) target = $region29
    $region28: #{discriminator_forward.12} parent=1 // pred_region
      %71 = dma.done [#allocation6], 16
    $region29: #{discriminator_forward.12} parent=1 // pred_fallthru
      _
    // Predicated region
    $region30: #{discriminator_forward.12} parent=1 // pred_check
      _
    $region31: #{discriminator_forward.12} parent=1 // pred_check_branch
      %73 = sbr.rel (0) target = $region33
    $region32: #{discriminator_forward.12} parent=1 // pred_region
      %74 = dma.done [#allocation6], 16
    $region33: #{discriminator_forward.12} parent=1 // pred_fallthru
      _
    // Predicated region
    $region34: #{discriminator_forward.12} parent=1 // pred_check
      _
    $region35: #{discriminator_forward.12} parent=1 // pred_check_branch
      %76 = sbr.rel (0) target = $region37
    $region36: #{discriminator_forward.12} parent=1 // pred_region
      %77 = dma.done [#allocation9], 16
    $region37: #{discriminator_forward.12} parent=1 // pred_fallthru
      _
    // Predicated region
    $region38: #{discriminator_forward.12} parent=1 // pred_check
      _
    $region39: #{discriminator_forward.12} parent=1 // pred_check_branch
      %79 = sbr.rel (0) target = $region41
    $region40: #{discriminator_forward.12} parent=1 // pred_region
      %80 = dma.done [#allocation9], 16
    $region41: #{discriminator_forward.12} parent=1 // pred_fallthru
      _
    %v81 = vld [vmem:[#allocation2] sm:$0xff]
    %v82 = vld [vmem:[#allocation2 + $0x8] sm:$0xff]
    %v83 = vld [vmem:[#allocation2 + $0x10] sm:$0xff]
    %v84 = vld [vmem:[#allocation2 + $0x18] sm:$0xff]
    %v85 = vld [vmem:[#allocation5] sm:$0x1]
    %v86 = vmul.f32 %v85, 0.03125
    %v87 = vld [vmem:[#allocation7] sm:$0x1]
    %v88 = vmul.f32 %v87, 0.03125
    %v89 = vmul.f32 %v86, %v86
    %v90 = vsub.f32 %v88, %v89
    %v91 = vmax.f32 %v90, 0.0
    %v93 = vlaneseq
    %v94 = vshrl.u32 %v93, 7
    %v95 = vsub.s32 0, %v94
    %v96 = vrot.slane %v86, %v95
    %v98 = vsub.f32 %v81, %v96
    %v99 = vsub.f32 %v82, %v96
    %v100 = vsub.f32 %v83, %v96
    %v101 = vsub.f32 %v84, %v96
    %v102 = vadd.f32 %v91, 1e-05
    %v103 = vrsqrt.pop %v102
    %v105 = vlaneseq
    %v106 = vshrl.u32 %v105, 7
    %v107 = vsub.s32 0, %v106
    %v108 = vrot.slane %v103, %v107
    %v110 = vmul.f32 %v98, %v108
    %v111 = vmul.f32 %v99, %v108
    %v112 = vmul.f32 %v100, %v108
    %v113 = vmul.f32 %v101, %v108
    %v114 = vld [vmem:[#allocation8] sm:$0x1]
    %v116 = vlaneseq
    %v117 = vshrl.u32 %v116, 7
    %v118 = vsub.s32 0, %v117
    %v119 = vrot.slane %v114, %v118
    %v121 = vmul.f32 %v110, %v119
    %v122 = vmul.f32 %v111, %v119
    %v123 = vmul.f32 %v112, %v119
    %v124 = vmul.f32 %v113, %v119
    %v125 = vld [vmem:[#allocation10] sm:$0x1]
    %v127 = vlaneseq
    %v128 = vshrl.u32 %v127, 7
    %v129 = vsub.s32 0, %v128
    %v130 = vrot.slane %v125, %v129
    %v132 = vadd.f32 %v121, %v130
    %v133 = vadd.f32 %v122, %v130
    %v134 = vadd.f32 %v123, %v130
    %v135 = vadd.f32 %v124, %v130
    %vm136 = vcmp.ge.f32.partialorder %v132, 0.0
    %vm137 = vcmp.ge.f32.partialorder %v133, 0.0
    %vm138 = vcmp.ge.f32.partialorder %v134, 0.0
    %vm139 = vcmp.ge.f32.partialorder %v135, 0.0
    %v140 = vmul.f32 %v132, 0.3
    %v141 = vmul.f32 %v133, 0.3
    %v142 = vmul.f32 %v134, 0.3
    %v143 = vmul.f32 %v135, 0.3
    %v144 = vsel %vm136, %v132, %v140
    %v145 = vsel %vm137, %v133, %v141
    %v146 = vsel %vm138, %v134, %v142
    %v147 = vsel %vm139, %v135, %v143
    %148 = vst [vmem:[#allocation11] sm:$0xff] %v144
    %149 = vst [vmem:[#allocation11 + $0x8] sm:$0xff] %v145
    %150 = vst [vmem:[#allocation11 + $0x10] sm:$0xff] %v146
    %151 = vst [vmem:[#allocation11 + $0x18] sm:$0xff] %v147
    // Predicated region
    $region42: #{discriminator_forward.12} parent=1 // pred_check
      _
    $region43: #{discriminator_forward.12} parent=1 // pred_check_branch
      %153 = sbr.rel (0) target = $region45
    $region44: #{discriminator_forward.12} parent=1 // pred_region
      %s155 = ssub.s32 512, 512
      %156 = vsyncadd [#allocation4], %s155
      %s157 = sshll.u32 [#allocation11], 4
      %s158 = int_to_ptr.vmem [resolvable:$true] %s157
      %163 = dma.vmem_to_hbm [thread:$0]  %s158, 512, %s5, [#allocation4], 128, 128, 8
    $region45: #{discriminator_forward.12} parent=1 // pred_fallthru
      _
    // Predicated region
    $region46: #{discriminator_forward.12} parent=1 // pred_check
      _
    $region47: #{discriminator_forward.12} parent=1 // pred_check_branch
      %165 = sbr.rel (0) target = $region49
    $region48: #{discriminator_forward.12} parent=1 // pred_region
      %166 = dma.done [#allocation4], 512
    $region49: #{discriminator_forward.12} parent=1 // pred_fallthru
      _
    %167 = vsyncpa [#allocation3], 1
    %168 = vsyncpa [#allocation6], 1
    %169 = vsyncpa [#allocation9], 1
    %170 = vsyncpa [#allocation4], 1

// kernel: sub.10
$region0: #{sub.10}
  %s0 = inlined_call_operand.vmem [shape: f32[2,192], index: 0, kind: input, shape index: {}]
  %s1 = inlined_call_operand.vmem [shape: f32[2,64,3], index: 1, kind: output, shape index: {}]
  $region1: #{sub.10} parent=0
    #allocation0 [shape = 'u8[8192]{0}', space=vmem, size = 0x2000, scoped, tag = 'scoped mem for input reshape']
    %s3 = sshllo.u32 0, 2
    %s4 = scalar_lea.vmem %s0, 2
    %v5 = vld [vmem:[%s4] sm:%s3]
    %s6 = scalar_lea.vmem [#allocation0], 8
    %7 = vst [vmem:[%s6] sm:%s3] %v5
    %v8 = vld [vmem:[%s0] sm:%s3]
    %9 = vst [vmem:[#allocation0] sm:%s3] %v8
    %v10 = vld [vmem:[#allocation0] sm:$0x3]
    %vm11 = vcmask 23552
    %12 = vst.msk [vmem:[%s1] sm:$0x1] %vm11, %v10
    %s13 = scalar_lea.vmem %s1, 63
    %14 = vst.msk [vmem:[%s13] sm:$0x2] %vm11, %v10
    %s15 = scalar_lea.vmem [#allocation0], 8
    %v16 = vld [vmem:[%s15] sm:$0x3]
    %17 = vrot.lane.b32.xlu0 %v16, 127
    %v18 = vpop.permute.xlu0 %17
    %vm19 = vcmask 23552
    %s20 = scalar_lea.vmem %s1, 43
    %21 = vst.msk [vmem:[%s20] sm:$0x1] %vm19, %v18
    %s22 = scalar_lea.vmem %s1, 106
    %23 = vst.msk [vmem:[%s22] sm:$0x2] %vm19, %v18
    %v24 = vld [vmem:[#allocation0] sm:$0x3]
    %25 = vrot.lane.b32.xlu0 %v24, 125
    %v26 = vpop.permute.xlu0 %25
    %vm27 = vcmask 23552
    %s28 = scalar_lea.vmem %s1, 1
    %29 = vst.msk [vmem:[%s28] sm:$0x1] %vm27, %v26
    %s30 = scalar_lea.vmem %s1, 64
    %31 = vst.msk [vmem:[%s30] sm:$0x2] %vm27, %v26
    %s32 = scalar_lea.vmem [#allocation0], 8
    %v33 = vld [vmem:[%s32] sm:$0x3]
    %34 = vrot.lane.b32.xlu0 %v33, 124
    %v35 = vpop.permute.xlu0 %34
    %vm36 = vcmask 23552
    %s37 = scalar_lea.vmem %s1, 44
    %38 = vst.msk [vmem:[%s37] sm:$0x1] %vm36, %v35
    %s39 = scalar_lea.vmem %s1, 107
    %40 = vst.msk [vmem:[%s39] sm:$0x2] %vm36, %v35
    %v41 = vld [vmem:[#allocation0] sm:$0x3]
    %42 = vrot.lane.b32.xlu0 %v41, 122
    %v43 = vpop.permute.xlu0 %42
    %vm44 = vcmask 23552
    %s45 = scalar_lea.vmem %s1, 2
    %46 = vst.msk [vmem:[%s45] sm:$0x1] %vm44, %v43
    %s47 = scalar_lea.vmem %s1, 65
    %48 = vst.msk [vmem:[%s47] sm:$0x2] %vm44, %v43
    %s49 = scalar_lea.vmem [#allocation0], 8
    %v50 = vld [vmem:[%s49] sm:$0x3]
    %51 = vrot.lane.b32.xlu0 %v50, 121
    %v52 = vpop.permute.xlu0 %51
    %vm53 = vcmask 23552
    %s54 = scalar_lea.vmem %s1, 45
    %55 = vst.msk [vmem:[%s54] sm:$0x1] %vm53, %v52
    %s56 = scalar_lea.vmem %s1, 108
    %57 = vst.msk [vmem:[%s56] sm:$0x2] %vm53, %v52
    %v58 = vld [vmem:[#allocation0] sm:$0x3]
    %59 = vrot.lane.b32.xlu0 %v58, 119
    %v60 = vpop.permute.xlu0 %59
    %vm61 = vcmask 23552
    %s62 = scalar_lea.vmem %s1, 3
    %63 = vst.msk [vmem:[%s62] sm:$0x1] %vm61, %v60
    %s64 = scalar_lea.vmem %s1, 66
    %65 = vst.msk [vmem:[%s64] sm:$0x2] %vm61, %v60
    %s66 = scalar_lea.vmem [#allocation0], 8
    %v67 = vld [vmem:[%s66] sm:$0x3]
    %68 = vrot.lane.b32.xlu0 %v67, 118
    %v69 = vpop.permute.xlu0 %68
    %vm70 = vcmask 23552
    %s71 = scalar_lea.vmem %s1, 46
    %72 = vst.msk [vmem:[%s71] sm:$0x1] %vm70, %v69
    %s73 = scalar_lea.vmem %s1, 109
    %74 = vst.msk [vmem:[%s73] sm:$0x2] %vm70, %v69
    %v75 = vld [vmem:[#allocation0] sm:$0x3]
    %76 = vrot.lane.b32.xlu0 %v75, 116
    %v77 = vpop.permute.xlu0 %76
    %vm78 = vcmask 23552
    %s79 = scalar_lea.vmem %s1, 4
    %80 = vst.msk [vmem:[%s79] sm:$0x1] %vm78, %v77
    %s81 = scalar_lea.vmem %s1, 67
    %82 = vst.msk [vmem:[%s81] sm:$0x2] %vm78, %v77
    %s83 = scalar_lea.vmem [#allocation0], 8
    %v84 = vld [vmem:[%s83] sm:$0x3]
    %85 = vrot.lane.b32.xlu0 %v84, 115
    %v86 = vpop.permute.xlu0 %85
    %vm87 = vcmask 23552
    %s88 = scalar_lea.vmem %s1, 47
    %89 = vst.msk [vmem:[%s88] sm:$0x1] %vm87, %v86
    %s90 = scalar_lea.vmem %s1, 110
    %91 = vst.msk [vmem:[%s90] sm:$0x2] %vm87, %v86
    %v92 = vld [vmem:[#allocation0] sm:$0x3]
    %93 = vrot.lane.b32.xlu0 %v92, 113
    %v94 = vpop.permute.xlu0 %93
    %vm95 = vcmask 23552
    %s96 = scalar_lea.vmem %s1, 5
    %97 = vst.msk [vmem:[%s96] sm:$0x1] %vm95, %v94
    %s98 = scalar_lea.vmem %s1, 68
    %99 = vst.msk [vmem:[%s98] sm:$0x2] %vm95, %v94
    %s100 = scalar_lea.vmem [#allocation0], 8
    %v101 = vld [vmem:[%s100] sm:$0x3]
    %102 = vrot.lane.b32.xlu0 %v101, 112
    %v103 = vpop.permute.xlu0 %102
    %vm104 = vcmask 23552
    %s105 = scalar_lea.vmem %s1, 48
    %106 = vst.msk [vmem:[%s105] sm:$0x1] %vm104, %v103
    %s107 = scalar_lea.vmem %s1, 111
    %108 = vst.msk [vmem:[%s107] sm:$0x2] %vm104, %v103
    %v109 = vld [vmem:[#allocation0] sm:$0x3]
    %110 = vrot.lane.b32.xlu0 %v109, 110
    %v111 = vpop.permute.xlu0 %110
    %vm112 = vcmask 23552
    %s113 = scalar_lea.vmem %s1, 6
    %114 = vst.msk [vmem:[%s113] sm:$0x1] %vm112, %v111
    %s115 = scalar_lea.vmem %s1, 69
    %116 = vst.msk [vmem:[%s115] sm:$0x2] %vm112, %v111
    %s117 = scalar_lea.vmem [#allocation0], 8
    %v118 = vld [vmem:[%s117] sm:$0x3]
    %119 = vrot.lane.b32.xlu0 %v118, 109
    %v120 = vpop.permute.xlu0 %119
    %vm121 = vcmask 23552
    %s122 = scalar_lea.vmem %s1, 49
    %123 = vst.msk [vmem:[%s122] sm:$0x1] %vm121, %v120
    %s124 = scalar_lea.vmem %s1, 112
    %125 = vst.msk [vmem:[%s124] sm:$0x2] %vm121, %v120
    %v126 = vld [vmem:[#allocation0] sm:$0x3]
    %127 = vrot.lane.b32.xlu0 %v126, 107
    %v128 = vpop.permute.xlu0 %127
    %vm129 = vcmask 23552
    %s130 = scalar_lea.vmem %s1, 7
    %131 = vst.msk [vmem:[%s130] sm:$0x1] %vm129, %v128
    %s132 = scalar_lea.vmem %s1, 70
    %133 = vst.msk [vmem:[%s132] sm:$0x2] %vm129, %v128
    %s134 = scalar_lea.vmem [#allocation0], 8
    %v135 = vld [vmem:[%s134] sm:$0x3]
    %136 = vrot.lane.b32.xlu0 %v135, 106
    %v137 = vpop.permute.xlu0 %136
    %vm138 = vcmask 23552
    %s139 = scalar_lea.vmem %s1, 50
    %140 = vst.msk [vmem:[%s139] sm:$0x1] %vm138, %v137
    %s141 = scalar_lea.vmem %s1, 113
    %142 = vst.msk [vmem:[%s141] sm:$0x2] %vm138, %v137
    %v143 = vld [vmem:[#allocation0] sm:$0x3]
    %144 = vrot.lane.b32.xlu0 %v143, 104
    %v145 = vpop.permute.xlu0 %144
    %vm146 = vcmask 23552
    %s147 = scalar_lea.vmem %s1, 8
    %148 = vst.msk [vmem:[%s147] sm:$0x1] %vm146, %v145
    %s149 = scalar_lea.vmem %s1, 71
    %150 = vst.msk [vmem:[%s149] sm:$0x2] %vm146, %v145
    %s151 = scalar_lea.vmem [#allocation0], 8
    %v152 = vld [vmem:[%s151] sm:$0x3]
    %153 = vrot.lane.b32.xlu0 %v152, 103
    %v154 = vpop.permute.xlu0 %153
    %vm155 = vcmask 23552
    %s156 = scalar_lea.vmem %s1, 51
    %157 = vst.msk [vmem:[%s156] sm:$0x1] %vm155, %v154
    %s158 = scalar_lea.vmem %s1, 114
    %159 = vst.msk [vmem:[%s158] sm:$0x2] %vm155, %v154
    %v160 = vld [vmem:[#allocation0] sm:$0x3]
    %161 = vrot.lane.b32.xlu0 %v160, 101
    %v162 = vpop.permute.xlu0 %161
    %vm163 = vcmask 23552
    %s164 = scalar_lea.vmem %s1, 9
    %165 = vst.msk [vmem:[%s164] sm:$0x1] %vm163, %v162
    %s166 = scalar_lea.vmem %s1, 72
    %167 = vst.msk [vmem:[%s166] sm:$0x2] %vm163, %v162
    %s168 = scalar_lea.vmem [#allocation0], 8
    %v169 = vld [vmem:[%s168] sm:$0x3]
    %170 = vrot.lane.b32.xlu0 %v169, 100
    %v171 = vpop.permute.xlu0 %170
    %vm172 = vcmask 23552
    %s173 = scalar_lea.vmem %s1, 52
    %174 = vst.msk [vmem:[%s173] sm:$0x1] %vm172, %v171
    %s175 = scalar_lea.vmem %s1, 115
    %176 = vst.msk [vmem:[%s175] sm:$0x2] %vm172, %v171
    %v177 = vld [vmem:[#allocation0] sm:$0x3]
    %178 = vrot.lane.b32.xlu0 %v177, 98
    %v179 = vpop.permute.xlu0 %178
    %vm180 = vcmask 23552
    %s181 = scalar_lea.vmem %s1, 10
    %182 = vst.msk [vmem:[%s181] sm:$0x1] %vm180, %v179
    %s183 = scalar_lea.vmem %s1, 73
    %184 = vst.msk [vmem:[%s183] sm:$0x2] %vm180, %v179
    %s185 = scalar_lea.vmem [#allocation0], 8
    %v186 = vld [vmem:[%s185] sm:$0x3]
    %187 = vrot.lane.b32.xlu0 %v186, 97
    %v188 = vpop.permute.xlu0 %187
    %vm189 = vcmask 23552
    %s190 = scalar_lea.vmem %s1, 53
    %191 = vst.msk [vmem:[%s190] sm:$0x1] %vm189, %v188
    %s192 = scalar_lea.vmem %s1, 116
    %193 = vst.msk [vmem:[%s192] sm:$0x2] %vm189, %v188
    %v194 = vld [vmem:[#allocation0] sm:$0x3]
    %195 = vrot.lane.b32.xlu0 %v194, 95
    %v196 = vpop.permute.xlu0 %195
    %vm197 = vcmask 23552
    %s198 = scalar_lea.vmem %s1, 11
    %199 = vst.msk [vmem:[%s198] sm:$0x1] %vm197, %v196
    %s200 = scalar_lea.vmem %s1, 74
    %201 = vst.msk [vmem:[%s200] sm:$0x2] %vm197, %v196
    %s202 = scalar_lea.vmem [#allocation0], 8
    %v203 = vld [vmem:[%s202] sm:$0x3]
    %204 = vrot.lane.b32.xlu0 %v203, 94
    %v205 = vpop.permute.xlu0 %204
    %vm206 = vcmask 23552
    %s207 = scalar_lea.vmem %s1, 54
    %208 = vst.msk [vmem:[%s207] sm:$0x1] %vm206, %v205
    %s209 = scalar_lea.vmem %s1, 117
    %210 = vst.msk [vmem:[%s209] sm:$0x2] %vm206, %v205
    %v211 = vld [vmem:[#allocation0] sm:$0x3]
    %212 = vrot.lane.b32.xlu0 %v211, 92
    %v213 = vpop.permute.xlu0 %212
    %vm214 = vcmask 23552
    %s215 = scalar_lea.vmem %s1, 12
    %216 = vst.msk [vmem:[%s215] sm:$0x1] %vm214, %v213
    %s217 = scalar_lea.vmem %s1, 75
    %218 = vst.msk [vmem:[%s217] sm:$0x2] %vm214, %v213
    %s219 = scalar_lea.vmem [#allocation0], 8
    %v220 = vld [vmem:[%s219] sm:$0x3]
    %221 = vrot.lane.b32.xlu0 %v220, 91
    %v222 = vpop.permute.xlu0 %221
    %vm223 = vcmask 23552
    %s224 = scalar_lea.vmem %s1, 55
    %225 = vst.msk [vmem:[%s224] sm:$0x1] %vm223, %v222
    %s226 = scalar_lea.vmem %s1, 118
    %227 = vst.msk [vmem:[%s226] sm:$0x2] %vm223, %v222
    %v228 = vld [vmem:[#allocation0] sm:$0x3]
    %229 = vrot.lane.b32.xlu0 %v228, 89
    %v230 = vpop.permute.xlu0 %229
    %vm231 = vcmask 23552
    %s232 = scalar_lea.vmem %s1, 13
    %233 = vst.msk [vmem:[%s232] sm:$0x1] %vm231, %v230
    %s234 = scalar_lea.vmem %s1, 76
    %235 = vst.msk [vmem:[%s234] sm:$0x2] %vm231, %v230
    %s236 = scalar_lea.vmem [#allocation0], 8
    %v237 = vld [vmem:[%s236] sm:$0x3]
    %238 = vrot.lane.b32.xlu0 %v237, 88
    %v239 = vpop.permute.xlu0 %238
    %vm240 = vcmask 23552
    %s241 = scalar_lea.vmem %s1, 56
    %242 = vst.msk [vmem:[%s241] sm:$0x1] %vm240, %v239
    %s243 = scalar_lea.vmem %s1, 119
    %244 = vst.msk [vmem:[%s243] sm:$0x2] %vm240, %v239
    %v245 = vld [vmem:[#allocation0] sm:$0x3]
    %246 = vrot.lane.b32.xlu0 %v245, 86
    %v247 = vpop.permute.xlu0 %246
    %vm248 = vcmask 23552
    %s249 = scalar_lea.vmem %s1, 14
    %250 = vst.msk [vmem:[%s249] sm:$0x1] %vm248, %v247
    %s251 = scalar_lea.vmem %s1, 77
    %252 = vst.msk [vmem:[%s251] sm:$0x2] %vm248, %v247
    %s253 = scalar_lea.vmem [#allocation0], 8
    %v254 = vld [vmem:[%s253] sm:$0x3]
    %255 = vrot.lane.b32.xlu0 %v254, 85
    %v256 = vpop.permute.xlu0 %255
    %vm257 = vcmask 23552
    %s258 = scalar_lea.vmem %s1, 57
    %259 = vst.msk [vmem:[%s258] sm:$0x1] %vm257, %v256
    %s260 = scalar_lea.vmem %s1, 120
    %261 = vst.msk [vmem:[%s260] sm:$0x2] %vm257, %v256
    %v262 = vld [vmem:[#allocation0] sm:$0x3]
    %263 = vrot.lane.b32.xlu0 %v262, 83
    %v264 = vpop.permute.xlu0 %263
    %vm265 = vcmask 23552
    %s266 = scalar_lea.vmem %s1, 15
    %267 = vst.msk [vmem:[%s266] sm:$0x1] %vm265, %v264
    %s268 = scalar_lea.vmem %s1, 78
    %269 = vst.msk [vmem:[%s268] sm:$0x2] %vm265, %v264
    %s270 = scalar_lea.vmem [#allocation0], 8
    %v271 = vld [vmem:[%s270] sm:$0x3]
    %272 = vrot.lane.b32.xlu0 %v271, 82
    %v273 = vpop.permute.xlu0 %272
    %vm274 = vcmask 23552
    %s275 = scalar_lea.vmem %s1, 58
    %276 = vst.msk [vmem:[%s275] sm:$0x1] %vm274, %v273
    %s277 = scalar_lea.vmem %s1, 121
    %278 = vst.msk [vmem:[%s277] sm:$0x2] %vm274, %v273
    %v279 = vld [vmem:[#allocation0] sm:$0x3]
    %280 = vrot.lane.b32.xlu0 %v279, 80
    %v281 = vpop.permute.xlu0 %280
    %vm282 = vcmask 23552
    %s283 = scalar_lea.vmem %s1, 16
    %284 = vst.msk [vmem:[%s283] sm:$0x1] %vm282, %v281
    %s285 = scalar_lea.vmem %s1, 79
    %286 = vst.msk [vmem:[%s285] sm:$0x2] %vm282, %v281
    %s287 = scalar_lea.vmem [#allocation0], 8
    %v288 = vld [vmem:[%s287] sm:$0x3]
    %289 = vrot.lane.b32.xlu0 %v288, 79
    %v290 = vpop.permute.xlu0 %289
    %vm291 = vcmask 23552
    %s292 = scalar_lea.vmem %s1, 59
    %293 = vst.msk [vmem:[%s292] sm:$0x1] %vm291, %v290
    %s294 = scalar_lea.vmem %s1, 122
    %295 = vst.msk [vmem:[%s294] sm:$0x2] %vm291, %v290
    %v296 = vld [vmem:[#allocation0] sm:$0x3]
    %297 = vrot.lane.b32.xlu0 %v296, 77
    %v298 = vpop.permute.xlu0 %297
    %vm299 = vcmask 23552
    %s300 = scalar_lea.vmem %s1, 17
    %301 = vst.msk [vmem:[%s300] sm:$0x1] %vm299, %v298
    %s302 = scalar_lea.vmem %s1, 80
    %303 = vst.msk [vmem:[%s302] sm:$0x2] %vm299, %v298
    %s304 = scalar_lea.vmem [#allocation0], 8
    %v305 = vld [vmem:[%s304] sm:$0x3]
    %306 = vrot.lane.b32.xlu0 %v305, 76
    %v307 = vpop.permute.xlu0 %306
    %vm308 = vcmask 23552
    %s309 = scalar_lea.vmem %s1, 60
    %310 = vst.msk [vmem:[%s309] sm:$0x1] %vm308, %v307
    %s311 = scalar_lea.vmem %s1, 123
    %312 = vst.msk [vmem:[%s311] sm:$0x2] %vm308, %v307
    %v313 = vld [vmem:[#allocation0] sm:$0x3]
    %314 = vrot.lane.b32.xlu0 %v313, 74
    %v315 = vpop.permute.xlu0 %314
    %vm316 = vcmask 23552
    %s317 = scalar_lea.vmem %s1, 18
    %318 = vst.msk [vmem:[%s317] sm:$0x1] %vm316, %v315
    %s319 = scalar_lea.vmem %s1, 81
    %320 = vst.msk [vmem:[%s319] sm:$0x2] %vm316, %v315
    %s321 = scalar_lea.vmem [#allocation0], 8
    %v322 = vld [vmem:[%s321] sm:$0x3]
    %323 = vrot.lane.b32.xlu0 %v322, 73
    %v324 = vpop.permute.xlu0 %323
    %vm325 = vcmask 23552
    %s326 = scalar_lea.vmem %s1, 61
    %327 = vst.msk [vmem:[%s326] sm:$0x1] %vm325, %v324
    %s328 = scalar_lea.vmem %s1, 124
    %329 = vst.msk [vmem:[%s328] sm:$0x2] %vm325, %v324
    %v330 = vld [vmem:[#allocation0] sm:$0x3]
    %331 = vrot.lane.b32.xlu0 %v330, 71
    %v332 = vpop.permute.xlu0 %331
    %vm333 = vcmask 23552
    %s334 = scalar_lea.vmem %s1, 19
    %335 = vst.msk [vmem:[%s334] sm:$0x1] %vm333, %v332
    %s336 = scalar_lea.vmem %s1, 82
    %337 = vst.msk [vmem:[%s336] sm:$0x2] %vm333, %v332
    %s338 = scalar_lea.vmem [#allocation0], 8
    %v339 = vld [vmem:[%s338] sm:$0x3]
    %340 = vrot.lane.b32.xlu0 %v339, 70
    %v341 = vpop.permute.xlu0 %340
    %vm342 = vcmask 23552
    %s343 = scalar_lea.vmem %s1, 62
    %344 = vst.msk [vmem:[%s343] sm:$0x1] %vm342, %v341
    %s345 = scalar_lea.vmem %s1, 125
    %346 = vst.msk [vmem:[%s345] sm:$0x2] %vm342, %v341
    %v347 = vld [vmem:[#allocation0] sm:$0x3]
    %348 = vrot.lane.b32.xlu0 %v347, 68
    %v349 = vpop.permute.xlu0 %348
    %vm350 = vcmask 23552
    %s351 = scalar_lea.vmem %s1, 20
    %352 = vst.msk [vmem:[%s351] sm:$0x1] %vm350, %v349
    %s353 = scalar_lea.vmem %s1, 83
    %354 = vst.msk [vmem:[%s353] sm:$0x2] %vm350, %v349
    %s355 = scalar_lea.vmem [#allocation0], 8
    %v356 = vld [vmem:[%s355] sm:$0x3]
    %357 = vrot.lane.b32.xlu0 %v356, 67
    %v358 = vpop.permute.xlu0 %357
    %vm359 = vcmask 23552
    %s360 = scalar_lea.vmem %s1, 63
    %361 = vst.msk [vmem:[%s360] sm:$0x1] %vm359, %v358
    %s362 = scalar_lea.vmem %s1, 126
    %363 = vst.msk [vmem:[%s362] sm:$0x2] %vm359, %v358
    %v364 = vld [vmem:[#allocation0] sm:$0x3]
    %365 = vrot.lane.b32.xlu0 %v364, 65
    %v366 = vpop.permute.xlu0 %365
    %vm367 = vcmask 23552
    %s368 = scalar_lea.vmem %s1, 21
    %369 = vst.msk [vmem:[%s368] sm:$0x1] %vm367, %v366
    %s370 = scalar_lea.vmem %s1, 84
    %371 = vst.msk [vmem:[%s370] sm:$0x2] %vm367, %v366
    %v372 = vld [vmem:[#allocation0] sm:$0x3]
    %373 = vrot.lane.b32.xlu0 %v372, 62
    %v374 = vpop.permute.xlu0 %373
    %vm375 = vcmask 23552
    %s376 = scalar_lea.vmem %s1, 22
    %377 = vst.msk [vmem:[%s376] sm:$0x1] %vm375, %v374
    %s378 = scalar_lea.vmem %s1, 85
    %379 = vst.msk [vmem:[%s378] sm:$0x2] %vm375, %v374
    %v380 = vld [vmem:[#allocation0] sm:$0x3]
    %381 = vrot.lane.b32.xlu0 %v380, 59
    %v382 = vpop.permute.xlu0 %381
    %vm383 = vcmask 23552
    %s384 = scalar_lea.vmem %s1, 23
    %385 = vst.msk [vmem:[%s384] sm:$0x1] %vm383, %v382
    %s386 = scalar_lea.vmem %s1, 86
    %387 = vst.msk [vmem:[%s386] sm:$0x2] %vm383, %v382
    %v388 = vld [vmem:[#allocation0] sm:$0x3]
    %389 = vrot.lane.b32.xlu0 %v388, 56
    %v390 = vpop.permute.xlu0 %389
    %vm391 = vcmask 23552
    %s392 = scalar_lea.vmem %s1, 24
    %393 = vst.msk [vmem:[%s392] sm:$0x1] %vm391, %v390
    %s394 = scalar_lea.vmem %s1, 87
    %395 = vst.msk [vmem:[%s394] sm:$0x2] %vm391, %v390
    %v396 = vld [vmem:[#allocation0] sm:$0x3]
    %397 = vrot.lane.b32.xlu0 %v396, 53
    %v398 = vpop.permute.xlu0 %397
    %vm399 = vcmask 23552
    %s400 = scalar_lea.vmem %s1, 25
    %401 = vst.msk [vmem:[%s400] sm:$0x1] %vm399, %v398
    %s402 = scalar_lea.vmem %s1, 88
    %403 = vst.msk [vmem:[%s402] sm:$0x2] %vm399, %v398
    %v404 = vld [vmem:[#allocation0] sm:$0x3]
    %405 = vrot.lane.b32.xlu0 %v404, 50
    %v406 = vpop.permute.xlu0 %405
    %vm407 = vcmask 23552
    %s408 = scalar_lea.vmem %s1, 26
    %409 = vst.msk [vmem:[%s408] sm:$0x1] %vm407, %v406
    %s410 = scalar_lea.vmem %s1, 89
    %411 = vst.msk [vmem:[%s410] sm:$0x2] %vm407, %v406
    %v412 = vld [vmem:[#allocation0] sm:$0x3]
    %413 = vrot.lane.b32.xlu0 %v412, 47
    %v414 = vpop.permute.xlu0 %413
    %vm415 = vcmask 23552
    %s416 = scalar_lea.vmem %s1, 27
    %417 = vst.msk [vmem:[%s416] sm:$0x1] %vm415, %v414
    %s418 = scalar_lea.vmem %s1, 90
    %419 = vst.msk [vmem:[%s418] sm:$0x2] %vm415, %v414
    %v420 = vld [vmem:[#allocation0] sm:$0x3]
    %421 = vrot.lane.b32.xlu0 %v420, 44
    %v422 = vpop.permute.xlu0 %421
    %vm423 = vcmask 23552
    %s424 = scalar_lea.vmem %s1, 28
    %425 = vst.msk [vmem:[%s424] sm:$0x1] %vm423, %v422
    %s426 = scalar_lea.vmem %s1, 91
    %427 = vst.msk [vmem:[%s426] sm:$0x2] %vm423, %v422
    %v428 = vld [vmem:[#allocation0] sm:$0x3]
    %429 = vrot.lane.b32.xlu0 %v428, 41
    %v430 = vpop.permute.xlu0 %429
    %vm431 = vcmask 23552
    %s432 = scalar_lea.vmem %s1, 29
    %433 = vst.msk [vmem:[%s432] sm:$0x1] %vm431, %v430
    %s434 = scalar_lea.vmem %s1, 92
    %435 = vst.msk [vmem:[%s434] sm:$0x2] %vm431, %v430
    %v436 = vld [vmem:[#allocation0] sm:$0x3]
    %437 = vrot.lane.b32.xlu0 %v436, 38
    %v438 = vpop.permute.xlu0 %437
    %vm439 = vcmask 23552
    %s440 = scalar_lea.vmem %s1, 30
    %441 = vst.msk [vmem:[%s440] sm:$0x1] %vm439, %v438
    %s442 = scalar_lea.vmem %s1, 93
    %443 = vst.msk [vmem:[%s442] sm:$0x2] %vm439, %v438
    %v444 = vld [vmem:[#allocation0] sm:$0x3]
    %445 = vrot.lane.b32.xlu0 %v444, 35
    %v446 = vpop.permute.xlu0 %445
    %vm447 = vcmask 23552
    %s448 = scalar_lea.vmem %s1, 31
    %449 = vst.msk [vmem:[%s448] sm:$0x1] %vm447, %v446
    %s450 = scalar_lea.vmem %s1, 94
    %451 = vst.msk [vmem:[%s450] sm:$0x2] %vm447, %v446
    %v452 = vld [vmem:[#allocation0] sm:$0x3]
    %453 = vrot.lane.b32.xlu0 %v452, 32
    %v454 = vpop.permute.xlu0 %453
    %vm455 = vcmask 23552
    %s456 = scalar_lea.vmem %s1, 32
    %457 = vst.msk [vmem:[%s456] sm:$0x1] %vm455, %v454
    %s458 = scalar_lea.vmem %s1, 95
    %459 = vst.msk [vmem:[%s458] sm:$0x2] %vm455, %v454
    %v460 = vld [vmem:[#allocation0] sm:$0x3]
    %461 = vrot.lane.b32.xlu0 %v460, 29
    %v462 = vpop.permute.xlu0 %461
    %vm463 = vcmask 23552
    %s464 = scalar_lea.vmem %s1, 33
    %465 = vst.msk [vmem:[%s464] sm:$0x1] %vm463, %v462
    %s466 = scalar_lea.vmem %s1, 96
    %467 = vst.msk [vmem:[%s466] sm:$0x2] %vm463, %v462
    %v468 = vld [vmem:[#allocation0] sm:$0x3]
    %469 = vrot.lane.b32.xlu0 %v468, 26
    %v470 = vpop.permute.xlu0 %469
    %vm471 = vcmask 23552
    %s472 = scalar_lea.vmem %s1, 34
    %473 = vst.msk [vmem:[%s472] sm:$0x1] %vm471, %v470
    %s474 = scalar_lea.vmem %s1, 97
    %475 = vst.msk [vmem:[%s474] sm:$0x2] %vm471, %v470
    %v476 = vld [vmem:[#allocation0] sm:$0x3]
    %477 = vrot.lane.b32.xlu0 %v476, 23
    %v478 = vpop.permute.xlu0 %477
    %vm479 = vcmask 23552
    %s480 = scalar_lea.vmem %s1, 35
    %481 = vst.msk [vmem:[%s480] sm:$0x1] %vm479, %v478
    %s482 = scalar_lea.vmem %s1, 98
    %483 = vst.msk [vmem:[%s482] sm:$0x2] %vm479, %v478
    %v484 = vld [vmem:[#allocation0] sm:$0x3]
    %485 = vrot.lane.b32.xlu0 %v484, 20
    %v486 = vpop.permute.xlu0 %485
    %vm487 = vcmask 23552
    %s488 = scalar_lea.vmem %s1, 36
    %489 = vst.msk [vmem:[%s488] sm:$0x1] %vm487, %v486
    %s490 = scalar_lea.vmem %s1, 99
    %491 = vst.msk [vmem:[%s490] sm:$0x2] %vm487, %v486
    %v492 = vld [vmem:[#allocation0] sm:$0x3]
    %493 = vrot.lane.b32.xlu0 %v492, 17
    %v494 = vpop.permute.xlu0 %493
    %vm495 = vcmask 23552
    %s496 = scalar_lea.vmem %s1, 37
    %497 = vst.msk [vmem:[%s496] sm:$0x1] %vm495, %v494
    %s498 = scalar_lea.vmem %s1, 100
    %499 = vst.msk [vmem:[%s498] sm:$0x2] %vm495, %v494
    %v500 = vld [vmem:[#allocation0] sm:$0x3]
    %501 = vrot.lane.b32.xlu0 %v500, 14
    %v502 = vpop.permute.xlu0 %501
    %vm503 = vcmask 23552
    %s504 = scalar_lea.vmem %s1, 38
    %505 = vst.msk [vmem:[%s504] sm:$0x1] %vm503, %v502
    %s506 = scalar_lea.vmem %s1, 101
    %507 = vst.msk [vmem:[%s506] sm:$0x2] %vm503, %v502
    %v508 = vld [vmem:[#allocation0] sm:$0x3]
    %509 = vrot.lane.b32.xlu0 %v508, 11
    %v510 = vpop.permute.xlu0 %509
    %vm511 = vcmask 23552
    %s512 = scalar_lea.vmem %s1, 39
    %513 = vst.msk [vmem:[%s512] sm:$0x1] %vm511, %v510
    %s514 = scalar_lea.vmem %s1, 102
    %515 = vst.msk [vmem:[%s514] sm:$0x2] %vm511, %v510
    %v516 = vld [vmem:[#allocation0] sm:$0x3]
    %517 = vrot.lane.b32.xlu0 %v516, 8
    %v518 = vpop.permute.xlu0 %517
    %vm519 = vcmask 23552
    %s520 = scalar_lea.vmem %s1, 40
    %521 = vst.msk [vmem:[%s520] sm:$0x1] %vm519, %v518
    %s522 = scalar_lea.vmem %s1, 103
    %523 = vst.msk [vmem:[%s522] sm:$0x2] %vm519, %v518
    %v524 = vld [vmem:[#allocation0] sm:$0x3]
    %525 = vrot.lane.b32.xlu0 %v524, 5
    %v526 = vpop.permute.xlu0 %525
    %vm527 = vcmask 23552
    %s528 = scalar_lea.vmem %s1, 41
    %529 = vst.msk [vmem:[%s528] sm:$0x1] %vm527, %v526
    %s530 = scalar_lea.vmem %s1, 104
    %531 = vst.msk [vmem:[%s530] sm:$0x2] %vm527, %v526
    %v532 = vld [vmem:[#allocation0] sm:$0x3]
    %s533 = scalar_lea.vmem [#allocation0], 8
    %v534 = vld [vmem:[%s533] sm:$0x3]
    %vm535 = vcmask 1031168
    %v536 = vsel %vm535, %v534, %v532
    %537 = vrot.lane.b32.xlu0 %v536, 2
    %v538 = vpop.permute.xlu0 %537
    %vm539 = vcmask 15360
    %s540 = scalar_lea.vmem %s1, 42
    %541 = vst.msk [vmem:[%s540] sm:$0x1] %vm539, %v538
    %s542 = scalar_lea.vmem %s1, 105
    %543 = vst.msk [vmem:[%s542] sm:$0x2] %vm539, %v538
    %vm544 = vcmask 23568
    %s545 = scalar_lea.vmem %s1, 42
    %546 = vst.msk [vmem:[%s545] sm:$0x1] %vm544, %v538
    %s547 = scalar_lea.vmem %s1, 105
    %548 = vst.msk [vmem:[%s547] sm:$0x2] %vm544, %v538

// kernel: discriminator_forward.13
$region0: #{discriminator_forward.13}
  #allocation0 [shape = 'u32[]', space=smem, size = 0x4, offset = 0x4, fixed_abs, tag = 'smem constant byte address 0x4 - core index']
  #allocation1 [shape = 'u32[144,128]{1,0:T(1,128)}', space=vmem, size = 0x12000, scoped, tag = 'internal scratch']
  #allocation2 [shape = 'f32[8,128]{1,0:T(8,128)}', space=vmem, size = 0x1000, scoped, tag = 'scratch operand']
  %s0 = inlined_call_operand.hbm [shape: bf16[8,256], index: 0, kind: input, shape index: {}]
  %s1 = inlined_call_operand.hbm [shape: bf16[256,128], index: 1, kind: input, shape index: {}]
  %s2 = inlined_call_operand.hbm [shape: f32[1,128], index: 2, kind: input, shape index: {}]
  %s3 = inlined_call_operand.hbm [shape: f32[8,128], index: 3, kind: output, shape index: {}]
  %s4 = sld [smem:[#allocation0]]
  $region42: #{discriminator_forward.13} parent=0
    _
  %s6 = ssub.s32 1, %s4
  %s7 = scalar_select 0, %s6, %s4
  $region1: #{discriminator_forward.13} parent=0
    #allocation3 [shape = 'u8[4096]{0}', space=vmem, size = 0x1000, scoped, tag = 'input window, operand 0, single buffered']
    #allocation4 [shape = 's32[1]{0}', space=sflag, size = 0x4, scoped, tag = 'scoped memory for discriminator_forward.13']
    #allocation5 [shape = 's32[1]{0}', space=sflag, size = 0x4, scoped, tag = 'scoped memory for discriminator_forward.13']
    #allocation6 [shape = 'u8[65536]{0}', space=vmem, size = 0x10000, scoped, tag = 'input window, operand 1, single buffered']
    #allocation7 [shape = 's32[1]{0}', space=sflag, size = 0x4, scoped, tag = 'scoped memory for discriminator_forward.13']
    #allocation8 [shape = 'u8[512]{0}', space=vmem, size = 0x400, scoped, tag = 'input window, operand 2, single buffered']
    #allocation9 [shape = 'u8[4096]{0}', space=vmem, size = 0x1000, scoped, tag = 'output window, operand 0, single buffered']
    %8 = vsyncpa [#allocation4], 0
    %9 = vsyncpa [#allocation7], 0
    %10 = vsyncpa [#allocation5], 0
    // Predicated region
    $region2: #{discriminator_forward.13} parent=1 // pred_check
      _
    $region3: #{discriminator_forward.13} parent=1 // pred_check_branch
      %12 = sbr.rel (0) target = $region5
    $region4: #{discriminator_forward.13} parent=1 // pred_region
      %s14 = ssub.s32 128, 128
      %15 = vsyncadd [#allocation4], %s14
      %s17 = sshll.u32 [#allocation3], 4
      %s18 = int_to_ptr.vmem [resolvable:$true] %s17
      %20 = dma.hbm_to_vmem [thread:$0]  %s0, 128, %s18, [#allocation4]
    $region5: #{discriminator_forward.13} parent=1 // pred_fallthru
      _
    // Predicated region
    $region6: #{discriminator_forward.13} parent=1 // pred_check
      _
    $region7: #{discriminator_forward.13} parent=1 // pred_check_branch
      %22 = sbr.rel (0) target = $region9
    $region8: #{discriminator_forward.13} parent=1 // pred_region
      %s24 = ssub.s32 2048, 2048
      %25 = vsyncadd [#allocation7], %s24
      %s26 = sshll.u32 [#allocation6], 4
      %s27 = int_to_ptr.vmem [resolvable:$true] %s26
      %32 = dma.hbm_to_vmem [thread:$0]  %s1, 2048, %s27, [#allocation7], 64, 64, 4
    $region9: #{discriminator_forward.13} parent=1 // pred_fallthru
      _
    // Predicated region
    $region10: #{discriminator_forward.13} parent=1 // pred_check
      _
    $region11: #{discriminator_forward.13} parent=1 // pred_check_branch
      %34 = sbr.rel (0) target = $region13
    $region12: #{discriminator_forward.13} parent=1 // pred_region
      %s36 = ssub.s32 16, 16
      %37 = vsyncadd [#allocation7], %s36
      %s39 = sshll.u32 [#allocation8], 4
      %s40 = int_to_ptr.vmem [resolvable:$true] %s39
      %42 = dma.hbm_to_vmem [thread:$0]  %s2, 16, %s40, [#allocation7]
    $region13: #{discriminator_forward.13} parent=1 // pred_fallthru
      _
    // Predicated region
    $region14: #{discriminator_forward.13} parent=1 // pred_check
      _
    $region15: #{discriminator_forward.13} parent=1 // pred_check_branch
      %44 = sbr.rel (0) target = $region17
    $region16: #{discriminator_forward.13} parent=1 // pred_region
      %45 = dma.done [#allocation4], 128
    $region17: #{discriminator_forward.13} parent=1 // pred_fallthru
      _
    // Predicated region
    $region18: #{discriminator_forward.13} parent=1 // pred_check
      _
    $region19: #{discriminator_forward.13} parent=1 // pred_check_branch
      %47 = sbr.rel (0) target = $region21
    $region20: #{discriminator_forward.13} parent=1 // pred_region
      %48 = dma.done [#allocation7], 2048
    $region21: #{discriminator_forward.13} parent=1 // pred_fallthru
      _
    // Predicated region
    $region22: #{discriminator_forward.13} parent=1 // pred_check
      _
    $region23: #{discriminator_forward.13} parent=1 // pred_check_branch
      %50 = sbr.rel (0) target = $region25
    $region24: #{discriminator_forward.13} parent=1 // pred_region
      %51 = dma.done [#allocation7], 16
    $region25: #{discriminator_forward.13} parent=1 // pred_fallthru
      _
    %p53 = scmp.eq.s32.totalorder 0, 0
    // Predicated region
    $region26: #{discriminator_forward.13} parent=1 // pred_check
      %p54 = pneg %p53
    $region27: #{discriminator_forward.13} parent=1 // pred_check_branch
      %56 = sbr.rel (%p54) target = $region29
    $region28: #{discriminator_forward.13} parent=1 // pred_region
      %57 = vst [vmem:[#allocation2] sm:$0xff] 0.0
    $region29: #{discriminator_forward.13} parent=1 // pred_fallthru
      _
    %v58 = vld [vmem:[#allocation2] sm:$0xff]
    %v59 = vld [vmem:[#allocation3] sm:$0xff]
    %v60 = vld [vmem:[#allocation6] sm:$0xf]
    %v61 = vld [vmem:[#allocation6 + $0x4] sm:$0xf]
    %v62 = vld [vmem:[#allocation6 + $0x8] sm:$0xf]
    %v63 = vld [vmem:[#allocation6 + $0xc] sm:$0xf]
    %v64 = vld [vmem:[#allocation6 + $0x10] sm:$0xf]
    %v65 = vld [vmem:[#allocation6 + $0x14] sm:$0xf]
    %v66 = vld [vmem:[#allocation6 + $0x18] sm:$0xf]
    %v67 = vld [vmem:[#allocation6 + $0x1c] sm:$0xf]
    %v68 = vld [vmem:[#allocation6 + $0x20] sm:$0xf]
    %v69 = vld [vmem:[#allocation6 + $0x24] sm:$0xf]
    %v70 = vld [vmem:[#allocation6 + $0x28] sm:$0xf]
    %v71 = vld [vmem:[#allocation6 + $0x2c] sm:$0xf]
    %v72 = vld [vmem:[#allocation6 + $0x30] sm:$0xf]
    %v73 = vld [vmem:[#allocation6 + $0x34] sm:$0xf]
    %v74 = vld [vmem:[#allocation6 + $0x38] sm:$0xf]
    %v75 = vld [vmem:[#allocation6 + $0x3c] sm:$0xf]
    %v76 = vld [vmem:[#allocation6 + $0x40] sm:$0xf]
    %v77 = vld [vmem:[#allocation6 + $0x44] sm:$0xf]
    %v78 = vld [vmem:[#allocation6 + $0x48] sm:$0xf]
    %v79 = vld [vmem:[#allocation6 + $0x4c] sm:$0xf]
    %v80 = vld [vmem:[#allocation6 + $0x50] sm:$0xf]
    %v81 = vld [vmem:[#allocation6 + $0x54] sm:$0xf]
    %v82 = vld [vmem:[#allocation6 + $0x58] sm:$0xf]
    %v83 = vld [vmem:[#allocation6 + $0x5c] sm:$0xf]
    %v84 = vld [vmem:[#allocation6 + $0x60] sm:$0xf]
    %v85 = vld [vmem:[#allocation6 + $0x64] sm:$0xf]
    %v86 = vld [vmem:[#allocation6 + $0x68] sm:$0xf]
    %v87 = vld [vmem:[#allocation6 + $0x6c] sm:$0xf]
    %v88 = vld [vmem:[#allocation6 + $0x70] sm:$0xf]
    %v89 = vld [vmem:[#allocation6 + $0x74] sm:$0xf]
    %v90 = vld [vmem:[#allocation6 + $0x78] sm:$0xf]
    %v91 = vld [vmem:[#allocation6 + $0x7c] sm:$0xf]
    %v93 = vunpack.c.l.b16 %v59
    %v94 = vunpack.c.h.b16 %v59
    %v95 = vpack.c.b16 %v93, %v93
    %v96 = vpack.c.b16 %v94, %v94
    %v131 = vunpack.c.l.b16 %v60
    %v132 = vunpack.c.l.b16 %v61
    %v133 = vunpack.c.l.b16 %v62
    %v134 = vunpack.c.l.b16 %v63
    %v135 = vunpack.c.l.b16 %v64
    %v136 = vunpack.c.l.b16 %v65
    %v137 = vunpack.c.l.b16 %v66
    %v138 = vunpack.c.l.b16 %v67
    %v139 = vunpack.c.l.b16 %v68
    %v140 = vunpack.c.l.b16 %v69
    %v141 = vunpack.c.l.b16 %v70
    %v142 = vunpack.c.l.b16 %v71
    %v143 = vunpack.c.l.b16 %v72
    %v144 = vunpack.c.l.b16 %v73
    %v145 = vunpack.c.l.b16 %v74
    %v146 = vunpack.c.l.b16 %v75
    %v147 = vunpack.c.l.b16 %v76
    %v148 = vunpack.c.l.b16 %v77
    %v149 = vunpack.c.l.b16 %v78
    %v150 = vunpack.c.l.b16 %v79
    %v151 = vunpack.c.l.b16 %v80
    %v152 = vunpack.c.l.b16 %v81
    %v153 = vunpack.c.l.b16 %v82
    %v154 = vunpack.c.l.b16 %v83
    %v155 = vunpack.c.l.b16 %v84
    %v156 = vunpack.c.l.b16 %v85
    %v157 = vunpack.c.l.b16 %v86
    %v158 = vunpack.c.l.b16 %v87
    %v159 = vunpack.c.l.b16 %v88
    %v160 = vunpack.c.l.b16 %v89
    %v161 = vunpack.c.l.b16 %v90
    %v162 = vunpack.c.l.b16 %v91
    %v163 = vpack.c.b16 %v132, %v131
    %v164 = vpack.c.b16 %v134, %v133
    %v165 = vpack.c.b16 %v136, %v135
    %v166 = vpack.c.b16 %v138, %v137
    %v167 = vpack.c.b16 %v140, %v139
    %v168 = vpack.c.b16 %v142, %v141
    %v169 = vpack.c.b16 %v144, %v143
    %v170 = vpack.c.b16 %v146, %v145
    %v171 = vpack.c.b16 %v148, %v147
    %v172 = vpack.c.b16 %v150, %v149
    %v173 = vpack.c.b16 %v152, %v151
    %v174 = vpack.c.b16 %v154, %v153
    %v175 = vpack.c.b16 %v156, %v155
    %v176 = vpack.c.b16 %v158, %v157
    %v177 = vpack.c.b16 %v160, %v159
    %v178 = vpack.c.b16 %v162, %v161
    %195 = vmatprep.subr.bf16.mxu0 0
    %196 = vmatpush1.bf16.msra.mxu0 %v163
    %197 = vmatprep.subr.bf16.mxu0 0
    %198 = vmatpush1.bf16.msra.mxu0 %v164
    %199 = vmatprep.subr.bf16.mxu0 0
    %200 = vmatpush1.bf16.msra.mxu0 %v165
    %201 = vmatprep.subr.bf16.mxu0 0
    %202 = vmatpush1.bf16.msra.mxu0 %v166
    %203 = vmatprep.subr.bf16.mxu0 0
    %204 = vmatpush1.bf16.msra.mxu0 %v167
    %205 = vmatprep.subr.bf16.mxu0 0
    %206 = vmatpush1.bf16.msra.mxu0 %v168
    %207 = vmatprep.subr.bf16.mxu0 0
    %208 = vmatpush1.bf16.msra.mxu0 %v169
    %209 = vmatprep.subr.bf16.mxu0 0
    %210 = vmatpush1.bf16.msra.mxu0 %v170
    %211 = vmatprep.subr.bf16.mxu0 0
    %212 = vmatpush1.bf16.msra.mxu0 %v171
    %213 = vmatprep.subr.bf16.mxu0 0
    %214 = vmatpush1.bf16.msra.mxu0 %v172
    %215 = vmatprep.subr.bf16.mxu0 0
    %216 = vmatpush1.bf16.msra.mxu0 %v173
    %217 = vmatprep.subr.bf16.mxu0 0
    %218 = vmatpush1.bf16.msra.mxu0 %v174
    %219 = vmatprep.subr.bf16.mxu0 0
    %220 = vmatpush1.bf16.msra.mxu0 %v175
    %221 = vmatprep.subr.bf16.mxu0 0
    %222 = vmatpush1.bf16.msra.mxu0 %v176
    %223 = vmatprep.subr.bf16.mxu0 0
    %224 = vmatpush1.bf16.msra.mxu0 %v177
    %225 = vmatprep.subr.bf16.mxu0 0
    %226 = vmatpush1.bf16.msra.mxu0 %v178
    %227 = vmatprep.mubr.bf16.mxu0 %v96
    %228 = vmatmul.mubr.bf16.gmra.mrb[0].mxu0 %v95
    %v229 = vpop.f32.mrb[0].mxu0
    %v230 = vadd.f32 0.0, %v229
    %v231 = vpop.f32.mrb[0].mxu0
    %v232 = vpop.f32.mrb[0].mxu0
    %v233 = vpop.f32.mrb[0].mxu0
    %234 = vdwg.mxu0
    %v235 = vadd.f32 %v58, %v230
    %236 = vst [vmem:[#allocation2] sm:$0xff] %v235
    // Predicated region
    $region30: #{discriminator_forward.13} parent=1 // pred_check
      %p237 = pneg %p53
    $region31: #{discriminator_forward.13} parent=1 // pred_check_branch
      %239 = sbr.rel (%p237) target = $region33
    $region32: #{discriminator_forward.13} parent=1 // pred_region
      %v240 = vld [vmem:[#allocation2] sm:$0xff]
      %v241 = vld [vmem:[#allocation8] sm:$0x1]
      %v243 = vlaneseq
      %v244 = vshrl.u32 %v243, 7
      %v245 = vsub.s32 0, %v244
      %v246 = vrot.slane %v241, %v245
      %v248 = vadd.f32 %v240, %v246
      %vm249 = vcmp.ge.f32.partialorder %v248, 0.0
      %v250 = vmul.f32 %v248, 0.3
      %v251 = vsel %vm249, %v248, %v250
      %252 = vst [vmem:[#allocation9] sm:$0xff] %v251
    $region33: #{discriminator_forward.13} parent=1 // pred_fallthru
      _
    // Predicated region
    $region34: #{discriminator_forward.13} parent=1 // pred_check
      _
    $region35: #{discriminator_forward.13} parent=1 // pred_check_branch
      %254 = sbr.rel (0) target = $region37
    $region36: #{discriminator_forward.13} parent=1 // pred_region
      %s256 = ssub.s32 128, 128
      %257 = vsyncadd [#allocation5], %s256
      %s259 = sshll.u32 [#allocation9], 4
      %s260 = int_to_ptr.vmem [resolvable:$true] %s259
      %262 = dma.vmem_to_hbm [thread:$0]  %s260, 128, %s3, [#allocation5]
    $region37: #{discriminator_forward.13} parent=1 // pred_fallthru
      _
    // Predicated region
    $region38: #{discriminator_forward.13} parent=1 // pred_check
      _
    $region39: #{discriminator_forward.13} parent=1 // pred_check_branch
      %264 = sbr.rel (0) target = $region41
    $region40: #{discriminator_forward.13} parent=1 // pred_region
      %265 = dma.done [#allocation5], 128
    $region41: #{discriminator_forward.13} parent=1 // pred_fallthru
      _
    %266 = vsyncpa [#allocation4], 1
    %267 = vsyncpa [#allocation7], 1
    %268 = vsyncpa [#allocation5], 1

// kernel: discriminator_forward.14
$region0: #{discriminator_forward.14}
  #allocation0 [shape = 'u32[]', space=smem, size = 0x4, offset = 0x4, fixed_abs, tag = 'smem constant byte address 0x4 - core index']
  #allocation1 [shape = 'u32[144,128]{1,0:T(1,128)}', space=vmem, size = 0x12000, scoped, tag = 'internal scratch']
  #allocation2 [shape = 'f32[8,256]{1,0:T(8,128)}', space=vmem, size = 0x2000, scoped, tag = 'scratch operand']
  %s0 = inlined_call_operand.hbm [shape: bf16[8,128], index: 0, kind: input, shape index: {}]
  %s1 = inlined_call_operand.hbm [shape: bf16[128,256], index: 1, kind: input, shape index: {}]
  %s2 = inlined_call_operand.hbm [shape: f32[1,256], index: 2, kind: input, shape index: {}]
  %s3 = inlined_call_operand.hbm [shape: f32[8,256], index: 3, kind: output, shape index: {}]
  %s4 = sld [smem:[#allocation0]]
  $region42: #{discriminator_forward.14} parent=0
    _
  %s6 = ssub.s32 1, %s4
  %s7 = scalar_select 0, %s6, %s4
  $region1: #{discriminator_forward.14} parent=0
    #allocation3 [shape = 'u8[2048]{0}', space=vmem, size = 0x800, scoped, tag = 'input window, operand 0, single buffered']
    #allocation4 [shape = 's32[1]{0}', space=sflag, size = 0x4, scoped, tag = 'scoped memory for discriminator_forward.14']
    #allocation5 [shape = 's32[1]{0}', space=sflag, size = 0x4, scoped, tag = 'scoped memory for discriminator_forward.14']
    #allocation6 [shape = 'u8[65536]{0}', space=vmem, size = 0x10000, scoped, tag = 'input window, operand 1, single buffered']
    #allocation7 [shape = 's32[1]{0}', space=sflag, size = 0x4, scoped, tag = 'scoped memory for discriminator_forward.14']
    #allocation8 [shape = 'u8[1024]{0}', space=vmem, size = 0x400, scoped, tag = 'input window, operand 2, single buffered']
    #allocation9 [shape = 'u8[8192]{0}', space=vmem, size = 0x2000, scoped, tag = 'output window, operand 0, single buffered']
    %8 = vsyncpa [#allocation4], 0
    %9 = vsyncpa [#allocation7], 0
    %10 = vsyncpa [#allocation5], 0
    // Predicated region
    $region2: #{discriminator_forward.14} parent=1 // pred_check
      _
    $region3: #{discriminator_forward.14} parent=1 // pred_check_branch
      %12 = sbr.rel (0) target = $region5
    $region4: #{discriminator_forward.14} parent=1 // pred_region
      %s14 = ssub.s32 64, 64
      %15 = vsyncadd [#allocation4], %s14
      %s17 = sshll.u32 [#allocation3], 4
      %s18 = int_to_ptr.vmem [resolvable:$true] %s17
      %20 = dma.hbm_to_vmem [thread:$0]  %s0, 64, %s18, [#allocation4]
    $region5: #{discriminator_forward.14} parent=1 // pred_fallthru
      _
    // Predicated region
    $region6: #{discriminator_forward.14} parent=1 // pred_check
      _
    $region7: #{discriminator_forward.14} parent=1 // pred_check_branch
      %22 = sbr.rel (0) target = $region9
    $region8: #{discriminator_forward.14} parent=1 // pred_region
      %s24 = ssub.s32 2048, 2048
      %25 = vsyncadd [#allocation7], %s24
      %s26 = sshll.u32 [#allocation6], 4
      %s27 = int_to_ptr.vmem [resolvable:$true] %s26
      %32 = dma.hbm_to_vmem [thread:$0]  %s1, 2048, %s27, [#allocation7], 128, 128, 8
    $region9: #{discriminator_forward.14} parent=1 // pred_fallthru
      _
    // Predicated region
    $region10: #{discriminator_forward.14} parent=1 // pred_check
      _
    $region11: #{discriminator_forward.14} parent=1 // pred_check_branch
      %34 = sbr.rel (0) target = $region13
    $region12: #{discriminator_forward.14} parent=1 // pred_region
      %s36 = ssub.s32 32, 32
      %37 = vsyncadd [#allocation7], %s36
      %s39 = sshll.u32 [#allocation8], 4
      %s40 = int_to_ptr.vmem [resolvable:$true] %s39
      %42 = dma.hbm_to_vmem [thread:$0]  %s2, 32, %s40, [#allocation7]
    $region13: #{discriminator_forward.14} parent=1 // pred_fallthru
      _
    // Predicated region
    $region14: #{discriminator_forward.14} parent=1 // pred_check
      _
    $region15: #{discriminator_forward.14} parent=1 // pred_check_branch
      %44 = sbr.rel (0) target = $region17
    $region16: #{discriminator_forward.14} parent=1 // pred_region
      %45 = dma.done [#allocation4], 64
    $region17: #{discriminator_forward.14} parent=1 // pred_fallthru
      _
    // Predicated region
    $region18: #{discriminator_forward.14} parent=1 // pred_check
      _
    $region19: #{discriminator_forward.14} parent=1 // pred_check_branch
      %47 = sbr.rel (0) target = $region21
    $region20: #{discriminator_forward.14} parent=1 // pred_region
      %48 = dma.done [#allocation7], 2048
    $region21: #{discriminator_forward.14} parent=1 // pred_fallthru
      _
    // Predicated region
    $region22: #{discriminator_forward.14} parent=1 // pred_check
      _
    $region23: #{discriminator_forward.14} parent=1 // pred_check_branch
      %50 = sbr.rel (0) target = $region25
    $region24: #{discriminator_forward.14} parent=1 // pred_region
      %51 = dma.done [#allocation7], 32
    $region25: #{discriminator_forward.14} parent=1 // pred_fallthru
      _
    %p53 = scmp.eq.s32.totalorder 0, 0
    // Predicated region
    $region26: #{discriminator_forward.14} parent=1 // pred_check
      %p54 = pneg %p53
    $region27: #{discriminator_forward.14} parent=1 // pred_check_branch
      %56 = sbr.rel (%p54) target = $region29
    $region28: #{discriminator_forward.14} parent=1 // pred_region
      %57 = vst [vmem:[#allocation2] sm:$0xff] 0.0
      %58 = vst [vmem:[#allocation2 + $0x8] sm:$0xff] 0.0
    $region29: #{discriminator_forward.14} parent=1 // pred_fallthru
      _
    %v59 = vld [vmem:[#allocation2] sm:$0xff]
    %v60 = vld [vmem:[#allocation2 + $0x8] sm:$0xff]
    %v61 = vld [vmem:[#allocation3] sm:$0xf]
    %v62 = vld [vmem:[#allocation6] sm:$0xff]
    %v63 = vld [vmem:[#allocation6 + $0x8] sm:$0xff]
    %v64 = vld [vmem:[#allocation6 + $0x10] sm:$0xff]
    %v65 = vld [vmem:[#allocation6 + $0x18] sm:$0xff]
    %v66 = vld [vmem:[#allocation6 + $0x20] sm:$0xff]
    %v67 = vld [vmem:[#allocation6 + $0x28] sm:$0xff]
    %v68 = vld [vmem:[#allocation6 + $0x30] sm:$0xff]
    %v69 = vld [vmem:[#allocation6 + $0x38] sm:$0xff]
    %v70 = vld [vmem:[#allocation6 + $0x40] sm:$0xff]
    %v71 = vld [vmem:[#allocation6 + $0x48] sm:$0xff]
    %v72 = vld [vmem:[#allocation6 + $0x50] sm:$0xff]
    %v73 = vld [vmem:[#allocation6 + $0x58] sm:$0xff]
    %v74 = vld [vmem:[#allocation6 + $0x60] sm:$0xff]
    %v75 = vld [vmem:[#allocation6 + $0x68] sm:$0xff]
    %v76 = vld [vmem:[#allocation6 + $0x70] sm:$0xff]
    %v77 = vld [vmem:[#allocation6 + $0x78] sm:$0xff]
    %v94 = vunpack.c.l.b16 %v62
    %v95 = vunpack.c.h.b16 %v62
    %v96 = vunpack.c.l.b16 %v63
    %v97 = vunpack.c.h.b16 %v63
    %v98 = vunpack.c.l.b16 %v64
    %v99 = vunpack.c.h.b16 %v64
    %v100 = vunpack.c.l.b16 %v65
    %v101 = vunpack.c.h.b16 %v65
    %v102 = vunpack.c.l.b16 %v66
    %v103 = vunpack.c.h.b16 %v66
    %v104 = vunpack.c.l.b16 %v67
    %v105 = vunpack.c.h.b16 %v67
    %v106 = vunpack.c.l.b16 %v68
    %v107 = vunpack.c.h.b16 %v68
    %v108 = vunpack.c.l.b16 %v69
    %v109 = vunpack.c.h.b16 %v69
    %v110 = vunpack.c.l.b16 %v70
    %v111 = vunpack.c.h.b16 %v70
    %v112 = vunpack.c.l.b16 %v71
    %v113 = vunpack.c.h.b16 %v71
    %v114 = vunpack.c.l.b16 %v72
    %v115 = vunpack.c.h.b16 %v72
    %v116 = vunpack.c.l.b16 %v73
    %v117 = vunpack.c.h.b16 %v73
    %v118 = vunpack.c.l.b16 %v74
    %v119 = vunpack.c.h.b16 %v74
    %v120 = vunpack.c.l.b16 %v75
    %v121 = vunpack.c.h.b16 %v75
    %v122 = vunpack.c.l.b16 %v76
    %v123 = vunpack.c.h.b16 %v76
    %v124 = vunpack.c.l.b16 %v77
    %v125 = vunpack.c.h.b16 %v77
    %v126 = vpack.c.b16 %v96, %v94
    %v127 = vpack.c.b16 %v97, %v95
    %v128 = vpack.c.b16 %v100, %v98
    %v129 = vpack.c.b16 %v101, %v99
    %v130 = vpack.c.b16 %v104, %v102
    %v131 = vpack.c.b16 %v105, %v103
    %v132 = vpack.c.b16 %v108, %v106
    %v133 = vpack.c.b16 %v109, %v107
    %v134 = vpack.c.b16 %v112, %v110
    %v135 = vpack.c.b16 %v113, %v111
    %v136 = vpack.c.b16 %v116, %v114
    %v137 = vpack.c.b16 %v117, %v115
    %v138 = vpack.c.b16 %v120, %v118
    %v139 = vpack.c.b16 %v121, %v119
    %v140 = vpack.c.b16 %v124, %v122
    %v141 = vpack.c.b16 %v125, %v123
    %158 = vmatprep.subr.bf16.mxu0 %v127
    %159 = vmatpush1.bf16.msra.mxu0 %v126
    %160 = vmatprep.subr.bf16.mxu0 %v129
    %161 = vmatpush1.bf16.msra.mxu0 %v128
    %162 = vmatprep.subr.bf16.mxu0 %v131
    %163 = vmatpush1.bf16.msra.mxu0 %v130
    %164 = vmatprep.subr.bf16.mxu0 %v133
    %165 = vmatpush1.bf16.msra.mxu0 %v132
    %166 = vmatprep.subr.bf16.mxu0 %v135
    %167 = vmatpush1.bf16.msra.mxu0 %v134
    %168 = vmatprep.subr.bf16.mxu0 %v137
    %169 = vmatpush1.bf16.msra.mxu0 %v136
    %170 = vmatprep.subr.bf16.mxu0 %v139
    %171 = vmatpush1.bf16.msra.mxu0 %v138
    %172 = vmatprep.subr.bf16.mxu0 %v141
    %173 = vmatpush1.bf16.msra.mxu0 %v140
    %174 = vmatprep.subr.bf16.mxu0 0
    %175 = vmatpush1.bf16.msra.mxu0 0
    %176 = vmatprep.subr.bf16.mxu0 0
    %177 = vmatpush1.bf16.msra.mxu0 0
    %178 = vmatprep.subr.bf16.mxu0 0
    %179 = vmatpush1.bf16.msra.mxu0 0
    %180 = vmatprep.subr.bf16.mxu0 0
    %181 = vmatpush1.bf16.msra.mxu0 0
    %182 = vmatprep.subr.bf16.mxu0 0
    %183 = vmatpush1.bf16.msra.mxu0 0
    %184 = vmatprep.subr.bf16.mxu0 0
    %185 = vmatpush1.bf16.msra.mxu0 0
    %186 = vmatprep.subr.bf16.mxu0 0
    %187 = vmatpush1.bf16.msra.mxu0 0
    %188 = vmatprep.subr.bf16.mxu0 0
    %189 = vmatpush1.bf16.msra.mxu0 0
    %190 = vmatprep.mubr.bf16.mxu0 0
    %191 = vmatmul.mubr.bf16.gmra.mrb[0].mxu0 %v61
    %v192 = vpop.f32.mrb[0].mxu0
    %v193 = vadd.f32 0.0, %v192
    %v194 = vpop.f32.mrb[0].mxu0
    %v195 = vadd.f32 0.0, %v194
    %v196 = vpop.f32.mrb[0].mxu0
    %v197 = vpop.f32.mrb[0].mxu0
    %198 = vdwg.mxu0
    %v199 = vadd.f32 %v59, %v193
    %v200 = vadd.f32 %v60, %v195
    %201 = vst [vmem:[#allocation2] sm:$0xff] %v199
    %202 = vst [vmem:[#allocation2 + $0x8] sm:$0xff] %v200
    // Predicated region
    $region30: #{discriminator_forward.14} parent=1 // pred_check
      %p203 = pneg %p53
    $region31: #{discriminator_forward.14} parent=1 // pred_check_branch
      %205 = sbr.rel (%p203) target = $region33
    $region32: #{discriminator_forward.14} parent=1 // pred_region
      %v206 = vld [vmem:[#allocation2] sm:$0xff]
      %v207 = vld [vmem:[#allocation2 + $0x8] sm:$0xff]
      %v208 = vld [vmem:[#allocation8] sm:$0x3]
      %v210 = vlaneseq
      %v211 = vshrl.u32 %v210, 7
      %v212 = vsub.s32 0, %v211
      %v213 = vrot.slane %v208, %v212
      %v214 = vlaneseq
      %v215 = vshrl.u32 %v214, 7
      %v216 = vsub.s32 1, %v215
      %v217 = vrot.slane %v208, %v216
      %v220 = vadd.f32 %v206, %v213
      %v221 = vadd.f32 %v207, %v217
      %222 = vst [vmem:[#allocation9] sm:$0xff] %v220
      %223 = vst [vmem:[#allocation9 + $0x8] sm:$0xff] %v221
    $region33: #{discriminator_forward.14} parent=1 // pred_fallthru
      _
    // Predicated region
    $region34: #{discriminator_forward.14} parent=1 // pred_check
      _
    $region35: #{discriminator_forward.14} parent=1 // pred_check_branch
      %225 = sbr.rel (0) target = $region37
    $region36: #{discriminator_forward.14} parent=1 // pred_region
      %s227 = ssub.s32 256, 256
      %228 = vsyncadd [#allocation5], %s227
      %s230 = sshll.u32 [#allocation9], 4
      %s231 = int_to_ptr.vmem [resolvable:$true] %s230
      %233 = dma.vmem_to_hbm [thread:$0]  %s231, 256, %s3, [#allocation5]
    $region37: #{discriminator_forward.14} parent=1 // pred_fallthru
      _
    // Predicated region
    $region38: #{discriminator_forward.14} parent=1 // pred_check
      _
    $region39: #{discriminator_forward.14} parent=1 // pred_check_branch
      %235 = sbr.rel (0) target = $region41
    $region40: #{discriminator_forward.14} parent=1 // pred_region
      %236 = dma.done [#allocation5], 256
    $region41: #{discriminator_forward.14} parent=1 // pred_fallthru
      _
    %237 = vsyncpa [#allocation4], 1
    %238 = vsyncpa [#allocation7], 1
    %239 = vsyncpa [#allocation5], 1

// kernel: discriminator_forward.15
$region0: #{discriminator_forward.15}
  #allocation0 [shape = 'u32[]', space=smem, size = 0x4, offset = 0x4, fixed_abs, tag = 'smem constant byte address 0x4 - core index']
  #allocation1 [shape = 'u32[144,128]{1,0:T(1,128)}', space=vmem, size = 0x12000, scoped, tag = 'internal scratch']
  #allocation2 [shape = 'f32[8,128]{1,0:T(8,128)}', space=vmem, size = 0x1000, scoped, tag = 'scratch operand']
  %s0 = inlined_call_operand.hbm [shape: bf16[8,192], index: 0, kind: input, shape index: {}]
  %s1 = inlined_call_operand.hbm [shape: bf16[192,128], index: 1, kind: input, shape index: {}]
  %s2 = inlined_call_operand.hbm [shape: f32[1,128], index: 2, kind: input, shape index: {}]
  %s3 = inlined_call_operand.hbm [shape: f32[8,128], index: 3, kind: output, shape index: {}]
  %s4 = sld [smem:[#allocation0]]
  $region42: #{discriminator_forward.15} parent=0
    _
  %s6 = ssub.s32 1, %s4
  %s7 = scalar_select 0, %s6, %s4
  $region1: #{discriminator_forward.15} parent=0
    #allocation3 [shape = 'u8[4096]{0}', space=vmem, size = 0x1000, scoped, tag = 'input window, operand 0, single buffered']
    #allocation4 [shape = 's32[1]{0}', space=sflag, size = 0x4, scoped, tag = 'scoped memory for discriminator_forward.15']
    #allocation5 [shape = 's32[1]{0}', space=sflag, size = 0x4, scoped, tag = 'scoped memory for discriminator_forward.15']
    #allocation6 [shape = 'u8[49152]{0}', space=vmem, size = 0xc000, scoped, tag = 'input window, operand 1, single buffered']
    #allocation7 [shape = 's32[1]{0}', space=sflag, size = 0x4, scoped, tag = 'scoped memory for discriminator_forward.15']
    #allocation8 [shape = 'u8[512]{0}', space=vmem, size = 0x400, scoped, tag = 'input window, operand 2, single buffered']
    #allocation9 [shape = 'u8[4096]{0}', space=vmem, size = 0x1000, scoped, tag = 'output window, operand 0, single buffered']
    %8 = vsyncpa [#allocation4], 0
    %9 = vsyncpa [#allocation7], 0
    %10 = vsyncpa [#allocation5], 0
    // Predicated region
    $region2: #{discriminator_forward.15} parent=1 // pred_check
      _
    $region3: #{discriminator_forward.15} parent=1 // pred_check_branch
      %12 = sbr.rel (0) target = $region5
    $region4: #{discriminator_forward.15} parent=1 // pred_region
      %s14 = ssub.s32 128, 128
      %15 = vsyncadd [#allocation4], %s14
      %s17 = sshll.u32 [#allocation3], 4
      %s18 = int_to_ptr.vmem [resolvable:$true] %s17
      %20 = dma.hbm_to_vmem [thread:$0]  %s0, 128, %s18, [#allocation4]
    $region5: #{discriminator_forward.15} parent=1 // pred_fallthru
      _
    // Predicated region
    $region6: #{discriminator_forward.15} parent=1 // pred_check
      _
    $region7: #{discriminator_forward.15} parent=1 // pred_check_branch
      %22 = sbr.rel (0) target = $region9
    $region8: #{discriminator_forward.15} parent=1 // pred_region
      %s24 = ssub.s32 1536, 1536
      %25 = vsyncadd [#allocation7], %s24
      %s26 = sshll.u32 [#allocation6], 4
      %s27 = int_to_ptr.vmem [resolvable:$true] %s26
      %32 = dma.hbm_to_vmem [thread:$0]  %s1, 1536, %s27, [#allocation7], 64, 64, 4
    $region9: #{discriminator_forward.15} parent=1 // pred_fallthru
      _
    // Predicated region
    $region10: #{discriminator_forward.15} parent=1 // pred_check
      _
    $region11: #{discriminator_forward.15} parent=1 // pred_check_branch
      %34 = sbr.rel (0) target = $region13
    $region12: #{discriminator_forward.15} parent=1 // pred_region
      %s36 = ssub.s32 16, 16
      %37 = vsyncadd [#allocation7], %s36
      %s39 = sshll.u32 [#allocation8], 4
      %s40 = int_to_ptr.vmem [resolvable:$true] %s39
      %42 = dma.hbm_to_vmem [thread:$0]  %s2, 16, %s40, [#allocation7]
    $region13: #{discriminator_forward.15} parent=1 // pred_fallthru
      _
    // Predicated region
    $region14: #{discriminator_forward.15} parent=1 // pred_check
      _
    $region15: #{discriminator_forward.15} parent=1 // pred_check_branch
      %44 = sbr.rel (0) target = $region17
    $region16: #{discriminator_forward.15} parent=1 // pred_region
      %45 = dma.done [#allocation4], 128
    $region17: #{discriminator_forward.15} parent=1 // pred_fallthru
      _
    // Predicated region
    $region18: #{discriminator_forward.15} parent=1 // pred_check
      _
    $region19: #{discriminator_forward.15} parent=1 // pred_check_branch
      %47 = sbr.rel (0) target = $region21
    $region20: #{discriminator_forward.15} parent=1 // pred_region
      %48 = dma.done [#allocation7], 1536
    $region21: #{discriminator_forward.15} parent=1 // pred_fallthru
      _
    // Predicated region
    $region22: #{discriminator_forward.15} parent=1 // pred_check
      _
    $region23: #{discriminator_forward.15} parent=1 // pred_check_branch
      %50 = sbr.rel (0) target = $region25
    $region24: #{discriminator_forward.15} parent=1 // pred_region
      %51 = dma.done [#allocation7], 16
    $region25: #{discriminator_forward.15} parent=1 // pred_fallthru
      _
    %p53 = scmp.eq.s32.totalorder 0, 0
    // Predicated region
    $region26: #{discriminator_forward.15} parent=1 // pred_check
      %p54 = pneg %p53
    $region27: #{discriminator_forward.15} parent=1 // pred_check_branch
      %56 = sbr.rel (%p54) target = $region29
    $region28: #{discriminator_forward.15} parent=1 // pred_region
      %57 = vst [vmem:[#allocation2] sm:$0xff] 0.0
    $region29: #{discriminator_forward.15} parent=1 // pred_fallthru
      _
    %v58 = vld [vmem:[#allocation2] sm:$0xff]
    %v59 = vld [vmem:[#allocation3] sm:$0xff]
    %v60 = vld [vmem:[#allocation6] sm:$0xf]
    %v61 = vld [vmem:[#allocation6 + $0x4] sm:$0xf]
    %v62 = vld [vmem:[#allocation6 + $0x8] sm:$0xf]
    %v63 = vld [vmem:[#allocation6 + $0xc] sm:$0xf]
    %v64 = vld [vmem:[#allocation6 + $0x10] sm:$0xf]
    %v65 = vld [vmem:[#allocation6 + $0x14] sm:$0xf]
    %v66 = vld [vmem:[#allocation6 + $0x18] sm:$0xf]
    %v67 = vld [vmem:[#allocation6 + $0x1c] sm:$0xf]
    %v68 = vld [vmem:[#allocation6 + $0x20] sm:$0xf]
    %v69 = vld [vmem:[#allocation6 + $0x24] sm:$0xf]
    %v70 = vld [vmem:[#allocation6 + $0x28] sm:$0xf]
    %v71 = vld [vmem:[#allocation6 + $0x2c] sm:$0xf]
    %v72 = vld [vmem:[#allocation6 + $0x30] sm:$0xf]
    %v73 = vld [vmem:[#allocation6 + $0x34] sm:$0xf]
    %v74 = vld [vmem:[#allocation6 + $0x38] sm:$0xf]
    %v75 = vld [vmem:[#allocation6 + $0x3c] sm:$0xf]
    %v76 = vld [vmem:[#allocation6 + $0x40] sm:$0xf]
    %v77 = vld [vmem:[#allocation6 + $0x44] sm:$0xf]
    %v78 = vld [vmem:[#allocation6 + $0x48] sm:$0xf]
    %v79 = vld [vmem:[#allocation6 + $0x4c] sm:$0xf]
    %v80 = vld [vmem:[#allocation6 + $0x50] sm:$0xf]
    %v81 = vld [vmem:[#allocation6 + $0x54] sm:$0xf]
    %v82 = vld [vmem:[#allocation6 + $0x58] sm:$0xf]
    %v83 = vld [vmem:[#allocation6 + $0x5c] sm:$0xf]
    %v85 = vunpack.c.l.b16 %v59
    %v86 = vunpack.c.h.b16 %v59
    %v87 = vpack.c.b16 %v85, %v85
    %v88 = vpack.c.b16 %v86, %v86
    %v114 = vunpack.c.l.b16 %v60
    %v115 = vunpack.c.l.b16 %v61
    %v116 = vunpack.c.l.b16 %v62
    %v117 = vunpack.c.l.b16 %v63
    %v118 = vunpack.c.l.b16 %v64
    %v119 = vunpack.c.l.b16 %v65
    %v120 = vunpack.c.l.b16 %v66
    %v121 = vunpack.c.l.b16 %v67
    %v122 = vunpack.c.l.b16 %v68
    %v123 = vunpack.c.l.b16 %v69
    %v124 = vunpack.c.l.b16 %v70
    %v125 = vunpack.c.l.b16 %v71
    %v126 = vunpack.c.l.b16 %v72
    %v127 = vunpack.c.l.b16 %v73
    %v128 = vunpack.c.l.b16 %v74
    %v129 = vunpack.c.l.b16 %v75
    %v130 = vunpack.c.l.b16 %v76
    %v131 = vunpack.c.l.b16 %v77
    %v132 = vunpack.c.l.b16 %v78
    %v133 = vunpack.c.l.b16 %v79
    %v134 = vunpack.c.l.b16 %v80
    %v135 = vunpack.c.l.b16 %v81
    %v136 = vunpack.c.l.b16 %v82
    %v137 = vunpack.c.l.b16 %v83
    %v138 = vpack.c.b16 %v115, %v114
    %v139 = vpack.c.b16 %v117, %v116
    %v140 = vpack.c.b16 %v119, %v118
    %v141 = vpack.c.b16 %v121, %v120
    %v142 = vpack.c.b16 %v123, %v122
    %v143 = vpack.c.b16 %v125, %v124
    %v144 = vpack.c.b16 %v127, %v126
    %v145 = vpack.c.b16 %v129, %v128
    %v146 = vpack.c.b16 %v131, %v130
    %v147 = vpack.c.b16 %v133, %v132
    %v148 = vpack.c.b16 %v135, %v134
    %v149 = vpack.c.b16 %v137, %v136
    %vm162 = vcmask 523264
    %v164 = vsel %vm162, %v88, 0
    %166 = vmatprep.subr.bf16.mxu0 0
    %167 = vmatpush1.bf16.msra.mxu0 %v138
    %168 = vmatprep.subr.bf16.mxu0 0
    %169 = vmatpush1.bf16.msra.mxu0 %v139
    %170 = vmatprep.subr.bf16.mxu0 0
    %171 = vmatpush1.bf16.msra.mxu0 %v140
    %172 = vmatprep.subr.bf16.mxu0 0
    %173 = vmatpush1.bf16.msra.mxu0 %v141
    %174 = vmatprep.subr.bf16.mxu0 0
    %175 = vmatpush1.bf16.msra.mxu0 %v142
    %176 = vmatprep.subr.bf16.mxu0 0
    %177 = vmatpush1.bf16.msra.mxu0 %v143
    %178 = vmatprep.subr.bf16.mxu0 0
    %179 = vmatpush1.bf16.msra.mxu0 %v144
    %180 = vmatprep.subr.bf16.mxu0 0
    %181 = vmatpush1.bf16.msra.mxu0 %v145
    %182 = vmatprep.subr.bf16.mxu0 0
    %183 = vmatpush1.bf16.msra.mxu0 %v146
    %184 = vmatprep.subr.bf16.mxu0 0
    %185 = vmatpush1.bf16.msra.mxu0 %v147
    %186 = vmatprep.subr.bf16.mxu0 0
    %187 = vmatpush1.bf16.msra.mxu0 %v148
    %188 = vmatprep.subr.bf16.mxu0 0
    %189 = vmatpush1.bf16.msra.mxu0 %v149
    %190 = vmatprep.subr.bf16.mxu0 0
    %191 = vmatpush1.bf16.msra.mxu0 0
    %192 = vmatprep.subr.bf16.mxu0 0
    %193 = vmatpush1.bf16.msra.mxu0 0
    %194 = vmatprep.subr.bf16.mxu0 0
    %195 = vmatpush1.bf16.msra.mxu0 0
    %196 = vmatprep.subr.bf16.mxu0 0
    %197 = vmatpush1.bf16.msra.mxu0 0
    %198 = vmatprep.mubr.bf16.mxu0 %v164
    %199 = vmatmul.mubr.bf16.gmra.mrb[0].mxu0 %v87
    %v200 = vpop.f32.mrb[0].mxu0
    %v201 = vadd.f32 0.0, %v200
    %v202 = vpop.f32.mrb[0].mxu0
    %v203 = vpop.f32.mrb[0].mxu0
    %v204 = vpop.f32.mrb[0].mxu0
    %205 = vdwg.mxu0
    %v206 = vadd.f32 %v58, %v201
    %207 = vst [vmem:[#allocation2] sm:$0xff] %v206
    // Predicated region
    $region30: #{discriminator_forward.15} parent=1 // pred_check
      %p208 = pneg %p53
    $region31: #{discriminator_forward.15} parent=1 // pred_check_branch
      %210 = sbr.rel (%p208) target = $region33
    $region32: #{discriminator_forward.15} parent=1 // pred_region
      %v211 = vld [vmem:[#allocation2] sm:$0xff]
      %v212 = vld [vmem:[#allocation8] sm:$0x1]
      %v214 = vlaneseq
      %v215 = vshrl.u32 %v214, 7
      %v216 = vsub.s32 0, %v215
      %v217 = vrot.slane %v212, %v216
      %v219 = vadd.f32 %v211, %v217
      %v220 = vxor.u32 %v219, 2147483648
      %v221 = vmul.f32 %v220, 1.442695
      %v222 = vpow.pop %v221
      %v223 = vadd.f32 %v222, 1.0
      %v224 = vrcp.pop %v223
      %v225 = vmul.f32 1.0, %v224
      %226 = vst [vmem:[#allocation9] sm:$0xff] %v225
    $region33: #{discriminator_forward.15} parent=1 // pred_fallthru
      _
    // Predicated region
    $region34: #{discriminator_forward.15} parent=1 // pred_check
      _
    $region35: #{discriminator_forward.15} parent=1 // pred_check_branch
      %228 = sbr.rel (0) target = $region37
    $region36: #{discriminator_forward.15} parent=1 // pred_region
      %s230 = ssub.s32 128, 128
      %231 = vsyncadd [#allocation5], %s230
      %s233 = sshll.u32 [#allocation9], 4
      %s234 = int_to_ptr.vmem [resolvable:$true] %s233
      %236 = dma.vmem_to_hbm [thread:$0]  %s234, 128, %s3, [#allocation5]
    $region37: #{discriminator_forward.15} parent=1 // pred_fallthru
      _
    // Predicated region
    $region38: #{discriminator_forward.15} parent=1 // pred_check
      _
    $region39: #{discriminator_forward.15} parent=1 // pred_check_branch
      %238 = sbr.rel (0) target = $region41
    $region40: #{discriminator_forward.15} parent=1 // pred_region
      %239 = dma.done [#allocation5], 128
    $region41: #{discriminator_forward.15} parent=1 // pred_fallthru
      _
    %240 = vsyncpa [#allocation4], 1
    %241 = vsyncpa [#allocation7], 1
    %242 = vsyncpa [#allocation5], 1

</llo_original>
